<compile_context>
chip_gen: v5e
topology: v5e:2x2
jax: 0.10.0
libtpu: 0.0.40
codegen_flags: <defaults>
</compile_context>

<pallas_src>
import functools

import jax
import jax.numpy as jnp
from jax import lax
from jax.experimental import pallas as pl
from jax.experimental.pallas import tpu as pltpu


# ----------------------------------------------------------------------------
# helpers
# ----------------------------------------------------------------------------
def _round_up(x, m):
    return (x + m - 1) // m * m


@functools.lru_cache(maxsize=None)
def _mxu_tile():
    """256-wide N/K tiles on v6e/v7x (2x256x256 MXU); 128 on v5e and older."""
    try:
        kind = jax.devices()[0].device_kind.lower()
    except Exception:
        return 128
    for tag in ("v2", "v3", "v4", "v5"):
        if tag in kind:
            return 128
    return 256


# ----------------------------------------------------------------------------
# Pallas kernels
# ----------------------------------------------------------------------------
def _matmul_bias_kernel(a_ref, b_ref, bias_ref, o_ref, acc_ref, *, activation):
    """C = A @ B + bias (optional fused tanh).  Grid = (M_tiles, N_tiles, K_tiles)."""
    k = pl.program_id(2)

    @pl.when(k == 0)
    def _():
        acc_ref[...] = jnp.zeros_like(acc_ref)

    acc_ref[...] += jnp.dot(a_ref[...], b_ref[...],
                            preferred_element_type=jnp.float32)

    @pl.when(k == pl.num_programs(2) - 1)
    def _():
        r = acc_ref[...] + bias_ref[...]
        if activation == "tanh":
            r = jnp.tanh(r)
        o_ref[...] = r.astype(o_ref.dtype)


def _in_stats(r, hw):
    """Single-pass masked per-channel mean and rsqrt(var + eps) over HW rows."""
    rows = lax.broadcasted_iota(jnp.int32, r.shape, 0)
    rm = jnp.where(rows < hw, r, 0.0)
    inv_hw = 1.0 / hw
    mean = jnp.sum(rm, axis=0, keepdims=True) * inv_hw
    var = jnp.sum(rm * rm, axis=0, keepdims=True) * inv_hw - mean * mean
    return mean, lax.rsqrt(var + 1e-5)


def _conv_in_kernel(a_ref, b_ref, bias_ref, o_ref, acc_ref, *, hw, relu):
    """Conv (as matmul) + InstanceNorm (+ReLU) fused epilogue.

    Grid = (sample, Cout_tiles, K_tiles); the M block covers one sample's full
    HW so the per-channel statistics are complete at the last K step.
    """
    k = pl.program_id(2)

    @pl.when(k == 0)
    def _():
        acc_ref[...] = jnp.zeros_like(acc_ref)

    acc_ref[...] += jnp.dot(a_ref[...], b_ref[...],
                            preferred_element_type=jnp.float32)

    @pl.when(k == pl.num_programs(2) - 1)
    def _():
        r = acc_ref[...] + bias_ref[...]              # (HWp, tn) f32
        mean, scale = _in_stats(r, hw)
        y = (r - mean) * scale
        if relu:
            y = jnp.maximum(y, 0.0)
        o_ref[...] = y.astype(o_ref.dtype)


def _conv_in_res_kernel(a_ref, b_ref, bias_ref, res_ref, o_ref, acc_ref, *, hw):
    """Conv + InstanceNorm + residual add (tail of a ResNetBlock)."""
    k = pl.program_id(2)

    @pl.when(k == 0)
    def _():
        acc_ref[...] = jnp.zeros_like(acc_ref)

    acc_ref[...] += jnp.dot(a_ref[...], b_ref[...],
                            preferred_element_type=jnp.float32)

    @pl.when(k == pl.num_programs(2) - 1)
    def _():
        r = acc_ref[...] + bias_ref[...]
        mean, scale = _in_stats(r, hw)
        y = res_ref[...].astype(jnp.float32) + (r - mean) * scale
        o_ref[...] = y.astype(o_ref.dtype)


def _instance_norm_kernel(x_ref, o_ref, *, relu):
    """Stand-alone InstanceNorm(+ReLU), single-pass stats.  Block (1, HW, C)."""
    x = x_ref[...].astype(jnp.float32)
    inv_hw = 1.0 / x.shape[1]
    mean = jnp.sum(x, axis=1, keepdims=True) * inv_hw
    var = jnp.sum(x * x, axis=1, keepdims=True) * inv_hw - mean * mean
    y = (x - mean) * lax.rsqrt(var + 1e-5)
    if relu:
        y = jnp.maximum(y, 0.0)
    o_ref[...] = y.astype(o_ref.dtype)


# ----------------------------------------------------------------------------
# Pallas wrappers
# ----------------------------------------------------------------------------
def matmul_bias(A, B, bias, activation=None):
    """A: (M, K), B: (K, N), bias: (N,) -> (M, N) f32.  M/N/K tiled, bf16 MXU."""
    M, K = A.shape
    _, Nc = B.shape
    t = _mxu_tile()
    tn = min(t, _round_up(Nc, 128))
    tk = min(t, _round_up(K, 128))
    tm = min(512, _round_up(M, 8))

    Mp, Kp, Np = _round_up(M, tm), _round_up(K, tk), _round_up(Nc, tn)
    Ap = jnp.pad(A.astype(jnp.bfloat16), ((0, Mp - M), (0, Kp - K)))
    Bp = jnp.pad(B.astype(jnp.bfloat16), ((0, Kp - K), (0, Np - Nc)))
    bp = jnp.pad(bias.astype(jnp.float32), (0, Np - Nc)).reshape(1, Np)

    out = pl.pallas_call(
        functools.partial(_matmul_bias_kernel, activation=activation),
        out_shape=jax.ShapeDtypeStruct((Mp, Np), jnp.float32),
        grid_spec=pltpu.PrefetchScalarGridSpec(
            num_scalar_prefetch=0,
            grid=(Mp // tm, Np // tn, Kp // tk),
            in_specs=[
                pl.BlockSpec((tm, tk), lambda i, j, k: (i, k)),
                pl.BlockSpec((tk, tn), lambda i, j, k: (k, j)),
                pl.BlockSpec((1, tn), lambda i, j, k: (0, j)),
            ],
            out_specs=pl.BlockSpec((tm, tn), lambda i, j, k: (i, j)),
            scratch_shapes=[pltpu.VMEM((tm, tn), jnp.float32)],
        ),
        compiler_params=pltpu.CompilerParams(
            dimension_semantics=("parallel", "parallel", "arbitrary")),
    )(Ap, Bp, bp)
    return out[:M, :Nc]


def conv_in_matmul(A, B, bias, relu=False, residual=None):
    """Fused im2col-matmul + bias + InstanceNorm [+ReLU | +residual].

    A: (N, HW, K) patches, B: (K, Cout), bias: (Cout,),
    residual: (N, HW, Cout) or None.  Returns (N, HW, Cout) f32.
    """
    N, HW, K = A.shape
    Cout = B.shape[1]
    t = _mxu_tile()
    tn = min(t, _round_up(Cout, 128))
    tk = min(t, _round_up(K, 128))
    HWp = _round_up(HW, 8)
    Kp, Np = _round_up(K, tk), _round_up(Cout, tn)
    # NOTE: the M block is one sample's full HW (needed for exact IN stats).
    # Working set is HWp*(tk+tn) per step -- tiny here; for very large images
    # switch to an HW-tiled two-pass stats kernel.

    Ap = jnp.pad(A.astype(jnp.bfloat16),
                 ((0, 0), (0, HWp - HW), (0, Kp - K))).reshape(N * HWp, Kp)
    Bp = jnp.pad(B.astype(jnp.bfloat16), ((0, Kp - K), (0, Np - Cout)))
    bp = jnp.pad(bias.astype(jnp.float32), (0, Np - Cout)).reshape(1, Np)

    in_specs = [
        pl.BlockSpec((HWp, tk), lambda n, j, k: (n, k)),
        pl.BlockSpec((tk, tn), lambda n, j, k: (k, j)),
        pl.BlockSpec((1, tn), lambda n, j, k: (0, j)),
    ]
    args = [Ap, Bp, bp]
    if residual is None:
        kernel = functools.partial(_conv_in_kernel, hw=HW, relu=relu)
    else:
        Rp = jnp.pad(residual.astype(jnp.float32),
                     ((0, 0), (0, HWp - HW), (0, Np - Cout))).reshape(N * HWp, Np)
        in_specs.append(pl.BlockSpec((HWp, tn), lambda n, j, k: (n, j)))
        args.append(Rp)
        kernel = functools.partial(_conv_in_res_kernel, hw=HW)

    out = pl.pallas_call(
        kernel,
        out_shape=jax.ShapeDtypeStruct((N * HWp, Np), jnp.float32),
        grid_spec=pltpu.PrefetchScalarGridSpec(
            num_scalar_prefetch=0,
            grid=(N, Np // tn, Kp // tk),
            in_specs=in_specs,
            out_specs=pl.BlockSpec((HWp, tn), lambda n, j, k: (n, j)),
            scratch_shapes=[pltpu.VMEM((HWp, tn), jnp.float32)],
        ),
        compiler_params=pltpu.CompilerParams(
            dimension_semantics=("parallel", "parallel", "arbitrary")),
    )(*args)
    return out.reshape(N, HWp, Np)[:, :HW, :Cout]


def instance_norm(x, relu=False):
    """x: (N, H, W, C) NHWC.  InstanceNorm2d (affine=False, eps=1e-5) + ReLU."""
    N, H, W, C = x.shape
    HW = H * W
    xf = x.reshape(N, HW, C)
    spec = pl.BlockSpec((1, HW, C), lambda n: (n, 0, 0))
    out = pl.pallas_call(
        functools.partial(_instance_norm_kernel, relu=relu),
        out_shape=jax.ShapeDtypeStruct((N, HW, C), x.dtype),
        grid_spec=pltpu.PrefetchScalarGridSpec(
            num_scalar_prefetch=0, grid=(N,), in_specs=[spec], out_specs=spec),
        compiler_params=pltpu.CompilerParams(
            dimension_semantics=("parallel",)),
    )(xf)
    return out.reshape(N, H, W, C)


# ----------------------------------------------------------------------------
# Conv / ConvTranspose built on the Pallas matmuls
# ----------------------------------------------------------------------------
def _im2col(x, k, stride):
    """x: (N, H, W, C) already padded.  Returns (N, Ho, Wo, k*k*C), Ho, Wo."""
    N, H, W, C = x.shape
    Ho = (H - k) // stride + 1
    Wo = (W - k) // stride + 1
    cols = []
    for kh in range(k):
        for kw in range(k):
            cols.append(x[:, kh:kh + (Ho - 1) * stride + 1:stride,
                          kw:kw + (Wo - 1) * stride + 1:stride, :])
    return jnp.concatenate(cols, axis=-1), Ho, Wo


def conv2d(x, w, b, stride=1, activation=None):
    """Plain conv (no norm).  x pre-padded NHWC; w: (k,k,Cin,Cout); b: (Cout,)."""
    k, _, Cin, Cout = w.shape
    patches, Ho, Wo = _im2col(x.astype(jnp.bfloat16), k, stride)
    N = x.shape[0]
    A = patches.reshape(N * Ho * Wo, k * k * Cin)
    B = w.reshape(k * k * Cin, Cout)
    out = matmul_bias(A, B, b, activation=activation)
    return out.reshape(N, Ho, Wo, Cout)


def conv2d_in(x, w, b, stride=1, relu=False, residual=None):
    """Conv + InstanceNorm (+ReLU | +residual) as ONE fused Pallas kernel."""
    k, _, Cin, Cout = w.shape
    patches, Ho, Wo = _im2col(x.astype(jnp.bfloat16), k, stride)
    N = x.shape[0]
    A = patches.reshape(N, Ho * Wo, k * k * Cin)
    B = w.reshape(k * k * Cin, Cout)
    res = None if residual is None else residual.reshape(N, Ho * Wo, Cout)
    out = conv_in_matmul(A, B, b, relu=relu, residual=res)
    return out.reshape(N, Ho, Wo, Cout)


def _subpixel_weight(w):
    """(3,3,Cin,Cout) conv-transpose weight -> (4*Cin, 4*Cout) sub-pixel matrix.

    Row block t = 2*dh+dw (input tap (i+dh, j+dw)); column block s = 2*a+b
    (output sub-pixel (2i+a, 2j+b)).  Tap (dh,dw) reaches sub-pixel (a,b)
    through kernel element (a+1-2dh, b+1-2dw) when inside the 3x3 kernel.
    """
    Cin, Cout = w.shape[2], w.shape[3]
    zero = jnp.zeros((Cin, Cout), w.dtype)
    rows = []
    for dh in (0, 1):
        for dw in (0, 1):
            cols = []
            for a in (0, 1):
                for b in (0, 1):
                    kh, kw = a + 1 - 2 * dh, b + 1 - 2 * dw
                    cols.append(w[kh, kw] if (0 <= kh <= 2 and 0 <= kw <= 2)
                                else zero)
            rows.append(jnp.concatenate(cols, axis=1))
    return jnp.concatenate(rows, axis=0)


def conv_transpose2d(x, w, b):
    """ConvTranspose2d(k=3, stride=2, padding=1, output_padding=1) via the
    sub-pixel decomposition: a 2x2-patch matmul producing 4*Cout channels,
    then pixel shuffle (no zero-dilated input, no wasted MACs on zeros)."""
    N, H, W, Cin = x.shape
    Cout = w.shape[3]
    xp = jnp.pad(x.astype(jnp.bfloat16), ((0, 0), (0, 1), (0, 1), (0, 0)))
    patches = jnp.concatenate(
        [xp[:, 0:H, 0:W, :], xp[:, 0:H, 1:W + 1, :],
         xp[:, 1:H + 1, 0:W, :], xp[:, 1:H + 1, 1:W + 1, :]], axis=-1)
    A = patches.reshape(N * H * W, 4 * Cin)
    Wb = _subpixel_weight(w)                      # (4*Cin, 4*Cout)
    bb = jnp.tile(b, 4)                           # (4*Cout,)
    out = matmul_bias(A, Wb, bb)                  # (N*H*W, 4*Cout)
    out = out.reshape(N, H, W, 2, 2, Cout)
    return out.transpose(0, 1, 3, 2, 4, 5).reshape(N, 2 * H, 2 * W, Cout)


def reflect_pad(x, p):
    return jnp.pad(x, ((0, 0), (p, p), (p, p), (0, 0)), mode="reflect")


def zero_pad(x, p):
    return jnp.pad(x, ((0, 0), (p, p), (p, p), (0, 0)))


# ----------------------------------------------------------------------------
# Generator forward
# ----------------------------------------------------------------------------
def generator_forward(params, x_nchw):
    x = jnp.transpose(x_nchw, (0, 2, 3, 1))                      # NCHW -> NHWC

    # Stem: ReflectionPad(3) -> Conv 7x7 (1->64) -> IN -> ReLU   (fused)
    x = conv2d_in(reflect_pad(x, 3), params["c1_w"], params["c1_b"], relu=True)

    # Downsample: Conv 3x3 s2 p1 (64->128) -> IN -> ReLU         (fused)
    x = conv2d_in(zero_pad(x, 1), params["c2_w"], params["c2_b"],
                  stride=2, relu=True)

    # Downsample: Conv 3x3 s2 p1 (128->256) -> IN -> ReLU        (fused)
    x = conv2d_in(zero_pad(x, 1), params["c3_w"], params["c3_b"],
                  stride=2, relu=True)

    # 9 x ResNetBlock(256): each conv+IN(+ReLU / +residual) is one kernel
    def res_step(h, p):
        wa, ba, wb, bb = p
        y = conv2d_in(reflect_pad(h, 1), wa, ba, relu=True)
        h = conv2d_in(reflect_pad(y, 1), wb, bb, residual=h)     # h + IN(conv)
        return h, None

    x, _ = lax.scan(res_step, x,
                    (params["res_wa"], params["res_ba"],
                     params["res_wb"], params["res_bb"]))

    # Upsample: ConvTranspose 3x3 s2 p1 op1 (256->128) -> IN -> ReLU
    x = conv_transpose2d(x, params["t1_w"], params["t1_b"])
    x = instance_norm(x, relu=True)

    # Upsample: ConvTranspose 3x3 s2 p1 op1 (128->64) -> IN -> ReLU
    x = conv_transpose2d(x, params["t2_w"], params["t2_b"])
    x = instance_norm(x, relu=True)

    # Head: ReflectionPad(3) -> Conv 7x7 (64->1) -> Tanh (fused in matmul)
    x = conv2d(reflect_pad(x, 3), params["c4_w"], params["c4_b"],
               activation="tanh")

    return jnp.transpose(x, (0, 3, 1, 2))                        # NHWC -> NCHW


# ----------------------------------------------------------------------------
# Deterministic synthetic parameter init (normal(0, 0.02) weights, zero biases)
# ----------------------------------------------------------------------------
def init_params(key):
    ks = jax.random.split(key, 8)

    def w(k, shape):
        return (0.02 * jax.random.normal(k, shape)).astype(jnp.float32)

    z = lambda *s: jnp.zeros(s, jnp.float32)
    return {
        "c1_w": w(ks[0], (7, 7, 1, 64)),     "c1_b": z(64),
        "c2_w": w(ks[1], (3, 3, 64, 128)),   "c2_b": z(128),
        "c3_w": w(ks[2], (3, 3, 128, 256)),  "c3_b": z(256),
        "res_wa": w(ks[3], (9, 3, 3, 256, 256)), "res_ba": z(9, 256),
        "res_wb": w(ks[4], (9, 3, 3, 256, 256)), "res_bb": z(9, 256),
        "t1_w": w(ks[5], (3, 3, 256, 128)),  "t1_b": z(128),
        "t2_w": w(ks[6], (3, 3, 128, 64)),   "t2_b": z(64),
        "c4_w": w(ks[7], (7, 7, 64, 1)),     "c4_b": z(1),
    }


if __name__ == "__main__":
    root = jax.random.PRNGKey(0)
    k_params, k_x = jax.random.split(root)

    params = init_params(k_params)
    x = jax.random.normal(k_x, (2, 1, 16, 16), jnp.float32)      # NCHW, like PyTorch

    fwd = jax.jit(generator_forward)
    out = fwd(params, x)
    out = jax.block_until_ready(out)

    assert out.shape == (2, 1, 16, 16), out.shape
    assert bool(jnp.all(jnp.isfinite(out)))
    assert bool(jnp.all(jnp.abs(out) <= 1.0))                    # tanh range
    print("KERNEL_OK")
</pallas_src>

<mosaic_0001>
module attributes {stable_mosaic.version = 11 : i64} {
  func.func @_conv_in_kernel(%arg0: i32, %arg1: i32, %arg2: i32, %arg3: memref<256x128xbf16, #tpu.memory_space<vmem>>, %arg4: memref<128x128xbf16, #tpu.memory_space<vmem>>, %arg5: memref<1x128xf32, #tpu.memory_space<vmem>>, %arg6: memref<256x128xf32, #tpu.memory_space<vmem>>, %arg7: memref<256x128xf32, #tpu.memory_space<vmem>>) attributes {dimension_semantics = [#tpu.dimension_semantics<parallel>, #tpu.dimension_semantics<parallel>, #tpu.dimension_semantics<arbitrary>], iteration_bounds = array<i64: 2, 1, 1>, scalar_prefetch = 0 : i64, scratch_operands = 1 : i64, tpu.core_type = #tpu.core_type<tc>, window_params = [{transform_indices = @transform_0, window_bounds = array<i64: 256, 128>}, {transform_indices = @transform_1, window_bounds = array<i64: 128, 128>}, {transform_indices = @transform_2, window_bounds = array<i64: 1, 128>}, {transform_indices = @transform_3, window_bounds = array<i64: 256, 128>}]} {
    %c0_i32 = arith.constant 0 : i32
    %0 = arith.cmpi eq, %arg2, %c0_i32 : i32
    %1 = arith.extui %0 : i1 to i32
    %c0_i32_0 = arith.constant 0 : i32
    %2 = arith.cmpi ne, %1, %c0_i32_0 : i32
    scf.if %2 {
      %cst_10 = arith.constant 0.000000e+00 : f32
      %12 = vector.broadcast %cst_10 : f32 to vector<256x128xf32>
      %c0_11 = arith.constant 0 : index
      %c0_12 = arith.constant 0 : index
      %13 = vector.load %arg7[%c0_11, %c0_12] : memref<256x128xf32, #tpu.memory_space<vmem>>, vector<256x128xf32>
      tpu.vector_store %arg7[%c0_11, %c0_12], %12 {strides = array<i32>} : memref<256x128xf32, #tpu.memory_space<vmem>>, vector<256x128xf32>,
    } else {
    }
    %c0 = arith.constant 0 : index
    %c0_1 = arith.constant 0 : index
    %3 = vector.load %arg7[%c0, %c0_1] : memref<256x128xf32, #tpu.memory_space<vmem>>, vector<256x128xf32>
    %c0_2 = arith.constant 0 : index
    %c0_3 = arith.constant 0 : index
    %4 = vector.load %arg3[%c0_2, %c0_3] : memref<256x128xbf16, #tpu.memory_space<vmem>>, vector<256x128xbf16>
    %c0_4 = arith.constant 0 : index
    %c0_5 = arith.constant 0 : index
    %5 = vector.load %arg4[%c0_4, %c0_5] : memref<128x128xbf16, #tpu.memory_space<vmem>>, vector<128x128xbf16>
    %cst = arith.constant dense<0.000000e+00> : vector<256x128xf32>
    %6 = tpu.matmul %4, %5, %cst {dimension_numbers = #tpu.dot_dimension_numbers<[1], [0], [0], [1], [0, 0, 1, 1], [], []>} : vector<256x128xbf16>, vector<128x128xbf16>, vector<256x128xf32> -> vector<256x128xf32>
    %7 = arith.addf %3, %6 : vector<256x128xf32>
    %c0_6 = arith.constant 0 : index
    %c0_7 = arith.constant 0 : index
    %8 = vector.load %arg7[%c0_6, %c0_7] : memref<256x128xf32, #tpu.memory_space<vmem>>, vector<256x128xf32>
    tpu.vector_store %arg7[%c0_6, %c0_7], %7 {strides = array<i32>} : memref<256x128xf32, #tpu.memory_space<vmem>>, vector<256x128xf32>,
    %c0_i32_8 = arith.constant 0 : i32
    %9 = arith.cmpi eq, %arg2, %c0_i32_8 : i32
    %10 = arith.extui %9 : i1 to i32
    %c0_i32_9 = arith.constant 0 : i32
    %11 = arith.cmpi ne, %10, %c0_i32_9 : i32
    scf.if %11 {
      %c0_10 = arith.constant 0 : index
      %c0_11 = arith.constant 0 : index
      %12 = vector.load %arg7[%c0_10, %c0_11] : memref<256x128xf32, #tpu.memory_space<vmem>>, vector<256x128xf32>
      %c0_12 = arith.constant 0 : index
      %c0_13 = arith.constant 0 : index
      %13 = vector.load %arg5[%c0_12, %c0_13] : memref<1x128xf32, #tpu.memory_space<vmem>>, vector<1x128xf32>
      %14 = vector.broadcast %13 : vector<1x128xf32> to vector<256x128xf32>
      %15 = arith.addf %12, %14 : vector<256x128xf32>
      %16 = tpu.iota {dimensions = array<i32: 0>} : vector<256x128xi32>
      %c256_i32 = arith.constant 256 : i32
      %17 = vector.broadcast %c256_i32 : i32 to vector<256x128xi32>
      %18 = arith.cmpi slt, %16, %17 : vector<256x128xi32>
      %cst_14 = arith.constant 0.000000e+00 : f32
      %19 = vector.broadcast %cst_14 : f32 to vector<256x128xf32>
      %20 = arith.select %18, %15, %19 : vector<256x128xi1>, vector<256x128xf32>
      %cst_15 = arith.constant dense<0.000000e+00> : vector<128xf32>
      %21 = vector.multi_reduction <add>, %20, %cst_15 [0] : vector<256x128xf32> to vector<128xf32>
      %22 = vector.shape_cast %21 : vector<128xf32> to vector<1x128xf32>
      %cst_16 = arith.constant 3.906250e-03 : f32
      %23 = vector.broadcast %cst_16 : f32 to vector<1x128xf32>
      %24 = arith.mulf %22, %23 : vector<1x128xf32>
      %25 = arith.mulf %20, %20 : vector<256x128xf32>
      %cst_17 = arith.constant dense<0.000000e+00> : vector<128xf32>
      %26 = vector.multi_reduction <add>, %25, %cst_17 [0] : vector<256x128xf32> to vector<128xf32>
      %27 = vector.shape_cast %26 : vector<128xf32> to vector<1x128xf32>
      %cst_18 = arith.constant 3.906250e-03 : f32
      %28 = vector.broadcast %cst_18 : f32 to vector<1x128xf32>
      %29 = arith.mulf %27, %28 : vector<1x128xf32>
      %30 = arith.mulf %24, %24 : vector<1x128xf32>
      %31 = arith.subf %29, %30 : vector<1x128xf32>
      %cst_19 = arith.constant 9.99999974E-6 : f32
      %32 = vector.broadcast %cst_19 : f32 to vector<1x128xf32>
      %33 = arith.addf %31, %32 : vector<1x128xf32>
      %34 = math.rsqrt %33 : vector<1x128xf32>
      %35 = vector.broadcast %24 : vector<1x128xf32> to vector<256x128xf32>
      %36 = arith.subf %15, %35 : vector<256x128xf32>
      %37 = vector.broadcast %34 : vector<1x128xf32> to vector<256x128xf32>
      %38 = arith.mulf %36, %37 : vector<256x128xf32>
      %cst_20 = arith.constant 0.000000e+00 : f32
      %39 = vector.broadcast %cst_20 : f32 to vector<256x128xf32>
      %40 = arith.maximumf %38, %39 : vector<256x128xf32>
      %c0_21 = arith.constant 0 : index
      %c0_22 = arith.constant 0 : index
      %41 = vector.load %arg6[%c0_21, %c0_22] : memref<256x128xf32, #tpu.memory_space<vmem>>, vector<256x128xf32>
      tpu.vector_store %arg6[%c0_21, %c0_22], %40 {strides = array<i32>} : memref<256x128xf32, #tpu.memory_space<vmem>>, vector<256x128xf32>,
    } else {
    }
    return
  }
  func.func @transform_0(%arg0: i32, %arg1: i32, %arg2: i32) -> (i32, i32) {
    %c0_i32 = arith.constant 0 : i32
    return %arg0, %arg2 : i32, i32
  }
  func.func @transform_1(%arg0: i32, %arg1: i32, %arg2: i32) -> (i32, i32) {
    %c0_i32 = arith.constant 0 : i32
    return %arg2, %arg1 : i32, i32
  }
  func.func @transform_2(%arg0: i32, %arg1: i32, %arg2: i32) -> (i32, i32) {
    %c0_i32 = arith.constant 0 : i32
    %c0_i32_0 = arith.constant 0 : i32
    return %c0_i32, %arg1 : i32, i32
  }
  func.func @transform_3(%arg0: i32, %arg1: i32, %arg2: i32) -> (i32, i32) {
    %c0_i32 = arith.constant 0 : i32
    return %arg0, %arg1 : i32, i32
  }
}

module attributes {stable_mosaic.version = 11 : i64} {
  func.func @_conv_in_kernel(%arg0: i32, %arg1: i32, %arg2: i32, %arg3: memref<64x256xbf16, #tpu.memory_space<vmem>>, %arg4: memref<256x128xbf16, #tpu.memory_space<vmem>>, %arg5: memref<1x128xf32, #tpu.memory_space<vmem>>, %arg6: memref<64x128xf32, #tpu.memory_space<vmem>>, %arg7: memref<64x128xf32, #tpu.memory_space<vmem>>) attributes {dimension_semantics = [#tpu.dimension_semantics<parallel>, #tpu.dimension_semantics<parallel>, #tpu.dimension_semantics<arbitrary>], iteration_bounds = array<i64: 2, 1, 3>, scalar_prefetch = 0 : i64, scratch_operands = 1 : i64, tpu.core_type = #tpu.core_type<tc>, window_params = [{transform_indices = @transform_0, window_bounds = array<i64: 64, 256>}, {transform_indices = @transform_1, window_bounds = array<i64: 256, 128>}, {transform_indices = @transform_2, window_bounds = array<i64: 1, 128>}, {transform_indices = @transform_3, window_bounds = array<i64: 64, 128>}]} {
    %c0_i32 = arith.constant 0 : i32
    %0 = arith.cmpi eq, %arg2, %c0_i32 : i32
    %1 = arith.extui %0 : i1 to i32
    %c0_i32_0 = arith.constant 0 : i32
    %2 = arith.cmpi ne, %1, %c0_i32_0 : i32
    scf.if %2 {
      %cst_9 = arith.constant 0.000000e+00 : f32
      %12 = vector.broadcast %cst_9 : f32 to vector<64x128xf32>
      %c0_10 = arith.constant 0 : index
      %c0_11 = arith.constant 0 : index
      %13 = vector.load %arg7[%c0_10, %c0_11] : memref<64x128xf32, #tpu.memory_space<vmem>>, vector<64x128xf32>
      tpu.vector_store %arg7[%c0_10, %c0_11], %12 {strides = array<i32>} : memref<64x128xf32, #tpu.memory_space<vmem>>, vector<64x128xf32>,
    } else {
    }
    %c0 = arith.constant 0 : index
    %c0_1 = arith.constant 0 : index
    %3 = vector.load %arg7[%c0, %c0_1] : memref<64x128xf32, #tpu.memory_space<vmem>>, vector<64x128xf32>
    %c0_2 = arith.constant 0 : index
    %c0_3 = arith.constant 0 : index
    %4 = vector.load %arg3[%c0_2, %c0_3] : memref<64x256xbf16, #tpu.memory_space<vmem>>, vector<64x256xbf16>
    %c0_4 = arith.constant 0 : index
    %c0_5 = arith.constant 0 : index
    %5 = vector.load %arg4[%c0_4, %c0_5] : memref<256x128xbf16, #tpu.memory_space<vmem>>, vector<256x128xbf16>
    %cst = arith.constant dense<0.000000e+00> : vector<64x128xf32>
    %6 = tpu.matmul %4, %5, %cst {dimension_numbers = #tpu.dot_dimension_numbers<[1], [0], [0], [1], [0, 0, 1, 1], [], []>} : vector<64x256xbf16>, vector<256x128xbf16>, vector<64x128xf32> -> vector<64x128xf32>
    %7 = arith.addf %3, %6 : vector<64x128xf32>
    %c0_6 = arith.constant 0 : index
    %c0_7 = arith.constant 0 : index
    %8 = vector.load %arg7[%c0_6, %c0_7] : memref<64x128xf32, #tpu.memory_space<vmem>>, vector<64x128xf32>
    tpu.vector_store %arg7[%c0_6, %c0_7], %7 {strides = array<i32>} : memref<64x128xf32, #tpu.memory_space<vmem>>, vector<64x128xf32>,
    %c2_i32 = arith.constant 2 : i32
    %9 = arith.cmpi eq, %arg2, %c2_i32 : i32
    %10 = arith.extui %9 : i1 to i32
    %c0_i32_8 = arith.constant 0 : i32
    %11 = arith.cmpi ne, %10, %c0_i32_8 : i32
    scf.if %11 {
      %c0_9 = arith.constant 0 : index
      %c0_10 = arith.constant 0 : index
      %12 = vector.load %arg7[%c0_9, %c0_10] : memref<64x128xf32, #tpu.memory_space<vmem>>, vector<64x128xf32>
      %c0_11 = arith.constant 0 : index
      %c0_12 = arith.constant 0 : index
      %13 = vector.load %arg5[%c0_11, %c0_12] : memref<1x128xf32, #tpu.memory_space<vmem>>, vector<1x128xf32>
      %14 = vector.broadcast %13 : vector<1x128xf32> to vector<64x128xf32>
      %15 = arith.addf %12, %14 : vector<64x128xf32>
      %16 = tpu.iota {dimensions = array<i32: 0>} : vector<64x128xi32>
      %c64_i32 = arith.constant 64 : i32
      %17 = vector.broadcast %c64_i32 : i32 to vector<64x128xi32>
      %18 = arith.cmpi slt, %16, %17 : vector<64x128xi32>
      %cst_13 = arith.constant 0.000000e+00 : f32
      %19 = vector.broadcast %cst_13 : f32 to vector<64x128xf32>
      %20 = arith.select %18, %15, %19 : vector<64x128xi1>, vector<64x128xf32>
      %cst_14 = arith.constant dense<0.000000e+00> : vector<128xf32>
      %21 = vector.multi_reduction <add>, %20, %cst_14 [0] : vector<64x128xf32> to vector<128xf32>
      %22 = vector.shape_cast %21 : vector<128xf32> to vector<1x128xf32>
      %cst_15 = arith.constant 1.562500e-02 : f32
      %23 = vector.broadcast %cst_15 : f32 to vector<1x128xf32>
      %24 = arith.mulf %22, %23 : vector<1x128xf32>
      %25 = arith.mulf %20, %20 : vector<64x128xf32>
      %cst_16 = arith.constant dense<0.000000e+00> : vector<128xf32>
      %26 = vector.multi_reduction <add>, %25, %cst_16 [0] : vector<64x128xf32> to vector<128xf32>
      %27 = vector.shape_cast %26 : vector<128xf32> to vector<1x128xf32>
      %cst_17 = arith.constant 1.562500e-02 : f32
      %28 = vector.broadcast %cst_17 : f32 to vector<1x128xf32>
      %29 = arith.mulf %27, %28 : vector<1x128xf32>
      %30 = arith.mulf %24, %24 : vector<1x128xf32>
      %31 = arith.subf %29, %30 : vector<1x128xf32>
      %cst_18 = arith.constant 9.99999974E-6 : f32
      %32 = vector.broadcast %cst_18 : f32 to vector<1x128xf32>
      %33 = arith.addf %31, %32 : vector<1x128xf32>
      %34 = math.rsqrt %33 : vector<1x128xf32>
      %35 = vector.broadcast %24 : vector<1x128xf32> to vector<64x128xf32>
      %36 = arith.subf %15, %35 : vector<64x128xf32>
      %37 = vector.broadcast %34 : vector<1x128xf32> to vector<64x128xf32>
      %38 = arith.mulf %36, %37 : vector<64x128xf32>
      %cst_19 = arith.constant 0.000000e+00 : f32
      %39 = vector.broadcast %cst_19 : f32 to vector<64x128xf32>
      %40 = arith.maximumf %38, %39 : vector<64x128xf32>
      %c0_20 = arith.constant 0 : index
      %c0_21 = arith.constant 0 : index
      %41 = vector.load %arg6[%c0_20, %c0_21] : memref<64x128xf32, #tpu.memory_space<vmem>>, vector<64x128xf32>
      tpu.vector_store %arg6[%c0_20, %c0_21], %40 {strides = array<i32>} : memref<64x128xf32, #tpu.memory_space<vmem>>, vector<64x128xf32>,
    } else {
    }
    return
  }
  func.func @transform_0(%arg0: i32, %arg1: i32, %arg2: i32) -> (i32, i32) {
    %c0_i32 = arith.constant 0 : i32
    return %arg0, %arg2 : i32, i32
  }
  func.func @transform_1(%arg0: i32, %arg1: i32, %arg2: i32) -> (i32, i32) {
    %c0_i32 = arith.constant 0 : i32
    return %arg2, %arg1 : i32, i32
  }
  func.func @transform_2(%arg0: i32, %arg1: i32, %arg2: i32) -> (i32, i32) {
    %c0_i32 = arith.constant 0 : i32
    %c0_i32_0 = arith.constant 0 : i32
    return %c0_i32, %arg1 : i32, i32
  }
  func.func @transform_3(%arg0: i32, %arg1: i32, %arg2: i32) -> (i32, i32) {
    %c0_i32 = arith.constant 0 : i32
    return %arg0, %arg1 : i32, i32
  }
}

module attributes {stable_mosaic.version = 11 : i64} {
  func.func @_conv_in_kernel(%arg0: i32, %arg1: i32, %arg2: i32, %arg3: memref<16x256xbf16, #tpu.memory_space<vmem>>, %arg4: memref<256x256xbf16, #tpu.memory_space<vmem>>, %arg5: memref<1x256xf32, #tpu.memory_space<vmem>>, %arg6: memref<16x256xf32, #tpu.memory_space<vmem>>, %arg7: memref<16x256xf32, #tpu.memory_space<vmem>>) attributes {dimension_semantics = [#tpu.dimension_semantics<parallel>, #tpu.dimension_semantics<parallel>, #tpu.dimension_semantics<arbitrary>], iteration_bounds = array<i64: 2, 1, 5>, scalar_prefetch = 0 : i64, scratch_operands = 1 : i64, tpu.core_type = #tpu.core_type<tc>, window_params = [{transform_indices = @transform_0, window_bounds = array<i64: 16, 256>}, {transform_indices = @transform_1, window_bounds = array<i64: 256, 256>}, {transform_indices = @transform_2, window_bounds = array<i64: 1, 256>}, {transform_indices = @transform_3, window_bounds = array<i64: 16, 256>}]} {
    %c0_i32 = arith.constant 0 : i32
    %0 = arith.cmpi eq, %arg2, %c0_i32 : i32
    %1 = arith.extui %0 : i1 to i32
    %c0_i32_0 = arith.constant 0 : i32
    %2 = arith.cmpi ne, %1, %c0_i32_0 : i32
    scf.if %2 {
      %cst_9 = arith.constant 0.000000e+00 : f32
      %12 = vector.broadcast %cst_9 : f32 to vector<16x256xf32>
      %c0_10 = arith.constant 0 : index
      %c0_11 = arith.constant 0 : index
      %13 = vector.load %arg7[%c0_10, %c0_11] : memref<16x256xf32, #tpu.memory_space<vmem>>, vector<16x256xf32>
      tpu.vector_store %arg7[%c0_10, %c0_11], %12 {strides = array<i32>} : memref<16x256xf32, #tpu.memory_space<vmem>>, vector<16x256xf32>,
    } else {
    }
    %c0 = arith.constant 0 : index
    %c0_1 = arith.constant 0 : index
    %3 = vector.load %arg7[%c0, %c0_1] : memref<16x256xf32, #tpu.memory_space<vmem>>, vector<16x256xf32>
    %c0_2 = arith.constant 0 : index
    %c0_3 = arith.constant 0 : index
    %4 = vector.load %arg3[%c0_2, %c0_3] : memref<16x256xbf16, #tpu.memory_space<vmem>>, vector<16x256xbf16>
    %c0_4 = arith.constant 0 : index
    %c0_5 = arith.constant 0 : index
    %5 = vector.load %arg4[%c0_4, %c0_5] : memref<256x256xbf16, #tpu.memory_space<vmem>>, vector<256x256xbf16>
    %cst = arith.constant dense<0.000000e+00> : vector<16x256xf32>
    %6 = tpu.matmul %4, %5, %cst {dimension_numbers = #tpu.dot_dimension_numbers<[1], [0], [0], [1], [0, 0, 1, 1], [], []>} : vector<16x256xbf16>, vector<256x256xbf16>, vector<16x256xf32> -> vector<16x256xf32>
    %7 = arith.addf %3, %6 : vector<16x256xf32>
    %c0_6 = arith.constant 0 : index
    %c0_7 = arith.constant 0 : index
    %8 = vector.load %arg7[%c0_6, %c0_7] : memref<16x256xf32, #tpu.memory_space<vmem>>, vector<16x256xf32>
    tpu.vector_store %arg7[%c0_6, %c0_7], %7 {strides = array<i32>} : memref<16x256xf32, #tpu.memory_space<vmem>>, vector<16x256xf32>,
    %c4_i32 = arith.constant 4 : i32
    %9 = arith.cmpi eq, %arg2, %c4_i32 : i32
    %10 = arith.extui %9 : i1 to i32
    %c0_i32_8 = arith.constant 0 : i32
    %11 = arith.cmpi ne, %10, %c0_i32_8 : i32
    scf.if %11 {
      %c0_9 = arith.constant 0 : index
      %c0_10 = arith.constant 0 : index
      %12 = vector.load %arg7[%c0_9, %c0_10] : memref<16x256xf32, #tpu.memory_space<vmem>>, vector<16x256xf32>
      %c0_11 = arith.constant 0 : index
      %c0_12 = arith.constant 0 : index
      %13 = vector.load %arg5[%c0_11, %c0_12] : memref<1x256xf32, #tpu.memory_space<vmem>>, vector<1x256xf32>
      %14 = vector.broadcast %13 : vector<1x256xf32> to vector<16x256xf32>
      %15 = arith.addf %12, %14 : vector<16x256xf32>
      %16 = tpu.iota {dimensions = array<i32: 0>} : vector<16x256xi32>
      %c16_i32 = arith.constant 16 : i32
      %17 = vector.broadcast %c16_i32 : i32 to vector<16x256xi32>
      %18 = arith.cmpi slt, %16, %17 : vector<16x256xi32>
      %cst_13 = arith.constant 0.000000e+00 : f32
      %19 = vector.broadcast %cst_13 : f32 to vector<16x256xf32>
      %20 = arith.select %18, %15, %19 : vector<16x256xi1>, vector<16x256xf32>
      %cst_14 = arith.constant dense<0.000000e+00> : vector<256xf32>
      %21 = vector.multi_reduction <add>, %20, %cst_14 [0] : vector<16x256xf32> to vector<256xf32>
      %22 = vector.shape_cast %21 : vector<256xf32> to vector<1x256xf32>
      %cst_15 = arith.constant 6.250000e-02 : f32
      %23 = vector.broadcast %cst_15 : f32 to vector<1x256xf32>
      %24 = arith.mulf %22, %23 : vector<1x256xf32>
      %25 = arith.mulf %20, %20 : vector<16x256xf32>
      %cst_16 = arith.constant dense<0.000000e+00> : vector<256xf32>
      %26 = vector.multi_reduction <add>, %25, %cst_16 [0] : vector<16x256xf32> to vector<256xf32>
      %27 = vector.shape_cast %26 : vector<256xf32> to vector<1x256xf32>
      %cst_17 = arith.constant 6.250000e-02 : f32
      %28 = vector.broadcast %cst_17 : f32 to vector<1x256xf32>
      %29 = arith.mulf %27, %28 : vector<1x256xf32>
      %30 = arith.mulf %24, %24 : vector<1x256xf32>
      %31 = arith.subf %29, %30 : vector<1x256xf32>
      %cst_18 = arith.constant 9.99999974E-6 : f32
      %32 = vector.broadcast %cst_18 : f32 to vector<1x256xf32>
      %33 = arith.addf %31, %32 : vector<1x256xf32>
      %34 = math.rsqrt %33 : vector<1x256xf32>
      %35 = vector.broadcast %24 : vector<1x256xf32> to vector<16x256xf32>
      %36 = arith.subf %15, %35 : vector<16x256xf32>
      %37 = vector.broadcast %34 : vector<1x256xf32> to vector<16x256xf32>
      %38 = arith.mulf %36, %37 : vector<16x256xf32>
      %cst_19 = arith.constant 0.000000e+00 : f32
      %39 = vector.broadcast %cst_19 : f32 to vector<16x256xf32>
      %40 = arith.maximumf %38, %39 : vector<16x256xf32>
      %c0_20 = arith.constant 0 : index
      %c0_21 = arith.constant 0 : index
      %41 = vector.load %arg6[%c0_20, %c0_21] : memref<16x256xf32, #tpu.memory_space<vmem>>, vector<16x256xf32>
      tpu.vector_store %arg6[%c0_20, %c0_21], %40 {strides = array<i32>} : memref<16x256xf32, #tpu.memory_space<vmem>>, vector<16x256xf32>,
    } else {
    }
    return
  }
  func.func @transform_0(%arg0: i32, %arg1: i32, %arg2: i32) -> (i32, i32) {
    %c0_i32 = arith.constant 0 : i32
    return %arg0, %arg2 : i32, i32
  }
  func.func @transform_1(%arg0: i32, %arg1: i32, %arg2: i32) -> (i32, i32) {
    %c0_i32 = arith.constant 0 : i32
    return %arg2, %arg1 : i32, i32
  }
  func.func @transform_2(%arg0: i32, %arg1: i32, %arg2: i32) -> (i32, i32) {
    %c0_i32 = arith.constant 0 : i32
    %c0_i32_0 = arith.constant 0 : i32
    return %c0_i32, %arg1 : i32, i32
  }
  func.func @transform_3(%arg0: i32, %arg1: i32, %arg2: i32) -> (i32, i32) {
    %c0_i32 = arith.constant 0 : i32
    return %arg0, %arg1 : i32, i32
  }
}

module attributes {stable_mosaic.version = 11 : i64} {
  func.func @_conv_in_kernel(%arg0: i32, %arg1: i32, %arg2: i32, %arg3: memref<16x256xbf16, #tpu.memory_space<vmem>>, %arg4: memref<256x256xbf16, #tpu.memory_space<vmem>>, %arg5: memref<1x256xf32, #tpu.memory_space<vmem>>, %arg6: memref<16x256xf32, #tpu.memory_space<vmem>>, %arg7: memref<16x256xf32, #tpu.memory_space<vmem>>) attributes {dimension_semantics = [#tpu.dimension_semantics<parallel>, #tpu.dimension_semantics<parallel>, #tpu.dimension_semantics<arbitrary>], iteration_bounds = array<i64: 2, 1, 9>, scalar_prefetch = 0 : i64, scratch_operands = 1 : i64, tpu.core_type = #tpu.core_type<tc>, window_params = [{transform_indices = @transform_0, window_bounds = array<i64: 16, 256>}, {transform_indices = @transform_1, window_bounds = array<i64: 256, 256>}, {transform_indices = @transform_2, window_bounds = array<i64: 1, 256>}, {transform_indices = @transform_3, window_bounds = array<i64: 16, 256>}]} {
    %c0_i32 = arith.constant 0 : i32
    %0 = arith.cmpi eq, %arg2, %c0_i32 : i32
    %1 = arith.extui %0 : i1 to i32
    %c0_i32_0 = arith.constant 0 : i32
    %2 = arith.cmpi ne, %1, %c0_i32_0 : i32
    scf.if %2 {
      %cst_9 = arith.constant 0.000000e+00 : f32
      %12 = vector.broadcast %cst_9 : f32 to vector<16x256xf32>
      %c0_10 = arith.constant 0 : index
      %c0_11 = arith.constant 0 : index
      %13 = vector.load %arg7[%c0_10, %c0_11] : memref<16x256xf32, #tpu.memory_space<vmem>>, vector<16x256xf32>
      tpu.vector_store %arg7[%c0_10, %c0_11], %12 {strides = array<i32>} : memref<16x256xf32, #tpu.memory_space<vmem>>, vector<16x256xf32>,
    } else {
    }
    %c0 = arith.constant 0 : index
    %c0_1 = arith.constant 0 : index
    %3 = vector.load %arg7[%c0, %c0_1] : memref<16x256xf32, #tpu.memory_space<vmem>>, vector<16x256xf32>
    %c0_2 = arith.constant 0 : index
    %c0_3 = arith.constant 0 : index
    %4 = vector.load %arg3[%c0_2, %c0_3] : memref<16x256xbf16, #tpu.memory_space<vmem>>, vector<16x256xbf16>
    %c0_4 = arith.constant 0 : index
    %c0_5 = arith.constant 0 : index
    %5 = vector.load %arg4[%c0_4, %c0_5] : memref<256x256xbf16, #tpu.memory_space<vmem>>, vector<256x256xbf16>
    %cst = arith.constant dense<0.000000e+00> : vector<16x256xf32>
    %6 = tpu.matmul %4, %5, %cst {dimension_numbers = #tpu.dot_dimension_numbers<[1], [0], [0], [1], [0, 0, 1, 1], [], []>} : vector<16x256xbf16>, vector<256x256xbf16>, vector<16x256xf32> -> vector<16x256xf32>
    %7 = arith.addf %3, %6 : vector<16x256xf32>
    %c0_6 = arith.constant 0 : index
    %c0_7 = arith.constant 0 : index
    %8 = vector.load %arg7[%c0_6, %c0_7] : memref<16x256xf32, #tpu.memory_space<vmem>>, vector<16x256xf32>
    tpu.vector_store %arg7[%c0_6, %c0_7], %7 {strides = array<i32>} : memref<16x256xf32, #tpu.memory_space<vmem>>, vector<16x256xf32>,
    %c8_i32 = arith.constant 8 : i32
    %9 = arith.cmpi eq, %arg2, %c8_i32 : i32
    %10 = arith.extui %9 : i1 to i32
    %c0_i32_8 = arith.constant 0 : i32
    %11 = arith.cmpi ne, %10, %c0_i32_8 : i32
    scf.if %11 {
      %c0_9 = arith.constant 0 : index
      %c0_10 = arith.constant 0 : index
      %12 = vector.load %arg7[%c0_9, %c0_10] : memref<16x256xf32, #tpu.memory_space<vmem>>, vector<16x256xf32>
      %c0_11 = arith.constant 0 : index
      %c0_12 = arith.constant 0 : index
      %13 = vector.load %arg5[%c0_11, %c0_12] : memref<1x256xf32, #tpu.memory_space<vmem>>, vector<1x256xf32>
      %14 = vector.broadcast %13 : vector<1x256xf32> to vector<16x256xf32>
      %15 = arith.addf %12, %14 : vector<16x256xf32>
      %16 = tpu.iota {dimensions = array<i32: 0>} : vector<16x256xi32>
      %c16_i32 = arith.constant 16 : i32
      %17 = vector.broadcast %c16_i32 : i32 to vector<16x256xi32>
      %18 = arith.cmpi slt, %16, %17 : vector<16x256xi32>
      %cst_13 = arith.constant 0.000000e+00 : f32
      %19 = vector.broadcast %cst_13 : f32 to vector<16x256xf32>
      %20 = arith.select %18, %15, %19 : vector<16x256xi1>, vector<16x256xf32>
      %cst_14 = arith.constant dense<0.000000e+00> : vector<256xf32>
      %21 = vector.multi_reduction <add>, %20, %cst_14 [0] : vector<16x256xf32> to vector<256xf32>
      %22 = vector.shape_cast %21 : vector<256xf32> to vector<1x256xf32>
      %cst_15 = arith.constant 6.250000e-02 : f32
      %23 = vector.broadcast %cst_15 : f32 to vector<1x256xf32>
      %24 = arith.mulf %22, %23 : vector<1x256xf32>
      %25 = arith.mulf %20, %20 : vector<16x256xf32>
      %cst_16 = arith.constant dense<0.000000e+00> : vector<256xf32>
      %26 = vector.multi_reduction <add>, %25, %cst_16 [0] : vector<16x256xf32> to vector<256xf32>
      %27 = vector.shape_cast %26 : vector<256xf32> to vector<1x256xf32>
      %cst_17 = arith.constant 6.250000e-02 : f32
      %28 = vector.broadcast %cst_17 : f32 to vector<1x256xf32>
      %29 = arith.mulf %27, %28 : vector<1x256xf32>
      %30 = arith.mulf %24, %24 : vector<1x256xf32>
      %31 = arith.subf %29, %30 : vector<1x256xf32>
      %cst_18 = arith.constant 9.99999974E-6 : f32
      %32 = vector.broadcast %cst_18 : f32 to vector<1x256xf32>
      %33 = arith.addf %31, %32 : vector<1x256xf32>
      %34 = math.rsqrt %33 : vector<1x256xf32>
      %35 = vector.broadcast %24 : vector<1x256xf32> to vector<16x256xf32>
      %36 = arith.subf %15, %35 : vector<16x256xf32>
      %37 = vector.broadcast %34 : vector<1x256xf32> to vector<16x256xf32>
      %38 = arith.mulf %36, %37 : vector<16x256xf32>
      %cst_19 = arith.constant 0.000000e+00 : f32
      %39 = vector.broadcast %cst_19 : f32 to vector<16x256xf32>
      %40 = arith.maximumf %38, %39 : vector<16x256xf32>
      %c0_20 = arith.constant 0 : index
      %c0_21 = arith.constant 0 : index
      %41 = vector.load %arg6[%c0_20, %c0_21] : memref<16x256xf32, #tpu.memory_space<vmem>>, vector<16x256xf32>
      tpu.vector_store %arg6[%c0_20, %c0_21], %40 {strides = array<i32>} : memref<16x256xf32, #tpu.memory_space<vmem>>, vector<16x256xf32>,
    } else {
    }
    return
  }
  func.func @transform_0(%arg0: i32, %arg1: i32, %arg2: i32) -> (i32, i32) {
    %c0_i32 = arith.constant 0 : i32
    return %arg0, %arg2 : i32, i32
  }
  func.func @transform_1(%arg0: i32, %arg1: i32, %arg2: i32) -> (i32, i32) {
    %c0_i32 = arith.constant 0 : i32
    return %arg2, %arg1 : i32, i32
  }
  func.func @transform_2(%arg0: i32, %arg1: i32, %arg2: i32) -> (i32, i32) {
    %c0_i32 = arith.constant 0 : i32
    %c0_i32_0 = arith.constant 0 : i32
    return %c0_i32, %arg1 : i32, i32
  }
  func.func @transform_3(%arg0: i32, %arg1: i32, %arg2: i32) -> (i32, i32) {
    %c0_i32 = arith.constant 0 : i32
    return %arg0, %arg1 : i32, i32
  }
}

module attributes {stable_mosaic.version = 11 : i64} {
  func.func @_conv_in_res_kernel(%arg0: i32, %arg1: i32, %arg2: i32, %arg3: memref<16x256xbf16, #tpu.memory_space<vmem>>, %arg4: memref<256x256xbf16, #tpu.memory_space<vmem>>, %arg5: memref<1x256xf32, #tpu.memory_space<vmem>>, %arg6: memref<16x256xf32, #tpu.memory_space<vmem>>, %arg7: memref<16x256xf32, #tpu.memory_space<vmem>>, %arg8: memref<16x256xf32, #tpu.memory_space<vmem>>) attributes {dimension_semantics = [#tpu.dimension_semantics<parallel>, #tpu.dimension_semantics<parallel>, #tpu.dimension_semantics<arbitrary>], iteration_bounds = array<i64: 2, 1, 9>, scalar_prefetch = 0 : i64, scratch_operands = 1 : i64, tpu.core_type = #tpu.core_type<tc>, window_params = [{transform_indices = @transform_0, window_bounds = array<i64: 16, 256>}, {transform_indices = @transform_1, window_bounds = array<i64: 256, 256>}, {transform_indices = @transform_2, window_bounds = array<i64: 1, 256>}, {transform_indices = @transform_3, window_bounds = array<i64: 16, 256>}, {transform_indices = @transform_4, window_bounds = array<i64: 16, 256>}]} {
    %c0_i32 = arith.constant 0 : i32
    %0 = arith.cmpi eq, %arg2, %c0_i32 : i32
    %1 = arith.extui %0 : i1 to i32
    %c0_i32_0 = arith.constant 0 : i32
    %2 = arith.cmpi ne, %1, %c0_i32_0 : i32
    scf.if %2 {
      %cst_9 = arith.constant 0.000000e+00 : f32
      %12 = vector.broadcast %cst_9 : f32 to vector<16x256xf32>
      %c0_10 = arith.constant 0 : index
      %c0_11 = arith.constant 0 : index
      %13 = vector.load %arg8[%c0_10, %c0_11] : memref<16x256xf32, #tpu.memory_space<vmem>>, vector<16x256xf32>
      tpu.vector_store %arg8[%c0_10, %c0_11], %12 {strides = array<i32>} : memref<16x256xf32, #tpu.memory_space<vmem>>, vector<16x256xf32>,
    } else {
    }
    %c0 = arith.constant 0 : index
    %c0_1 = arith.constant 0 : index
    %3 = vector.load %arg8[%c0, %c0_1] : memref<16x256xf32, #tpu.memory_space<vmem>>, vector<16x256xf32>
    %c0_2 = arith.constant 0 : index
    %c0_3 = arith.constant 0 : index
    %4 = vector.load %arg3[%c0_2, %c0_3] : memref<16x256xbf16, #tpu.memory_space<vmem>>, vector<16x256xbf16>
    %c0_4 = arith.constant 0 : index
    %c0_5 = arith.constant 0 : index
    %5 = vector.load %arg4[%c0_4, %c0_5] : memref<256x256xbf16, #tpu.memory_space<vmem>>, vector<256x256xbf16>
    %cst = arith.constant dense<0.000000e+00> : vector<16x256xf32>
    %6 = tpu.matmul %4, %5, %cst {dimension_numbers = #tpu.dot_dimension_numbers<[1], [0], [0], [1], [0, 0, 1, 1], [], []>} : vector<16x256xbf16>, vector<256x256xbf16>, vector<16x256xf32> -> vector<16x256xf32>
    %7 = arith.addf %3, %6 : vector<16x256xf32>
    %c0_6 = arith.constant 0 : index
    %c0_7 = arith.constant 0 : index
    %8 = vector.load %arg8[%c0_6, %c0_7] : memref<16x256xf32, #tpu.memory_space<vmem>>, vector<16x256xf32>
    tpu.vector_store %arg8[%c0_6, %c0_7], %7 {strides = array<i32>} : memref<16x256xf32, #tpu.memory_space<vmem>>, vector<16x256xf32>,
    %c8_i32 = arith.constant 8 : i32
    %9 = arith.cmpi eq, %arg2, %c8_i32 : i32
    %10 = arith.extui %9 : i1 to i32
    %c0_i32_8 = arith.constant 0 : i32
    %11 = arith.cmpi ne, %10, %c0_i32_8 : i32
    scf.if %11 {
      %c0_9 = arith.constant 0 : index
      %c0_10 = arith.constant 0 : index
      %12 = vector.load %arg8[%c0_9, %c0_10] : memref<16x256xf32, #tpu.memory_space<vmem>>, vector<16x256xf32>
      %c0_11 = arith.constant 0 : index
      %c0_12 = arith.constant 0 : index
      %13 = vector.load %arg5[%c0_11, %c0_12] : memref<1x256xf32, #tpu.memory_space<vmem>>, vector<1x256xf32>
      %14 = vector.broadcast %13 : vector<1x256xf32> to vector<16x256xf32>
      %15 = arith.addf %12, %14 : vector<16x256xf32>
      %16 = tpu.iota {dimensions = array<i32: 0>} : vector<16x256xi32>
      %c16_i32 = arith.constant 16 : i32
      %17 = vector.broadcast %c16_i32 : i32 to vector<16x256xi32>
      %18 = arith.cmpi slt, %16, %17 : vector<16x256xi32>
      %cst_13 = arith.constant 0.000000e+00 : f32
      %19 = vector.broadcast %cst_13 : f32 to vector<16x256xf32>
      %20 = arith.select %18, %15, %19 : vector<16x256xi1>, vector<16x256xf32>
      %cst_14 = arith.constant dense<0.000000e+00> : vector<256xf32>
      %21 = vector.multi_reduction <add>, %20, %cst_14 [0] : vector<16x256xf32> to vector<256xf32>
      %22 = vector.shape_cast %21 : vector<256xf32> to vector<1x256xf32>
      %cst_15 = arith.constant 6.250000e-02 : f32
      %23 = vector.broadcast %cst_15 : f32 to vector<1x256xf32>
      %24 = arith.mulf %22, %23 : vector<1x256xf32>
      %25 = arith.mulf %20, %20 : vector<16x256xf32>
      %cst_16 = arith.constant dense<0.000000e+00> : vector<256xf32>
      %26 = vector.multi_reduction <add>, %25, %cst_16 [0] : vector<16x256xf32> to vector<256xf32>
      %27 = vector.shape_cast %26 : vector<256xf32> to vector<1x256xf32>
      %cst_17 = arith.constant 6.250000e-02 : f32
      %28 = vector.broadcast %cst_17 : f32 to vector<1x256xf32>
      %29 = arith.mulf %27, %28 : vector<1x256xf32>
      %30 = arith.mulf %24, %24 : vector<1x256xf32>
      %31 = arith.subf %29, %30 : vector<1x256xf32>
      %cst_18 = arith.constant 9.99999974E-6 : f32
      %32 = vector.broadcast %cst_18 : f32 to vector<1x256xf32>
      %33 = arith.addf %31, %32 : vector<1x256xf32>
      %34 = math.rsqrt %33 : vector<1x256xf32>
      %c0_19 = arith.constant 0 : index
      %c0_20 = arith.constant 0 : index
      %35 = vector.load %arg6[%c0_19, %c0_20] : memref<16x256xf32, #tpu.memory_space<vmem>>, vector<16x256xf32>
      %36 = vector.broadcast %24 : vector<1x256xf32> to vector<16x256xf32>
      %37 = arith.subf %15, %36 : vector<16x256xf32>
      %38 = vector.broadcast %34 : vector<1x256xf32> to vector<16x256xf32>
      %39 = arith.mulf %37, %38 : vector<16x256xf32>
      %40 = arith.addf %35, %39 : vector<16x256xf32>
      %c0_21 = arith.constant 0 : index
      %c0_22 = arith.constant 0 : index
      %41 = vector.load %arg7[%c0_21, %c0_22] : memref<16x256xf32, #tpu.memory_space<vmem>>, vector<16x256xf32>
      tpu.vector_store %arg7[%c0_21, %c0_22], %40 {strides = array<i32>} : memref<16x256xf32, #tpu.memory_space<vmem>>, vector<16x256xf32>,
    } else {
    }
    return
  }
  func.func @transform_0(%arg0: i32, %arg1: i32, %arg2: i32) -> (i32, i32) {
    %c0_i32 = arith.constant 0 : i32
    return %arg0, %arg2 : i32, i32
  }
  func.func @transform_1(%arg0: i32, %arg1: i32, %arg2: i32) -> (i32, i32) {
    %c0_i32 = arith.constant 0 : i32
    return %arg2, %arg1 : i32, i32
  }
  func.func @transform_2(%arg0: i32, %arg1: i32, %arg2: i32) -> (i32, i32) {
    %c0_i32 = arith.constant 0 : i32
    %c0_i32_0 = arith.constant 0 : i32
    return %c0_i32, %arg1 : i32, i32
  }
  func.func @transform_3(%arg0: i32, %arg1: i32, %arg2: i32) -> (i32, i32) {
    %c0_i32 = arith.constant 0 : i32
    return %arg0, %arg1 : i32, i32
  }
  func.func @transform_4(%arg0: i32, %arg1: i32, %arg2: i32) -> (i32, i32) {
    %c0_i32 = arith.constant 0 : i32
    return %arg0, %arg1 : i32, i32
  }
}

module attributes {stable_mosaic.version = 11 : i64} {
  func.func @_matmul_bias_kernel(%arg0: i32, %arg1: i32, %arg2: i32, %arg3: memref<32x256xbf16, #tpu.memory_space<vmem>>, %arg4: memref<256x256xbf16, #tpu.memory_space<vmem>>, %arg5: memref<1x256xf32, #tpu.memory_space<vmem>>, %arg6: memref<32x256xf32, #tpu.memory_space<vmem>>, %arg7: memref<32x256xf32, #tpu.memory_space<vmem>>) attributes {dimension_semantics = [#tpu.dimension_semantics<parallel>, #tpu.dimension_semantics<parallel>, #tpu.dimension_semantics<arbitrary>], iteration_bounds = array<i64: 1, 2, 4>, scalar_prefetch = 0 : i64, scratch_operands = 1 : i64, tpu.core_type = #tpu.core_type<tc>, window_params = [{transform_indices = @transform_0, window_bounds = array<i64: 32, 256>}, {transform_indices = @transform_1, window_bounds = array<i64: 256, 256>}, {transform_indices = @transform_2, window_bounds = array<i64: 1, 256>}, {transform_indices = @transform_3, window_bounds = array<i64: 32, 256>}]} {
    %c0_i32 = arith.constant 0 : i32
    %0 = arith.cmpi eq, %arg2, %c0_i32 : i32
    %1 = arith.extui %0 : i1 to i32
    %c0_i32_0 = arith.constant 0 : i32
    %2 = arith.cmpi ne, %1, %c0_i32_0 : i32
    scf.if %2 {
      %cst_9 = arith.constant 0.000000e+00 : f32
      %12 = vector.broadcast %cst_9 : f32 to vector<32x256xf32>
      %c0_10 = arith.constant 0 : index
      %c0_11 = arith.constant 0 : index
      %13 = vector.load %arg7[%c0_10, %c0_11] : memref<32x256xf32, #tpu.memory_space<vmem>>, vector<32x256xf32>
      tpu.vector_store %arg7[%c0_10, %c0_11], %12 {strides = array<i32>} : memref<32x256xf32, #tpu.memory_space<vmem>>, vector<32x256xf32>,
    } else {
    }
    %c0 = arith.constant 0 : index
    %c0_1 = arith.constant 0 : index
    %3 = vector.load %arg7[%c0, %c0_1] : memref<32x256xf32, #tpu.memory_space<vmem>>, vector<32x256xf32>
    %c0_2 = arith.constant 0 : index
    %c0_3 = arith.constant 0 : index
    %4 = vector.load %arg3[%c0_2, %c0_3] : memref<32x256xbf16, #tpu.memory_space<vmem>>, vector<32x256xbf16>
    %c0_4 = arith.constant 0 : index
    %c0_5 = arith.constant 0 : index
    %5 = vector.load %arg4[%c0_4, %c0_5] : memref<256x256xbf16, #tpu.memory_space<vmem>>, vector<256x256xbf16>
    %cst = arith.constant dense<0.000000e+00> : vector<32x256xf32>
    %6 = tpu.matmul %4, %5, %cst {dimension_numbers = #tpu.dot_dimension_numbers<[1], [0], [0], [1], [0, 0, 1, 1], [], []>} : vector<32x256xbf16>, vector<256x256xbf16>, vector<32x256xf32> -> vector<32x256xf32>
    %7 = arith.addf %3, %6 : vector<32x256xf32>
    %c0_6 = arith.constant 0 : index
    %c0_7 = arith.constant 0 : index
    %8 = vector.load %arg7[%c0_6, %c0_7] : memref<32x256xf32, #tpu.memory_space<vmem>>, vector<32x256xf32>
    tpu.vector_store %arg7[%c0_6, %c0_7], %7 {strides = array<i32>} : memref<32x256xf32, #tpu.memory_space<vmem>>, vector<32x256xf32>,
    %c3_i32 = arith.constant 3 : i32
    %9 = arith.cmpi eq, %arg2, %c3_i32 : i32
    %10 = arith.extui %9 : i1 to i32
    %c0_i32_8 = arith.constant 0 : i32
    %11 = arith.cmpi ne, %10, %c0_i32_8 : i32
    scf.if %11 {
      %c0_9 = arith.constant 0 : index
      %c0_10 = arith.constant 0 : index
      %12 = vector.load %arg7[%c0_9, %c0_10] : memref<32x256xf32, #tpu.memory_space<vmem>>, vector<32x256xf32>
      %c0_11 = arith.constant 0 : index
      %c0_12 = arith.constant 0 : index
      %13 = vector.load %arg5[%c0_11, %c0_12] : memref<1x256xf32, #tpu.memory_space<vmem>>, vector<1x256xf32>
      %14 = vector.broadcast %13 : vector<1x256xf32> to vector<32x256xf32>
      %15 = arith.addf %12, %14 : vector<32x256xf32>
      %c0_13 = arith.constant 0 : index
      %c0_14 = arith.constant 0 : index
      %16 = vector.load %arg6[%c0_13, %c0_14] : memref<32x256xf32, #tpu.memory_space<vmem>>, vector<32x256xf32>
      tpu.vector_store %arg6[%c0_13, %c0_14], %15 {strides = array<i32>} : memref<32x256xf32, #tpu.memory_space<vmem>>, vector<32x256xf32>,
    } else {
    }
    return
  }
  func.func @transform_0(%arg0: i32, %arg1: i32, %arg2: i32) -> (i32, i32) {
    %c0_i32 = arith.constant 0 : i32
    return %arg0, %arg2 : i32, i32
  }
  func.func @transform_1(%arg0: i32, %arg1: i32, %arg2: i32) -> (i32, i32) {
    %c0_i32 = arith.constant 0 : i32
    return %arg2, %arg1 : i32, i32
  }
  func.func @transform_2(%arg0: i32, %arg1: i32, %arg2: i32) -> (i32, i32) {
    %c0_i32 = arith.constant 0 : i32
    %c0_i32_0 = arith.constant 0 : i32
    return %c0_i32, %arg1 : i32, i32
  }
  func.func @transform_3(%arg0: i32, %arg1: i32, %arg2: i32) -> (i32, i32) {
    %c0_i32 = arith.constant 0 : i32
    return %arg0, %arg1 : i32, i32
  }
}

module attributes {stable_mosaic.version = 11 : i64} {
  func.func @_instance_norm_kernel(%arg0: i32, %arg1: memref<1x64x128xf32, #tpu.memory_space<vmem>>, %arg2: memref<1x64x128xf32, #tpu.memory_space<vmem>>) attributes {dimension_semantics = [#tpu.dimension_semantics<parallel>], iteration_bounds = array<i64: 2>, scalar_prefetch = 0 : i64, scratch_operands = 0 : i64, tpu.core_type = #tpu.core_type<tc>, window_params = [{transform_indices = @transform_0, window_bounds = array<i64: 1, 64, 128>}, {transform_indices = @transform_1, window_bounds = array<i64: 1, 64, 128>}]} {
    %c0 = arith.constant 0 : index
    %c0_0 = arith.constant 0 : index
    %c0_1 = arith.constant 0 : index
    %0 = vector.load %arg1[%c0, %c0_0, %c0_1] : memref<1x64x128xf32, #tpu.memory_space<vmem>>, vector<1x64x128xf32>
    %cst = arith.constant dense<0.000000e+00> : vector<1x128xf32>
    %1 = vector.multi_reduction <add>, %0, %cst [1] : vector<1x64x128xf32> to vector<1x128xf32>
    %2 = vector.shape_cast %1 : vector<1x128xf32> to vector<1x1x128xf32>
    %cst_2 = arith.constant 1.562500e-02 : f32
    %3 = vector.broadcast %cst_2 : f32 to vector<1x1x128xf32>
    %4 = arith.mulf %2, %3 : vector<1x1x128xf32>
    %5 = arith.mulf %0, %0 : vector<1x64x128xf32>
    %cst_3 = arith.constant dense<0.000000e+00> : vector<1x128xf32>
    %6 = vector.multi_reduction <add>, %5, %cst_3 [1] : vector<1x64x128xf32> to vector<1x128xf32>
    %7 = vector.shape_cast %6 : vector<1x128xf32> to vector<1x1x128xf32>
    %cst_4 = arith.constant 1.562500e-02 : f32
    %8 = vector.broadcast %cst_4 : f32 to vector<1x1x128xf32>
    %9 = arith.mulf %7, %8 : vector<1x1x128xf32>
    %10 = arith.mulf %4, %4 : vector<1x1x128xf32>
    %11 = arith.subf %9, %10 : vector<1x1x128xf32>
    %12 = vector.broadcast %4 : vector<1x1x128xf32> to vector<1x64x128xf32>
    %13 = arith.subf %0, %12 : vector<1x64x128xf32>
    %cst_5 = arith.constant 9.99999974E-6 : f32
    %14 = vector.broadcast %cst_5 : f32 to vector<1x1x128xf32>
    %15 = arith.addf %11, %14 : vector<1x1x128xf32>
    %16 = math.rsqrt %15 : vector<1x1x128xf32>
    %17 = vector.broadcast %16 : vector<1x1x128xf32> to vector<1x64x128xf32>
    %18 = arith.mulf %13, %17 : vector<1x64x128xf32>
    %cst_6 = arith.constant 0.000000e+00 : f32
    %19 = vector.broadcast %cst_6 : f32 to vector<1x64x128xf32>
    %20 = arith.maximumf %18, %19 : vector<1x64x128xf32>
    %c0_7 = arith.constant 0 : index
    %c0_8 = arith.constant 0 : index
    %c0_9 = arith.constant 0 : index
    %21 = vector.load %arg2[%c0_7, %c0_8, %c0_9] : memref<1x64x128xf32, #tpu.memory_space<vmem>>, vector<1x64x128xf32>
    tpu.vector_store %arg2[%c0_7, %c0_8, %c0_9], %20 {strides = array<i32>} : memref<1x64x128xf32, #tpu.memory_space<vmem>>, vector<1x64x128xf32>,
    return
  }
  func.func @transform_0(%arg0: i32) -> (i32, i32, i32) {
    %c0_i32 = arith.constant 0 : i32
    %c0_i32_0 = arith.constant 0 : i32
    %c0_i32_1 = arith.constant 0 : i32
    return %arg0, %c0_i32, %c0_i32_0 : i32, i32, i32
  }
  func.func @transform_1(%arg0: i32) -> (i32, i32, i32) {
    %c0_i32 = arith.constant 0 : i32
    %c0_i32_0 = arith.constant 0 : i32
    %c0_i32_1 = arith.constant 0 : i32
    return %arg0, %c0_i32, %c0_i32_0 : i32, i32, i32
  }
}

module attributes {stable_mosaic.version = 11 : i64} {
  func.func @_matmul_bias_kernel(%arg0: i32, %arg1: i32, %arg2: i32, %arg3: memref<128x256xbf16, #tpu.memory_space<vmem>>, %arg4: memref<256x256xbf16, #tpu.memory_space<vmem>>, %arg5: memref<1x256xf32, #tpu.memory_space<vmem>>, %arg6: memref<128x256xf32, #tpu.memory_space<vmem>>, %arg7: memref<128x256xf32, #tpu.memory_space<vmem>>) attributes {dimension_semantics = [#tpu.dimension_semantics<parallel>, #tpu.dimension_semantics<parallel>, #tpu.dimension_semantics<arbitrary>], iteration_bounds = array<i64: 1, 1, 2>, scalar_prefetch = 0 : i64, scratch_operands = 1 : i64, tpu.core_type = #tpu.core_type<tc>, window_params = [{transform_indices = @transform_0, window_bounds = array<i64: 128, 256>}, {transform_indices = @transform_1, window_bounds = array<i64: 256, 256>}, {transform_indices = @transform_2, window_bounds = array<i64: 1, 256>}, {transform_indices = @transform_3, window_bounds = array<i64: 128, 256>}]} {
    %c0_i32 = arith.constant 0 : i32
    %0 = arith.cmpi eq, %arg2, %c0_i32 : i32
    %1 = arith.extui %0 : i1 to i32
    %c0_i32_0 = arith.constant 0 : i32
    %2 = arith.cmpi ne, %1, %c0_i32_0 : i32
    scf.if %2 {
      %cst_9 = arith.constant 0.000000e+00 : f32
      %12 = vector.broadcast %cst_9 : f32 to vector<128x256xf32>
      %c0_10 = arith.constant 0 : index
      %c0_11 = arith.constant 0 : index
      %13 = vector.load %arg7[%c0_10, %c0_11] : memref<128x256xf32, #tpu.memory_space<vmem>>, vector<128x256xf32>
      tpu.vector_store %arg7[%c0_10, %c0_11], %12 {strides = array<i32>} : memref<128x256xf32, #tpu.memory_space<vmem>>, vector<128x256xf32>,
    } else {
    }
    %c0 = arith.constant 0 : index
    %c0_1 = arith.constant 0 : index
    %3 = vector.load %arg7[%c0, %c0_1] : memref<128x256xf32, #tpu.memory_space<vmem>>, vector<128x256xf32>
    %c0_2 = arith.constant 0 : index
    %c0_3 = arith.constant 0 : index
    %4 = vector.load %arg3[%c0_2, %c0_3] : memref<128x256xbf16, #tpu.memory_space<vmem>>, vector<128x256xbf16>
    %c0_4 = arith.constant 0 : index
    %c0_5 = arith.constant 0 : index
    %5 = vector.load %arg4[%c0_4, %c0_5] : memref<256x256xbf16, #tpu.memory_space<vmem>>, vector<256x256xbf16>
    %cst = arith.constant dense<0.000000e+00> : vector<128x256xf32>
    %6 = tpu.matmul %4, %5, %cst {dimension_numbers = #tpu.dot_dimension_numbers<[1], [0], [0], [1], [0, 0, 1, 1], [], []>} : vector<128x256xbf16>, vector<256x256xbf16>, vector<128x256xf32> -> vector<128x256xf32>
    %7 = arith.addf %3, %6 : vector<128x256xf32>
    %c0_6 = arith.constant 0 : index
    %c0_7 = arith.constant 0 : index
    %8 = vector.load %arg7[%c0_6, %c0_7] : memref<128x256xf32, #tpu.memory_space<vmem>>, vector<128x256xf32>
    tpu.vector_store %arg7[%c0_6, %c0_7], %7 {strides = array<i32>} : memref<128x256xf32, #tpu.memory_space<vmem>>, vector<128x256xf32>,
    %c1_i32 = arith.constant 1 : i32
    %9 = arith.cmpi eq, %arg2, %c1_i32 : i32
    %10 = arith.extui %9 : i1 to i32
    %c0_i32_8 = arith.constant 0 : i32
    %11 = arith.cmpi ne, %10, %c0_i32_8 : i32
    scf.if %11 {
      %c0_9 = arith.constant 0 : index
      %c0_10 = arith.constant 0 : index
      %12 = vector.load %arg7[%c0_9, %c0_10] : memref<128x256xf32, #tpu.memory_space<vmem>>, vector<128x256xf32>
      %c0_11 = arith.constant 0 : index
      %c0_12 = arith.constant 0 : index
      %13 = vector.load %arg5[%c0_11, %c0_12] : memref<1x256xf32, #tpu.memory_space<vmem>>, vector<1x256xf32>
      %14 = vector.broadcast %13 : vector<1x256xf32> to vector<128x256xf32>
      %15 = arith.addf %12, %14 : vector<128x256xf32>
      %c0_13 = arith.constant 0 : index
      %c0_14 = arith.constant 0 : index
      %16 = vector.load %arg6[%c0_13, %c0_14] : memref<128x256xf32, #tpu.memory_space<vmem>>, vector<128x256xf32>
      tpu.vector_store %arg6[%c0_13, %c0_14], %15 {strides = array<i32>} : memref<128x256xf32, #tpu.memory_space<vmem>>, vector<128x256xf32>,
    } else {
    }
    return
  }
  func.func @transform_0(%arg0: i32, %arg1: i32, %arg2: i32) -> (i32, i32) {
    %c0_i32 = arith.constant 0 : i32
    return %arg0, %arg2 : i32, i32
  }
  func.func @transform_1(%arg0: i32, %arg1: i32, %arg2: i32) -> (i32, i32) {
    %c0_i32 = arith.constant 0 : i32
    return %arg2, %arg1 : i32, i32
  }
  func.func @transform_2(%arg0: i32, %arg1: i32, %arg2: i32) -> (i32, i32) {
    %c0_i32 = arith.constant 0 : i32
    %c0_i32_0 = arith.constant 0 : i32
    return %c0_i32, %arg1 : i32, i32
  }
  func.func @transform_3(%arg0: i32, %arg1: i32, %arg2: i32) -> (i32, i32) {
    %c0_i32 = arith.constant 0 : i32
    return %arg0, %arg1 : i32, i32
  }
}

module attributes {stable_mosaic.version = 11 : i64} {
  func.func @_instance_norm_kernel(%arg0: i32, %arg1: memref<1x256x64xf32, #tpu.memory_space<vmem>>, %arg2: memref<1x256x64xf32, #tpu.memory_space<vmem>>) attributes {dimension_semantics = [#tpu.dimension_semantics<parallel>], iteration_bounds = array<i64: 2>, scalar_prefetch = 0 : i64, scratch_operands = 0 : i64, tpu.core_type = #tpu.core_type<tc>, window_params = [{transform_indices = @transform_0, window_bounds = array<i64: 1, 256, 64>}, {transform_indices = @transform_1, window_bounds = array<i64: 1, 256, 64>}]} {
    %c0 = arith.constant 0 : index
    %c0_0 = arith.constant 0 : index
    %c0_1 = arith.constant 0 : index
    %0 = vector.load %arg1[%c0, %c0_0, %c0_1] : memref<1x256x64xf32, #tpu.memory_space<vmem>>, vector<1x256x64xf32>
    %cst = arith.constant dense<0.000000e+00> : vector<1x64xf32>
    %1 = vector.multi_reduction <add>, %0, %cst [1] : vector<1x256x64xf32> to vector<1x64xf32>
    %2 = vector.shape_cast %1 : vector<1x64xf32> to vector<1x1x64xf32>
    %cst_2 = arith.constant 3.906250e-03 : f32
    %3 = vector.broadcast %cst_2 : f32 to vector<1x1x64xf32>
    %4 = arith.mulf %2, %3 : vector<1x1x64xf32>
    %5 = arith.mulf %0, %0 : vector<1x256x64xf32>
    %cst_3 = arith.constant dense<0.000000e+00> : vector<1x64xf32>
    %6 = vector.multi_reduction <add>, %5, %cst_3 [1] : vector<1x256x64xf32> to vector<1x64xf32>
    %7 = vector.shape_cast %6 : vector<1x64xf32> to vector<1x1x64xf32>
    %cst_4 = arith.constant 3.906250e-03 : f32
    %8 = vector.broadcast %cst_4 : f32 to vector<1x1x64xf32>
    %9 = arith.mulf %7, %8 : vector<1x1x64xf32>
    %10 = arith.mulf %4, %4 : vector<1x1x64xf32>
    %11 = arith.subf %9, %10 : vector<1x1x64xf32>
    %12 = vector.broadcast %4 : vector<1x1x64xf32> to vector<1x256x64xf32>
    %13 = arith.subf %0, %12 : vector<1x256x64xf32>
    %cst_5 = arith.constant 9.99999974E-6 : f32
    %14 = vector.broadcast %cst_5 : f32 to vector<1x1x64xf32>
    %15 = arith.addf %11, %14 : vector<1x1x64xf32>
    %16 = math.rsqrt %15 : vector<1x1x64xf32>
    %17 = vector.broadcast %16 : vector<1x1x64xf32> to vector<1x256x64xf32>
    %18 = arith.mulf %13, %17 : vector<1x256x64xf32>
    %cst_6 = arith.constant 0.000000e+00 : f32
    %19 = vector.broadcast %cst_6 : f32 to vector<1x256x64xf32>
    %20 = arith.maximumf %18, %19 : vector<1x256x64xf32>
    %c0_7 = arith.constant 0 : index
    %c0_8 = arith.constant 0 : index
    %c0_9 = arith.constant 0 : index
    %21 = vector.load %arg2[%c0_7, %c0_8, %c0_9] : memref<1x256x64xf32, #tpu.memory_space<vmem>>, vector<1x256x64xf32>
    tpu.vector_store %arg2[%c0_7, %c0_8, %c0_9], %20 {strides = array<i32>} : memref<1x256x64xf32, #tpu.memory_space<vmem>>, vector<1x256x64xf32>,
    return
  }
  func.func @transform_0(%arg0: i32) -> (i32, i32, i32) {
    %c0_i32 = arith.constant 0 : i32
    %c0_i32_0 = arith.constant 0 : i32
    %c0_i32_1 = arith.constant 0 : i32
    return %arg0, %c0_i32, %c0_i32_0 : i32, i32, i32
  }
  func.func @transform_1(%arg0: i32) -> (i32, i32, i32) {
    %c0_i32 = arith.constant 0 : i32
    %c0_i32_0 = arith.constant 0 : i32
    %c0_i32_1 = arith.constant 0 : i32
    return %arg0, %c0_i32, %c0_i32_0 : i32, i32, i32
  }
}

module attributes {stable_mosaic.version = 11 : i64} {
  func.func @_matmul_bias_kernel(%arg0: i32, %arg1: i32, %arg2: i32, %arg3: memref<512x256xbf16, #tpu.memory_space<vmem>>, %arg4: memref<256x128xbf16, #tpu.memory_space<vmem>>, %arg5: memref<1x128xf32, #tpu.memory_space<vmem>>, %arg6: memref<512x128xf32, #tpu.memory_space<vmem>>, %arg7: memref<512x128xf32, #tpu.memory_space<vmem>>) attributes {dimension_semantics = [#tpu.dimension_semantics<parallel>, #tpu.dimension_semantics<parallel>, #tpu.dimension_semantics<arbitrary>], iteration_bounds = array<i64: 1, 1, 13>, scalar_prefetch = 0 : i64, scratch_operands = 1 : i64, tpu.core_type = #tpu.core_type<tc>, window_params = [{transform_indices = @transform_0, window_bounds = array<i64: 512, 256>}, {transform_indices = @transform_1, window_bounds = array<i64: 256, 128>}, {transform_indices = @transform_2, window_bounds = array<i64: 1, 128>}, {transform_indices = @transform_3, window_bounds = array<i64: 512, 128>}]} {
    %c0_i32 = arith.constant 0 : i32
    %0 = arith.cmpi eq, %arg2, %c0_i32 : i32
    %1 = arith.extui %0 : i1 to i32
    %c0_i32_0 = arith.constant 0 : i32
    %2 = arith.cmpi ne, %1, %c0_i32_0 : i32
    scf.if %2 {
      %cst_9 = arith.constant 0.000000e+00 : f32
      %12 = vector.broadcast %cst_9 : f32 to vector<512x128xf32>
      %c0_10 = arith.constant 0 : index
      %c0_11 = arith.constant 0 : index
      %13 = vector.load %arg7[%c0_10, %c0_11] : memref<512x128xf32, #tpu.memory_space<vmem>>, vector<512x128xf32>
      tpu.vector_store %arg7[%c0_10, %c0_11], %12 {strides = array<i32>} : memref<512x128xf32, #tpu.memory_space<vmem>>, vector<512x128xf32>,
    } else {
    }
    %c0 = arith.constant 0 : index
    %c0_1 = arith.constant 0 : index
    %3 = vector.load %arg7[%c0, %c0_1] : memref<512x128xf32, #tpu.memory_space<vmem>>, vector<512x128xf32>
    %c0_2 = arith.constant 0 : index
    %c0_3 = arith.constant 0 : index
    %4 = vector.load %arg3[%c0_2, %c0_3] : memref<512x256xbf16, #tpu.memory_space<vmem>>, vector<512x256xbf16>
    %c0_4 = arith.constant 0 : index
    %c0_5 = arith.constant 0 : index
    %5 = vector.load %arg4[%c0_4, %c0_5] : memref<256x128xbf16, #tpu.memory_space<vmem>>, vector<256x128xbf16>
    %cst = arith.constant dense<0.000000e+00> : vector<512x128xf32>
    %6 = tpu.matmul %4, %5, %cst {dimension_numbers = #tpu.dot_dimension_numbers<[1], [0], [0], [1], [0, 0, 1, 1], [], []>} : vector<512x256xbf16>, vector<256x128xbf16>, vector<512x128xf32> -> vector<512x128xf32>
    %7 = arith.addf %3, %6 : vector<512x128xf32>
    %c0_6 = arith.constant 0 : index
    %c0_7 = arith.constant 0 : index
    %8 = vector.load %arg7[%c0_6, %c0_7] : memref<512x128xf32, #tpu.memory_space<vmem>>, vector<512x128xf32>
    tpu.vector_store %arg7[%c0_6, %c0_7], %7 {strides = array<i32>} : memref<512x128xf32, #tpu.memory_space<vmem>>, vector<512x128xf32>,
    %c12_i32 = arith.constant 12 : i32
    %9 = arith.cmpi eq, %arg2, %c12_i32 : i32
    %10 = arith.extui %9 : i1 to i32
    %c0_i32_8 = arith.constant 0 : i32
    %11 = arith.cmpi ne, %10, %c0_i32_8 : i32
    scf.if %11 {
      %c0_9 = arith.constant 0 : index
      %c0_10 = arith.constant 0 : index
      %12 = vector.load %arg7[%c0_9, %c0_10] : memref<512x128xf32, #tpu.memory_space<vmem>>, vector<512x128xf32>
      %c0_11 = arith.constant 0 : index
      %c0_12 = arith.constant 0 : index
      %13 = vector.load %arg5[%c0_11, %c0_12] : memref<1x128xf32, #tpu.memory_space<vmem>>, vector<1x128xf32>
      %14 = vector.broadcast %13 : vector<1x128xf32> to vector<512x128xf32>
      %15 = arith.addf %12, %14 : vector<512x128xf32>
      %16 = math.tanh %15 : vector<512x128xf32>
      %c0_13 = arith.constant 0 : index
      %c0_14 = arith.constant 0 : index
      %17 = vector.load %arg6[%c0_13, %c0_14] : memref<512x128xf32, #tpu.memory_space<vmem>>, vector<512x128xf32>
      tpu.vector_store %arg6[%c0_13, %c0_14], %16 {strides = array<i32>} : memref<512x128xf32, #tpu.memory_space<vmem>>, vector<512x128xf32>,
    } else {
    }
    return
  }
  func.func @transform_0(%arg0: i32, %arg1: i32, %arg2: i32) -> (i32, i32) {
    %c0_i32 = arith.constant 0 : i32
    return %arg0, %arg2 : i32, i32
  }
  func.func @transform_1(%arg0: i32, %arg1: i32, %arg2: i32) -> (i32, i32) {
    %c0_i32 = arith.constant 0 : i32
    return %arg2, %arg1 : i32, i32
  }
  func.func @transform_2(%arg0: i32, %arg1: i32, %arg2: i32) -> (i32, i32) {
    %c0_i32 = arith.constant 0 : i32
    %c0_i32_0 = arith.constant 0 : i32
    return %c0_i32, %arg1 : i32, i32
  }
  func.func @transform_3(%arg0: i32, %arg1: i32, %arg2: i32) -> (i32, i32) {
    %c0_i32 = arith.constant 0 : i32
    return %arg0, %arg1 : i32, i32
  }
}

</mosaic_0001>

<llo_original>
// kernel: generator_forward.8
$region0: #{generator_forward.8}
  #allocation0 [shape = 'u32[]', space=smem, size = 0x4, offset = 0x4, fixed_abs, tag = 'smem constant byte address 0x4 - core index']
  #allocation1 [shape = 'u32[72,128]{1,0:T(1,128)}', space=vmem, size = 0x9000, scoped, tag = 'internal scratch']
  #allocation2 [shape = 'f32[256,128]{1,0:T(8,128)}', space=vmem, size = 0x20000, scoped, tag = 'scratch operand']
  %s0 = inlined_call_operand.vmem [shape: bf16[512,128], index: 0, kind: input, shape index: {}]
  %s1 = inlined_call_operand.vmem [shape: bf16[128,128], index: 1, kind: input, shape index: {}]
  %s2 = inlined_call_operand.vmem [shape: f32[1,128], index: 2, kind: input, shape index: {}]
  %s3 = inlined_call_operand.vmem [shape: f32[512,128], index: 3, kind: output, shape index: {}]
  %s4 = sld [smem:[#allocation0]]
  $region53: #{generator_forward.8} parent=0
    _
  %s6 = ssub.s32 1, %s4
  %s7 = scalar_select 0, %s6, %s4
  loop: start=0, step=1, limit=4
  $region2: #{generator_forward.8} parent=0 // loop_pre_header
    _
  $region3: #{generator_forward.8} parent=0 // loop_header
    %s9 = sphi 0, %s13
    %p10 = scmp.ge.s32.totalorder %s9, 4
    %s16 = sphi 0, %s35
    %s17 = sphi 0, %s31
    %s18 = sphi 0, %s27
    %s19 = sphi 0, %s16
    %s20 = sphi 0, %s17
    %s21 = sphi 0, %s18
    %s22 = sphi 0, %s19
    %s23 = sphi 0, %s20
    %s24 = sphi 0, %s21
    %s40 = sphi 0, %s42
    %s43 = sphi 0, %s40
    %s44 = sphi 0, %s43
    %s60 = sphi 0, %s44
    %s68 = sphi 0, %s70
    %s71 = sphi 0, %s68
    %s72 = sphi 0, %s71
    %s88 = sphi 0, %s72
    %s94 = sphi 0, %s96
    %s97 = sphi 0, %s94
    %s98 = sphi 0, %s97
    %s114 = sphi 0, %s98
    %s122 = sphi 0, %s124
    %s125 = sphi 0, %s122
    %s126 = sphi 0, %s125
    %s142 = sphi 0, %s126
  $region4: #{generator_forward.8} parent=0 // loop_header_branch
    %12 = sbr.rel (%p10) target = $region8
  $region5: #{generator_forward.8} parent=0 // loop_body
    %s14 = ssub.s32 %s9, 1
    %s15 = ssub.s32 %s9, 2
    %s25 = sadd.s32 1, %s18
    %p26 = scmp.ge.s32.totalorder %s25, 1
    %s27 = scalar_select %p26, 0, %s25
    %s28 = sadd.s32 1, %s17
    %s29 = scalar_select %p26, %s28, %s17
    %p30 = scmp.ge.s32.totalorder %s29, 1
    %s31 = scalar_select %p30, 0, %s29
    %s32 = sadd.s32 1, %s16
    %s33 = scalar_select %p30, %s32, %s16
    %p34 = scmp.ge.s32.totalorder %s33, 2
    %s35 = scalar_select %p34, 0, %s33
    %s36 = ssub.s32 %s16, %s35
    %s37 = ssub.s32 %s18, %s27
    %s38 = sor.u32 %s36, %s37
    %p39 = scmp.eq.s32.totalorder %s38, 0
    %s41 = sadd.s32 %s40, 1
    %s42 = scalar_select %p39, %s40, %s41
    %p45 = pneg %p39
    %p46 = scmp.eq.s32.totalorder %s9, 1
    %p47 = por %p45, %p46
    %p48 = scmp.ne.s32.totalorder %s40, %s43
    %p49 = scmp.eq.s32.totalorder %s9, 0
    %p50 = por %p48, %p49
    %p51 = scmp.ne.s32.totalorder %s40, %s43
    %p52 = scmp.eq.s32.totalorder %s14, 1
    %p53 = por %p51, %p52
    %p54 = scmp.ne.s32.totalorder %s43, %s44
    %p55 = scmp.eq.s32.totalorder %s14, 0
    %p56 = por %p54, %p55
    %p57 = scmp.ne.s32.totalorder %s43, %s44
    %p58 = scmp.eq.s32.totalorder %s15, 1
    %p59 = por %p57, %p58
    %p61 = scmp.ne.s32.totalorder %s44, %s60
    %p62 = scmp.eq.s32.totalorder %s15, 0
    %p63 = por %p61, %p62
    %s64 = ssub.s32 %s18, %s27
    %s65 = ssub.s32 %s17, %s31
    %s66 = sor.u32 %s64, %s65
    %p67 = scmp.eq.s32.totalorder %s66, 0
    %s69 = sadd.s32 %s68, 1
    %s70 = scalar_select %p67, %s68, %s69
    %p73 = pneg %p67
    %p74 = scmp.eq.s32.totalorder %s9, 1
    %p75 = por %p73, %p74
    %p76 = scmp.ne.s32.totalorder %s68, %s71
    %p77 = scmp.eq.s32.totalorder %s9, 0
    %p78 = por %p76, %p77
    %p79 = scmp.ne.s32.totalorder %s68, %s71
    %p80 = scmp.eq.s32.totalorder %s14, 1
    %p81 = por %p79, %p80
    %p82 = scmp.ne.s32.totalorder %s71, %s72
    %p83 = scmp.eq.s32.totalorder %s14, 0
    %p84 = por %p82, %p83
    %p85 = scmp.ne.s32.totalorder %s71, %s72
    %p86 = scmp.eq.s32.totalorder %s15, 1
    %p87 = por %p85, %p86
    %p89 = scmp.ne.s32.totalorder %s72, %s88
    %p90 = scmp.eq.s32.totalorder %s15, 0
    %p91 = por %p89, %p90
    %s92 = ssub.s32 %s17, %s31
    %p93 = scmp.eq.s32.totalorder %s92, 0
    %s95 = sadd.s32 %s94, 1
    %s96 = scalar_select %p93, %s94, %s95
    %p99 = pneg %p93
    %p100 = scmp.eq.s32.totalorder %s9, 1
    %p101 = por %p99, %p100
    %p102 = scmp.ne.s32.totalorder %s94, %s97
    %p103 = scmp.eq.s32.totalorder %s9, 0
    %p104 = por %p102, %p103
    %p105 = scmp.ne.s32.totalorder %s94, %s97
    %p106 = scmp.eq.s32.totalorder %s14, 1
    %p107 = por %p105, %p106
    %p108 = scmp.ne.s32.totalorder %s97, %s98
    %p109 = scmp.eq.s32.totalorder %s14, 0
    %p110 = por %p108, %p109
    %p111 = scmp.ne.s32.totalorder %s97, %s98
    %p112 = scmp.eq.s32.totalorder %s15, 1
    %p113 = por %p111, %p112
    %p115 = scmp.ne.s32.totalorder %s98, %s114
    %p116 = scmp.eq.s32.totalorder %s15, 0
    %p117 = por %p115, %p116
    %s118 = ssub.s32 %s16, %s35
    %s119 = ssub.s32 %s17, %s31
    %s120 = sor.u32 %s118, %s119
    %p121 = scmp.eq.s32.totalorder %s120, 0
    %s123 = sadd.s32 %s122, 1
    %s124 = scalar_select %p121, %s122, %s123
    %p127 = pneg %p121
    %p128 = scmp.eq.s32.totalorder %s9, 1
    %p129 = por %p127, %p128
    %p130 = scmp.ne.s32.totalorder %s122, %s125
    %p131 = scmp.eq.s32.totalorder %s9, 0
    %p132 = por %p130, %p131
    %p133 = scmp.ne.s32.totalorder %s122, %s125
    %p134 = scmp.eq.s32.totalorder %s14, 1
    %p135 = por %p133, %p134
    %p136 = scmp.ne.s32.totalorder %s125, %s126
    %p137 = scmp.eq.s32.totalorder %s14, 0
    %p138 = por %p136, %p137
    %p139 = scmp.ne.s32.totalorder %s125, %s126
    %p140 = scmp.eq.s32.totalorder %s15, 1
    %p141 = por %p139, %p140
    %p143 = scmp.ne.s32.totalorder %s126, %s142
    %p144 = scmp.eq.s32.totalorder %s15, 0
    %p145 = por %p143, %p144
    %p146 = scmp.le.s32.totalorder 1, %s9
    %p147 = scmp.lt.s32.totalorder %s9, 3
    %p148 = pnand %p146, %p147
    %p149 = pneg %p148
    // Predicated region
    $region9: #{generator_forward.8} parent=5 // pred_check
      _
    $region10: #{generator_forward.8} parent=5 // pred_check_branch
      %151 = sbr.rel (%p148) target = $region12
    $region11: #{generator_forward.8} parent=5 // pred_region
      %s152 = ssub.s32 %s9, 1
      // Predicated region
      $region13: #{generator_forward.8} parent=11 // pred_check
        %p153 = pneg %p84
      $region14: #{generator_forward.8} parent=11 // pred_check_branch
        %155 = sbr.rel (%p153) target = $region16
      $region15: #{generator_forward.8} parent=11 // pred_region
        %s156 = smul.u32 16, %s21
        %p157 = scmp.lt.s32.totalorder %s156, 15
        %s158 = scalar_select %p157, %s156, 15
        %p159 = scmp.lt.s32.totalorder %s20, 0
        %s160 = scalar_select %p159, %s20, 0
        %s161 = sadd.s32 %s160, %s158
        %s162 = smul.addr %s161, 4
        %s163 = scalar_lea.vmem %s1, %s162
        %s164 = smul.u32 16, %s21
      $region16: #{generator_forward.8} parent=11 // pred_fallthru
        _
      // Predicated region
      $region17: #{generator_forward.8} parent=11 // pred_check
        %p165 = pneg %p110
      $region18: #{generator_forward.8} parent=11 // pred_check_branch
        %167 = sbr.rel (%p165) target = $region20
      $region19: #{generator_forward.8} parent=11 // pred_region
        %p168 = scmp.lt.s32.totalorder %s20, 0
        %s169 = scalar_select %p168, %s20, 0
        %s170 = scalar_lea.vmem %s2, %s169
      $region20: #{generator_forward.8} parent=11 // pred_fallthru
        _
    $region12: #{generator_forward.8} parent=5 // pred_fallthru
      _
    %p171 = scmp.lt.s32.totalorder %s9, 2
    // Predicated region
    $region21: #{generator_forward.8} parent=5 // pred_check
      %p172 = pneg %p171
    $region22: #{generator_forward.8} parent=5 // pred_check_branch
      %174 = sbr.rel (%p172) target = $region24
    $region23: #{generator_forward.8} parent=5 // pred_region
      // Predicated region
      $region25: #{generator_forward.8} parent=23 // pred_check
        %p175 = pneg %p50
      $region26: #{generator_forward.8} parent=23 // pred_check_branch
        %177 = sbr.rel (%p175) target = $region28
      $region27: #{generator_forward.8} parent=23 // pred_region
        %s178 = smul.u32 32, %s16
        %p179 = scmp.lt.s32.totalorder %s178, 63
        %s180 = scalar_select %p179, %s178, 63
        %p181 = scmp.lt.s32.totalorder %s18, 0
        %s182 = scalar_select %p181, %s18, 0
        %s183 = sadd.s32 %s182, %s180
        %s184 = smul.addr %s183, 4
        %s185 = scalar_lea.vmem %s0, %s184
        %s186 = smul.u32 32, %s16
      $region28: #{generator_forward.8} parent=23 // pred_fallthru
        _
    $region24: #{generator_forward.8} parent=5 // pred_fallthru
      _
    %p187 = scmp.le.s32.totalorder 1, %s9
    %p188 = scmp.lt.s32.totalorder %s9, 3
    %p189 = pnand %p187, %p188
    %p190 = pneg %p189
    // Predicated region
    $region29: #{generator_forward.8} parent=5 // pred_check
      _
    $region30: #{generator_forward.8} parent=5 // pred_check_branch
      %192 = sbr.rel (%p189) target = $region32
    $region31: #{generator_forward.8} parent=5 // pred_region
      %s193 = ssub.s32 %s9, 1
      %s194 = smul.u32 32, %s19
      %p195 = scmp.lt.s32.totalorder %s194, 63
      %s196 = scalar_select %p195, %s194, 63
      %p197 = scmp.lt.s32.totalorder %s21, 0
      %s198 = scalar_select %p197, %s21, 0
      %s199 = sadd.s32 %s198, %s196
      %s200 = smul.addr %s199, 4
      %s201 = scalar_lea.vmem %s0, %s200
      %p202 = pneg %p56
      %p203 = pneg %p53
      %s204 = smul.u32 16, %s21
      %p205 = scmp.lt.s32.totalorder %s204, 15
      %s206 = scalar_select %p205, %s204, 15
      %p207 = scmp.lt.s32.totalorder %s20, 0
      %s208 = scalar_select %p207, %s20, 0
      %s209 = sadd.s32 %s208, %s206
      %s210 = smul.addr %s209, 4
      %s211 = scalar_lea.vmem %s1, %s210
      %p212 = pneg %p84
      %p213 = pneg %p81
      %p214 = scmp.lt.s32.totalorder %s20, 0
      %s215 = scalar_select %p214, %s20, 0
      %s216 = scalar_lea.vmem %s2, %s215
      %p217 = pneg %p110
      %p218 = pneg %p107
      %p219 = pneg %p138
      %p220 = pneg %p135
      %s221 = smul.u32 32, %s19
      %p222 = scmp.lt.s32.totalorder %s221, 63
      %s223 = scalar_select %p222, %s221, 63
      %p224 = scmp.lt.s32.totalorder %s20, 0
      %s225 = scalar_select %p224, %s20, 0
      %s226 = sadd.s32 %s225, %s223
      %s227 = smul.addr %s226, 8
      %s228 = scalar_lea.vmem %s3, %s227
      %s229 = smul.u32 32, %s19
      %p230 = scmp.lt.s32.totalorder %s229, 63
      %s231 = scalar_select %p230, %s229, 63
      %p232 = scmp.lt.s32.totalorder %s21, 0
      %s233 = scalar_select %p232, %s21, 0
      %s234 = sadd.s32 %s233, %s231
      %s235 = smul.addr %s234, 4
      %s236 = scalar_lea.vmem %s0, %s235
      %s237 = smul.u32 32, %s19
      %s238 = smul.u32 16, %s21
      %p239 = scmp.lt.s32.totalorder %s238, 15
      %s240 = scalar_select %p239, %s238, 15
      %p241 = scmp.lt.s32.totalorder %s20, 0
      %s242 = scalar_select %p241, %s20, 0
      %s243 = sadd.s32 %s242, %s240
      %s244 = smul.addr %s243, 4
      %s245 = scalar_lea.vmem %s1, %s244
      %s246 = smul.u32 16, %s21
      %p247 = scmp.lt.s32.totalorder %s20, 0
      %s248 = scalar_select %p247, %s20, 0
      %s249 = scalar_lea.vmem %s2, %s248
      %s250 = smul.u32 32, %s19
      %p251 = scmp.lt.s32.totalorder %s250, 63
      %s252 = scalar_select %p251, %s250, 63
      %p253 = scmp.lt.s32.totalorder %s20, 0
      %s254 = scalar_select %p253, %s20, 0
      %s255 = sadd.s32 %s254, %s252
      %s256 = smul.addr %s255, 8
      %s257 = scalar_lea.vmem %s3, %s256
      %s258 = smul.u32 32, %s19
      %p259 = scmp.eq.s32.totalorder %s21, 0
      // Predicated region
      $region33: #{generator_forward.8} parent=31 // pred_check
        %p260 = pneg %p259
      $region34: #{generator_forward.8} parent=31 // pred_check_branch
        %262 = sbr.rel (%p260) target = $region36
      $region35: #{generator_forward.8} parent=31 // pred_region
        %263 = vst [vmem:[#allocation2] sm:$0xff] 0.0
        %264 = vst [vmem:[#allocation2 + $0x8] sm:$0xff] 0.0
        %265 = vst [vmem:[#allocation2 + $0x10] sm:$0xff] 0.0
        %266 = vst [vmem:[#allocation2 + $0x18] sm:$0xff] 0.0
        %267 = vst [vmem:[#allocation2 + $0x20] sm:$0xff] 0.0
        %268 = vst [vmem:[#allocation2 + $0x28] sm:$0xff] 0.0
        %269 = vst [vmem:[#allocation2 + $0x30] sm:$0xff] 0.0
        %270 = vst [vmem:[#allocation2 + $0x38] sm:$0xff] 0.0
        %271 = vst [vmem:[#allocation2 + $0x40] sm:$0xff] 0.0
        %272 = vst [vmem:[#allocation2 + $0x48] sm:$0xff] 0.0
        %273 = vst [vmem:[#allocation2 + $0x50] sm:$0xff] 0.0
        %274 = vst [vmem:[#allocation2 + $0x58] sm:$0xff] 0.0
        %275 = vst [vmem:[#allocation2 + $0x60] sm:$0xff] 0.0
        %276 = vst [vmem:[#allocation2 + $0x68] sm:$0xff] 0.0
        %277 = vst [vmem:[#allocation2 + $0x70] sm:$0xff] 0.0
        %278 = vst [vmem:[#allocation2 + $0x78] sm:$0xff] 0.0
        %279 = vst [vmem:[#allocation2 + $0x80] sm:$0xff] 0.0
        %280 = vst [vmem:[#allocation2 + $0x88] sm:$0xff] 0.0
        %281 = vst [vmem:[#allocation2 + $0x90] sm:$0xff] 0.0
        %282 = vst [vmem:[#allocation2 + $0x98] sm:$0xff] 0.0
        %283 = vst [vmem:[#allocation2 + $0xa0] sm:$0xff] 0.0
        %284 = vst [vmem:[#allocation2 + $0xa8] sm:$0xff] 0.0
        %285 = vst [vmem:[#allocation2 + $0xb0] sm:$0xff] 0.0
        %286 = vst [vmem:[#allocation2 + $0xb8] sm:$0xff] 0.0
        %287 = vst [vmem:[#allocation2 + $0xc0] sm:$0xff] 0.0
        %288 = vst [vmem:[#allocation2 + $0xc8] sm:$0xff] 0.0
        %289 = vst [vmem:[#allocation2 + $0xd0] sm:$0xff] 0.0
        %290 = vst [vmem:[#allocation2 + $0xd8] sm:$0xff] 0.0
        %291 = vst [vmem:[#allocation2 + $0xe0] sm:$0xff] 0.0
        %292 = vst [vmem:[#allocation2 + $0xe8] sm:$0xff] 0.0
        %293 = vst [vmem:[#allocation2 + $0xf0] sm:$0xff] 0.0
        %294 = vst [vmem:[#allocation2 + $0xf8] sm:$0xff] 0.0
      $region36: #{generator_forward.8} parent=31 // pred_fallthru
        _
      %v295 = vld [vmem:[#allocation2] sm:$0xff]
      %v296 = vld [vmem:[#allocation2 + $0x8] sm:$0xff]
      %v297 = vld [vmem:[#allocation2 + $0x10] sm:$0xff]
      %v298 = vld [vmem:[#allocation2 + $0x18] sm:$0xff]
      %v299 = vld [vmem:[#allocation2 + $0x20] sm:$0xff]
      %v300 = vld [vmem:[#allocation2 + $0x28] sm:$0xff]
      %v301 = vld [vmem:[#allocation2 + $0x30] sm:$0xff]
      %v302 = vld [vmem:[#allocation2 + $0x38] sm:$0xff]
      %v303 = vld [vmem:[#allocation2 + $0x40] sm:$0xff]
      %v304 = vld [vmem:[#allocation2 + $0x48] sm:$0xff]
      %v305 = vld [vmem:[#allocation2 + $0x50] sm:$0xff]
      %v306 = vld [vmem:[#allocation2 + $0x58] sm:$0xff]
      %v307 = vld [vmem:[#allocation2 + $0x60] sm:$0xff]
      %v308 = vld [vmem:[#allocation2 + $0x68] sm:$0xff]
      %v309 = vld [vmem:[#allocation2 + $0x70] sm:$0xff]
      %v310 = vld [vmem:[#allocation2 + $0x78] sm:$0xff]
      %v311 = vld [vmem:[#allocation2 + $0x80] sm:$0xff]
      %v312 = vld [vmem:[#allocation2 + $0x88] sm:$0xff]
      %v313 = vld [vmem:[#allocation2 + $0x90] sm:$0xff]
      %v314 = vld [vmem:[#allocation2 + $0x98] sm:$0xff]
      %v315 = vld [vmem:[#allocation2 + $0xa0] sm:$0xff]
      %v316 = vld [vmem:[#allocation2 + $0xa8] sm:$0xff]
      %v317 = vld [vmem:[#allocation2 + $0xb0] sm:$0xff]
      %v318 = vld [vmem:[#allocation2 + $0xb8] sm:$0xff]
      %v319 = vld [vmem:[#allocation2 + $0xc0] sm:$0xff]
      %v320 = vld [vmem:[#allocation2 + $0xc8] sm:$0xff]
      %v321 = vld [vmem:[#allocation2 + $0xd0] sm:$0xff]
      %v322 = vld [vmem:[#allocation2 + $0xd8] sm:$0xff]
      %v323 = vld [vmem:[#allocation2 + $0xe0] sm:$0xff]
      %v324 = vld [vmem:[#allocation2 + $0xe8] sm:$0xff]
      %v325 = vld [vmem:[#allocation2 + $0xf0] sm:$0xff]
      %v326 = vld [vmem:[#allocation2 + $0xf8] sm:$0xff]
      %v327 = vld [vmem:[%s236] sm:$0xf]
      %v328 = vld [vmem:[%s236 + $0x4] sm:$0xf]
      %v329 = vld [vmem:[%s236 + $0x8] sm:$0xf]
      %v330 = vld [vmem:[%s236 + $0xc] sm:$0xf]
      %v331 = vld [vmem:[%s236 + $0x10] sm:$0xf]
      %v332 = vld [vmem:[%s236 + $0x14] sm:$0xf]
      %v333 = vld [vmem:[%s236 + $0x18] sm:$0xf]
      %v334 = vld [vmem:[%s236 + $0x1c] sm:$0xf]
      %v335 = vld [vmem:[%s236 + $0x20] sm:$0xf]
      %v336 = vld [vmem:[%s236 + $0x24] sm:$0xf]
      %v337 = vld [vmem:[%s236 + $0x28] sm:$0xf]
      %v338 = vld [vmem:[%s236 + $0x2c] sm:$0xf]
      %v339 = vld [vmem:[%s236 + $0x30] sm:$0xf]
      %v340 = vld [vmem:[%s236 + $0x34] sm:$0xf]
      %v341 = vld [vmem:[%s236 + $0x38] sm:$0xf]
      %v342 = vld [vmem:[%s236 + $0x3c] sm:$0xf]
      %v343 = vld [vmem:[%s236 + $0x40] sm:$0xf]
      %v344 = vld [vmem:[%s236 + $0x44] sm:$0xf]
      %v345 = vld [vmem:[%s236 + $0x48] sm:$0xf]
      %v346 = vld [vmem:[%s236 + $0x4c] sm:$0xf]
      %v347 = vld [vmem:[%s236 + $0x50] sm:$0xf]
      %v348 = vld [vmem:[%s236 + $0x54] sm:$0xf]
      %v349 = vld [vmem:[%s236 + $0x58] sm:$0xf]
      %v350 = vld [vmem:[%s236 + $0x5c] sm:$0xf]
      %v351 = vld [vmem:[%s236 + $0x60] sm:$0xf]
      %v352 = vld [vmem:[%s236 + $0x64] sm:$0xf]
      %v353 = vld [vmem:[%s236 + $0x68] sm:$0xf]
      %v354 = vld [vmem:[%s236 + $0x6c] sm:$0xf]
      %v355 = vld [vmem:[%s236 + $0x70] sm:$0xf]
      %v356 = vld [vmem:[%s236 + $0x74] sm:$0xf]
      %v357 = vld [vmem:[%s236 + $0x78] sm:$0xf]
      %v358 = vld [vmem:[%s236 + $0x7c] sm:$0xf]
      %v359 = vld [vmem:[%s245] sm:$0xf]
      %v360 = vld [vmem:[%s245 + $0x4] sm:$0xf]
      %v361 = vld [vmem:[%s245 + $0x8] sm:$0xf]
      %v362 = vld [vmem:[%s245 + $0xc] sm:$0xf]
      %v363 = vld [vmem:[%s245 + $0x10] sm:$0xf]
      %v364 = vld [vmem:[%s245 + $0x14] sm:$0xf]
      %v365 = vld [vmem:[%s245 + $0x18] sm:$0xf]
      %v366 = vld [vmem:[%s245 + $0x1c] sm:$0xf]
      %v367 = vld [vmem:[%s245 + $0x20] sm:$0xf]
      %v368 = vld [vmem:[%s245 + $0x24] sm:$0xf]
      %v369 = vld [vmem:[%s245 + $0x28] sm:$0xf]
      %v370 = vld [vmem:[%s245 + $0x2c] sm:$0xf]
      %v371 = vld [vmem:[%s245 + $0x30] sm:$0xf]
      %v372 = vld [vmem:[%s245 + $0x34] sm:$0xf]
      %v373 = vld [vmem:[%s245 + $0x38] sm:$0xf]
      %v374 = vld [vmem:[%s245 + $0x3c] sm:$0xf]
      %v407 = vunpack.c.l.b16 %v327
      %v408 = vunpack.c.l.b16 %v328
      %v409 = vunpack.c.l.b16 %v329
      %v410 = vunpack.c.l.b16 %v330
      %v411 = vunpack.c.l.b16 %v331
      %v412 = vunpack.c.l.b16 %v332
      %v413 = vunpack.c.l.b16 %v333
      %v414 = vunpack.c.l.b16 %v334
      %v415 = vunpack.c.l.b16 %v335
      %v416 = vunpack.c.l.b16 %v336
      %v417 = vunpack.c.l.b16 %v337
      %v418 = vunpack.c.l.b16 %v338
      %v419 = vunpack.c.l.b16 %v339
      %v420 = vunpack.c.l.b16 %v340
      %v421 = vunpack.c.l.b16 %v341
      %v422 = vunpack.c.l.b16 %v342
      %v423 = vunpack.c.l.b16 %v343
      %v424 = vunpack.c.l.b16 %v344
      %v425 = vunpack.c.l.b16 %v345
      %v426 = vunpack.c.l.b16 %v346
      %v427 = vunpack.c.l.b16 %v347
      %v428 = vunpack.c.l.b16 %v348
      %v429 = vunpack.c.l.b16 %v349
      %v430 = vunpack.c.l.b16 %v350
      %v431 = vunpack.c.l.b16 %v351
      %v432 = vunpack.c.l.b16 %v352
      %v433 = vunpack.c.l.b16 %v353
      %v434 = vunpack.c.l.b16 %v354
      %v435 = vunpack.c.l.b16 %v355
      %v436 = vunpack.c.l.b16 %v356
      %v437 = vunpack.c.l.b16 %v357
      %v438 = vunpack.c.l.b16 %v358
      %v439 = vpack.c.b16 %v408, %v407
      %v440 = vpack.c.b16 %v410, %v409
      %v441 = vpack.c.b16 %v412, %v411
      %v442 = vpack.c.b16 %v414, %v413
      %v443 = vpack.c.b16 %v416, %v415
      %v444 = vpack.c.b16 %v418, %v417
      %v445 = vpack.c.b16 %v420, %v419
      %v446 = vpack.c.b16 %v422, %v421
      %v447 = vpack.c.b16 %v424, %v423
      %v448 = vpack.c.b16 %v426, %v425
      %v449 = vpack.c.b16 %v428, %v427
      %v450 = vpack.c.b16 %v430, %v429
      %v451 = vpack.c.b16 %v432, %v431
      %v452 = vpack.c.b16 %v434, %v433
      %v453 = vpack.c.b16 %v436, %v435
      %v454 = vpack.c.b16 %v438, %v437
      %v487 = vunpack.c.l.b16 %v359
      %v488 = vunpack.c.l.b16 %v360
      %v489 = vunpack.c.l.b16 %v361
      %v490 = vunpack.c.l.b16 %v362
      %v491 = vunpack.c.l.b16 %v363
      %v492 = vunpack.c.l.b16 %v364
      %v493 = vunpack.c.l.b16 %v365
      %v494 = vunpack.c.l.b16 %v366
      %v495 = vunpack.c.l.b16 %v367
      %v496 = vunpack.c.l.b16 %v368
      %v497 = vunpack.c.l.b16 %v369
      %v498 = vunpack.c.l.b16 %v370
      %v499 = vunpack.c.l.b16 %v371
      %v500 = vunpack.c.l.b16 %v372
      %v501 = vunpack.c.l.b16 %v373
      %v502 = vunpack.c.l.b16 %v374
      %v503 = vpack.c.b16 %v488, %v487
      %v504 = vpack.c.b16 %v490, %v489
      %v505 = vpack.c.b16 %v492, %v491
      %v506 = vpack.c.b16 %v494, %v493
      %v507 = vpack.c.b16 %v496, %v495
      %v508 = vpack.c.b16 %v498, %v497
      %v509 = vpack.c.b16 %v500, %v499
      %v510 = vpack.c.b16 %v502, %v501
      %519 = vmatpush.bf16.msra.mxu0 %v510
      %520 = vmatpush.bf16.msra.mxu0 %v509
      %521 = vmatpush.bf16.msra.mxu0 %v508
      %522 = vmatpush.bf16.msra.mxu0 %v507
      %523 = vmatpush.bf16.msra.mxu0 %v506
      %524 = vmatpush.bf16.msra.mxu0 %v505
      %525 = vmatpush.bf16.msra.mxu0 %v504
      %526 = vmatpush.bf16.msra.mxu0 %v503
      %527 = vmatmul.bf16.gmra.mxu0 %v439
      %v528 = vpop.f32.mrf.mxu0
      %v529 = vadd.f32 0.0, %v528
      %v530 = vpop.f32.mrf.mxu0
      %v531 = vadd.f32 0.0, %v530
      %532 = vmatmul.bf16.gmra.mxu0 %v440
      %v533 = vpop.f32.mrf.mxu0
      %v534 = vadd.f32 0.0, %v533
      %v535 = vpop.f32.mrf.mxu0
      %v536 = vadd.f32 0.0, %v535
      %537 = vmatmul.bf16.gmra.mxu0 %v441
      %v538 = vpop.f32.mrf.mxu0
      %v539 = vadd.f32 0.0, %v538
      %v540 = vpop.f32.mrf.mxu0
      %v541 = vadd.f32 0.0, %v540
      %542 = vmatmul.bf16.gmra.mxu0 %v442
      %v543 = vpop.f32.mrf.mxu0
      %v544 = vadd.f32 0.0, %v543
      %v545 = vpop.f32.mrf.mxu0
      %v546 = vadd.f32 0.0, %v545
      %547 = vmatmul.bf16.gmra.mxu0 %v443
      %v548 = vpop.f32.mrf.mxu0
      %v549 = vadd.f32 0.0, %v548
      %v550 = vpop.f32.mrf.mxu0
      %v551 = vadd.f32 0.0, %v550
      %552 = vmatmul.bf16.gmra.mxu0 %v444
      %v553 = vpop.f32.mrf.mxu0
      %v554 = vadd.f32 0.0, %v553
      %v555 = vpop.f32.mrf.mxu0
      %v556 = vadd.f32 0.0, %v555
      %557 = vmatmul.bf16.gmra.mxu0 %v445
      %v558 = vpop.f32.mrf.mxu0
      %v559 = vadd.f32 0.0, %v558
      %v560 = vpop.f32.mrf.mxu0
      %v561 = vadd.f32 0.0, %v560
      %562 = vmatmul.bf16.gmra.mxu0 %v446
      %v563 = vpop.f32.mrf.mxu0
      %v564 = vadd.f32 0.0, %v563
      %v565 = vpop.f32.mrf.mxu0
      %v566 = vadd.f32 0.0, %v565
      %567 = vmatmul.bf16.gmra.mxu0 %v447
      %v568 = vpop.f32.mrf.mxu0
      %v569 = vadd.f32 0.0, %v568
      %v570 = vpop.f32.mrf.mxu0
      %v571 = vadd.f32 0.0, %v570
      %572 = vmatmul.bf16.gmra.mxu0 %v448
      %v573 = vpop.f32.mrf.mxu0
      %v574 = vadd.f32 0.0, %v573
      %v575 = vpop.f32.mrf.mxu0
      %v576 = vadd.f32 0.0, %v575
      %577 = vmatmul.bf16.gmra.mxu0 %v449
      %v578 = vpop.f32.mrf.mxu0
      %v579 = vadd.f32 0.0, %v578
      %v580 = vpop.f32.mrf.mxu0
      %v581 = vadd.f32 0.0, %v580
      %582 = vmatmul.bf16.gmra.mxu0 %v450
      %v583 = vpop.f32.mrf.mxu0
      %v584 = vadd.f32 0.0, %v583
      %v585 = vpop.f32.mrf.mxu0
      %v586 = vadd.f32 0.0, %v585
      %587 = vmatmul.bf16.gmra.mxu0 %v451
      %v588 = vpop.f32.mrf.mxu0
      %v589 = vadd.f32 0.0, %v588
      %v590 = vpop.f32.mrf.mxu0
      %v591 = vadd.f32 0.0, %v590
      %592 = vmatmul.bf16.gmra.mxu0 %v452
      %v593 = vpop.f32.mrf.mxu0
      %v594 = vadd.f32 0.0, %v593
      %v595 = vpop.f32.mrf.mxu0
      %v596 = vadd.f32 0.0, %v595
      %597 = vmatmul.bf16.gmra.mxu0 %v453
      %v598 = vpop.f32.mrf.mxu0
      %v599 = vadd.f32 0.0, %v598
      %v600 = vpop.f32.mrf.mxu0
      %v601 = vadd.f32 0.0, %v600
      %602 = vmatmul.bf16.gmra.mxu0 %v454
      %v603 = vpop.f32.mrf.mxu0
      %v604 = vadd.f32 0.0, %v603
      %v605 = vpop.f32.mrf.mxu0
      %v606 = vadd.f32 0.0, %v605
      %607 = vdwg.mxu0
      %v608 = vadd.f32 %v295, %v529
      %v609 = vadd.f32 %v296, %v531
      %v610 = vadd.f32 %v297, %v534
      %v611 = vadd.f32 %v298, %v536
      %v612 = vadd.f32 %v299, %v539
      %v613 = vadd.f32 %v300, %v541
      %v614 = vadd.f32 %v301, %v544
      %v615 = vadd.f32 %v302, %v546
      %v616 = vadd.f32 %v303, %v549
      %v617 = vadd.f32 %v304, %v551
      %v618 = vadd.f32 %v305, %v554
      %v619 = vadd.f32 %v306, %v556
      %v620 = vadd.f32 %v307, %v559
      %v621 = vadd.f32 %v308, %v561
      %v622 = vadd.f32 %v309, %v564
      %v623 = vadd.f32 %v310, %v566
      %v624 = vadd.f32 %v311, %v569
      %v625 = vadd.f32 %v312, %v571
      %v626 = vadd.f32 %v313, %v574
      %v627 = vadd.f32 %v314, %v576
      %v628 = vadd.f32 %v315, %v579
      %v629 = vadd.f32 %v316, %v581
      %v630 = vadd.f32 %v317, %v584
      %v631 = vadd.f32 %v318, %v586
      %v632 = vadd.f32 %v319, %v589
      %v633 = vadd.f32 %v320, %v591
      %v634 = vadd.f32 %v321, %v594
      %v635 = vadd.f32 %v322, %v596
      %v636 = vadd.f32 %v323, %v599
      %v637 = vadd.f32 %v324, %v601
      %v638 = vadd.f32 %v325, %v604
      %v639 = vadd.f32 %v326, %v606
      %640 = vst [vmem:[#allocation2] sm:$0xff] %v608
      %641 = vst [vmem:[#allocation2 + $0x8] sm:$0xff] %v609
      %642 = vst [vmem:[#allocation2 + $0x10] sm:$0xff] %v610
      %643 = vst [vmem:[#allocation2 + $0x18] sm:$0xff] %v611
      %644 = vst [vmem:[#allocation2 + $0x20] sm:$0xff] %v612
      %645 = vst [vmem:[#allocation2 + $0x28] sm:$0xff] %v613
      %646 = vst [vmem:[#allocation2 + $0x30] sm:$0xff] %v614
      %647 = vst [vmem:[#allocation2 + $0x38] sm:$0xff] %v615
      %648 = vst [vmem:[#allocation2 + $0x40] sm:$0xff] %v616
      %649 = vst [vmem:[#allocation2 + $0x48] sm:$0xff] %v617
      %650 = vst [vmem:[#allocation2 + $0x50] sm:$0xff] %v618
      %651 = vst [vmem:[#allocation2 + $0x58] sm:$0xff] %v619
      %652 = vst [vmem:[#allocation2 + $0x60] sm:$0xff] %v620
      %653 = vst [vmem:[#allocation2 + $0x68] sm:$0xff] %v621
      %654 = vst [vmem:[#allocation2 + $0x70] sm:$0xff] %v622
      %655 = vst [vmem:[#allocation2 + $0x78] sm:$0xff] %v623
      %656 = vst [vmem:[#allocation2 + $0x80] sm:$0xff] %v624
      %657 = vst [vmem:[#allocation2 + $0x88] sm:$0xff] %v625
      %658 = vst [vmem:[#allocation2 + $0x90] sm:$0xff] %v626
      %659 = vst [vmem:[#allocation2 + $0x98] sm:$0xff] %v627
      %660 = vst [vmem:[#allocation2 + $0xa0] sm:$0xff] %v628
      %661 = vst [vmem:[#allocation2 + $0xa8] sm:$0xff] %v629
      %662 = vst [vmem:[#allocation2 + $0xb0] sm:$0xff] %v630
      %663 = vst [vmem:[#allocation2 + $0xb8] sm:$0xff] %v631
      %664 = vst [vmem:[#allocation2 + $0xc0] sm:$0xff] %v632
      %665 = vst [vmem:[#allocation2 + $0xc8] sm:$0xff] %v633
      %666 = vst [vmem:[#allocation2 + $0xd0] sm:$0xff] %v634
      %667 = vst [vmem:[#allocation2 + $0xd8] sm:$0xff] %v635
      %668 = vst [vmem:[#allocation2 + $0xe0] sm:$0xff] %v636
      %669 = vst [vmem:[#allocation2 + $0xe8] sm:$0xff] %v637
      %670 = vst [vmem:[#allocation2 + $0xf0] sm:$0xff] %v638
      %671 = vst [vmem:[#allocation2 + $0xf8] sm:$0xff] %v639
      // Predicated region
      $region37: #{generator_forward.8} parent=31 // pred_check
        %p672 = pneg %p259
      $region38: #{generator_forward.8} parent=31 // pred_check_branch
        %674 = sbr.rel (%p672) target = $region40
      $region39: #{generator_forward.8} parent=31 // pred_region
        %v675 = vld [vmem:[#allocation2] sm:$0xff]
        %v676 = vld [vmem:[#allocation2 + $0x8] sm:$0xff]
        %v677 = vld [vmem:[#allocation2 + $0x10] sm:$0xff]
        %v678 = vld [vmem:[#allocation2 + $0x18] sm:$0xff]
        %v679 = vld [vmem:[#allocation2 + $0x20] sm:$0xff]
        %v680 = vld [vmem:[#allocation2 + $0x28] sm:$0xff]
        %v681 = vld [vmem:[#allocation2 + $0x30] sm:$0xff]
        %v682 = vld [vmem:[#allocation2 + $0x38] sm:$0xff]
        %v683 = vld [vmem:[#allocation2 + $0x40] sm:$0xff]
        %v684 = vld [vmem:[#allocation2 + $0x48] sm:$0xff]
        %v685 = vld [vmem:[#allocation2 + $0x50] sm:$0xff]
        %v686 = vld [vmem:[#allocation2 + $0x58] sm:$0xff]
        %v687 = vld [vmem:[#allocation2 + $0x60] sm:$0xff]
        %v688 = vld [vmem:[#allocation2 + $0x68] sm:$0xff]
        %v689 = vld [vmem:[#allocation2 + $0x70] sm:$0xff]
        %v690 = vld [vmem:[#allocation2 + $0x78] sm:$0xff]
        %v691 = vld [vmem:[#allocation2 + $0x80] sm:$0xff]
        %v692 = vld [vmem:[#allocation2 + $0x88] sm:$0xff]
        %v693 = vld [vmem:[#allocation2 + $0x90] sm:$0xff]
        %v694 = vld [vmem:[#allocation2 + $0x98] sm:$0xff]
        %v695 = vld [vmem:[#allocation2 + $0xa0] sm:$0xff]
        %v696 = vld [vmem:[#allocation2 + $0xa8] sm:$0xff]
        %v697 = vld [vmem:[#allocation2 + $0xb0] sm:$0xff]
        %v698 = vld [vmem:[#allocation2 + $0xb8] sm:$0xff]
        %v699 = vld [vmem:[#allocation2 + $0xc0] sm:$0xff]
        %v700 = vld [vmem:[#allocation2 + $0xc8] sm:$0xff]
        %v701 = vld [vmem:[#allocation2 + $0xd0] sm:$0xff]
        %v702 = vld [vmem:[#allocation2 + $0xd8] sm:$0xff]
        %v703 = vld [vmem:[#allocation2 + $0xe0] sm:$0xff]
        %v704 = vld [vmem:[#allocation2 + $0xe8] sm:$0xff]
        %v705 = vld [vmem:[#allocation2 + $0xf0] sm:$0xff]
        %v706 = vld [vmem:[#allocation2 + $0xf8] sm:$0xff]
        %v707 = vld [vmem:[%s249] sm:$0x1]
        %v709 = vperm.slane %v707, 0
        %v711 = vadd.f32 %v675, %v709
        %v712 = vadd.f32 %v676, %v709
        %v713 = vadd.f32 %v677, %v709
        %v714 = vadd.f32 %v678, %v709
        %v715 = vadd.f32 %v679, %v709
        %v716 = vadd.f32 %v680, %v709
        %v717 = vadd.f32 %v681, %v709
        %v718 = vadd.f32 %v682, %v709
        %v719 = vadd.f32 %v683, %v709
        %v720 = vadd.f32 %v684, %v709
        %v721 = vadd.f32 %v685, %v709
        %v722 = vadd.f32 %v686, %v709
        %v723 = vadd.f32 %v687, %v709
        %v724 = vadd.f32 %v688, %v709
        %v725 = vadd.f32 %v689, %v709
        %v726 = vadd.f32 %v690, %v709
        %v727 = vadd.f32 %v691, %v709
        %v728 = vadd.f32 %v692, %v709
        %v729 = vadd.f32 %v693, %v709
        %v730 = vadd.f32 %v694, %v709
        %v731 = vadd.f32 %v695, %v709
        %v732 = vadd.f32 %v696, %v709
        %v733 = vadd.f32 %v697, %v709
        %v734 = vadd.f32 %v698, %v709
        %v735 = vadd.f32 %v699, %v709
        %v736 = vadd.f32 %v700, %v709
        %v737 = vadd.f32 %v701, %v709
        %v738 = vadd.f32 %v702, %v709
        %v739 = vadd.f32 %v703, %v709
        %v740 = vadd.f32 %v704, %v709
        %v741 = vadd.f32 %v705, %v709
        %v742 = vadd.f32 %v706, %v709
        %v743 = vlaneseq
        %v744 = vshrl.u32 %v743, 7
        %v745 = vadd.s32 %v744, 8
        %v746 = vadd.s32 %v744, 16
        %v747 = vadd.s32 %v744, 24
        %v748 = vadd.s32 %v744, 32
        %v749 = vadd.s32 %v744, 40
        %v750 = vadd.s32 %v744, 48
        %v751 = vadd.s32 %v744, 56
        %v752 = vadd.s32 %v744, 64
        %v753 = vadd.s32 %v744, 72
        %v754 = vadd.s32 %v744, 80
        %v755 = vadd.s32 %v744, 88
        %v756 = vadd.s32 %v744, 96
        %v757 = vadd.s32 %v744, 104
        %v758 = vadd.s32 %v744, 112
        %v759 = vadd.s32 %v744, 120
        %v760 = vadd.s32 %v744, 128
        %v761 = vadd.s32 %v744, 136
        %v762 = vadd.s32 %v744, 144
        %v763 = vadd.s32 %v744, 152
        %v764 = vadd.s32 %v744, 160
        %v765 = vadd.s32 %v744, 168
        %v766 = vadd.s32 %v744, 176
        %v767 = vadd.s32 %v744, 184
        %v768 = vadd.s32 %v744, 192
        %v769 = vadd.s32 %v744, 200
        %v770 = vadd.s32 %v744, 208
        %v771 = vadd.s32 %v744, 216
        %v772 = vadd.s32 %v744, 224
        %v773 = vadd.s32 %v744, 232
        %v774 = vadd.s32 %v744, 240
        %v775 = vadd.s32 %v744, 248
        %vm776 = vcmp.lt.s32.totalorder %v744, 256
        %vm777 = vcmp.lt.s32.totalorder %v745, 256
        %vm778 = vcmp.lt.s32.totalorder %v746, 256
        %vm779 = vcmp.lt.s32.totalorder %v747, 256
        %vm780 = vcmp.lt.s32.totalorder %v748, 256
        %vm781 = vcmp.lt.s32.totalorder %v749, 256
        %vm782 = vcmp.lt.s32.totalorder %v750, 256
        %vm783 = vcmp.lt.s32.totalorder %v751, 256
        %vm784 = vcmp.lt.s32.totalorder %v752, 256
        %vm785 = vcmp.lt.s32.totalorder %v753, 256
        %vm786 = vcmp.lt.s32.totalorder %v754, 256
        %vm787 = vcmp.lt.s32.totalorder %v755, 256
        %vm788 = vcmp.lt.s32.totalorder %v756, 256
        %vm789 = vcmp.lt.s32.totalorder %v757, 256
        %vm790 = vcmp.lt.s32.totalorder %v758, 256
        %vm791 = vcmp.lt.s32.totalorder %v759, 256
        %vm792 = vcmp.lt.s32.totalorder %v760, 256
        %vm793 = vcmp.lt.s32.totalorder %v761, 256
        %vm794 = vcmp.lt.s32.totalorder %v762, 256
        %vm795 = vcmp.lt.s32.totalorder %v763, 256
        %vm796 = vcmp.lt.s32.totalorder %v764, 256
        %vm797 = vcmp.lt.s32.totalorder %v765, 256
        %vm798 = vcmp.lt.s32.totalorder %v766, 256
        %vm799 = vcmp.lt.s32.totalorder %v767, 256
        %vm800 = vcmp.lt.s32.totalorder %v768, 256
        %vm801 = vcmp.lt.s32.totalorder %v769, 256
        %vm802 = vcmp.lt.s32.totalorder %v770, 256
        %vm803 = vcmp.lt.s32.totalorder %v771, 256
        %vm804 = vcmp.lt.s32.totalorder %v772, 256
        %vm805 = vcmp.lt.s32.totalorder %v773, 256
        %vm806 = vcmp.lt.s32.totalorder %v774, 256
        %vm807 = vcmp.lt.s32.totalorder %v775, 256
        %v808 = vsel %vm776, %v711, 0.0
        %v809 = vsel %vm777, %v712, 0.0
        %v810 = vsel %vm778, %v713, 0.0
        %v811 = vsel %vm779, %v714, 0.0
        %v812 = vsel %vm780, %v715, 0.0
        %v813 = vsel %vm781, %v716, 0.0
        %v814 = vsel %vm782, %v717, 0.0
        %v815 = vsel %vm783, %v718, 0.0
        %v816 = vsel %vm784, %v719, 0.0
        %v817 = vsel %vm785, %v720, 0.0
        %v818 = vsel %vm786, %v721, 0.0
        %v819 = vsel %vm787, %v722, 0.0
        %v820 = vsel %vm788, %v723, 0.0
        %v821 = vsel %vm789, %v724, 0.0
        %v822 = vsel %vm790, %v725, 0.0
        %v823 = vsel %vm791, %v726, 0.0
        %v824 = vsel %vm792, %v727, 0.0
        %v825 = vsel %vm793, %v728, 0.0
        %v826 = vsel %vm794, %v729, 0.0
        %v827 = vsel %vm795, %v730, 0.0
        %v828 = vsel %vm796, %v731, 0.0
        %v829 = vsel %vm797, %v732, 0.0
        %v830 = vsel %vm798, %v733, 0.0
        %v831 = vsel %vm799, %v734, 0.0
        %v832 = vsel %vm800, %v735, 0.0
        %v833 = vsel %vm801, %v736, 0.0
        %v834 = vsel %vm802, %v737, 0.0
        %v835 = vsel %vm803, %v738, 0.0
        %v836 = vsel %vm804, %v739, 0.0
        %v837 = vsel %vm805, %v740, 0.0
        %v838 = vsel %vm806, %v741, 0.0
        %v839 = vsel %vm807, %v742, 0.0
        %v840 = vadd.f32 %v808, %v809
        %v841 = vadd.f32 %v840, %v810
        %v842 = vadd.f32 %v841, %v811
        %v843 = vadd.f32 %v842, %v812
        %v844 = vadd.f32 %v843, %v813
        %v845 = vadd.f32 %v844, %v814
        %v846 = vadd.f32 %v845, %v815
        %v847 = vadd.f32 %v846, %v816
        %v848 = vadd.f32 %v847, %v817
        %v849 = vadd.f32 %v848, %v818
        %v850 = vadd.f32 %v849, %v819
        %v851 = vadd.f32 %v850, %v820
        %v852 = vadd.f32 %v851, %v821
        %v853 = vadd.f32 %v852, %v822
        %v854 = vadd.f32 %v853, %v823
        %v855 = vadd.f32 %v854, %v824
        %v856 = vadd.f32 %v855, %v825
        %v857 = vadd.f32 %v856, %v826
        %v858 = vadd.f32 %v857, %v827
        %v859 = vadd.f32 %v858, %v828
        %v860 = vadd.f32 %v859, %v829
        %v861 = vadd.f32 %v860, %v830
        %v862 = vadd.f32 %v861, %v831
        %v863 = vadd.f32 %v862, %v832
        %v864 = vadd.f32 %v863, %v833
        %v865 = vadd.f32 %v864, %v834
        %v866 = vadd.f32 %v865, %v835
        %v867 = vadd.f32 %v866, %v836
        %v868 = vadd.f32 %v867, %v837
        %v869 = vadd.f32 %v868, %v838
        %v870 = vadd.f32 %v869, %v839
        %v871 = vrot.slane %v870, 4
        %v872 = vadd.f32 %v870, %v871
        %v873 = vrot.slane %v872, 2
        %v874 = vadd.f32 %v872, %v873
        %v875 = vrot.slane %v874, 1
        %v876 = vadd.f32 %v874, %v875
        %v877 = vmul.f32 %v876, 0.00390625
        %v878 = vmul.f32 %v808, %v808
        %v879 = vmul.f32 %v809, %v809
        %v880 = vmul.f32 %v810, %v810
        %v881 = vmul.f32 %v811, %v811
        %v882 = vmul.f32 %v812, %v812
        %v883 = vmul.f32 %v813, %v813
        %v884 = vmul.f32 %v814, %v814
        %v885 = vmul.f32 %v815, %v815
        %v886 = vmul.f32 %v816, %v816
        %v887 = vmul.f32 %v817, %v817
        %v888 = vmul.f32 %v818, %v818
        %v889 = vmul.f32 %v819, %v819
        %v890 = vmul.f32 %v820, %v820
        %v891 = vmul.f32 %v821, %v821
        %v892 = vmul.f32 %v822, %v822
        %v893 = vmul.f32 %v823, %v823
        %v894 = vmul.f32 %v824, %v824
        %v895 = vmul.f32 %v825, %v825
        %v896 = vmul.f32 %v826, %v826
        %v897 = vmul.f32 %v827, %v827
        %v898 = vmul.f32 %v828, %v828
        %v899 = vmul.f32 %v829, %v829
        %v900 = vmul.f32 %v830, %v830
        %v901 = vmul.f32 %v831, %v831
        %v902 = vmul.f32 %v832, %v832
        %v903 = vmul.f32 %v833, %v833
        %v904 = vmul.f32 %v834, %v834
        %v905 = vmul.f32 %v835, %v835
        %v906 = vmul.f32 %v836, %v836
        %v907 = vmul.f32 %v837, %v837
        %v908 = vmul.f32 %v838, %v838
        %v909 = vmul.f32 %v839, %v839
        %v910 = vadd.f32 %v878, %v879
        %v911 = vadd.f32 %v910, %v880
        %v912 = vadd.f32 %v911, %v881
        %v913 = vadd.f32 %v912, %v882
        %v914 = vadd.f32 %v913, %v883
        %v915 = vadd.f32 %v914, %v884
        %v916 = vadd.f32 %v915, %v885
        %v917 = vadd.f32 %v916, %v886
        %v918 = vadd.f32 %v917, %v887
        %v919 = vadd.f32 %v918, %v888
        %v920 = vadd.f32 %v919, %v889
        %v921 = vadd.f32 %v920, %v890
        %v922 = vadd.f32 %v921, %v891
        %v923 = vadd.f32 %v922, %v892
        %v924 = vadd.f32 %v923, %v893
        %v925 = vadd.f32 %v924, %v894
        %v926 = vadd.f32 %v925, %v895
        %v927 = vadd.f32 %v926, %v896
        %v928 = vadd.f32 %v927, %v897
        %v929 = vadd.f32 %v928, %v898
        %v930 = vadd.f32 %v929, %v899
        %v931 = vadd.f32 %v930, %v900
        %v932 = vadd.f32 %v931, %v901
        %v933 = vadd.f32 %v932, %v902
        %v934 = vadd.f32 %v933, %v903
        %v935 = vadd.f32 %v934, %v904
        %v936 = vadd.f32 %v935, %v905
        %v937 = vadd.f32 %v936, %v906
        %v938 = vadd.f32 %v937, %v907
        %v939 = vadd.f32 %v938, %v908
        %v940 = vadd.f32 %v939, %v909
        %v941 = vrot.slane %v940, 4
        %v942 = vadd.f32 %v940, %v941
        %v943 = vrot.slane %v942, 2
        %v944 = vadd.f32 %v942, %v943
        %v945 = vrot.slane %v944, 1
        %v946 = vadd.f32 %v944, %v945
        %v947 = vmul.f32 %v946, 0.00390625
        %v948 = vmul.f32 %v877, %v877
        %v949 = vsub.f32 %v947, %v948
        %v950 = vadd.f32 %v949, 1e-05
        %v951 = vrsqrt.pop %v950
        %v952 = vmul.f32 %v951, %v950
        %v953 = vmul.f32 %v952, %v951
        %v954 = vmul.f32 0.5, %v953
        %v955 = vsub.f32 1.5, %v954
        %v956 = vmul.f32 %v951, %v955
        %vm957 = vweird.f32 %v950
        %vm958 = vweird.f32 %v951
        %vm959 = vmor %vm957, %vm958
        %v960 = vsel %vm959, %v951, %v956
        %v961 = vsub.f32 %v711, %v877
        %v962 = vsub.f32 %v712, %v877
        %v963 = vsub.f32 %v713, %v877
        %v964 = vsub.f32 %v714, %v877
        %v965 = vsub.f32 %v715, %v877
        %v966 = vsub.f32 %v716, %v877
        %v967 = vsub.f32 %v717, %v877
        %v968 = vsub.f32 %v718, %v877
        %v969 = vsub.f32 %v719, %v877
        %v970 = vsub.f32 %v720, %v877
        %v971 = vsub.f32 %v721, %v877
        %v972 = vsub.f32 %v722, %v877
        %v973 = vsub.f32 %v723, %v877
        %v974 = vsub.f32 %v724, %v877
        %v975 = vsub.f32 %v725, %v877
        %v976 = vsub.f32 %v726, %v877
        %v977 = vsub.f32 %v727, %v877
        %v978 = vsub.f32 %v728, %v877
        %v979 = vsub.f32 %v729, %v877
        %v980 = vsub.f32 %v730, %v877
        %v981 = vsub.f32 %v731, %v877
        %v982 = vsub.f32 %v732, %v877
        %v983 = vsub.f32 %v733, %v877
        %v984 = vsub.f32 %v734, %v877
        %v985 = vsub.f32 %v735, %v877
        %v986 = vsub.f32 %v736, %v877
        %v987 = vsub.f32 %v737, %v877
        %v988 = vsub.f32 %v738, %v877
        %v989 = vsub.f32 %v739, %v877
        %v990 = vsub.f32 %v740, %v877
        %v991 = vsub.f32 %v741, %v877
        %v992 = vsub.f32 %v742, %v877
        %v993 = vmul.f32 %v961, %v960
        %v994 = vmul.f32 %v962, %v960
        %v995 = vmul.f32 %v963, %v960
        %v996 = vmul.f32 %v964, %v960
        %v997 = vmul.f32 %v965, %v960
        %v998 = vmul.f32 %v966, %v960
        %v999 = vmul.f32 %v967, %v960
        %v1000 = vmul.f32 %v968, %v960
        %v1001 = vmul.f32 %v969, %v960
        %v1002 = vmul.f32 %v970, %v960
        %v1003 = vmul.f32 %v971, %v960
        %v1004 = vmul.f32 %v972, %v960
        %v1005 = vmul.f32 %v973, %v960
        %v1006 = vmul.f32 %v974, %v960
        %v1007 = vmul.f32 %v975, %v960
        %v1008 = vmul.f32 %v976, %v960
        %v1009 = vmul.f32 %v977, %v960
        %v1010 = vmul.f32 %v978, %v960
        %v1011 = vmul.f32 %v979, %v960
        %v1012 = vmul.f32 %v980, %v960
        %v1013 = vmul.f32 %v981, %v960
        %v1014 = vmul.f32 %v982, %v960
        %v1015 = vmul.f32 %v983, %v960
        %v1016 = vmul.f32 %v984, %v960
        %v1017 = vmul.f32 %v985, %v960
        %v1018 = vmul.f32 %v986, %v960
        %v1019 = vmul.f32 %v987, %v960
        %v1020 = vmul.f32 %v988, %v960
        %v1021 = vmul.f32 %v989, %v960
        %v1022 = vmul.f32 %v990, %v960
        %v1023 = vmul.f32 %v991, %v960
        %v1024 = vmul.f32 %v992, %v960
        %v1025 = vmax.f32 %v993, 0.0
        %v1026 = vmax.f32 %v994, 0.0
        %v1027 = vmax.f32 %v995, 0.0
        %v1028 = vmax.f32 %v996, 0.0
        %v1029 = vmax.f32 %v997, 0.0
        %v1030 = vmax.f32 %v998, 0.0
        %v1031 = vmax.f32 %v999, 0.0
        %v1032 = vmax.f32 %v1000, 0.0
        %v1033 = vmax.f32 %v1001, 0.0
        %v1034 = vmax.f32 %v1002, 0.0
        %v1035 = vmax.f32 %v1003, 0.0
        %v1036 = vmax.f32 %v1004, 0.0
        %v1037 = vmax.f32 %v1005, 0.0
        %v1038 = vmax.f32 %v1006, 0.0
        %v1039 = vmax.f32 %v1007, 0.0
        %v1040 = vmax.f32 %v1008, 0.0
        %v1041 = vmax.f32 %v1009, 0.0
        %v1042 = vmax.f32 %v1010, 0.0
        %v1043 = vmax.f32 %v1011, 0.0
        %v1044 = vmax.f32 %v1012, 0.0
        %v1045 = vmax.f32 %v1013, 0.0
        %v1046 = vmax.f32 %v1014, 0.0
        %v1047 = vmax.f32 %v1015, 0.0
        %v1048 = vmax.f32 %v1016, 0.0
        %v1049 = vmax.f32 %v1017, 0.0
        %v1050 = vmax.f32 %v1018, 0.0
        %v1051 = vmax.f32 %v1019, 0.0
        %v1052 = vmax.f32 %v1020, 0.0
        %v1053 = vmax.f32 %v1021, 0.0
        %v1054 = vmax.f32 %v1022, 0.0
        %v1055 = vmax.f32 %v1023, 0.0
        %v1056 = vmax.f32 %v1024, 0.0
        %1057 = vst [vmem:[%s257] sm:$0xff] %v1025
        %1058 = vst [vmem:[%s257 + $0x8] sm:$0xff] %v1026
        %1059 = vst [vmem:[%s257 + $0x10] sm:$0xff] %v1027
        %1060 = vst [vmem:[%s257 + $0x18] sm:$0xff] %v1028
        %1061 = vst [vmem:[%s257 + $0x20] sm:$0xff] %v1029
        %1062 = vst [vmem:[%s257 + $0x28] sm:$0xff] %v1030
        %1063 = vst [vmem:[%s257 + $0x30] sm:$0xff] %v1031
        %1064 = vst [vmem:[%s257 + $0x38] sm:$0xff] %v1032
        %1065 = vst [vmem:[%s257 + $0x40] sm:$0xff] %v1033
        %1066 = vst [vmem:[%s257 + $0x48] sm:$0xff] %v1034
        %1067 = vst [vmem:[%s257 + $0x50] sm:$0xff] %v1035
        %1068 = vst [vmem:[%s257 + $0x58] sm:$0xff] %v1036
        %1069 = vst [vmem:[%s257 + $0x60] sm:$0xff] %v1037
        %1070 = vst [vmem:[%s257 + $0x68] sm:$0xff] %v1038
        %1071 = vst [vmem:[%s257 + $0x70] sm:$0xff] %v1039
        %1072 = vst [vmem:[%s257 + $0x78] sm:$0xff] %v1040
        %1073 = vst [vmem:[%s257 + $0x80] sm:$0xff] %v1041
        %1074 = vst [vmem:[%s257 + $0x88] sm:$0xff] %v1042
        %1075 = vst [vmem:[%s257 + $0x90] sm:$0xff] %v1043
        %1076 = vst [vmem:[%s257 + $0x98] sm:$0xff] %v1044
        %1077 = vst [vmem:[%s257 + $0xa0] sm:$0xff] %v1045
        %1078 = vst [vmem:[%s257 + $0xa8] sm:$0xff] %v1046
        %1079 = vst [vmem:[%s257 + $0xb0] sm:$0xff] %v1047
        %1080 = vst [vmem:[%s257 + $0xb8] sm:$0xff] %v1048
        %1081 = vst [vmem:[%s257 + $0xc0] sm:$0xff] %v1049
        %1082 = vst [vmem:[%s257 + $0xc8] sm:$0xff] %v1050
        %1083 = vst [vmem:[%s257 + $0xd0] sm:$0xff] %v1051
        %1084 = vst [vmem:[%s257 + $0xd8] sm:$0xff] %v1052
        %1085 = vst [vmem:[%s257 + $0xe0] sm:$0xff] %v1053
        %1086 = vst [vmem:[%s257 + $0xe8] sm:$0xff] %v1054
        %1087 = vst [vmem:[%s257 + $0xf0] sm:$0xff] %v1055
        %1088 = vst [vmem:[%s257 + $0xf8] sm:$0xff] %v1056
      $region40: #{generator_forward.8} parent=31 // pred_fallthru
        _
      %s1089 = smul.u32 32, %s19
      %p1090 = scmp.lt.s32.totalorder %s1089, 63
      %s1091 = scalar_select %p1090, %s1089, 63
      %p1092 = scmp.lt.s32.totalorder %s20, 0
      %s1093 = scalar_select %p1092, %s20, 0
      %s1094 = sadd.s32 %s1093, %s1091
      %s1095 = smul.addr %s1094, 8
      %s1096 = scalar_lea.vmem %s3, %s1095
      // Predicated region
      $region41: #{generator_forward.8} parent=31 // pred_check
        %p1097 = pneg %p135
      $region42: #{generator_forward.8} parent=31 // pred_check_branch
        %1099 = sbr.rel (%p1097) target = $region44
      $region43: #{generator_forward.8} parent=31 // pred_region
        %s1100 = smul.u32 32, %s19
      $region44: #{generator_forward.8} parent=31 // pred_fallthru
        _
    $region32: #{generator_forward.8} parent=5 // pred_fallthru
      _
    %p1101 = scmp.le.s32.totalorder 2, %s9
    // Predicated region
    $region45: #{generator_forward.8} parent=5 // pred_check
      %p1102 = pneg %p1101
    $region46: #{generator_forward.8} parent=5 // pred_check_branch
      %1104 = sbr.rel (%p1102) target = $region48
    $region47: #{generator_forward.8} parent=5 // pred_region
      %s1105 = ssub.s32 %s9, 2
      // Predicated region
      $region49: #{generator_forward.8} parent=47 // pred_check
        %p1106 = pneg %p141
      $region50: #{generator_forward.8} parent=47 // pred_check_branch
        %1108 = sbr.rel (%p1106) target = $region52
      $region51: #{generator_forward.8} parent=47 // pred_region
        %s1109 = smul.u32 32, %s22
        %p1110 = scmp.lt.s32.totalorder %s1109, 63
        %s1111 = scalar_select %p1110, %s1109, 63
        %p1112 = scmp.lt.s32.totalorder %s23, 0
        %s1113 = scalar_select %p1112, %s23, 0
        %s1114 = sadd.s32 %s1113, %s1111
        %s1115 = smul.addr %s1114, 8
        %s1116 = scalar_lea.vmem %s3, %s1115
      $region52: #{generator_forward.8} parent=47 // pred_fallthru
        _
    $region48: #{generator_forward.8} parent=5 // pred_fallthru
      _
  $region6: #{generator_forward.8} parent=0 // loop_footer
    %s13 = sadd.s32 1, %s9
  $region7: #{generator_forward.8} parent=0 // loop_footer_branch
    %8 = sbr.rel target = $region3
  $region8: #{generator_forward.8} parent=0 // loop_exit
    _

// kernel: generator_forward.9
$region0: #{generator_forward.9}
  #allocation0 [shape = 'u32[]', space=smem, size = 0x4, offset = 0x4, fixed_abs, tag = 'smem constant byte address 0x4 - core index']
  #allocation1 [shape = 'u32[72,128]{1,0:T(1,128)}', space=vmem, size = 0x9000, scoped, tag = 'internal scratch']
  #allocation2 [shape = 'f32[64,128]{1,0:T(8,128)}', space=vmem, size = 0x8000, scoped, tag = 'scratch operand']
  %s0 = inlined_call_operand.vmem [shape: bf16[128,768], index: 0, kind: input, shape index: {}]
  %s1 = inlined_call_operand.vmem [shape: bf16[768,128], index: 1, kind: input, shape index: {}]
  %s2 = inlined_call_operand.vmem [shape: f32[1,128], index: 2, kind: input, shape index: {}]
  %s3 = inlined_call_operand.vmem [shape: f32[128,128], index: 3, kind: output, shape index: {}]
  %s4 = sld [smem:[#allocation0]]
  $region91: #{generator_forward.9} parent=0
    _
  %s6 = ssub.s32 1, %s4
  %s7 = scalar_select 0, %s6, %s4
  $region1: #{generator_forward.9} parent=0
    #allocation3 [shape = 'u8[65536]{0}', space=vmem, size = 0x10000, scoped, tag = 'input window, operand 0']
    loop: start=0, step=1, limit=8
    $region2: #{generator_forward.9} parent=1 // loop_pre_header
      _
    $region3: #{generator_forward.9} parent=1 // loop_header
      %s9 = sphi 0, %s13
      %p10 = scmp.ge.s32.totalorder %s9, 8
      %s16 = sphi 0, %s35
      %s17 = sphi 0, %s31
      %s18 = sphi 0, %s27
      %s19 = sphi 0, %s16
      %s20 = sphi 0, %s17
      %s21 = sphi 0, %s18
      %s22 = sphi 0, %s19
      %s23 = sphi 0, %s20
      %s24 = sphi 0, %s21
      %s40 = sphi 0, %s42
      %s43 = sphi 0, %s40
      %s44 = sphi 0, %s43
      %s60 = sphi 0, %s44
      %s68 = sphi 0, %s70
      %s71 = sphi 0, %s68
      %s72 = sphi 0, %s71
      %s88 = sphi 0, %s72
      %s94 = sphi 0, %s96
      %s97 = sphi 0, %s94
      %s98 = sphi 0, %s97
      %s114 = sphi 0, %s98
      %s122 = sphi 0, %s124
      %s125 = sphi 0, %s122
      %s126 = sphi 0, %s125
      %s142 = sphi 0, %s126
    $region4: #{generator_forward.9} parent=1 // loop_header_branch
      %12 = sbr.rel (%p10) target = $region8
    $region5: #{generator_forward.9} parent=1 // loop_body
      %s14 = ssub.s32 %s9, 1
      %s15 = ssub.s32 %s9, 2
      %s25 = sadd.s32 1, %s18
      %p26 = scmp.ge.s32.totalorder %s25, 3
      %s27 = scalar_select %p26, 0, %s25
      %s28 = sadd.s32 1, %s17
      %s29 = scalar_select %p26, %s28, %s17
      %p30 = scmp.ge.s32.totalorder %s29, 1
      %s31 = scalar_select %p30, 0, %s29
      %s32 = sadd.s32 1, %s16
      %s33 = scalar_select %p30, %s32, %s16
      %p34 = scmp.ge.s32.totalorder %s33, 2
      %s35 = scalar_select %p34, 0, %s33
      %s36 = ssub.s32 %s16, %s35
      %s37 = ssub.s32 %s18, %s27
      %s38 = sor.u32 %s36, %s37
      %p39 = scmp.eq.s32.totalorder %s38, 0
      %s41 = sadd.s32 %s40, 1
      %s42 = scalar_select %p39, %s40, %s41
      %p45 = pneg %p39
      %p46 = scmp.eq.s32.totalorder %s9, 5
      %p47 = por %p45, %p46
      %p48 = scmp.ne.s32.totalorder %s40, %s43
      %p49 = scmp.eq.s32.totalorder %s9, 0
      %p50 = por %p48, %p49
      %p51 = scmp.ne.s32.totalorder %s40, %s43
      %p52 = scmp.eq.s32.totalorder %s14, 5
      %p53 = por %p51, %p52
      %p54 = scmp.ne.s32.totalorder %s43, %s44
      %p55 = scmp.eq.s32.totalorder %s14, 0
      %p56 = por %p54, %p55
      %p57 = scmp.ne.s32.totalorder %s43, %s44
      %p58 = scmp.eq.s32.totalorder %s15, 5
      %p59 = por %p57, %p58
      %p61 = scmp.ne.s32.totalorder %s44, %s60
      %p62 = scmp.eq.s32.totalorder %s15, 0
      %p63 = por %p61, %p62
      %s64 = ssub.s32 %s18, %s27
      %s65 = ssub.s32 %s17, %s31
      %s66 = sor.u32 %s64, %s65
      %p67 = scmp.eq.s32.totalorder %s66, 0
      %s69 = sadd.s32 %s68, 1
      %s70 = scalar_select %p67, %s68, %s69
      %p73 = pneg %p67
      %p74 = scmp.eq.s32.totalorder %s9, 5
      %p75 = por %p73, %p74
      %p76 = scmp.ne.s32.totalorder %s68, %s71
      %p77 = scmp.eq.s32.totalorder %s9, 0
      %p78 = por %p76, %p77
      %p79 = scmp.ne.s32.totalorder %s68, %s71
      %p80 = scmp.eq.s32.totalorder %s14, 5
      %p81 = por %p79, %p80
      %p82 = scmp.ne.s32.totalorder %s71, %s72
      %p83 = scmp.eq.s32.totalorder %s14, 0
      %p84 = por %p82, %p83
      %p85 = scmp.ne.s32.totalorder %s71, %s72
      %p86 = scmp.eq.s32.totalorder %s15, 5
      %p87 = por %p85, %p86
      %p89 = scmp.ne.s32.totalorder %s72, %s88
      %p90 = scmp.eq.s32.totalorder %s15, 0
      %p91 = por %p89, %p90
      %s92 = ssub.s32 %s17, %s31
      %p93 = scmp.eq.s32.totalorder %s92, 0
      %s95 = sadd.s32 %s94, 1
      %s96 = scalar_select %p93, %s94, %s95
      %p99 = pneg %p93
      %p100 = scmp.eq.s32.totalorder %s9, 5
      %p101 = por %p99, %p100
      %p102 = scmp.ne.s32.totalorder %s94, %s97
      %p103 = scmp.eq.s32.totalorder %s9, 0
      %p104 = por %p102, %p103
      %p105 = scmp.ne.s32.totalorder %s94, %s97
      %p106 = scmp.eq.s32.totalorder %s14, 5
      %p107 = por %p105, %p106
      %p108 = scmp.ne.s32.totalorder %s97, %s98
      %p109 = scmp.eq.s32.totalorder %s14, 0
      %p110 = por %p108, %p109
      %p111 = scmp.ne.s32.totalorder %s97, %s98
      %p112 = scmp.eq.s32.totalorder %s15, 5
      %p113 = por %p111, %p112
      %p115 = scmp.ne.s32.totalorder %s98, %s114
      %p116 = scmp.eq.s32.totalorder %s15, 0
      %p117 = por %p115, %p116
      %s118 = ssub.s32 %s16, %s35
      %s119 = ssub.s32 %s17, %s31
      %s120 = sor.u32 %s118, %s119
      %p121 = scmp.eq.s32.totalorder %s120, 0
      %s123 = sadd.s32 %s122, 1
      %s124 = scalar_select %p121, %s122, %s123
      %p127 = pneg %p121
      %p128 = scmp.eq.s32.totalorder %s9, 5
      %p129 = por %p127, %p128
      %p130 = scmp.ne.s32.totalorder %s122, %s125
      %p131 = scmp.eq.s32.totalorder %s9, 0
      %p132 = por %p130, %p131
      %p133 = scmp.ne.s32.totalorder %s122, %s125
      %p134 = scmp.eq.s32.totalorder %s14, 5
      %p135 = por %p133, %p134
      %p136 = scmp.ne.s32.totalorder %s125, %s126
      %p137 = scmp.eq.s32.totalorder %s14, 0
      %p138 = por %p136, %p137
      %p139 = scmp.ne.s32.totalorder %s125, %s126
      %p140 = scmp.eq.s32.totalorder %s15, 5
      %p141 = por %p139, %p140
      %p143 = scmp.ne.s32.totalorder %s126, %s142
      %p144 = scmp.eq.s32.totalorder %s15, 0
      %p145 = por %p143, %p144
      %p146 = scmp.le.s32.totalorder 1, %s9
      %p147 = scmp.lt.s32.totalorder %s9, 7
      %p148 = pnand %p146, %p147
      %p149 = pneg %p148
      // Predicated region
      $region9: #{generator_forward.9} parent=5 // pred_check
        _
      $region10: #{generator_forward.9} parent=5 // pred_check_branch
        %151 = sbr.rel (%p148) target = $region12
      $region11: #{generator_forward.9} parent=5 // pred_region
        %s152 = ssub.s32 %s9, 1
        // Predicated region
        $region13: #{generator_forward.9} parent=11 // pred_check
          %p153 = pneg %p110
        $region14: #{generator_forward.9} parent=11 // pred_check_branch
          %155 = sbr.rel (%p153) target = $region16
        $region15: #{generator_forward.9} parent=11 // pred_region
          %p156 = scmp.lt.s32.totalorder %s20, 0
          %s157 = scalar_select %p156, %s20, 0
          %s158 = scalar_lea.vmem %s2, %s157
        $region16: #{generator_forward.9} parent=11 // pred_fallthru
          _
      $region12: #{generator_forward.9} parent=5 // pred_fallthru
        _
      %p159 = scmp.lt.s32.totalorder %s9, 6
      // Predicated region
      $region17: #{generator_forward.9} parent=5 // pred_check
        %p160 = pneg %p159
      $region18: #{generator_forward.9} parent=5 // pred_check_branch
        %162 = sbr.rel (%p160) target = $region20
      $region19: #{generator_forward.9} parent=5 // pred_region
        // Predicated region
        $region21: #{generator_forward.9} parent=19 // pred_check
          %p163 = pneg %p50
        $region22: #{generator_forward.9} parent=19 // pred_check_branch
          %165 = sbr.rel (%p163) target = $region24
        $region23: #{generator_forward.9} parent=19 // pred_region
          %s166 = sand.u32 %s40, 1
          %s167 = sand.u32 %s40, 1
          %s168 = smul.addr %s167, 64
          %s169 = scalar_lea.vmem [#allocation3], %s168
          %s170 = smul.u32 8, %s16
          %s171 = smul.u32 2, %s18
          %s172 = smul.addr %s170, 6
          %s173 = sadd.s32 %s171, %s172
          %s174 = smul.addr %s173, 4
          %s175 = scalar_lea.vmem %s0, %s174
          // Predicated region
          $region25: #{generator_forward.9} parent=23 // pred_check
            _
          $region26: #{generator_forward.9} parent=23 // pred_check_branch
            %177 = sbr.rel (0) target = $region28
          $region27: #{generator_forward.9} parent=23 // pred_region
            // Predicated region
            $region29: #{generator_forward.9} parent=27 // pred_check
              _
            $region30: #{generator_forward.9} parent=27 // pred_check_branch
              %179 = sbr.rel (0) target = $region32
            $region31: #{generator_forward.9} parent=27 // pred_region
              // Predicated region
              $region44: #{generator_forward.9} parent=31 // pred_check
                _
              $region45: #{generator_forward.9} parent=31 // pred_check_branch
                %209 = sbr.rel (0) target = $region47
              $region46: #{generator_forward.9} parent=31 // pred_region
                loop: start=0, step=1, limit=1
                $region48: #{generator_forward.9} parent=46 // loop_pre_header
                  _
                $region49: #{generator_forward.9} parent=46 // loop_header
                  %s211 = sphi 0, %s215
                  %p212 = scmp.ge.s32.totalorder %s211, 1
                  %s216 = sphi %s175, %s175
                  %s217 = sphi %s169, %s169
                $region50: #{generator_forward.9} parent=46 // loop_header_branch
                  %214 = sbr.rel (%p212) target = $region54
                $region51: #{generator_forward.9} parent=46 // loop_body
                  %v218 = vld [vmem:[%s216] sm:$0xff]
                  %219 = vst [vmem:[%s217] sm:$0xff] %v218
                  %v220 = vld [vmem:[%s216 + $0x18] sm:$0xff]
                  %221 = vst [vmem:[%s217 + $0x8] sm:$0xff] %v220
                  %v222 = vld [vmem:[%s216 + $0x30] sm:$0xff]
                  %223 = vst [vmem:[%s217 + $0x10] sm:$0xff] %v222
                  %v224 = vld [vmem:[%s216 + $0x48] sm:$0xff]
                  %225 = vst [vmem:[%s217 + $0x18] sm:$0xff] %v224
                  %v226 = vld [vmem:[%s216 + $0x60] sm:$0xff]
                  %227 = vst [vmem:[%s217 + $0x20] sm:$0xff] %v226
                  %v228 = vld [vmem:[%s216 + $0x78] sm:$0xff]
                  %229 = vst [vmem:[%s217 + $0x28] sm:$0xff] %v228
                  %v230 = vld [vmem:[%s216 + $0x90] sm:$0xff]
                  %231 = vst [vmem:[%s217 + $0x30] sm:$0xff] %v230
                  %v232 = vld [vmem:[%s216 + $0xa8] sm:$0xff]
                  %233 = vst [vmem:[%s217 + $0x38] sm:$0xff] %v232
                $region52: #{generator_forward.9} parent=46 // loop_footer
                  %s215 = sadd.s32 1, %s211
                $region53: #{generator_forward.9} parent=46 // loop_footer_branch
                  %210 = sbr.rel target = $region49
                $region54: #{generator_forward.9} parent=46 // loop_exit
                  _
              $region47: #{generator_forward.9} parent=31 // pred_fallthru
                _
              // Predicated region
              $region55: #{generator_forward.9} parent=31 // pred_check
                _
              $region56: #{generator_forward.9} parent=31 // pred_check_branch
                %235 = sbr.rel target = $region58
              $region57: #{generator_forward.9} parent=31 // pred_region
                _
              $region58: #{generator_forward.9} parent=31 // pred_fallthru
                _
            $region32: #{generator_forward.9} parent=27 // pred_fallthru
              _
            // Predicated region
            $region33: #{generator_forward.9} parent=27 // pred_check
              _
            $region34: #{generator_forward.9} parent=27 // pred_check_branch
              %181 = sbr.rel target = $region36
            $region35: #{generator_forward.9} parent=27 // pred_region
              %s183 = ssub.s32 256, 1
              loop: start=0, step=1, limit=1
              $region37: #{generator_forward.9} parent=35 // loop_pre_header
                _
              $region38: #{generator_forward.9} parent=35 // loop_header
                %s185 = sphi 0, %s189
                %p186 = scmp.ge.s32.totalorder %s185, 1
                %s190 = sphi %s175, %s175
                %s191 = sphi %s169, %s169
              $region39: #{generator_forward.9} parent=35 // loop_header_branch
                %188 = sbr.rel (%p186) target = $region43
              $region40: #{generator_forward.9} parent=35 // loop_body
                %v192 = vld [vmem:[%s190] sm:%s183]
                %193 = vst [vmem:[%s191] sm:%s183] %v192
                %v194 = vld [vmem:[%s190 + $0x18] sm:%s183]
                %195 = vst [vmem:[%s191 + $0x8] sm:%s183] %v194
                %v196 = vld [vmem:[%s190 + $0x30] sm:%s183]
                %197 = vst [vmem:[%s191 + $0x10] sm:%s183] %v196
                %v198 = vld [vmem:[%s190 + $0x48] sm:%s183]
                %199 = vst [vmem:[%s191 + $0x18] sm:%s183] %v198
                %v200 = vld [vmem:[%s190 + $0x60] sm:%s183]
                %201 = vst [vmem:[%s191 + $0x20] sm:%s183] %v200
                %v202 = vld [vmem:[%s190 + $0x78] sm:%s183]
                %203 = vst [vmem:[%s191 + $0x28] sm:%s183] %v202
                %v204 = vld [vmem:[%s190 + $0x90] sm:%s183]
                %205 = vst [vmem:[%s191 + $0x30] sm:%s183] %v204
                %v206 = vld [vmem:[%s190 + $0xa8] sm:%s183]
                %207 = vst [vmem:[%s191 + $0x38] sm:%s183] %v206
              $region41: #{generator_forward.9} parent=35 // loop_footer
                %s189 = sadd.s32 1, %s185
              $region42: #{generator_forward.9} parent=35 // loop_footer_branch
                %184 = sbr.rel target = $region38
              $region43: #{generator_forward.9} parent=35 // loop_exit
                _
            $region36: #{generator_forward.9} parent=27 // pred_fallthru
              _
          $region28: #{generator_forward.9} parent=23 // pred_fallthru
            _
          %236 = vnop
        $region24: #{generator_forward.9} parent=19 // pred_fallthru
          _
        // Predicated region
        $region59: #{generator_forward.9} parent=19 // pred_check
          %p237 = pneg %p78
        $region60: #{generator_forward.9} parent=19 // pred_check_branch
          %239 = sbr.rel (%p237) target = $region62
        $region61: #{generator_forward.9} parent=19 // pred_region
          %s240 = smul.u32 32, %s18
          %p241 = scmp.lt.s32.totalorder %s240, 95
          %s242 = scalar_select %p241, %s240, 95
          %p243 = scmp.lt.s32.totalorder %s17, 0
          %s244 = scalar_select %p243, %s17, 0
          %s245 = sadd.s32 %s244, %s242
          %s246 = smul.addr %s245, 4
          %s247 = scalar_lea.vmem %s1, %s246
          %s248 = smul.u32 32, %s18
        $region62: #{generator_forward.9} parent=19 // pred_fallthru
          _
      $region20: #{generator_forward.9} parent=5 // pred_fallthru
        _
      %p249 = scmp.le.s32.totalorder 1, %s9
      %p250 = scmp.lt.s32.totalorder %s9, 7
      %p251 = pnand %p249, %p250
      %p252 = pneg %p251
      // Predicated region
      $region63: #{generator_forward.9} parent=5 // pred_check
        _
      $region64: #{generator_forward.9} parent=5 // pred_check_branch
        %254 = sbr.rel (%p251) target = $region66
      $region65: #{generator_forward.9} parent=5 // pred_region
        %s255 = ssub.s32 %s9, 1
        %s256 = sand.u32 %s43, 1
        %s257 = sand.u32 %s43, 1
        %s258 = smul.addr %s257, 64
        %s259 = scalar_lea.vmem [#allocation3], %s258
        // Predicated region
        $region67: #{generator_forward.9} parent=65 // pred_check
          %p260 = pneg %p56
        $region68: #{generator_forward.9} parent=65 // pred_check_branch
          %262 = sbr.rel (%p260) target = $region70
        $region69: #{generator_forward.9} parent=65 // pred_region
          _
        $region70: #{generator_forward.9} parent=65 // pred_fallthru
          _
        %s263 = sand.u32 %s43, 1
        %s264 = sand.u32 %s43, 1
        %s265 = smul.addr %s264, 64
        %s266 = scalar_lea.vmem [#allocation3], %s265
        %p267 = pneg %p56
        %p268 = pneg %p53
        %s269 = smul.u32 32, %s21
        %p270 = scmp.lt.s32.totalorder %s269, 95
        %s271 = scalar_select %p270, %s269, 95
        %p272 = scmp.lt.s32.totalorder %s20, 0
        %s273 = scalar_select %p272, %s20, 0
        %s274 = sadd.s32 %s273, %s271
        %s275 = smul.addr %s274, 4
        %s276 = scalar_lea.vmem %s1, %s275
        %p277 = pneg %p84
        %p278 = pneg %p81
        %p279 = scmp.lt.s32.totalorder %s20, 0
        %s280 = scalar_select %p279, %s20, 0
        %s281 = scalar_lea.vmem %s2, %s280
        %p282 = pneg %p110
        %p283 = pneg %p107
        %p284 = pneg %p138
        %p285 = pneg %p135
        %s286 = smul.u32 8, %s19
        %p287 = scmp.lt.s32.totalorder %s286, 15
        %s288 = scalar_select %p287, %s286, 15
        %p289 = scmp.lt.s32.totalorder %s20, 0
        %s290 = scalar_select %p289, %s20, 0
        %s291 = sadd.s32 %s290, %s288
        %s292 = smul.addr %s291, 8
        %s293 = scalar_lea.vmem %s3, %s292
        %s294 = smul.u32 8, %s19
        %s295 = smul.u32 2, %s21
        %s296 = smul.u32 32, %s21
        %p297 = scmp.lt.s32.totalorder %s296, 95
        %s298 = scalar_select %p297, %s296, 95
        %p299 = scmp.lt.s32.totalorder %s20, 0
        %s300 = scalar_select %p299, %s20, 0
        %s301 = sadd.s32 %s300, %s298
        %s302 = smul.addr %s301, 4
        %s303 = scalar_lea.vmem %s1, %s302
        %s304 = smul.u32 32, %s21
        %p305 = scmp.lt.s32.totalorder %s20, 0
        %s306 = scalar_select %p305, %s20, 0
        %s307 = scalar_lea.vmem %s2, %s306
        %s308 = smul.u32 8, %s19
        %p309 = scmp.lt.s32.totalorder %s308, 15
        %s310 = scalar_select %p309, %s308, 15
        %p311 = scmp.lt.s32.totalorder %s20, 0
        %s312 = scalar_select %p311, %s20, 0
        %s313 = sadd.s32 %s312, %s310
        %s314 = smul.addr %s313, 8
        %s315 = scalar_lea.vmem %s3, %s314
        %s316 = smul.u32 8, %s19
        %p317 = scmp.eq.s32.totalorder %s21, 0
        // Predicated region
        $region71: #{generator_forward.9} parent=65 // pred_check
          %p318 = pneg %p317
        $region72: #{generator_forward.9} parent=65 // pred_check_branch
          %320 = sbr.rel (%p318) target = $region74
        $region73: #{generator_forward.9} parent=65 // pred_region
          %321 = vst [vmem:[#allocation2] sm:$0xff] 0.0
          %322 = vst [vmem:[#allocation2 + $0x8] sm:$0xff] 0.0
          %323 = vst [vmem:[#allocation2 + $0x10] sm:$0xff] 0.0
          %324 = vst [vmem:[#allocation2 + $0x18] sm:$0xff] 0.0
          %325 = vst [vmem:[#allocation2 + $0x20] sm:$0xff] 0.0
          %326 = vst [vmem:[#allocation2 + $0x28] sm:$0xff] 0.0
          %327 = vst [vmem:[#allocation2 + $0x30] sm:$0xff] 0.0
          %328 = vst [vmem:[#allocation2 + $0x38] sm:$0xff] 0.0
        $region74: #{generator_forward.9} parent=65 // pred_fallthru
          _
        %v329 = vld [vmem:[#allocation2] sm:$0xff]
        %v330 = vld [vmem:[#allocation2 + $0x8] sm:$0xff]
        %v331 = vld [vmem:[#allocation2 + $0x10] sm:$0xff]
        %v332 = vld [vmem:[#allocation2 + $0x18] sm:$0xff]
        %v333 = vld [vmem:[#allocation2 + $0x20] sm:$0xff]
        %v334 = vld [vmem:[#allocation2 + $0x28] sm:$0xff]
        %v335 = vld [vmem:[#allocation2 + $0x30] sm:$0xff]
        %v336 = vld [vmem:[#allocation2 + $0x38] sm:$0xff]
        %v337 = vld [vmem:[%s259] sm:$0xff]
        %v338 = vld [vmem:[%s259 + $0x8] sm:$0xff]
        %v339 = vld [vmem:[%s259 + $0x10] sm:$0xff]
        %v340 = vld [vmem:[%s259 + $0x18] sm:$0xff]
        %v341 = vld [vmem:[%s259 + $0x20] sm:$0xff]
        %v342 = vld [vmem:[%s259 + $0x28] sm:$0xff]
        %v343 = vld [vmem:[%s259 + $0x30] sm:$0xff]
        %v344 = vld [vmem:[%s259 + $0x38] sm:$0xff]
        %v345 = vld [vmem:[%s303] sm:$0xf]
        %v346 = vld [vmem:[%s303 + $0x4] sm:$0xf]
        %v347 = vld [vmem:[%s303 + $0x8] sm:$0xf]
        %v348 = vld [vmem:[%s303 + $0xc] sm:$0xf]
        %v349 = vld [vmem:[%s303 + $0x10] sm:$0xf]
        %v350 = vld [vmem:[%s303 + $0x14] sm:$0xf]
        %v351 = vld [vmem:[%s303 + $0x18] sm:$0xf]
        %v352 = vld [vmem:[%s303 + $0x1c] sm:$0xf]
        %v353 = vld [vmem:[%s303 + $0x20] sm:$0xf]
        %v354 = vld [vmem:[%s303 + $0x24] sm:$0xf]
        %v355 = vld [vmem:[%s303 + $0x28] sm:$0xf]
        %v356 = vld [vmem:[%s303 + $0x2c] sm:$0xf]
        %v357 = vld [vmem:[%s303 + $0x30] sm:$0xf]
        %v358 = vld [vmem:[%s303 + $0x34] sm:$0xf]
        %v359 = vld [vmem:[%s303 + $0x38] sm:$0xf]
        %v360 = vld [vmem:[%s303 + $0x3c] sm:$0xf]
        %v361 = vld [vmem:[%s303 + $0x40] sm:$0xf]
        %v362 = vld [vmem:[%s303 + $0x44] sm:$0xf]
        %v363 = vld [vmem:[%s303 + $0x48] sm:$0xf]
        %v364 = vld [vmem:[%s303 + $0x4c] sm:$0xf]
        %v365 = vld [vmem:[%s303 + $0x50] sm:$0xf]
        %v366 = vld [vmem:[%s303 + $0x54] sm:$0xf]
        %v367 = vld [vmem:[%s303 + $0x58] sm:$0xf]
        %v368 = vld [vmem:[%s303 + $0x5c] sm:$0xf]
        %v369 = vld [vmem:[%s303 + $0x60] sm:$0xf]
        %v370 = vld [vmem:[%s303 + $0x64] sm:$0xf]
        %v371 = vld [vmem:[%s303 + $0x68] sm:$0xf]
        %v372 = vld [vmem:[%s303 + $0x6c] sm:$0xf]
        %v373 = vld [vmem:[%s303 + $0x70] sm:$0xf]
        %v374 = vld [vmem:[%s303 + $0x74] sm:$0xf]
        %v375 = vld [vmem:[%s303 + $0x78] sm:$0xf]
        %v376 = vld [vmem:[%s303 + $0x7c] sm:$0xf]
        %v385 = vunpack.c.l.b16 %v337
        %v386 = vunpack.c.h.b16 %v337
        %v387 = vunpack.c.l.b16 %v338
        %v388 = vunpack.c.h.b16 %v338
        %v389 = vunpack.c.l.b16 %v339
        %v390 = vunpack.c.h.b16 %v339
        %v391 = vunpack.c.l.b16 %v340
        %v392 = vunpack.c.h.b16 %v340
        %v393 = vunpack.c.l.b16 %v341
        %v394 = vunpack.c.h.b16 %v341
        %v395 = vunpack.c.l.b16 %v342
        %v396 = vunpack.c.h.b16 %v342
        %v397 = vunpack.c.l.b16 %v343
        %v398 = vunpack.c.h.b16 %v343
        %v399 = vunpack.c.l.b16 %v344
        %v400 = vunpack.c.h.b16 %v344
        %v401 = vpack.c.b16 %v387, %v385
        %v402 = vpack.c.b16 %v388, %v386
        %v403 = vpack.c.b16 %v391, %v389
        %v404 = vpack.c.b16 %v392, %v390
        %v405 = vpack.c.b16 %v395, %v393
        %v406 = vpack.c.b16 %v396, %v394
        %v407 = vpack.c.b16 %v399, %v397
        %v408 = vpack.c.b16 %v400, %v398
        %v449 = vunpack.c.l.b16 %v345
        %v450 = vunpack.c.l.b16 %v346
        %v451 = vunpack.c.l.b16 %v347
        %v452 = vunpack.c.l.b16 %v348
        %v453 = vunpack.c.l.b16 %v349
        %v454 = vunpack.c.l.b16 %v350
        %v455 = vunpack.c.l.b16 %v351
        %v456 = vunpack.c.l.b16 %v352
        %v457 = vunpack.c.l.b16 %v353
        %v458 = vunpack.c.l.b16 %v354
        %v459 = vunpack.c.l.b16 %v355
        %v460 = vunpack.c.l.b16 %v356
        %v461 = vunpack.c.l.b16 %v357
        %v462 = vunpack.c.l.b16 %v358
        %v463 = vunpack.c.l.b16 %v359
        %v464 = vunpack.c.l.b16 %v360
        %v465 = vunpack.c.l.b16 %v361
        %v466 = vunpack.c.l.b16 %v362
        %v467 = vunpack.c.l.b16 %v363
        %v468 = vunpack.c.l.b16 %v364
        %v469 = vunpack.c.l.b16 %v365
        %v470 = vunpack.c.l.b16 %v366
        %v471 = vunpack.c.l.b16 %v367
        %v472 = vunpack.c.l.b16 %v368
        %v473 = vunpack.c.l.b16 %v369
        %v474 = vunpack.c.l.b16 %v370
        %v475 = vunpack.c.l.b16 %v371
        %v476 = vunpack.c.l.b16 %v372
        %v477 = vunpack.c.l.b16 %v373
        %v478 = vunpack.c.l.b16 %v374
        %v479 = vunpack.c.l.b16 %v375
        %v480 = vunpack.c.l.b16 %v376
        %v481 = vpack.c.b16 %v450, %v449
        %v482 = vpack.c.b16 %v452, %v451
        %v483 = vpack.c.b16 %v454, %v453
        %v484 = vpack.c.b16 %v456, %v455
        %v485 = vpack.c.b16 %v458, %v457
        %v486 = vpack.c.b16 %v460, %v459
        %v487 = vpack.c.b16 %v462, %v461
        %v488 = vpack.c.b16 %v464, %v463
        %v489 = vpack.c.b16 %v466, %v465
        %v490 = vpack.c.b16 %v468, %v467
        %v491 = vpack.c.b16 %v470, %v469
        %v492 = vpack.c.b16 %v472, %v471
        %v493 = vpack.c.b16 %v474, %v473
        %v494 = vpack.c.b16 %v476, %v475
        %v495 = vpack.c.b16 %v478, %v477
        %v496 = vpack.c.b16 %v480, %v479
        %513 = vmatpush.bf16.msra.mxu0 %v488
        %514 = vmatpush.bf16.msra.mxu0 %v487
        %515 = vmatpush.bf16.msra.mxu0 %v486
        %516 = vmatpush.bf16.msra.mxu0 %v485
        %517 = vmatpush.bf16.msra.mxu0 %v484
        %518 = vmatpush.bf16.msra.mxu0 %v483
        %519 = vmatpush.bf16.msra.mxu0 %v482
        %520 = vmatpush.bf16.msra.mxu0 %v481
        %521 = vmatmul.bf16.gmra.mxu0 %v401
        %v522 = vpop.f32.mrf.mxu0
        %v523 = vadd.f32 0.0, %v522
        %v524 = vpop.f32.mrf.mxu0
        %v525 = vadd.f32 0.0, %v524
        %526 = vmatmul.bf16.gmra.mxu0 %v403
        %v527 = vpop.f32.mrf.mxu0
        %v528 = vadd.f32 0.0, %v527
        %v529 = vpop.f32.mrf.mxu0
        %v530 = vadd.f32 0.0, %v529
        %531 = vmatmul.bf16.gmra.mxu0 %v405
        %v532 = vpop.f32.mrf.mxu0
        %v533 = vadd.f32 0.0, %v532
        %v534 = vpop.f32.mrf.mxu0
        %v535 = vadd.f32 0.0, %v534
        %536 = vmatmul.bf16.gmra.mxu0 %v407
        %v537 = vpop.f32.mrf.mxu0
        %v538 = vadd.f32 0.0, %v537
        %v539 = vpop.f32.mrf.mxu0
        %v540 = vadd.f32 0.0, %v539
        %541 = vdwg.mxu0
        %542 = vmatpush.bf16.msra.mxu0 %v496
        %543 = vmatpush.bf16.msra.mxu0 %v495
        %544 = vmatpush.bf16.msra.mxu0 %v494
        %545 = vmatpush.bf16.msra.mxu0 %v493
        %546 = vmatpush.bf16.msra.mxu0 %v492
        %547 = vmatpush.bf16.msra.mxu0 %v491
        %548 = vmatpush.bf16.msra.mxu0 %v490
        %549 = vmatpush.bf16.msra.mxu0 %v489
        %550 = vmatmul.bf16.gmra.mxu0 %v402
        %v551 = vpop.f32.mrf.mxu0
        %v552 = vadd.f32 %v523, %v551
        %v553 = vpop.f32.mrf.mxu0
        %v554 = vadd.f32 %v525, %v553
        %555 = vmatmul.bf16.gmra.mxu0 %v404
        %v556 = vpop.f32.mrf.mxu0
        %v557 = vadd.f32 %v528, %v556
        %v558 = vpop.f32.mrf.mxu0
        %v559 = vadd.f32 %v530, %v558
        %560 = vmatmul.bf16.gmra.mxu0 %v406
        %v561 = vpop.f32.mrf.mxu0
        %v562 = vadd.f32 %v533, %v561
        %v563 = vpop.f32.mrf.mxu0
        %v564 = vadd.f32 %v535, %v563
        %565 = vmatmul.bf16.gmra.mxu0 %v408
        %v566 = vpop.f32.mrf.mxu0
        %v567 = vadd.f32 %v538, %v566
        %v568 = vpop.f32.mrf.mxu0
        %v569 = vadd.f32 %v540, %v568
        %570 = vdwg.mxu0
        %v571 = vadd.f32 %v329, %v552
        %v572 = vadd.f32 %v330, %v554
        %v573 = vadd.f32 %v331, %v557
        %v574 = vadd.f32 %v332, %v559
        %v575 = vadd.f32 %v333, %v562
        %v576 = vadd.f32 %v334, %v564
        %v577 = vadd.f32 %v335, %v567
        %v578 = vadd.f32 %v336, %v569
        %579 = vst [vmem:[#allocation2] sm:$0xff] %v571
        %580 = vst [vmem:[#allocation2 + $0x8] sm:$0xff] %v572
        %581 = vst [vmem:[#allocation2 + $0x10] sm:$0xff] %v573
        %582 = vst [vmem:[#allocation2 + $0x18] sm:$0xff] %v574
        %583 = vst [vmem:[#allocation2 + $0x20] sm:$0xff] %v575
        %584 = vst [vmem:[#allocation2 + $0x28] sm:$0xff] %v576
        %585 = vst [vmem:[#allocation2 + $0x30] sm:$0xff] %v577
        %586 = vst [vmem:[#allocation2 + $0x38] sm:$0xff] %v578
        %p587 = scmp.eq.s32.totalorder %s21, 2
        // Predicated region
        $region75: #{generator_forward.9} parent=65 // pred_check
          %p588 = pneg %p587
        $region76: #{generator_forward.9} parent=65 // pred_check_branch
          %590 = sbr.rel (%p588) target = $region78
        $region77: #{generator_forward.9} parent=65 // pred_region
          %v591 = vld [vmem:[#allocation2] sm:$0xff]
          %v592 = vld [vmem:[#allocation2 + $0x8] sm:$0xff]
          %v593 = vld [vmem:[#allocation2 + $0x10] sm:$0xff]
          %v594 = vld [vmem:[#allocation2 + $0x18] sm:$0xff]
          %v595 = vld [vmem:[#allocation2 + $0x20] sm:$0xff]
          %v596 = vld [vmem:[#allocation2 + $0x28] sm:$0xff]
          %v597 = vld [vmem:[#allocation2 + $0x30] sm:$0xff]
          %v598 = vld [vmem:[#allocation2 + $0x38] sm:$0xff]
          %v599 = vld [vmem:[%s307] sm:$0x1]
          %v601 = vperm.slane %v599, 0
          %v603 = vadd.f32 %v591, %v601
          %v604 = vadd.f32 %v592, %v601
          %v605 = vadd.f32 %v593, %v601
          %v606 = vadd.f32 %v594, %v601
          %v607 = vadd.f32 %v595, %v601
          %v608 = vadd.f32 %v596, %v601
          %v609 = vadd.f32 %v597, %v601
          %v610 = vadd.f32 %v598, %v601
          %v611 = vlaneseq
          %v612 = vshrl.u32 %v611, 7
          %v613 = vadd.s32 %v612, 8
          %v614 = vadd.s32 %v612, 16
          %v615 = vadd.s32 %v612, 24
          %v616 = vadd.s32 %v612, 32
          %v617 = vadd.s32 %v612, 40
          %v618 = vadd.s32 %v612, 48
          %v619 = vadd.s32 %v612, 56
          %vm620 = vcmp.lt.s32.totalorder %v612, 64
          %vm621 = vcmp.lt.s32.totalorder %v613, 64
          %vm622 = vcmp.lt.s32.totalorder %v614, 64
          %vm623 = vcmp.lt.s32.totalorder %v615, 64
          %vm624 = vcmp.lt.s32.totalorder %v616, 64
          %vm625 = vcmp.lt.s32.totalorder %v617, 64
          %vm626 = vcmp.lt.s32.totalorder %v618, 64
          %vm627 = vcmp.lt.s32.totalorder %v619, 64
          %v628 = vsel %vm620, %v603, 0.0
          %v629 = vsel %vm621, %v604, 0.0
          %v630 = vsel %vm622, %v605, 0.0
          %v631 = vsel %vm623, %v606, 0.0
          %v632 = vsel %vm624, %v607, 0.0
          %v633 = vsel %vm625, %v608, 0.0
          %v634 = vsel %vm626, %v609, 0.0
          %v635 = vsel %vm627, %v610, 0.0
          %v636 = vadd.f32 %v628, %v629
          %v637 = vadd.f32 %v636, %v630
          %v638 = vadd.f32 %v637, %v631
          %v639 = vadd.f32 %v638, %v632
          %v640 = vadd.f32 %v639, %v633
          %v641 = vadd.f32 %v640, %v634
          %v642 = vadd.f32 %v641, %v635
          %v643 = vrot.slane %v642, 4
          %v644 = vadd.f32 %v642, %v643
          %v645 = vrot.slane %v644, 2
          %v646 = vadd.f32 %v644, %v645
          %v647 = vrot.slane %v646, 1
          %v648 = vadd.f32 %v646, %v647
          %v649 = vmul.f32 %v648, 0.015625
          %v650 = vmul.f32 %v628, %v628
          %v651 = vmul.f32 %v629, %v629
          %v652 = vmul.f32 %v630, %v630
          %v653 = vmul.f32 %v631, %v631
          %v654 = vmul.f32 %v632, %v632
          %v655 = vmul.f32 %v633, %v633
          %v656 = vmul.f32 %v634, %v634
          %v657 = vmul.f32 %v635, %v635
          %v658 = vadd.f32 %v650, %v651
          %v659 = vadd.f32 %v658, %v652
          %v660 = vadd.f32 %v659, %v653
          %v661 = vadd.f32 %v660, %v654
          %v662 = vadd.f32 %v661, %v655
          %v663 = vadd.f32 %v662, %v656
          %v664 = vadd.f32 %v663, %v657
          %v665 = vrot.slane %v664, 4
          %v666 = vadd.f32 %v664, %v665
          %v667 = vrot.slane %v666, 2
          %v668 = vadd.f32 %v666, %v667
          %v669 = vrot.slane %v668, 1
          %v670 = vadd.f32 %v668, %v669
          %v671 = vmul.f32 %v670, 0.015625
          %v672 = vmul.f32 %v649, %v649
          %v673 = vsub.f32 %v671, %v672
          %v674 = vadd.f32 %v673, 1e-05
          %v675 = vrsqrt.pop %v674
          %v676 = vmul.f32 %v675, %v674
          %v677 = vmul.f32 %v676, %v675
          %v678 = vmul.f32 0.5, %v677
          %v679 = vsub.f32 1.5, %v678
          %v680 = vmul.f32 %v675, %v679
          %vm681 = vweird.f32 %v674
          %vm682 = vweird.f32 %v675
          %vm683 = vmor %vm681, %vm682
          %v684 = vsel %vm683, %v675, %v680
          %v685 = vsub.f32 %v603, %v649
          %v686 = vsub.f32 %v604, %v649
          %v687 = vsub.f32 %v605, %v649
          %v688 = vsub.f32 %v606, %v649
          %v689 = vsub.f32 %v607, %v649
          %v690 = vsub.f32 %v608, %v649
          %v691 = vsub.f32 %v609, %v649
          %v692 = vsub.f32 %v610, %v649
          %v693 = vmul.f32 %v685, %v684
          %v694 = vmul.f32 %v686, %v684
          %v695 = vmul.f32 %v687, %v684
          %v696 = vmul.f32 %v688, %v684
          %v697 = vmul.f32 %v689, %v684
          %v698 = vmul.f32 %v690, %v684
          %v699 = vmul.f32 %v691, %v684
          %v700 = vmul.f32 %v692, %v684
          %v701 = vmax.f32 %v693, 0.0
          %v702 = vmax.f32 %v694, 0.0
          %v703 = vmax.f32 %v695, 0.0
          %v704 = vmax.f32 %v696, 0.0
          %v705 = vmax.f32 %v697, 0.0
          %v706 = vmax.f32 %v698, 0.0
          %v707 = vmax.f32 %v699, 0.0
          %v708 = vmax.f32 %v700, 0.0
          %709 = vst [vmem:[%s315] sm:$0xff] %v701
          %710 = vst [vmem:[%s315 + $0x8] sm:$0xff] %v702
          %711 = vst [vmem:[%s315 + $0x10] sm:$0xff] %v703
          %712 = vst [vmem:[%s315 + $0x18] sm:$0xff] %v704
          %713 = vst [vmem:[%s315 + $0x20] sm:$0xff] %v705
          %714 = vst [vmem:[%s315 + $0x28] sm:$0xff] %v706
          %715 = vst [vmem:[%s315 + $0x30] sm:$0xff] %v707
          %716 = vst [vmem:[%s315 + $0x38] sm:$0xff] %v708
        $region78: #{generator_forward.9} parent=65 // pred_fallthru
          _
        %s717 = smul.u32 8, %s19
        %p718 = scmp.lt.s32.totalorder %s717, 15
        %s719 = scalar_select %p718, %s717, 15
        %p720 = scmp.lt.s32.totalorder %s20, 0
        %s721 = scalar_select %p720, %s20, 0
        %s722 = sadd.s32 %s721, %s719
        %s723 = smul.addr %s722, 8
        %s724 = scalar_lea.vmem %s3, %s723
        // Predicated region
        $region79: #{generator_forward.9} parent=65 // pred_check
          %p725 = pneg %p135
        $region80: #{generator_forward.9} parent=65 // pred_check_branch
          %727 = sbr.rel (%p725) target = $region82
        $region81: #{generator_forward.9} parent=65 // pred_region
          %s728 = smul.u32 8, %s19
        $region82: #{generator_forward.9} parent=65 // pred_fallthru
          _
      $region66: #{generator_forward.9} parent=5 // pred_fallthru
        _
      %p729 = scmp.le.s32.totalorder 2, %s9
      // Predicated region
      $region83: #{generator_forward.9} parent=5 // pred_check
        %p730 = pneg %p729
      $region84: #{generator_forward.9} parent=5 // pred_check_branch
        %732 = sbr.rel (%p730) target = $region86
      $region85: #{generator_forward.9} parent=5 // pred_region
        %s733 = ssub.s32 %s9, 2
        // Predicated region
        $region87: #{generator_forward.9} parent=85 // pred_check
          %p734 = pneg %p141
        $region88: #{generator_forward.9} parent=85 // pred_check_branch
          %736 = sbr.rel (%p734) target = $region90
        $region89: #{generator_forward.9} parent=85 // pred_region
          %s737 = smul.u32 8, %s22
          %p738 = scmp.lt.s32.totalorder %s737, 15
          %s739 = scalar_select %p738, %s737, 15
          %p740 = scmp.lt.s32.totalorder %s23, 0
          %s741 = scalar_select %p740, %s23, 0
          %s742 = sadd.s32 %s741, %s739
          %s743 = smul.addr %s742, 8
          %s744 = scalar_lea.vmem %s3, %s743
        $region90: #{generator_forward.9} parent=85 // pred_fallthru
          _
      $region86: #{generator_forward.9} parent=5 // pred_fallthru
        _
    $region6: #{generator_forward.9} parent=1 // loop_footer
      %s13 = sadd.s32 1, %s9
    $region7: #{generator_forward.9} parent=1 // loop_footer_branch
      %8 = sbr.rel target = $region3
    $region8: #{generator_forward.9} parent=1 // loop_exit
      _

// kernel: generator_forward.10
$region0: #{generator_forward.10}
  #allocation0 [shape = 'u32[]', space=smem, size = 0x4, offset = 0x4, fixed_abs, tag = 'smem constant byte address 0x4 - core index']
  #allocation1 [shape = 'u32[72,128]{1,0:T(1,128)}', space=vmem, size = 0x9000, scoped, tag = 'internal scratch']
  #allocation2 [shape = 'f32[16,256]{1,0:T(8,128)}', space=vmem, size = 0x4000, scoped, tag = 'scratch operand']
  %s0 = inlined_call_operand.vmem [shape: bf16[32,1280], index: 0, kind: input, shape index: {}]
  %s1 = inlined_call_operand.vmem [shape: bf16[1280,256], index: 1, kind: input, shape index: {}]
  %s2 = inlined_call_operand.vmem [shape: f32[1,256], index: 2, kind: input, shape index: {}]
  %s3 = inlined_call_operand.vmem [shape: f32[32,256], index: 3, kind: output, shape index: {}]
  %s4 = sld [smem:[#allocation0]]
  $region91: #{generator_forward.10} parent=0
    _
  %s6 = ssub.s32 1, %s4
  %s7 = scalar_select 0, %s6, %s4
  $region1: #{generator_forward.10} parent=0
    #allocation3 [shape = 'u8[16384]{0}', space=vmem, size = 0x4000, scoped, tag = 'input window, operand 0']
    loop: start=0, step=1, limit=12
    $region2: #{generator_forward.10} parent=1 // loop_pre_header
      _
    $region3: #{generator_forward.10} parent=1 // loop_header
      %s9 = sphi 0, %s13
      %p10 = scmp.ge.s32.totalorder %s9, 12
      %s16 = sphi 0, %s35
      %s17 = sphi 0, %s31
      %s18 = sphi 0, %s27
      %s19 = sphi 0, %s16
      %s20 = sphi 0, %s17
      %s21 = sphi 0, %s18
      %s22 = sphi 0, %s19
      %s23 = sphi 0, %s20
      %s24 = sphi 0, %s21
      %s40 = sphi 0, %s42
      %s43 = sphi 0, %s40
      %s44 = sphi 0, %s43
      %s60 = sphi 0, %s44
      %s68 = sphi 0, %s70
      %s71 = sphi 0, %s68
      %s72 = sphi 0, %s71
      %s88 = sphi 0, %s72
      %s94 = sphi 0, %s96
      %s97 = sphi 0, %s94
      %s98 = sphi 0, %s97
      %s114 = sphi 0, %s98
      %s122 = sphi 0, %s124
      %s125 = sphi 0, %s122
      %s126 = sphi 0, %s125
      %s142 = sphi 0, %s126
    $region4: #{generator_forward.10} parent=1 // loop_header_branch
      %12 = sbr.rel (%p10) target = $region8
    $region5: #{generator_forward.10} parent=1 // loop_body
      %s14 = ssub.s32 %s9, 1
      %s15 = ssub.s32 %s9, 2
      %s25 = sadd.s32 1, %s18
      %p26 = scmp.ge.s32.totalorder %s25, 5
      %s27 = scalar_select %p26, 0, %s25
      %s28 = sadd.s32 1, %s17
      %s29 = scalar_select %p26, %s28, %s17
      %p30 = scmp.ge.s32.totalorder %s29, 1
      %s31 = scalar_select %p30, 0, %s29
      %s32 = sadd.s32 1, %s16
      %s33 = scalar_select %p30, %s32, %s16
      %p34 = scmp.ge.s32.totalorder %s33, 2
      %s35 = scalar_select %p34, 0, %s33
      %s36 = ssub.s32 %s16, %s35
      %s37 = ssub.s32 %s18, %s27
      %s38 = sor.u32 %s36, %s37
      %p39 = scmp.eq.s32.totalorder %s38, 0
      %s41 = sadd.s32 %s40, 1
      %s42 = scalar_select %p39, %s40, %s41
      %p45 = pneg %p39
      %p46 = scmp.eq.s32.totalorder %s9, 9
      %p47 = por %p45, %p46
      %p48 = scmp.ne.s32.totalorder %s40, %s43
      %p49 = scmp.eq.s32.totalorder %s9, 0
      %p50 = por %p48, %p49
      %p51 = scmp.ne.s32.totalorder %s40, %s43
      %p52 = scmp.eq.s32.totalorder %s14, 9
      %p53 = por %p51, %p52
      %p54 = scmp.ne.s32.totalorder %s43, %s44
      %p55 = scmp.eq.s32.totalorder %s14, 0
      %p56 = por %p54, %p55
      %p57 = scmp.ne.s32.totalorder %s43, %s44
      %p58 = scmp.eq.s32.totalorder %s15, 9
      %p59 = por %p57, %p58
      %p61 = scmp.ne.s32.totalorder %s44, %s60
      %p62 = scmp.eq.s32.totalorder %s15, 0
      %p63 = por %p61, %p62
      %s64 = ssub.s32 %s18, %s27
      %s65 = ssub.s32 %s17, %s31
      %s66 = sor.u32 %s64, %s65
      %p67 = scmp.eq.s32.totalorder %s66, 0
      %s69 = sadd.s32 %s68, 1
      %s70 = scalar_select %p67, %s68, %s69
      %p73 = pneg %p67
      %p74 = scmp.eq.s32.totalorder %s9, 9
      %p75 = por %p73, %p74
      %p76 = scmp.ne.s32.totalorder %s68, %s71
      %p77 = scmp.eq.s32.totalorder %s9, 0
      %p78 = por %p76, %p77
      %p79 = scmp.ne.s32.totalorder %s68, %s71
      %p80 = scmp.eq.s32.totalorder %s14, 9
      %p81 = por %p79, %p80
      %p82 = scmp.ne.s32.totalorder %s71, %s72
      %p83 = scmp.eq.s32.totalorder %s14, 0
      %p84 = por %p82, %p83
      %p85 = scmp.ne.s32.totalorder %s71, %s72
      %p86 = scmp.eq.s32.totalorder %s15, 9
      %p87 = por %p85, %p86
      %p89 = scmp.ne.s32.totalorder %s72, %s88
      %p90 = scmp.eq.s32.totalorder %s15, 0
      %p91 = por %p89, %p90
      %s92 = ssub.s32 %s17, %s31
      %p93 = scmp.eq.s32.totalorder %s92, 0
      %s95 = sadd.s32 %s94, 1
      %s96 = scalar_select %p93, %s94, %s95
      %p99 = pneg %p93
      %p100 = scmp.eq.s32.totalorder %s9, 9
      %p101 = por %p99, %p100
      %p102 = scmp.ne.s32.totalorder %s94, %s97
      %p103 = scmp.eq.s32.totalorder %s9, 0
      %p104 = por %p102, %p103
      %p105 = scmp.ne.s32.totalorder %s94, %s97
      %p106 = scmp.eq.s32.totalorder %s14, 9
      %p107 = por %p105, %p106
      %p108 = scmp.ne.s32.totalorder %s97, %s98
      %p109 = scmp.eq.s32.totalorder %s14, 0
      %p110 = por %p108, %p109
      %p111 = scmp.ne.s32.totalorder %s97, %s98
      %p112 = scmp.eq.s32.totalorder %s15, 9
      %p113 = por %p111, %p112
      %p115 = scmp.ne.s32.totalorder %s98, %s114
      %p116 = scmp.eq.s32.totalorder %s15, 0
      %p117 = por %p115, %p116
      %s118 = ssub.s32 %s16, %s35
      %s119 = ssub.s32 %s17, %s31
      %s120 = sor.u32 %s118, %s119
      %p121 = scmp.eq.s32.totalorder %s120, 0
      %s123 = sadd.s32 %s122, 1
      %s124 = scalar_select %p121, %s122, %s123
      %p127 = pneg %p121
      %p128 = scmp.eq.s32.totalorder %s9, 9
      %p129 = por %p127, %p128
      %p130 = scmp.ne.s32.totalorder %s122, %s125
      %p131 = scmp.eq.s32.totalorder %s9, 0
      %p132 = por %p130, %p131
      %p133 = scmp.ne.s32.totalorder %s122, %s125
      %p134 = scmp.eq.s32.totalorder %s14, 9
      %p135 = por %p133, %p134
      %p136 = scmp.ne.s32.totalorder %s125, %s126
      %p137 = scmp.eq.s32.totalorder %s14, 0
      %p138 = por %p136, %p137
      %p139 = scmp.ne.s32.totalorder %s125, %s126
      %p140 = scmp.eq.s32.totalorder %s15, 9
      %p141 = por %p139, %p140
      %p143 = scmp.ne.s32.totalorder %s126, %s142
      %p144 = scmp.eq.s32.totalorder %s15, 0
      %p145 = por %p143, %p144
      %p146 = scmp.le.s32.totalorder 1, %s9
      %p147 = scmp.lt.s32.totalorder %s9, 11
      %p148 = pnand %p146, %p147
      %p149 = pneg %p148
      // Predicated region
      $region9: #{generator_forward.10} parent=5 // pred_check
        _
      $region10: #{generator_forward.10} parent=5 // pred_check_branch
        %151 = sbr.rel (%p148) target = $region12
      $region11: #{generator_forward.10} parent=5 // pred_region
        %s152 = ssub.s32 %s9, 1
        // Predicated region
        $region13: #{generator_forward.10} parent=11 // pred_check
          %p153 = pneg %p110
        $region14: #{generator_forward.10} parent=11 // pred_check_branch
          %155 = sbr.rel (%p153) target = $region16
        $region15: #{generator_forward.10} parent=11 // pred_region
          %s156 = smul.u32 2, %s20
          %p157 = scmp.lt.s32.totalorder %s156, 1
          %s158 = scalar_select %p157, %s156, 1
          %s159 = scalar_lea.vmem %s2, %s158
          %s160 = smul.u32 2, %s20
        $region16: #{generator_forward.10} parent=11 // pred_fallthru
          _
      $region12: #{generator_forward.10} parent=5 // pred_fallthru
        _
      %p161 = scmp.lt.s32.totalorder %s9, 10
      // Predicated region
      $region17: #{generator_forward.10} parent=5 // pred_check
        %p162 = pneg %p161
      $region18: #{generator_forward.10} parent=5 // pred_check_branch
        %164 = sbr.rel (%p162) target = $region20
      $region19: #{generator_forward.10} parent=5 // pred_region
        // Predicated region
        $region21: #{generator_forward.10} parent=19 // pred_check
          %p165 = pneg %p50
        $region22: #{generator_forward.10} parent=19 // pred_check_branch
          %167 = sbr.rel (%p165) target = $region24
        $region23: #{generator_forward.10} parent=19 // pred_region
          %s168 = sand.u32 %s40, 1
          %s169 = sand.u32 %s40, 1
          %s170 = smul.addr %s169, 16
          %s171 = scalar_lea.vmem [#allocation3], %s170
          %s172 = smul.u32 2, %s16
          %s173 = smul.u32 2, %s18
          %s174 = smul.addr %s172, 10
          %s175 = sadd.s32 %s173, %s174
          %s176 = smul.addr %s175, 4
          %s177 = scalar_lea.vmem %s0, %s176
          // Predicated region
          $region25: #{generator_forward.10} parent=23 // pred_check
            _
          $region26: #{generator_forward.10} parent=23 // pred_check_branch
            %179 = sbr.rel (0) target = $region28
          $region27: #{generator_forward.10} parent=23 // pred_region
            // Predicated region
            $region29: #{generator_forward.10} parent=27 // pred_check
              _
            $region30: #{generator_forward.10} parent=27 // pred_check_branch
              %181 = sbr.rel (0) target = $region32
            $region31: #{generator_forward.10} parent=27 // pred_region
              // Predicated region
              $region44: #{generator_forward.10} parent=31 // pred_check
                _
              $region45: #{generator_forward.10} parent=31 // pred_check_branch
                %199 = sbr.rel (0) target = $region47
              $region46: #{generator_forward.10} parent=31 // pred_region
                loop: start=0, step=1, limit=1
                $region48: #{generator_forward.10} parent=46 // loop_pre_header
                  _
                $region49: #{generator_forward.10} parent=46 // loop_header
                  %s201 = sphi 0, %s205
                  %p202 = scmp.ge.s32.totalorder %s201, 1
                  %s206 = sphi %s177, %s177
                  %s207 = sphi %s171, %s171
                $region50: #{generator_forward.10} parent=46 // loop_header_branch
                  %204 = sbr.rel (%p202) target = $region54
                $region51: #{generator_forward.10} parent=46 // loop_body
                  %v208 = vld [vmem:[%s206] sm:$0xff]
                  %209 = vst [vmem:[%s207] sm:$0xff] %v208
                  %v210 = vld [vmem:[%s206 + $0x28] sm:$0xff]
                  %211 = vst [vmem:[%s207 + $0x8] sm:$0xff] %v210
                $region52: #{generator_forward.10} parent=46 // loop_footer
                  %s205 = sadd.s32 1, %s201
                $region53: #{generator_forward.10} parent=46 // loop_footer_branch
                  %200 = sbr.rel target = $region49
                $region54: #{generator_forward.10} parent=46 // loop_exit
                  _
              $region47: #{generator_forward.10} parent=31 // pred_fallthru
                _
              // Predicated region
              $region55: #{generator_forward.10} parent=31 // pred_check
                _
              $region56: #{generator_forward.10} parent=31 // pred_check_branch
                %213 = sbr.rel target = $region58
              $region57: #{generator_forward.10} parent=31 // pred_region
                _
              $region58: #{generator_forward.10} parent=31 // pred_fallthru
                _
            $region32: #{generator_forward.10} parent=27 // pred_fallthru
              _
            // Predicated region
            $region33: #{generator_forward.10} parent=27 // pred_check
              _
            $region34: #{generator_forward.10} parent=27 // pred_check_branch
              %183 = sbr.rel target = $region36
            $region35: #{generator_forward.10} parent=27 // pred_region
              %s185 = ssub.s32 256, 1
              loop: start=0, step=1, limit=1
              $region37: #{generator_forward.10} parent=35 // loop_pre_header
                _
              $region38: #{generator_forward.10} parent=35 // loop_header
                %s187 = sphi 0, %s191
                %p188 = scmp.ge.s32.totalorder %s187, 1
                %s192 = sphi %s177, %s177
                %s193 = sphi %s171, %s171
              $region39: #{generator_forward.10} parent=35 // loop_header_branch
                %190 = sbr.rel (%p188) target = $region43
              $region40: #{generator_forward.10} parent=35 // loop_body
                %v194 = vld [vmem:[%s192] sm:%s185]
                %195 = vst [vmem:[%s193] sm:%s185] %v194
                %v196 = vld [vmem:[%s192 + $0x28] sm:%s185]
                %197 = vst [vmem:[%s193 + $0x8] sm:%s185] %v196
              $region41: #{generator_forward.10} parent=35 // loop_footer
                %s191 = sadd.s32 1, %s187
              $region42: #{generator_forward.10} parent=35 // loop_footer_branch
                %186 = sbr.rel target = $region38
              $region43: #{generator_forward.10} parent=35 // loop_exit
                _
            $region36: #{generator_forward.10} parent=27 // pred_fallthru
              _
          $region28: #{generator_forward.10} parent=23 // pred_fallthru
            _
          %214 = vnop
        $region24: #{generator_forward.10} parent=19 // pred_fallthru
          _
        // Predicated region
        $region59: #{generator_forward.10} parent=19 // pred_check
          %p215 = pneg %p78
        $region60: #{generator_forward.10} parent=19 // pred_check_branch
          %217 = sbr.rel (%p215) target = $region62
        $region61: #{generator_forward.10} parent=19 // pred_region
          %s218 = smul.u32 32, %s18
          %s219 = smul.u32 2, %s17
          %p220 = scmp.lt.s32.totalorder %s218, 159
          %s221 = scalar_select %p220, %s218, 159
          %p222 = scmp.lt.s32.totalorder %s219, 1
          %s223 = scalar_select %p222, %s219, 1
          %s224 = smul.addr %s221, 2
          %s225 = sadd.s32 %s223, %s224
          %s226 = smul.addr %s225, 4
          %s227 = scalar_lea.vmem %s1, %s226
          %s228 = smul.u32 32, %s18
          %s229 = smul.u32 2, %s17
        $region62: #{generator_forward.10} parent=19 // pred_fallthru
          _
      $region20: #{generator_forward.10} parent=5 // pred_fallthru
        _
      %p230 = scmp.le.s32.totalorder 1, %s9
      %p231 = scmp.lt.s32.totalorder %s9, 11
      %p232 = pnand %p230, %p231
      %p233 = pneg %p232
      // Predicated region
      $region63: #{generator_forward.10} parent=5 // pred_check
        _
      $region64: #{generator_forward.10} parent=5 // pred_check_branch
        %235 = sbr.rel (%p232) target = $region66
      $region65: #{generator_forward.10} parent=5 // pred_region
        %s236 = ssub.s32 %s9, 1
        %s237 = sand.u32 %s43, 1
        %s238 = sand.u32 %s43, 1
        %s239 = smul.addr %s238, 16
        %s240 = scalar_lea.vmem [#allocation3], %s239
        // Predicated region
        $region67: #{generator_forward.10} parent=65 // pred_check
          %p241 = pneg %p56
        $region68: #{generator_forward.10} parent=65 // pred_check_branch
          %243 = sbr.rel (%p241) target = $region70
        $region69: #{generator_forward.10} parent=65 // pred_region
          _
        $region70: #{generator_forward.10} parent=65 // pred_fallthru
          _
        %s244 = sand.u32 %s43, 1
        %s245 = sand.u32 %s43, 1
        %s246 = smul.addr %s245, 16
        %s247 = scalar_lea.vmem [#allocation3], %s246
        %p248 = pneg %p56
        %p249 = pneg %p53
        %s250 = smul.u32 32, %s21
        %s251 = smul.u32 2, %s20
        %p252 = scmp.lt.s32.totalorder %s250, 159
        %s253 = scalar_select %p252, %s250, 159
        %p254 = scmp.lt.s32.totalorder %s251, 1
        %s255 = scalar_select %p254, %s251, 1
        %s256 = smul.addr %s253, 2
        %s257 = sadd.s32 %s255, %s256
        %s258 = smul.addr %s257, 4
        %s259 = scalar_lea.vmem %s1, %s258
        %p260 = pneg %p84
        %p261 = pneg %p81
        %s262 = smul.u32 2, %s20
        %p263 = scmp.lt.s32.totalorder %s262, 1
        %s264 = scalar_select %p263, %s262, 1
        %s265 = scalar_lea.vmem %s2, %s264
        %p266 = pneg %p110
        %p267 = pneg %p107
        %p268 = pneg %p138
        %p269 = pneg %p135
        %s270 = smul.u32 2, %s19
        %s271 = smul.u32 2, %s20
        %p272 = scmp.lt.s32.totalorder %s270, 3
        %s273 = scalar_select %p272, %s270, 3
        %p274 = scmp.lt.s32.totalorder %s271, 1
        %s275 = scalar_select %p274, %s271, 1
        %s276 = smul.addr %s273, 2
        %s277 = sadd.s32 %s275, %s276
        %s278 = smul.addr %s277, 8
        %s279 = scalar_lea.vmem %s3, %s278
        %s280 = smul.u32 2, %s19
        %s281 = smul.u32 2, %s21
        %s282 = smul.u32 32, %s21
        %s283 = smul.u32 2, %s20
        %p284 = scmp.lt.s32.totalorder %s282, 159
        %s285 = scalar_select %p284, %s282, 159
        %p286 = scmp.lt.s32.totalorder %s283, 1
        %s287 = scalar_select %p286, %s283, 1
        %s288 = smul.addr %s285, 2
        %s289 = sadd.s32 %s287, %s288
        %s290 = smul.addr %s289, 4
        %s291 = scalar_lea.vmem %s1, %s290
        %s292 = smul.u32 32, %s21
        %s293 = smul.u32 2, %s20
        %s294 = smul.u32 2, %s20
        %p295 = scmp.lt.s32.totalorder %s294, 1
        %s296 = scalar_select %p295, %s294, 1
        %s297 = scalar_lea.vmem %s2, %s296
        %s298 = smul.u32 2, %s20
        %s299 = smul.u32 2, %s19
        %s300 = smul.u32 2, %s20
        %p301 = scmp.lt.s32.totalorder %s299, 3
        %s302 = scalar_select %p301, %s299, 3
        %p303 = scmp.lt.s32.totalorder %s300, 1
        %s304 = scalar_select %p303, %s300, 1
        %s305 = smul.addr %s302, 2
        %s306 = sadd.s32 %s304, %s305
        %s307 = smul.addr %s306, 8
        %s308 = scalar_lea.vmem %s3, %s307
        %s309 = smul.u32 2, %s19
        %s310 = smul.u32 2, %s20
        %p311 = scmp.eq.s32.totalorder %s21, 0
        // Predicated region
        $region71: #{generator_forward.10} parent=65 // pred_check
          %p312 = pneg %p311
        $region72: #{generator_forward.10} parent=65 // pred_check_branch
          %314 = sbr.rel (%p312) target = $region74
        $region73: #{generator_forward.10} parent=65 // pred_region
          %315 = vst [vmem:[#allocation2] sm:$0xff] 0.0
          %316 = vst [vmem:[#allocation2 + $0x8] sm:$0xff] 0.0
          %317 = vst [vmem:[#allocation2 + $0x10] sm:$0xff] 0.0
          %318 = vst [vmem:[#allocation2 + $0x18] sm:$0xff] 0.0
        $region74: #{generator_forward.10} parent=65 // pred_fallthru
          _
        %v319 = vld [vmem:[#allocation2] sm:$0xff]
        %v320 = vld [vmem:[#allocation2 + $0x8] sm:$0xff]
        %v321 = vld [vmem:[#allocation2 + $0x10] sm:$0xff]
        %v322 = vld [vmem:[#allocation2 + $0x18] sm:$0xff]
        %v323 = vld [vmem:[%s240] sm:$0xff]
        %v324 = vld [vmem:[%s240 + $0x8] sm:$0xff]
        %v325 = vld [vmem:[%s291] sm:$0xff]
        %v326 = vld [vmem:[%s291 + $0x8] sm:$0xff]
        %v327 = vld [vmem:[%s291 + $0x10] sm:$0xff]
        %v328 = vld [vmem:[%s291 + $0x18] sm:$0xff]
        %v329 = vld [vmem:[%s291 + $0x20] sm:$0xff]
        %v330 = vld [vmem:[%s291 + $0x28] sm:$0xff]
        %v331 = vld [vmem:[%s291 + $0x30] sm:$0xff]
        %v332 = vld [vmem:[%s291 + $0x38] sm:$0xff]
        %v333 = vld [vmem:[%s291 + $0x40] sm:$0xff]
        %v334 = vld [vmem:[%s291 + $0x48] sm:$0xff]
        %v335 = vld [vmem:[%s291 + $0x50] sm:$0xff]
        %v336 = vld [vmem:[%s291 + $0x58] sm:$0xff]
        %v337 = vld [vmem:[%s291 + $0x60] sm:$0xff]
        %v338 = vld [vmem:[%s291 + $0x68] sm:$0xff]
        %v339 = vld [vmem:[%s291 + $0x70] sm:$0xff]
        %v340 = vld [vmem:[%s291 + $0x78] sm:$0xff]
        %v341 = vld [vmem:[%s291 + $0x80] sm:$0xff]
        %v342 = vld [vmem:[%s291 + $0x88] sm:$0xff]
        %v343 = vld [vmem:[%s291 + $0x90] sm:$0xff]
        %v344 = vld [vmem:[%s291 + $0x98] sm:$0xff]
        %v345 = vld [vmem:[%s291 + $0xa0] sm:$0xff]
        %v346 = vld [vmem:[%s291 + $0xa8] sm:$0xff]
        %v347 = vld [vmem:[%s291 + $0xb0] sm:$0xff]
        %v348 = vld [vmem:[%s291 + $0xb8] sm:$0xff]
        %v349 = vld [vmem:[%s291 + $0xc0] sm:$0xff]
        %v350 = vld [vmem:[%s291 + $0xc8] sm:$0xff]
        %v351 = vld [vmem:[%s291 + $0xd0] sm:$0xff]
        %v352 = vld [vmem:[%s291 + $0xd8] sm:$0xff]
        %v353 = vld [vmem:[%s291 + $0xe0] sm:$0xff]
        %v354 = vld [vmem:[%s291 + $0xe8] sm:$0xff]
        %v355 = vld [vmem:[%s291 + $0xf0] sm:$0xff]
        %v356 = vld [vmem:[%s291 + $0xf8] sm:$0xff]
        %v359 = vunpack.c.l.b16 %v323
        %v360 = vunpack.c.h.b16 %v323
        %v361 = vunpack.c.l.b16 %v324
        %v362 = vunpack.c.h.b16 %v324
        %v363 = vpack.c.b16 %v361, %v359
        %v364 = vpack.c.b16 %v362, %v360
        %v399 = vunpack.c.l.b16 %v325
        %v400 = vunpack.c.h.b16 %v325
        %v401 = vunpack.c.l.b16 %v326
        %v402 = vunpack.c.h.b16 %v326
        %v403 = vunpack.c.l.b16 %v327
        %v404 = vunpack.c.h.b16 %v327
        %v405 = vunpack.c.l.b16 %v328
        %v406 = vunpack.c.h.b16 %v328
        %v407 = vunpack.c.l.b16 %v329
        %v408 = vunpack.c.h.b16 %v329
        %v409 = vunpack.c.l.b16 %v330
        %v410 = vunpack.c.h.b16 %v330
        %v411 = vunpack.c.l.b16 %v331
        %v412 = vunpack.c.h.b16 %v331
        %v413 = vunpack.c.l.b16 %v332
        %v414 = vunpack.c.h.b16 %v332
        %v415 = vunpack.c.l.b16 %v333
        %v416 = vunpack.c.h.b16 %v333
        %v417 = vunpack.c.l.b16 %v334
        %v418 = vunpack.c.h.b16 %v334
        %v419 = vunpack.c.l.b16 %v335
        %v420 = vunpack.c.h.b16 %v335
        %v421 = vunpack.c.l.b16 %v336
        %v422 = vunpack.c.h.b16 %v336
        %v423 = vunpack.c.l.b16 %v337
        %v424 = vunpack.c.h.b16 %v337
        %v425 = vunpack.c.l.b16 %v338
        %v426 = vunpack.c.h.b16 %v338
        %v427 = vunpack.c.l.b16 %v339
        %v428 = vunpack.c.h.b16 %v339
        %v429 = vunpack.c.l.b16 %v340
        %v430 = vunpack.c.h.b16 %v340
        %v431 = vunpack.c.l.b16 %v341
        %v432 = vunpack.c.h.b16 %v341
        %v433 = vunpack.c.l.b16 %v342
        %v434 = vunpack.c.h.b16 %v342
        %v435 = vunpack.c.l.b16 %v343
        %v436 = vunpack.c.h.b16 %v343
        %v437 = vunpack.c.l.b16 %v344
        %v438 = vunpack.c.h.b16 %v344
        %v439 = vunpack.c.l.b16 %v345
        %v440 = vunpack.c.h.b16 %v345
        %v441 = vunpack.c.l.b16 %v346
        %v442 = vunpack.c.h.b16 %v346
        %v443 = vunpack.c.l.b16 %v347
        %v444 = vunpack.c.h.b16 %v347
        %v445 = vunpack.c.l.b16 %v348
        %v446 = vunpack.c.h.b16 %v348
        %v447 = vunpack.c.l.b16 %v349
        %v448 = vunpack.c.h.b16 %v349
        %v449 = vunpack.c.l.b16 %v350
        %v450 = vunpack.c.h.b16 %v350
        %v451 = vunpack.c.l.b16 %v351
        %v452 = vunpack.c.h.b16 %v351
        %v453 = vunpack.c.l.b16 %v352
        %v454 = vunpack.c.h.b16 %v352
        %v455 = vunpack.c.l.b16 %v353
        %v456 = vunpack.c.h.b16 %v353
        %v457 = vunpack.c.l.b16 %v354
        %v458 = vunpack.c.h.b16 %v354
        %v459 = vunpack.c.l.b16 %v355
        %v460 = vunpack.c.h.b16 %v355
        %v461 = vunpack.c.l.b16 %v356
        %v462 = vunpack.c.h.b16 %v356
        %v463 = vpack.c.b16 %v401, %v399
        %v464 = vpack.c.b16 %v402, %v400
        %v465 = vpack.c.b16 %v405, %v403
        %v466 = vpack.c.b16 %v406, %v404
        %v467 = vpack.c.b16 %v409, %v407
        %v468 = vpack.c.b16 %v410, %v408
        %v469 = vpack.c.b16 %v413, %v411
        %v470 = vpack.c.b16 %v414, %v412
        %v471 = vpack.c.b16 %v417, %v415
        %v472 = vpack.c.b16 %v418, %v416
        %v473 = vpack.c.b16 %v421, %v419
        %v474 = vpack.c.b16 %v422, %v420
        %v475 = vpack.c.b16 %v425, %v423
        %v476 = vpack.c.b16 %v426, %v424
        %v477 = vpack.c.b16 %v429, %v427
        %v478 = vpack.c.b16 %v430, %v428
        %v479 = vpack.c.b16 %v433, %v431
        %v480 = vpack.c.b16 %v434, %v432
        %v481 = vpack.c.b16 %v437, %v435
        %v482 = vpack.c.b16 %v438, %v436
        %v483 = vpack.c.b16 %v441, %v439
        %v484 = vpack.c.b16 %v442, %v440
        %v485 = vpack.c.b16 %v445, %v443
        %v486 = vpack.c.b16 %v446, %v444
        %v487 = vpack.c.b16 %v449, %v447
        %v488 = vpack.c.b16 %v450, %v448
        %v489 = vpack.c.b16 %v453, %v451
        %v490 = vpack.c.b16 %v454, %v452
        %v491 = vpack.c.b16 %v457, %v455
        %v492 = vpack.c.b16 %v458, %v456
        %v493 = vpack.c.b16 %v461, %v459
        %v494 = vpack.c.b16 %v462, %v460
        %527 = vmatpush.bf16.msra.mxu0 %v477
        %528 = vmatpush.bf16.msra.mxu0 %v475
        %529 = vmatpush.bf16.msra.mxu0 %v473
        %530 = vmatpush.bf16.msra.mxu0 %v471
        %531 = vmatpush.bf16.msra.mxu0 %v469
        %532 = vmatpush.bf16.msra.mxu0 %v467
        %533 = vmatpush.bf16.msra.mxu0 %v465
        %534 = vmatpush.bf16.msra.mxu0 %v463
        %535 = vmatmul.bf16.gmra.mxu0 %v363
        %v536 = vpop.f32.mrf.mxu0
        %v537 = vadd.f32 0.0, %v536
        %v538 = vpop.f32.mrf.mxu0
        %v539 = vadd.f32 0.0, %v538
        %540 = vdwg.mxu0
        %541 = vmatpush.bf16.msra.mxu0 %v493
        %542 = vmatpush.bf16.msra.mxu0 %v491
        %543 = vmatpush.bf16.msra.mxu0 %v489
        %544 = vmatpush.bf16.msra.mxu0 %v487
        %545 = vmatpush.bf16.msra.mxu0 %v485
        %546 = vmatpush.bf16.msra.mxu0 %v483
        %547 = vmatpush.bf16.msra.mxu0 %v481
        %548 = vmatpush.bf16.msra.mxu0 %v479
        %549 = vmatmul.bf16.gmra.mxu0 %v364
        %v550 = vpop.f32.mrf.mxu0
        %v551 = vadd.f32 %v537, %v550
        %v552 = vpop.f32.mrf.mxu0
        %v553 = vadd.f32 %v539, %v552
        %554 = vdwg.mxu0
        %555 = vmatpush.bf16.msra.mxu0 %v478
        %556 = vmatpush.bf16.msra.mxu0 %v476
        %557 = vmatpush.bf16.msra.mxu0 %v474
        %558 = vmatpush.bf16.msra.mxu0 %v472
        %559 = vmatpush.bf16.msra.mxu0 %v470
        %560 = vmatpush.bf16.msra.mxu0 %v468
        %561 = vmatpush.bf16.msra.mxu0 %v466
        %562 = vmatpush.bf16.msra.mxu0 %v464
        %563 = vmatmul.bf16.gmra.mxu0 %v363
        %v564 = vpop.f32.mrf.mxu0
        %v565 = vadd.f32 0.0, %v564
        %v566 = vpop.f32.mrf.mxu0
        %v567 = vadd.f32 0.0, %v566
        %568 = vdwg.mxu0
        %569 = vmatpush.bf16.msra.mxu0 %v494
        %570 = vmatpush.bf16.msra.mxu0 %v492
        %571 = vmatpush.bf16.msra.mxu0 %v490
        %572 = vmatpush.bf16.msra.mxu0 %v488
        %573 = vmatpush.bf16.msra.mxu0 %v486
        %574 = vmatpush.bf16.msra.mxu0 %v484
        %575 = vmatpush.bf16.msra.mxu0 %v482
        %576 = vmatpush.bf16.msra.mxu0 %v480
        %577 = vmatmul.bf16.gmra.mxu0 %v364
        %v578 = vpop.f32.mrf.mxu0
        %v579 = vadd.f32 %v565, %v578
        %v580 = vpop.f32.mrf.mxu0
        %v581 = vadd.f32 %v567, %v580
        %582 = vdwg.mxu0
        %v583 = vadd.f32 %v319, %v551
        %v584 = vadd.f32 %v320, %v579
        %v585 = vadd.f32 %v321, %v553
        %v586 = vadd.f32 %v322, %v581
        %587 = vst [vmem:[#allocation2] sm:$0xff] %v583
        %588 = vst [vmem:[#allocation2 + $0x8] sm:$0xff] %v584
        %589 = vst [vmem:[#allocation2 + $0x10] sm:$0xff] %v585
        %590 = vst [vmem:[#allocation2 + $0x18] sm:$0xff] %v586
        %p591 = scmp.eq.s32.totalorder %s21, 4
        // Predicated region
        $region75: #{generator_forward.10} parent=65 // pred_check
          %p592 = pneg %p591
        $region76: #{generator_forward.10} parent=65 // pred_check_branch
          %594 = sbr.rel (%p592) target = $region78
        $region77: #{generator_forward.10} parent=65 // pred_region
          %v595 = vld [vmem:[#allocation2] sm:$0xff]
          %v596 = vld [vmem:[#allocation2 + $0x8] sm:$0xff]
          %v597 = vld [vmem:[#allocation2 + $0x10] sm:$0xff]
          %v598 = vld [vmem:[#allocation2 + $0x18] sm:$0xff]
          %v599 = vld [vmem:[%s297] sm:$0x3]
          %v601 = vperm.slane %v599, 0
          %v602 = vperm.slane %v599, 1
          %v605 = vadd.f32 %v595, %v601
          %v606 = vadd.f32 %v596, %v602
          %v607 = vadd.f32 %v597, %v601
          %v608 = vadd.f32 %v598, %v602
          %v609 = vlaneseq
          %v610 = vshrl.u32 %v609, 7
          %v611 = vadd.s32 %v610, 8
          %vm612 = vcmp.lt.s32.totalorder %v610, 16
          %vm613 = vcmp.lt.s32.totalorder %v611, 16
          %v614 = vsel %vm612, %v605, 0.0
          %v615 = vsel %vm612, %v606, 0.0
          %v616 = vsel %vm613, %v607, 0.0
          %v617 = vsel %vm613, %v608, 0.0
          %v618 = vadd.f32 %v614, %v616
          %v619 = vrot.slane %v618, 4
          %v620 = vadd.f32 %v618, %v619
          %v621 = vrot.slane %v620, 2
          %v622 = vadd.f32 %v620, %v621
          %v623 = vrot.slane %v622, 1
          %v624 = vadd.f32 %v622, %v623
          %v625 = vadd.f32 %v615, %v617
          %v626 = vrot.slane %v625, 4
          %v627 = vadd.f32 %v625, %v626
          %v628 = vrot.slane %v627, 2
          %v629 = vadd.f32 %v627, %v628
          %v630 = vrot.slane %v629, 1
          %v631 = vadd.f32 %v629, %v630
          %v632 = vmul.f32 %v624, 0.0625
          %v633 = vmul.f32 %v631, 0.0625
          %v634 = vmul.f32 %v614, %v614
          %v635 = vmul.f32 %v615, %v615
          %v636 = vmul.f32 %v616, %v616
          %v637 = vmul.f32 %v617, %v617
          %v638 = vadd.f32 %v634, %v636
          %v639 = vrot.slane %v638, 4
          %v640 = vadd.f32 %v638, %v639
          %v641 = vrot.slane %v640, 2
          %v642 = vadd.f32 %v640, %v641
          %v643 = vrot.slane %v642, 1
          %v644 = vadd.f32 %v642, %v643
          %v645 = vadd.f32 %v635, %v637
          %v646 = vrot.slane %v645, 4
          %v647 = vadd.f32 %v645, %v646
          %v648 = vrot.slane %v647, 2
          %v649 = vadd.f32 %v647, %v648
          %v650 = vrot.slane %v649, 1
          %v651 = vadd.f32 %v649, %v650
          %v652 = vmul.f32 %v644, 0.0625
          %v653 = vmul.f32 %v651, 0.0625
          %v654 = vmul.f32 %v632, %v632
          %v655 = vmul.f32 %v633, %v633
          %v656 = vsub.f32 %v652, %v654
          %v657 = vsub.f32 %v653, %v655
          %v658 = vadd.f32 %v656, 1e-05
          %v659 = vadd.f32 %v657, 1e-05
          %v660 = vrsqrt.pop %v658
          %v661 = vmul.f32 %v660, %v658
          %v662 = vmul.f32 %v661, %v660
          %v663 = vmul.f32 0.5, %v662
          %v664 = vsub.f32 1.5, %v663
          %v665 = vmul.f32 %v660, %v664
          %vm666 = vweird.f32 %v658
          %vm667 = vweird.f32 %v660
          %vm668 = vmor %vm666, %vm667
          %v669 = vsel %vm668, %v660, %v665
          %v670 = vrsqrt.pop %v659
          %v671 = vmul.f32 %v670, %v659
          %v672 = vmul.f32 %v671, %v670
          %v673 = vmul.f32 0.5, %v672
          %v674 = vsub.f32 1.5, %v673
          %v675 = vmul.f32 %v670, %v674
          %vm676 = vweird.f32 %v659
          %vm677 = vweird.f32 %v670
          %vm678 = vmor %vm676, %vm677
          %v679 = vsel %vm678, %v670, %v675
          %v680 = vsub.f32 %v605, %v632
          %v681 = vsub.f32 %v606, %v633
          %v682 = vsub.f32 %v607, %v632
          %v683 = vsub.f32 %v608, %v633
          %v684 = vmul.f32 %v680, %v669
          %v685 = vmul.f32 %v681, %v679
          %v686 = vmul.f32 %v682, %v669
          %v687 = vmul.f32 %v683, %v679
          %v688 = vmax.f32 %v684, 0.0
          %v689 = vmax.f32 %v685, 0.0
          %v690 = vmax.f32 %v686, 0.0
          %v691 = vmax.f32 %v687, 0.0
          %692 = vst [vmem:[%s308] sm:$0xff] %v688
          %693 = vst [vmem:[%s308 + $0x8] sm:$0xff] %v689
          %694 = vst [vmem:[%s308 + $0x10] sm:$0xff] %v690
          %695 = vst [vmem:[%s308 + $0x18] sm:$0xff] %v691
        $region78: #{generator_forward.10} parent=65 // pred_fallthru
          _
        %s696 = smul.u32 2, %s19
        %s697 = smul.u32 2, %s20
        %p698 = scmp.lt.s32.totalorder %s696, 3
        %s699 = scalar_select %p698, %s696, 3
        %p700 = scmp.lt.s32.totalorder %s697, 1
        %s701 = scalar_select %p700, %s697, 1
        %s702 = smul.addr %s699, 2
        %s703 = sadd.s32 %s701, %s702
        %s704 = smul.addr %s703, 8
        %s705 = scalar_lea.vmem %s3, %s704
        // Predicated region
        $region79: #{generator_forward.10} parent=65 // pred_check
          %p706 = pneg %p135
        $region80: #{generator_forward.10} parent=65 // pred_check_branch
          %708 = sbr.rel (%p706) target = $region82
        $region81: #{generator_forward.10} parent=65 // pred_region
          %s709 = smul.u32 2, %s19
          %s710 = smul.u32 2, %s20
        $region82: #{generator_forward.10} parent=65 // pred_fallthru
          _
      $region66: #{generator_forward.10} parent=5 // pred_fallthru
        _
      %p711 = scmp.le.s32.totalorder 2, %s9
      // Predicated region
      $region83: #{generator_forward.10} parent=5 // pred_check
        %p712 = pneg %p711
      $region84: #{generator_forward.10} parent=5 // pred_check_branch
        %714 = sbr.rel (%p712) target = $region86
      $region85: #{generator_forward.10} parent=5 // pred_region
        %s715 = ssub.s32 %s9, 2
        // Predicated region
        $region87: #{generator_forward.10} parent=85 // pred_check
          %p716 = pneg %p141
        $region88: #{generator_forward.10} parent=85 // pred_check_branch
          %718 = sbr.rel (%p716) target = $region90
        $region89: #{generator_forward.10} parent=85 // pred_region
          %s719 = smul.u32 2, %s22
          %s720 = smul.u32 2, %s23
          %p721 = scmp.lt.s32.totalorder %s719, 3
          %s722 = scalar_select %p721, %s719, 3
          %p723 = scmp.lt.s32.totalorder %s720, 1
          %s724 = scalar_select %p723, %s720, 1
          %s725 = smul.addr %s722, 2
          %s726 = sadd.s32 %s724, %s725
          %s727 = smul.addr %s726, 8
          %s728 = scalar_lea.vmem %s3, %s727
        $region90: #{generator_forward.10} parent=85 // pred_fallthru
          _
      $region86: #{generator_forward.10} parent=5 // pred_fallthru
        _
    $region6: #{generator_forward.10} parent=1 // loop_footer
      %s13 = sadd.s32 1, %s9
    $region7: #{generator_forward.10} parent=1 // loop_footer_branch
      %8 = sbr.rel target = $region3
    $region8: #{generator_forward.10} parent=1 // loop_exit
      _

// kernel: closed_call.7
$region0: #{closed_call.7}
  #allocation0 [shape = 'u32[]', space=smem, size = 0x4, offset = 0x4, fixed_abs, tag = 'smem constant byte address 0x4 - core index']
  #allocation1 [shape = 'u32[72,128]{1,0:T(1,128)}', space=vmem, size = 0x9000, scoped, tag = 'internal scratch']
  #allocation2 [shape = 'f32[16,256]{1,0:T(8,128)}', space=vmem, size = 0x4000, scoped, tag = 'scratch operand']
  %s0 = inlined_call_operand.vmem [shape: bf16[32,2304], index: 0, kind: input, shape index: {}]
  %s1 = inlined_call_operand.vmem [shape: bf16[2304,256], index: 1, kind: input, shape index: {}]
  %s2 = inlined_call_operand.vmem [shape: f32[1,256], index: 2, kind: input, shape index: {}]
  %s3 = inlined_call_operand.vmem [shape: f32[32,256], index: 3, kind: output, shape index: {}]
  %s4 = sld [smem:[#allocation0]]
  $region91: #{closed_call.7} parent=0
    _
  %s6 = ssub.s32 1, %s4
  %s7 = scalar_select 0, %s6, %s4
  $region1: #{closed_call.7} parent=0
    #allocation3 [shape = 'u8[16384]{0}', space=vmem, size = 0x4000, scoped, tag = 'input window, operand 0']
    loop: start=0, step=1, limit=20
    $region2: #{closed_call.7} parent=1 // loop_pre_header
      _
    $region3: #{closed_call.7} parent=1 // loop_header
      %s9 = sphi 0, %s13
      %p10 = scmp.ge.s32.totalorder %s9, 20
      %s16 = sphi 0, %s35
      %s17 = sphi 0, %s31
      %s18 = sphi 0, %s27
      %s19 = sphi 0, %s16
      %s20 = sphi 0, %s17
      %s21 = sphi 0, %s18
      %s22 = sphi 0, %s19
      %s23 = sphi 0, %s20
      %s24 = sphi 0, %s21
      %s40 = sphi 0, %s42
      %s43 = sphi 0, %s40
      %s44 = sphi 0, %s43
      %s60 = sphi 0, %s44
      %s68 = sphi 0, %s70
      %s71 = sphi 0, %s68
      %s72 = sphi 0, %s71
      %s88 = sphi 0, %s72
      %s94 = sphi 0, %s96
      %s97 = sphi 0, %s94
      %s98 = sphi 0, %s97
      %s114 = sphi 0, %s98
      %s122 = sphi 0, %s124
      %s125 = sphi 0, %s122
      %s126 = sphi 0, %s125
      %s142 = sphi 0, %s126
    $region4: #{closed_call.7} parent=1 // loop_header_branch
      %12 = sbr.rel (%p10) target = $region8
    $region5: #{closed_call.7} parent=1 // loop_body
      %s14 = ssub.s32 %s9, 1
      %s15 = ssub.s32 %s9, 2
      %s25 = sadd.s32 1, %s18
      %p26 = scmp.ge.s32.totalorder %s25, 9
      %s27 = scalar_select %p26, 0, %s25
      %s28 = sadd.s32 1, %s17
      %s29 = scalar_select %p26, %s28, %s17
      %p30 = scmp.ge.s32.totalorder %s29, 1
      %s31 = scalar_select %p30, 0, %s29
      %s32 = sadd.s32 1, %s16
      %s33 = scalar_select %p30, %s32, %s16
      %p34 = scmp.ge.s32.totalorder %s33, 2
      %s35 = scalar_select %p34, 0, %s33
      %s36 = ssub.s32 %s16, %s35
      %s37 = ssub.s32 %s18, %s27
      %s38 = sor.u32 %s36, %s37
      %p39 = scmp.eq.s32.totalorder %s38, 0
      %s41 = sadd.s32 %s40, 1
      %s42 = scalar_select %p39, %s40, %s41
      %p45 = pneg %p39
      %p46 = scmp.eq.s32.totalorder %s9, 17
      %p47 = por %p45, %p46
      %p48 = scmp.ne.s32.totalorder %s40, %s43
      %p49 = scmp.eq.s32.totalorder %s9, 0
      %p50 = por %p48, %p49
      %p51 = scmp.ne.s32.totalorder %s40, %s43
      %p52 = scmp.eq.s32.totalorder %s14, 17
      %p53 = por %p51, %p52
      %p54 = scmp.ne.s32.totalorder %s43, %s44
      %p55 = scmp.eq.s32.totalorder %s14, 0
      %p56 = por %p54, %p55
      %p57 = scmp.ne.s32.totalorder %s43, %s44
      %p58 = scmp.eq.s32.totalorder %s15, 17
      %p59 = por %p57, %p58
      %p61 = scmp.ne.s32.totalorder %s44, %s60
      %p62 = scmp.eq.s32.totalorder %s15, 0
      %p63 = por %p61, %p62
      %s64 = ssub.s32 %s18, %s27
      %s65 = ssub.s32 %s17, %s31
      %s66 = sor.u32 %s64, %s65
      %p67 = scmp.eq.s32.totalorder %s66, 0
      %s69 = sadd.s32 %s68, 1
      %s70 = scalar_select %p67, %s68, %s69
      %p73 = pneg %p67
      %p74 = scmp.eq.s32.totalorder %s9, 17
      %p75 = por %p73, %p74
      %p76 = scmp.ne.s32.totalorder %s68, %s71
      %p77 = scmp.eq.s32.totalorder %s9, 0
      %p78 = por %p76, %p77
      %p79 = scmp.ne.s32.totalorder %s68, %s71
      %p80 = scmp.eq.s32.totalorder %s14, 17
      %p81 = por %p79, %p80
      %p82 = scmp.ne.s32.totalorder %s71, %s72
      %p83 = scmp.eq.s32.totalorder %s14, 0
      %p84 = por %p82, %p83
      %p85 = scmp.ne.s32.totalorder %s71, %s72
      %p86 = scmp.eq.s32.totalorder %s15, 17
      %p87 = por %p85, %p86
      %p89 = scmp.ne.s32.totalorder %s72, %s88
      %p90 = scmp.eq.s32.totalorder %s15, 0
      %p91 = por %p89, %p90
      %s92 = ssub.s32 %s17, %s31
      %p93 = scmp.eq.s32.totalorder %s92, 0
      %s95 = sadd.s32 %s94, 1
      %s96 = scalar_select %p93, %s94, %s95
      %p99 = pneg %p93
      %p100 = scmp.eq.s32.totalorder %s9, 17
      %p101 = por %p99, %p100
      %p102 = scmp.ne.s32.totalorder %s94, %s97
      %p103 = scmp.eq.s32.totalorder %s9, 0
      %p104 = por %p102, %p103
      %p105 = scmp.ne.s32.totalorder %s94, %s97
      %p106 = scmp.eq.s32.totalorder %s14, 17
      %p107 = por %p105, %p106
      %p108 = scmp.ne.s32.totalorder %s97, %s98
      %p109 = scmp.eq.s32.totalorder %s14, 0
      %p110 = por %p108, %p109
      %p111 = scmp.ne.s32.totalorder %s97, %s98
      %p112 = scmp.eq.s32.totalorder %s15, 17
      %p113 = por %p111, %p112
      %p115 = scmp.ne.s32.totalorder %s98, %s114
      %p116 = scmp.eq.s32.totalorder %s15, 0
      %p117 = por %p115, %p116
      %s118 = ssub.s32 %s16, %s35
      %s119 = ssub.s32 %s17, %s31
      %s120 = sor.u32 %s118, %s119
      %p121 = scmp.eq.s32.totalorder %s120, 0
      %s123 = sadd.s32 %s122, 1
      %s124 = scalar_select %p121, %s122, %s123
      %p127 = pneg %p121
      %p128 = scmp.eq.s32.totalorder %s9, 17
      %p129 = por %p127, %p128
      %p130 = scmp.ne.s32.totalorder %s122, %s125
      %p131 = scmp.eq.s32.totalorder %s9, 0
      %p132 = por %p130, %p131
      %p133 = scmp.ne.s32.totalorder %s122, %s125
      %p134 = scmp.eq.s32.totalorder %s14, 17
      %p135 = por %p133, %p134
      %p136 = scmp.ne.s32.totalorder %s125, %s126
      %p137 = scmp.eq.s32.totalorder %s14, 0
      %p138 = por %p136, %p137
      %p139 = scmp.ne.s32.totalorder %s125, %s126
      %p140 = scmp.eq.s32.totalorder %s15, 17
      %p141 = por %p139, %p140
      %p143 = scmp.ne.s32.totalorder %s126, %s142
      %p144 = scmp.eq.s32.totalorder %s15, 0
      %p145 = por %p143, %p144
      %p146 = scmp.le.s32.totalorder 1, %s9
      %p147 = scmp.lt.s32.totalorder %s9, 19
      %p148 = pnand %p146, %p147
      %p149 = pneg %p148
      // Predicated region
      $region9: #{closed_call.7} parent=5 // pred_check
        _
      $region10: #{closed_call.7} parent=5 // pred_check_branch
        %151 = sbr.rel (%p148) target = $region12
      $region11: #{closed_call.7} parent=5 // pred_region
        %s152 = ssub.s32 %s9, 1
        // Predicated region
        $region13: #{closed_call.7} parent=11 // pred_check
          %p153 = pneg %p110
        $region14: #{closed_call.7} parent=11 // pred_check_branch
          %155 = sbr.rel (%p153) target = $region16
        $region15: #{closed_call.7} parent=11 // pred_region
          %s156 = smul.u32 2, %s20
          %p157 = scmp.lt.s32.totalorder %s156, 1
          %s158 = scalar_select %p157, %s156, 1
          %s159 = scalar_lea.vmem %s2, %s158
          %s160 = smul.u32 2, %s20
        $region16: #{closed_call.7} parent=11 // pred_fallthru
          _
      $region12: #{closed_call.7} parent=5 // pred_fallthru
        _
      %p161 = scmp.lt.s32.totalorder %s9, 18
      // Predicated region
      $region17: #{closed_call.7} parent=5 // pred_check
        %p162 = pneg %p161
      $region18: #{closed_call.7} parent=5 // pred_check_branch
        %164 = sbr.rel (%p162) target = $region20
      $region19: #{closed_call.7} parent=5 // pred_region
        // Predicated region
        $region21: #{closed_call.7} parent=19 // pred_check
          %p165 = pneg %p50
        $region22: #{closed_call.7} parent=19 // pred_check_branch
          %167 = sbr.rel (%p165) target = $region24
        $region23: #{closed_call.7} parent=19 // pred_region
          %s168 = sand.u32 %s40, 1
          %s169 = sand.u32 %s40, 1
          %s170 = smul.addr %s169, 16
          %s171 = scalar_lea.vmem [#allocation3], %s170
          %s172 = smul.u32 2, %s16
          %s173 = smul.u32 2, %s18
          %s174 = smul.addr %s172, 18
          %s175 = sadd.s32 %s173, %s174
          %s176 = smul.addr %s175, 4
          %s177 = scalar_lea.vmem %s0, %s176
          // Predicated region
          $region25: #{closed_call.7} parent=23 // pred_check
            _
          $region26: #{closed_call.7} parent=23 // pred_check_branch
            %179 = sbr.rel (0) target = $region28
          $region27: #{closed_call.7} parent=23 // pred_region
            // Predicated region
            $region29: #{closed_call.7} parent=27 // pred_check
              _
            $region30: #{closed_call.7} parent=27 // pred_check_branch
              %181 = sbr.rel (0) target = $region32
            $region31: #{closed_call.7} parent=27 // pred_region
              // Predicated region
              $region44: #{closed_call.7} parent=31 // pred_check
                _
              $region45: #{closed_call.7} parent=31 // pred_check_branch
                %199 = sbr.rel (0) target = $region47
              $region46: #{closed_call.7} parent=31 // pred_region
                loop: start=0, step=1, limit=1
                $region48: #{closed_call.7} parent=46 // loop_pre_header
                  _
                $region49: #{closed_call.7} parent=46 // loop_header
                  %s201 = sphi 0, %s205
                  %p202 = scmp.ge.s32.totalorder %s201, 1
                  %s206 = sphi %s177, %s177
                  %s207 = sphi %s171, %s171
                $region50: #{closed_call.7} parent=46 // loop_header_branch
                  %204 = sbr.rel (%p202) target = $region54
                $region51: #{closed_call.7} parent=46 // loop_body
                  %v208 = vld [vmem:[%s206] sm:$0xff]
                  %209 = vst [vmem:[%s207] sm:$0xff] %v208
                  %v210 = vld [vmem:[%s206 + $0x48] sm:$0xff]
                  %211 = vst [vmem:[%s207 + $0x8] sm:$0xff] %v210
                $region52: #{closed_call.7} parent=46 // loop_footer
                  %s205 = sadd.s32 1, %s201
                $region53: #{closed_call.7} parent=46 // loop_footer_branch
                  %200 = sbr.rel target = $region49
                $region54: #{closed_call.7} parent=46 // loop_exit
                  _
              $region47: #{closed_call.7} parent=31 // pred_fallthru
                _
              // Predicated region
              $region55: #{closed_call.7} parent=31 // pred_check
                _
              $region56: #{closed_call.7} parent=31 // pred_check_branch
                %213 = sbr.rel target = $region58
              $region57: #{closed_call.7} parent=31 // pred_region
                _
              $region58: #{closed_call.7} parent=31 // pred_fallthru
                _
            $region32: #{closed_call.7} parent=27 // pred_fallthru
              _
            // Predicated region
            $region33: #{closed_call.7} parent=27 // pred_check
              _
            $region34: #{closed_call.7} parent=27 // pred_check_branch
              %183 = sbr.rel target = $region36
            $region35: #{closed_call.7} parent=27 // pred_region
              %s185 = ssub.s32 256, 1
              loop: start=0, step=1, limit=1
              $region37: #{closed_call.7} parent=35 // loop_pre_header
                _
              $region38: #{closed_call.7} parent=35 // loop_header
                %s187 = sphi 0, %s191
                %p188 = scmp.ge.s32.totalorder %s187, 1
                %s192 = sphi %s177, %s177
                %s193 = sphi %s171, %s171
              $region39: #{closed_call.7} parent=35 // loop_header_branch
                %190 = sbr.rel (%p188) target = $region43
              $region40: #{closed_call.7} parent=35 // loop_body
                %v194 = vld [vmem:[%s192] sm:%s185]
                %195 = vst [vmem:[%s193] sm:%s185] %v194
                %v196 = vld [vmem:[%s192 + $0x48] sm:%s185]
                %197 = vst [vmem:[%s193 + $0x8] sm:%s185] %v196
              $region41: #{closed_call.7} parent=35 // loop_footer
                %s191 = sadd.s32 1, %s187
              $region42: #{closed_call.7} parent=35 // loop_footer_branch
                %186 = sbr.rel target = $region38
              $region43: #{closed_call.7} parent=35 // loop_exit
                _
            $region36: #{closed_call.7} parent=27 // pred_fallthru
              _
          $region28: #{closed_call.7} parent=23 // pred_fallthru
            _
          %214 = vnop
        $region24: #{closed_call.7} parent=19 // pred_fallthru
          _
        // Predicated region
        $region59: #{closed_call.7} parent=19 // pred_check
          %p215 = pneg %p78
        $region60: #{closed_call.7} parent=19 // pred_check_branch
          %217 = sbr.rel (%p215) target = $region62
        $region61: #{closed_call.7} parent=19 // pred_region
          %s218 = smul.u32 32, %s18
          %s219 = smul.u32 2, %s17
          %p220 = scmp.lt.s32.totalorder %s218, 287
          %s221 = scalar_select %p220, %s218, 287
          %p222 = scmp.lt.s32.totalorder %s219, 1
          %s223 = scalar_select %p222, %s219, 1
          %s224 = smul.addr %s221, 2
          %s225 = sadd.s32 %s223, %s224
          %s226 = smul.addr %s225, 4
          %s227 = scalar_lea.vmem %s1, %s226
          %s228 = smul.u32 32, %s18
          %s229 = smul.u32 2, %s17
        $region62: #{closed_call.7} parent=19 // pred_fallthru
          _
      $region20: #{closed_call.7} parent=5 // pred_fallthru
        _
      %p230 = scmp.le.s32.totalorder 1, %s9
      %p231 = scmp.lt.s32.totalorder %s9, 19
      %p232 = pnand %p230, %p231
      %p233 = pneg %p232
      // Predicated region
      $region63: #{closed_call.7} parent=5 // pred_check
        _
      $region64: #{closed_call.7} parent=5 // pred_check_branch
        %235 = sbr.rel (%p232) target = $region66
      $region65: #{closed_call.7} parent=5 // pred_region
        %s236 = ssub.s32 %s9, 1
        %s237 = sand.u32 %s43, 1
        %s238 = sand.u32 %s43, 1
        %s239 = smul.addr %s238, 16
        %s240 = scalar_lea.vmem [#allocation3], %s239
        // Predicated region
        $region67: #{closed_call.7} parent=65 // pred_check
          %p241 = pneg %p56
        $region68: #{closed_call.7} parent=65 // pred_check_branch
          %243 = sbr.rel (%p241) target = $region70
        $region69: #{closed_call.7} parent=65 // pred_region
          _
        $region70: #{closed_call.7} parent=65 // pred_fallthru
          _
        %s244 = sand.u32 %s43, 1
        %s245 = sand.u32 %s43, 1
        %s246 = smul.addr %s245, 16
        %s247 = scalar_lea.vmem [#allocation3], %s246
        %p248 = pneg %p56
        %p249 = pneg %p53
        %s250 = smul.u32 32, %s21
        %s251 = smul.u32 2, %s20
        %p252 = scmp.lt.s32.totalorder %s250, 287
        %s253 = scalar_select %p252, %s250, 287
        %p254 = scmp.lt.s32.totalorder %s251, 1
        %s255 = scalar_select %p254, %s251, 1
        %s256 = smul.addr %s253, 2
        %s257 = sadd.s32 %s255, %s256
        %s258 = smul.addr %s257, 4
        %s259 = scalar_lea.vmem %s1, %s258
        %p260 = pneg %p84
        %p261 = pneg %p81
        %s262 = smul.u32 2, %s20
        %p263 = scmp.lt.s32.totalorder %s262, 1
        %s264 = scalar_select %p263, %s262, 1
        %s265 = scalar_lea.vmem %s2, %s264
        %p266 = pneg %p110
        %p267 = pneg %p107
        %p268 = pneg %p138
        %p269 = pneg %p135
        %s270 = smul.u32 2, %s19
        %s271 = smul.u32 2, %s20
        %p272 = scmp.lt.s32.totalorder %s270, 3
        %s273 = scalar_select %p272, %s270, 3
        %p274 = scmp.lt.s32.totalorder %s271, 1
        %s275 = scalar_select %p274, %s271, 1
        %s276 = smul.addr %s273, 2
        %s277 = sadd.s32 %s275, %s276
        %s278 = smul.addr %s277, 8
        %s279 = scalar_lea.vmem %s3, %s278
        %s280 = smul.u32 2, %s19
        %s281 = smul.u32 2, %s21
        %s282 = smul.u32 32, %s21
        %s283 = smul.u32 2, %s20
        %p284 = scmp.lt.s32.totalorder %s282, 287
        %s285 = scalar_select %p284, %s282, 287
        %p286 = scmp.lt.s32.totalorder %s283, 1
        %s287 = scalar_select %p286, %s283, 1
        %s288 = smul.addr %s285, 2
        %s289 = sadd.s32 %s287, %s288
        %s290 = smul.addr %s289, 4
        %s291 = scalar_lea.vmem %s1, %s290
        %s292 = smul.u32 32, %s21
        %s293 = smul.u32 2, %s20
        %s294 = smul.u32 2, %s20
        %p295 = scmp.lt.s32.totalorder %s294, 1
        %s296 = scalar_select %p295, %s294, 1
        %s297 = scalar_lea.vmem %s2, %s296
        %s298 = smul.u32 2, %s20
        %s299 = smul.u32 2, %s19
        %s300 = smul.u32 2, %s20
        %p301 = scmp.lt.s32.totalorder %s299, 3
        %s302 = scalar_select %p301, %s299, 3
        %p303 = scmp.lt.s32.totalorder %s300, 1
        %s304 = scalar_select %p303, %s300, 1
        %s305 = smul.addr %s302, 2
        %s306 = sadd.s32 %s304, %s305
        %s307 = smul.addr %s306, 8
        %s308 = scalar_lea.vmem %s3, %s307
        %s309 = smul.u32 2, %s19
        %s310 = smul.u32 2, %s20
        %p311 = scmp.eq.s32.totalorder %s21, 0
        // Predicated region
        $region71: #{closed_call.7} parent=65 // pred_check
          %p312 = pneg %p311
        $region72: #{closed_call.7} parent=65 // pred_check_branch
          %314 = sbr.rel (%p312) target = $region74
        $region73: #{closed_call.7} parent=65 // pred_region
          %315 = vst [vmem:[#allocation2] sm:$0xff] 0.0
          %316 = vst [vmem:[#allocation2 + $0x8] sm:$0xff] 0.0
          %317 = vst [vmem:[#allocation2 + $0x10] sm:$0xff] 0.0
          %318 = vst [vmem:[#allocation2 + $0x18] sm:$0xff] 0.0
        $region74: #{closed_call.7} parent=65 // pred_fallthru
          _
        %v319 = vld [vmem:[#allocation2] sm:$0xff]
        %v320 = vld [vmem:[#allocation2 + $0x8] sm:$0xff]
        %v321 = vld [vmem:[#allocation2 + $0x10] sm:$0xff]
        %v322 = vld [vmem:[#allocation2 + $0x18] sm:$0xff]
        %v323 = vld [vmem:[%s240] sm:$0xff]
        %v324 = vld [vmem:[%s240 + $0x8] sm:$0xff]
        %v325 = vld [vmem:[%s291] sm:$0xff]
        %v326 = vld [vmem:[%s291 + $0x8] sm:$0xff]
        %v327 = vld [vmem:[%s291 + $0x10] sm:$0xff]
        %v328 = vld [vmem:[%s291 + $0x18] sm:$0xff]
        %v329 = vld [vmem:[%s291 + $0x20] sm:$0xff]
        %v330 = vld [vmem:[%s291 + $0x28] sm:$0xff]
        %v331 = vld [vmem:[%s291 + $0x30] sm:$0xff]
        %v332 = vld [vmem:[%s291 + $0x38] sm:$0xff]
        %v333 = vld [vmem:[%s291 + $0x40] sm:$0xff]
        %v334 = vld [vmem:[%s291 + $0x48] sm:$0xff]
        %v335 = vld [vmem:[%s291 + $0x50] sm:$0xff]
        %v336 = vld [vmem:[%s291 + $0x58] sm:$0xff]
        %v337 = vld [vmem:[%s291 + $0x60] sm:$0xff]
        %v338 = vld [vmem:[%s291 + $0x68] sm:$0xff]
        %v339 = vld [vmem:[%s291 + $0x70] sm:$0xff]
        %v340 = vld [vmem:[%s291 + $0x78] sm:$0xff]
        %v341 = vld [vmem:[%s291 + $0x80] sm:$0xff]
        %v342 = vld [vmem:[%s291 + $0x88] sm:$0xff]
        %v343 = vld [vmem:[%s291 + $0x90] sm:$0xff]
        %v344 = vld [vmem:[%s291 + $0x98] sm:$0xff]
        %v345 = vld [vmem:[%s291 + $0xa0] sm:$0xff]
        %v346 = vld [vmem:[%s291 + $0xa8] sm:$0xff]
        %v347 = vld [vmem:[%s291 + $0xb0] sm:$0xff]
        %v348 = vld [vmem:[%s291 + $0xb8] sm:$0xff]
        %v349 = vld [vmem:[%s291 + $0xc0] sm:$0xff]
        %v350 = vld [vmem:[%s291 + $0xc8] sm:$0xff]
        %v351 = vld [vmem:[%s291 + $0xd0] sm:$0xff]
        %v352 = vld [vmem:[%s291 + $0xd8] sm:$0xff]
        %v353 = vld [vmem:[%s291 + $0xe0] sm:$0xff]
        %v354 = vld [vmem:[%s291 + $0xe8] sm:$0xff]
        %v355 = vld [vmem:[%s291 + $0xf0] sm:$0xff]
        %v356 = vld [vmem:[%s291 + $0xf8] sm:$0xff]
        %v359 = vunpack.c.l.b16 %v323
        %v360 = vunpack.c.h.b16 %v323
        %v361 = vunpack.c.l.b16 %v324
        %v362 = vunpack.c.h.b16 %v324
        %v363 = vpack.c.b16 %v361, %v359
        %v364 = vpack.c.b16 %v362, %v360
        %v399 = vunpack.c.l.b16 %v325
        %v400 = vunpack.c.h.b16 %v325
        %v401 = vunpack.c.l.b16 %v326
        %v402 = vunpack.c.h.b16 %v326
        %v403 = vunpack.c.l.b16 %v327
        %v404 = vunpack.c.h.b16 %v327
        %v405 = vunpack.c.l.b16 %v328
        %v406 = vunpack.c.h.b16 %v328
        %v407 = vunpack.c.l.b16 %v329
        %v408 = vunpack.c.h.b16 %v329
        %v409 = vunpack.c.l.b16 %v330
        %v410 = vunpack.c.h.b16 %v330
        %v411 = vunpack.c.l.b16 %v331
        %v412 = vunpack.c.h.b16 %v331
        %v413 = vunpack.c.l.b16 %v332
        %v414 = vunpack.c.h.b16 %v332
        %v415 = vunpack.c.l.b16 %v333
        %v416 = vunpack.c.h.b16 %v333
        %v417 = vunpack.c.l.b16 %v334
        %v418 = vunpack.c.h.b16 %v334
        %v419 = vunpack.c.l.b16 %v335
        %v420 = vunpack.c.h.b16 %v335
        %v421 = vunpack.c.l.b16 %v336
        %v422 = vunpack.c.h.b16 %v336
        %v423 = vunpack.c.l.b16 %v337
        %v424 = vunpack.c.h.b16 %v337
        %v425 = vunpack.c.l.b16 %v338
        %v426 = vunpack.c.h.b16 %v338
        %v427 = vunpack.c.l.b16 %v339
        %v428 = vunpack.c.h.b16 %v339
        %v429 = vunpack.c.l.b16 %v340
        %v430 = vunpack.c.h.b16 %v340
        %v431 = vunpack.c.l.b16 %v341
        %v432 = vunpack.c.h.b16 %v341
        %v433 = vunpack.c.l.b16 %v342
        %v434 = vunpack.c.h.b16 %v342
        %v435 = vunpack.c.l.b16 %v343
        %v436 = vunpack.c.h.b16 %v343
        %v437 = vunpack.c.l.b16 %v344
        %v438 = vunpack.c.h.b16 %v344
        %v439 = vunpack.c.l.b16 %v345
        %v440 = vunpack.c.h.b16 %v345
        %v441 = vunpack.c.l.b16 %v346
        %v442 = vunpack.c.h.b16 %v346
        %v443 = vunpack.c.l.b16 %v347
        %v444 = vunpack.c.h.b16 %v347
        %v445 = vunpack.c.l.b16 %v348
        %v446 = vunpack.c.h.b16 %v348
        %v447 = vunpack.c.l.b16 %v349
        %v448 = vunpack.c.h.b16 %v349
        %v449 = vunpack.c.l.b16 %v350
        %v450 = vunpack.c.h.b16 %v350
        %v451 = vunpack.c.l.b16 %v351
        %v452 = vunpack.c.h.b16 %v351
        %v453 = vunpack.c.l.b16 %v352
        %v454 = vunpack.c.h.b16 %v352
        %v455 = vunpack.c.l.b16 %v353
        %v456 = vunpack.c.h.b16 %v353
        %v457 = vunpack.c.l.b16 %v354
        %v458 = vunpack.c.h.b16 %v354
        %v459 = vunpack.c.l.b16 %v355
        %v460 = vunpack.c.h.b16 %v355
        %v461 = vunpack.c.l.b16 %v356
        %v462 = vunpack.c.h.b16 %v356
        %v463 = vpack.c.b16 %v401, %v399
        %v464 = vpack.c.b16 %v402, %v400
        %v465 = vpack.c.b16 %v405, %v403
        %v466 = vpack.c.b16 %v406, %v404
        %v467 = vpack.c.b16 %v409, %v407
        %v468 = vpack.c.b16 %v410, %v408
        %v469 = vpack.c.b16 %v413, %v411
        %v470 = vpack.c.b16 %v414, %v412
        %v471 = vpack.c.b16 %v417, %v415
        %v472 = vpack.c.b16 %v418, %v416
        %v473 = vpack.c.b16 %v421, %v419
        %v474 = vpack.c.b16 %v422, %v420
        %v475 = vpack.c.b16 %v425, %v423
        %v476 = vpack.c.b16 %v426, %v424
        %v477 = vpack.c.b16 %v429, %v427
        %v478 = vpack.c.b16 %v430, %v428
        %v479 = vpack.c.b16 %v433, %v431
        %v480 = vpack.c.b16 %v434, %v432
        %v481 = vpack.c.b16 %v437, %v435
        %v482 = vpack.c.b16 %v438, %v436
        %v483 = vpack.c.b16 %v441, %v439
        %v484 = vpack.c.b16 %v442, %v440
        %v485 = vpack.c.b16 %v445, %v443
        %v486 = vpack.c.b16 %v446, %v444
        %v487 = vpack.c.b16 %v449, %v447
        %v488 = vpack.c.b16 %v450, %v448
        %v489 = vpack.c.b16 %v453, %v451
        %v490 = vpack.c.b16 %v454, %v452
        %v491 = vpack.c.b16 %v457, %v455
        %v492 = vpack.c.b16 %v458, %v456
        %v493 = vpack.c.b16 %v461, %v459
        %v494 = vpack.c.b16 %v462, %v460
        %527 = vmatpush.bf16.msra.mxu0 %v477
        %528 = vmatpush.bf16.msra.mxu0 %v475
        %529 = vmatpush.bf16.msra.mxu0 %v473
        %530 = vmatpush.bf16.msra.mxu0 %v471
        %531 = vmatpush.bf16.msra.mxu0 %v469
        %532 = vmatpush.bf16.msra.mxu0 %v467
        %533 = vmatpush.bf16.msra.mxu0 %v465
        %534 = vmatpush.bf16.msra.mxu0 %v463
        %535 = vmatmul.bf16.gmra.mxu0 %v363
        %v536 = vpop.f32.mrf.mxu0
        %v537 = vadd.f32 0.0, %v536
        %v538 = vpop.f32.mrf.mxu0
        %v539 = vadd.f32 0.0, %v538
        %540 = vdwg.mxu0
        %541 = vmatpush.bf16.msra.mxu0 %v493
        %542 = vmatpush.bf16.msra.mxu0 %v491
        %543 = vmatpush.bf16.msra.mxu0 %v489
        %544 = vmatpush.bf16.msra.mxu0 %v487
        %545 = vmatpush.bf16.msra.mxu0 %v485
        %546 = vmatpush.bf16.msra.mxu0 %v483
        %547 = vmatpush.bf16.msra.mxu0 %v481
        %548 = vmatpush.bf16.msra.mxu0 %v479
        %549 = vmatmul.bf16.gmra.mxu0 %v364
        %v550 = vpop.f32.mrf.mxu0
        %v551 = vadd.f32 %v537, %v550
        %v552 = vpop.f32.mrf.mxu0
        %v553 = vadd.f32 %v539, %v552
        %554 = vdwg.mxu0
        %555 = vmatpush.bf16.msra.mxu0 %v478
        %556 = vmatpush.bf16.msra.mxu0 %v476
        %557 = vmatpush.bf16.msra.mxu0 %v474
        %558 = vmatpush.bf16.msra.mxu0 %v472
        %559 = vmatpush.bf16.msra.mxu0 %v470
        %560 = vmatpush.bf16.msra.mxu0 %v468
        %561 = vmatpush.bf16.msra.mxu0 %v466
        %562 = vmatpush.bf16.msra.mxu0 %v464
        %563 = vmatmul.bf16.gmra.mxu0 %v363
        %v564 = vpop.f32.mrf.mxu0
        %v565 = vadd.f32 0.0, %v564
        %v566 = vpop.f32.mrf.mxu0
        %v567 = vadd.f32 0.0, %v566
        %568 = vdwg.mxu0
        %569 = vmatpush.bf16.msra.mxu0 %v494
        %570 = vmatpush.bf16.msra.mxu0 %v492
        %571 = vmatpush.bf16.msra.mxu0 %v490
        %572 = vmatpush.bf16.msra.mxu0 %v488
        %573 = vmatpush.bf16.msra.mxu0 %v486
        %574 = vmatpush.bf16.msra.mxu0 %v484
        %575 = vmatpush.bf16.msra.mxu0 %v482
        %576 = vmatpush.bf16.msra.mxu0 %v480
        %577 = vmatmul.bf16.gmra.mxu0 %v364
        %v578 = vpop.f32.mrf.mxu0
        %v579 = vadd.f32 %v565, %v578
        %v580 = vpop.f32.mrf.mxu0
        %v581 = vadd.f32 %v567, %v580
        %582 = vdwg.mxu0
        %v583 = vadd.f32 %v319, %v551
        %v584 = vadd.f32 %v320, %v579
        %v585 = vadd.f32 %v321, %v553
        %v586 = vadd.f32 %v322, %v581
        %587 = vst [vmem:[#allocation2] sm:$0xff] %v583
        %588 = vst [vmem:[#allocation2 + $0x8] sm:$0xff] %v584
        %589 = vst [vmem:[#allocation2 + $0x10] sm:$0xff] %v585
        %590 = vst [vmem:[#allocation2 + $0x18] sm:$0xff] %v586
        %p591 = scmp.eq.s32.totalorder %s21, 8
        // Predicated region
        $region75: #{closed_call.7} parent=65 // pred_check
          %p592 = pneg %p591
        $region76: #{closed_call.7} parent=65 // pred_check_branch
          %594 = sbr.rel (%p592) target = $region78
        $region77: #{closed_call.7} parent=65 // pred_region
          %v595 = vld [vmem:[#allocation2] sm:$0xff]
          %v596 = vld [vmem:[#allocation2 + $0x8] sm:$0xff]
          %v597 = vld [vmem:[#allocation2 + $0x10] sm:$0xff]
          %v598 = vld [vmem:[#allocation2 + $0x18] sm:$0xff]
          %v599 = vld [vmem:[%s297] sm:$0x3]
          %v601 = vperm.slane %v599, 0
          %v602 = vperm.slane %v599, 1
          %v605 = vadd.f32 %v595, %v601
          %v606 = vadd.f32 %v596, %v602
          %v607 = vadd.f32 %v597, %v601
          %v608 = vadd.f32 %v598, %v602
          %v609 = vlaneseq
          %v610 = vshrl.u32 %v609, 7
          %v611 = vadd.s32 %v610, 8
          %vm612 = vcmp.lt.s32.totalorder %v610, 16
          %vm613 = vcmp.lt.s32.totalorder %v611, 16
          %v614 = vsel %vm612, %v605, 0.0
          %v615 = vsel %vm612, %v606, 0.0
          %v616 = vsel %vm613, %v607, 0.0
          %v617 = vsel %vm613, %v608, 0.0
          %v618 = vadd.f32 %v614, %v616
          %v619 = vrot.slane %v618, 4
          %v620 = vadd.f32 %v618, %v619
          %v621 = vrot.slane %v620, 2
          %v622 = vadd.f32 %v620, %v621
          %v623 = vrot.slane %v622, 1
          %v624 = vadd.f32 %v622, %v623
          %v625 = vadd.f32 %v615, %v617
          %v626 = vrot.slane %v625, 4
          %v627 = vadd.f32 %v625, %v626
          %v628 = vrot.slane %v627, 2
          %v629 = vadd.f32 %v627, %v628
          %v630 = vrot.slane %v629, 1
          %v631 = vadd.f32 %v629, %v630
          %v632 = vmul.f32 %v624, 0.0625
          %v633 = vmul.f32 %v631, 0.0625
          %v634 = vmul.f32 %v614, %v614
          %v635 = vmul.f32 %v615, %v615
          %v636 = vmul.f32 %v616, %v616
          %v637 = vmul.f32 %v617, %v617
          %v638 = vadd.f32 %v634, %v636
          %v639 = vrot.slane %v638, 4
          %v640 = vadd.f32 %v638, %v639
          %v641 = vrot.slane %v640, 2
          %v642 = vadd.f32 %v640, %v641
          %v643 = vrot.slane %v642, 1
          %v644 = vadd.f32 %v642, %v643
          %v645 = vadd.f32 %v635, %v637
          %v646 = vrot.slane %v645, 4
          %v647 = vadd.f32 %v645, %v646
          %v648 = vrot.slane %v647, 2
          %v649 = vadd.f32 %v647, %v648
          %v650 = vrot.slane %v649, 1
          %v651 = vadd.f32 %v649, %v650
          %v652 = vmul.f32 %v644, 0.0625
          %v653 = vmul.f32 %v651, 0.0625
          %v654 = vmul.f32 %v632, %v632
          %v655 = vmul.f32 %v633, %v633
          %v656 = vsub.f32 %v652, %v654
          %v657 = vsub.f32 %v653, %v655
          %v658 = vadd.f32 %v656, 1e-05
          %v659 = vadd.f32 %v657, 1e-05
          %v660 = vrsqrt.pop %v658
          %v661 = vmul.f32 %v660, %v658
          %v662 = vmul.f32 %v661, %v660
          %v663 = vmul.f32 0.5, %v662
          %v664 = vsub.f32 1.5, %v663
          %v665 = vmul.f32 %v660, %v664
          %vm666 = vweird.f32 %v658
          %vm667 = vweird.f32 %v660
          %vm668 = vmor %vm666, %vm667
          %v669 = vsel %vm668, %v660, %v665
          %v670 = vrsqrt.pop %v659
          %v671 = vmul.f32 %v670, %v659
          %v672 = vmul.f32 %v671, %v670
          %v673 = vmul.f32 0.5, %v672
          %v674 = vsub.f32 1.5, %v673
          %v675 = vmul.f32 %v670, %v674
          %vm676 = vweird.f32 %v659
          %vm677 = vweird.f32 %v670
          %vm678 = vmor %vm676, %vm677
          %v679 = vsel %vm678, %v670, %v675
          %v680 = vsub.f32 %v605, %v632
          %v681 = vsub.f32 %v606, %v633
          %v682 = vsub.f32 %v607, %v632
          %v683 = vsub.f32 %v608, %v633
          %v684 = vmul.f32 %v680, %v669
          %v685 = vmul.f32 %v681, %v679
          %v686 = vmul.f32 %v682, %v669
          %v687 = vmul.f32 %v683, %v679
          %v688 = vmax.f32 %v684, 0.0
          %v689 = vmax.f32 %v685, 0.0
          %v690 = vmax.f32 %v686, 0.0
          %v691 = vmax.f32 %v687, 0.0
          %692 = vst [vmem:[%s308] sm:$0xff] %v688
          %693 = vst [vmem:[%s308 + $0x8] sm:$0xff] %v689
          %694 = vst [vmem:[%s308 + $0x10] sm:$0xff] %v690
          %695 = vst [vmem:[%s308 + $0x18] sm:$0xff] %v691
        $region78: #{closed_call.7} parent=65 // pred_fallthru
          _
        %s696 = smul.u32 2, %s19
        %s697 = smul.u32 2, %s20
        %p698 = scmp.lt.s32.totalorder %s696, 3
        %s699 = scalar_select %p698, %s696, 3
        %p700 = scmp.lt.s32.totalorder %s697, 1
        %s701 = scalar_select %p700, %s697, 1
        %s702 = smul.addr %s699, 2
        %s703 = sadd.s32 %s701, %s702
        %s704 = smul.addr %s703, 8
        %s705 = scalar_lea.vmem %s3, %s704
        // Predicated region
        $region79: #{closed_call.7} parent=65 // pred_check
          %p706 = pneg %p135
        $region80: #{closed_call.7} parent=65 // pred_check_branch
          %708 = sbr.rel (%p706) target = $region82
        $region81: #{closed_call.7} parent=65 // pred_region
          %s709 = smul.u32 2, %s19
          %s710 = smul.u32 2, %s20
        $region82: #{closed_call.7} parent=65 // pred_fallthru
          _
      $region66: #{closed_call.7} parent=5 // pred_fallthru
        _
      %p711 = scmp.le.s32.totalorder 2, %s9
      // Predicated region
      $region83: #{closed_call.7} parent=5 // pred_check
        %p712 = pneg %p711
      $region84: #{closed_call.7} parent=5 // pred_check_branch
        %714 = sbr.rel (%p712) target = $region86
      $region85: #{closed_call.7} parent=5 // pred_region
        %s715 = ssub.s32 %s9, 2
        // Predicated region
        $region87: #{closed_call.7} parent=85 // pred_check
          %p716 = pneg %p141
        $region88: #{closed_call.7} parent=85 // pred_check_branch
          %718 = sbr.rel (%p716) target = $region90
        $region89: #{closed_call.7} parent=85 // pred_region
          %s719 = smul.u32 2, %s22
          %s720 = smul.u32 2, %s23
          %p721 = scmp.lt.s32.totalorder %s719, 3
          %s722 = scalar_select %p721, %s719, 3
          %p723 = scmp.lt.s32.totalorder %s720, 1
          %s724 = scalar_select %p723, %s720, 1
          %s725 = smul.addr %s722, 2
          %s726 = sadd.s32 %s724, %s725
          %s727 = smul.addr %s726, 8
          %s728 = scalar_lea.vmem %s3, %s727
        $region90: #{closed_call.7} parent=85 // pred_fallthru
          _
      $region86: #{closed_call.7} parent=5 // pred_fallthru
        _
    $region6: #{closed_call.7} parent=1 // loop_footer
      %s13 = sadd.s32 1, %s9
    $region7: #{closed_call.7} parent=1 // loop_footer_branch
      %8 = sbr.rel target = $region3
    $region8: #{closed_call.7} parent=1 // loop_exit
      _

// kernel: closed_call.8
$region0: #{closed_call.8}
  #allocation0 [shape = 'u32[]', space=smem, size = 0x4, offset = 0x4, fixed_abs, tag = 'smem constant byte address 0x4 - core index']
  #allocation1 [shape = 'u32[72,128]{1,0:T(1,128)}', space=vmem, size = 0x9000, scoped, tag = 'internal scratch']
  #allocation2 [shape = 'f32[16,256]{1,0:T(8,128)}', space=vmem, size = 0x4000, scoped, tag = 'scratch operand']
  %s0 = inlined_call_operand.vmem [shape: bf16[32,2304], index: 0, kind: input, shape index: {}]
  %s1 = inlined_call_operand.vmem [shape: bf16[2304,256], index: 1, kind: input, shape index: {}]
  %s2 = inlined_call_operand.vmem [shape: f32[1,256], index: 2, kind: input, shape index: {}]
  %s3 = inlined_call_operand.vmem [shape: f32[32,256], index: 3, kind: input, shape index: {}]
  %s4 = inlined_call_operand.vmem [shape: f32[32,256], index: 4, kind: output, shape index: {}]
  %s5 = sld [smem:[#allocation0]]
  $region95: #{closed_call.8} parent=0
    _
  %s7 = ssub.s32 1, %s5
  %s8 = scalar_select 0, %s7, %s5
  $region1: #{closed_call.8} parent=0
    #allocation3 [shape = 'u8[16384]{0}', space=vmem, size = 0x4000, scoped, tag = 'input window, operand 0']
    loop: start=0, step=1, limit=20
    $region2: #{closed_call.8} parent=1 // loop_pre_header
      _
    $region3: #{closed_call.8} parent=1 // loop_header
      %s10 = sphi 0, %s14
      %p11 = scmp.ge.s32.totalorder %s10, 20
      %s17 = sphi 0, %s36
      %s18 = sphi 0, %s32
      %s19 = sphi 0, %s28
      %s20 = sphi 0, %s17
      %s21 = sphi 0, %s18
      %s22 = sphi 0, %s19
      %s23 = sphi 0, %s20
      %s24 = sphi 0, %s21
      %s25 = sphi 0, %s22
      %s41 = sphi 0, %s43
      %s44 = sphi 0, %s41
      %s45 = sphi 0, %s44
      %s61 = sphi 0, %s45
      %s69 = sphi 0, %s71
      %s72 = sphi 0, %s69
      %s73 = sphi 0, %s72
      %s89 = sphi 0, %s73
      %s95 = sphi 0, %s97
      %s98 = sphi 0, %s95
      %s99 = sphi 0, %s98
      %s115 = sphi 0, %s99
      %s123 = sphi 0, %s125
      %s126 = sphi 0, %s123
      %s127 = sphi 0, %s126
      %s143 = sphi 0, %s127
      %s151 = sphi 0, %s153
      %s154 = sphi 0, %s151
      %s155 = sphi 0, %s154
      %s171 = sphi 0, %s155
    $region4: #{closed_call.8} parent=1 // loop_header_branch
      %13 = sbr.rel (%p11) target = $region8
    $region5: #{closed_call.8} parent=1 // loop_body
      %s15 = ssub.s32 %s10, 1
      %s16 = ssub.s32 %s10, 2
      %s26 = sadd.s32 1, %s19
      %p27 = scmp.ge.s32.totalorder %s26, 9
      %s28 = scalar_select %p27, 0, %s26
      %s29 = sadd.s32 1, %s18
      %s30 = scalar_select %p27, %s29, %s18
      %p31 = scmp.ge.s32.totalorder %s30, 1
      %s32 = scalar_select %p31, 0, %s30
      %s33 = sadd.s32 1, %s17
      %s34 = scalar_select %p31, %s33, %s17
      %p35 = scmp.ge.s32.totalorder %s34, 2
      %s36 = scalar_select %p35, 0, %s34
      %s37 = ssub.s32 %s17, %s36
      %s38 = ssub.s32 %s19, %s28
      %s39 = sor.u32 %s37, %s38
      %p40 = scmp.eq.s32.totalorder %s39, 0
      %s42 = sadd.s32 %s41, 1
      %s43 = scalar_select %p40, %s41, %s42
      %p46 = pneg %p40
      %p47 = scmp.eq.s32.totalorder %s10, 17
      %p48 = por %p46, %p47
      %p49 = scmp.ne.s32.totalorder %s41, %s44
      %p50 = scmp.eq.s32.totalorder %s10, 0
      %p51 = por %p49, %p50
      %p52 = scmp.ne.s32.totalorder %s41, %s44
      %p53 = scmp.eq.s32.totalorder %s15, 17
      %p54 = por %p52, %p53
      %p55 = scmp.ne.s32.totalorder %s44, %s45
      %p56 = scmp.eq.s32.totalorder %s15, 0
      %p57 = por %p55, %p56
      %p58 = scmp.ne.s32.totalorder %s44, %s45
      %p59 = scmp.eq.s32.totalorder %s16, 17
      %p60 = por %p58, %p59
      %p62 = scmp.ne.s32.totalorder %s45, %s61
      %p63 = scmp.eq.s32.totalorder %s16, 0
      %p64 = por %p62, %p63
      %s65 = ssub.s32 %s19, %s28
      %s66 = ssub.s32 %s18, %s32
      %s67 = sor.u32 %s65, %s66
      %p68 = scmp.eq.s32.totalorder %s67, 0
      %s70 = sadd.s32 %s69, 1
      %s71 = scalar_select %p68, %s69, %s70
      %p74 = pneg %p68
      %p75 = scmp.eq.s32.totalorder %s10, 17
      %p76 = por %p74, %p75
      %p77 = scmp.ne.s32.totalorder %s69, %s72
      %p78 = scmp.eq.s32.totalorder %s10, 0
      %p79 = por %p77, %p78
      %p80 = scmp.ne.s32.totalorder %s69, %s72
      %p81 = scmp.eq.s32.totalorder %s15, 17
      %p82 = por %p80, %p81
      %p83 = scmp.ne.s32.totalorder %s72, %s73
      %p84 = scmp.eq.s32.totalorder %s15, 0
      %p85 = por %p83, %p84
      %p86 = scmp.ne.s32.totalorder %s72, %s73
      %p87 = scmp.eq.s32.totalorder %s16, 17
      %p88 = por %p86, %p87
      %p90 = scmp.ne.s32.totalorder %s73, %s89
      %p91 = scmp.eq.s32.totalorder %s16, 0
      %p92 = por %p90, %p91
      %s93 = ssub.s32 %s18, %s32
      %p94 = scmp.eq.s32.totalorder %s93, 0
      %s96 = sadd.s32 %s95, 1
      %s97 = scalar_select %p94, %s95, %s96
      %p100 = pneg %p94
      %p101 = scmp.eq.s32.totalorder %s10, 17
      %p102 = por %p100, %p101
      %p103 = scmp.ne.s32.totalorder %s95, %s98
      %p104 = scmp.eq.s32.totalorder %s10, 0
      %p105 = por %p103, %p104
      %p106 = scmp.ne.s32.totalorder %s95, %s98
      %p107 = scmp.eq.s32.totalorder %s15, 17
      %p108 = por %p106, %p107
      %p109 = scmp.ne.s32.totalorder %s98, %s99
      %p110 = scmp.eq.s32.totalorder %s15, 0
      %p111 = por %p109, %p110
      %p112 = scmp.ne.s32.totalorder %s98, %s99
      %p113 = scmp.eq.s32.totalorder %s16, 17
      %p114 = por %p112, %p113
      %p116 = scmp.ne.s32.totalorder %s99, %s115
      %p117 = scmp.eq.s32.totalorder %s16, 0
      %p118 = por %p116, %p117
      %s119 = ssub.s32 %s17, %s36
      %s120 = ssub.s32 %s18, %s32
      %s121 = sor.u32 %s119, %s120
      %p122 = scmp.eq.s32.totalorder %s121, 0
      %s124 = sadd.s32 %s123, 1
      %s125 = scalar_select %p122, %s123, %s124
      %p128 = pneg %p122
      %p129 = scmp.eq.s32.totalorder %s10, 17
      %p130 = por %p128, %p129
      %p131 = scmp.ne.s32.totalorder %s123, %s126
      %p132 = scmp.eq.s32.totalorder %s10, 0
      %p133 = por %p131, %p132
      %p134 = scmp.ne.s32.totalorder %s123, %s126
      %p135 = scmp.eq.s32.totalorder %s15, 17
      %p136 = por %p134, %p135
      %p137 = scmp.ne.s32.totalorder %s126, %s127
      %p138 = scmp.eq.s32.totalorder %s15, 0
      %p139 = por %p137, %p138
      %p140 = scmp.ne.s32.totalorder %s126, %s127
      %p141 = scmp.eq.s32.totalorder %s16, 17
      %p142 = por %p140, %p141
      %p144 = scmp.ne.s32.totalorder %s127, %s143
      %p145 = scmp.eq.s32.totalorder %s16, 0
      %p146 = por %p144, %p145
      %s147 = ssub.s32 %s17, %s36
      %s148 = ssub.s32 %s18, %s32
      %s149 = sor.u32 %s147, %s148
      %p150 = scmp.eq.s32.totalorder %s149, 0
      %s152 = sadd.s32 %s151, 1
      %s153 = scalar_select %p150, %s151, %s152
      %p156 = pneg %p150
      %p157 = scmp.eq.s32.totalorder %s10, 17
      %p158 = por %p156, %p157
      %p159 = scmp.ne.s32.totalorder %s151, %s154
      %p160 = scmp.eq.s32.totalorder %s10, 0
      %p161 = por %p159, %p160
      %p162 = scmp.ne.s32.totalorder %s151, %s154
      %p163 = scmp.eq.s32.totalorder %s15, 17
      %p164 = por %p162, %p163
      %p165 = scmp.ne.s32.totalorder %s154, %s155
      %p166 = scmp.eq.s32.totalorder %s15, 0
      %p167 = por %p165, %p166
      %p168 = scmp.ne.s32.totalorder %s154, %s155
      %p169 = scmp.eq.s32.totalorder %s16, 17
      %p170 = por %p168, %p169
      %p172 = scmp.ne.s32.totalorder %s155, %s171
      %p173 = scmp.eq.s32.totalorder %s16, 0
      %p174 = por %p172, %p173
      %p175 = scmp.le.s32.totalorder 1, %s10
      %p176 = scmp.lt.s32.totalorder %s10, 19
      %p177 = pnand %p175, %p176
      %p178 = pneg %p177
      // Predicated region
      $region9: #{closed_call.8} parent=5 // pred_check
        _
      $region10: #{closed_call.8} parent=5 // pred_check_branch
        %180 = sbr.rel (%p177) target = $region12
      $region11: #{closed_call.8} parent=5 // pred_region
        %s181 = ssub.s32 %s10, 1
        // Predicated region
        $region13: #{closed_call.8} parent=11 // pred_check
          %p182 = pneg %p111
        $region14: #{closed_call.8} parent=11 // pred_check_branch
          %184 = sbr.rel (%p182) target = $region16
        $region15: #{closed_call.8} parent=11 // pred_region
          %s185 = smul.u32 2, %s21
          %p186 = scmp.lt.s32.totalorder %s185, 1
          %s187 = scalar_select %p186, %s185, 1
          %s188 = scalar_lea.vmem %s2, %s187
          %s189 = smul.u32 2, %s21
        $region16: #{closed_call.8} parent=11 // pred_fallthru
          _
      $region12: #{closed_call.8} parent=5 // pred_fallthru
        _
      %p190 = scmp.lt.s32.totalorder %s10, 18
      // Predicated region
      $region17: #{closed_call.8} parent=5 // pred_check
        %p191 = pneg %p190
      $region18: #{closed_call.8} parent=5 // pred_check_branch
        %193 = sbr.rel (%p191) target = $region20
      $region19: #{closed_call.8} parent=5 // pred_region
        // Predicated region
        $region21: #{closed_call.8} parent=19 // pred_check
          %p194 = pneg %p51
        $region22: #{closed_call.8} parent=19 // pred_check_branch
          %196 = sbr.rel (%p194) target = $region24
        $region23: #{closed_call.8} parent=19 // pred_region
          %s197 = sand.u32 %s41, 1
          %s198 = sand.u32 %s41, 1
          %s199 = smul.addr %s198, 16
          %s200 = scalar_lea.vmem [#allocation3], %s199
          %s201 = smul.u32 2, %s17
          %s202 = smul.u32 2, %s19
          %s203 = smul.addr %s201, 18
          %s204 = sadd.s32 %s202, %s203
          %s205 = smul.addr %s204, 4
          %s206 = scalar_lea.vmem %s0, %s205
          // Predicated region
          $region25: #{closed_call.8} parent=23 // pred_check
            _
          $region26: #{closed_call.8} parent=23 // pred_check_branch
            %208 = sbr.rel (0) target = $region28
          $region27: #{closed_call.8} parent=23 // pred_region
            // Predicated region
            $region29: #{closed_call.8} parent=27 // pred_check
              _
            $region30: #{closed_call.8} parent=27 // pred_check_branch
              %210 = sbr.rel (0) target = $region32
            $region31: #{closed_call.8} parent=27 // pred_region
              // Predicated region
              $region44: #{closed_call.8} parent=31 // pred_check
                _
              $region45: #{closed_call.8} parent=31 // pred_check_branch
                %228 = sbr.rel (0) target = $region47
              $region46: #{closed_call.8} parent=31 // pred_region
                loop: start=0, step=1, limit=1
                $region48: #{closed_call.8} parent=46 // loop_pre_header
                  _
                $region49: #{closed_call.8} parent=46 // loop_header
                  %s230 = sphi 0, %s234
                  %p231 = scmp.ge.s32.totalorder %s230, 1
                  %s235 = sphi %s206, %s206
                  %s236 = sphi %s200, %s200
                $region50: #{closed_call.8} parent=46 // loop_header_branch
                  %233 = sbr.rel (%p231) target = $region54
                $region51: #{closed_call.8} parent=46 // loop_body
                  %v237 = vld [vmem:[%s235] sm:$0xff]
                  %238 = vst [vmem:[%s236] sm:$0xff] %v237
                  %v239 = vld [vmem:[%s235 + $0x48] sm:$0xff]
                  %240 = vst [vmem:[%s236 + $0x8] sm:$0xff] %v239
                $region52: #{closed_call.8} parent=46 // loop_footer
                  %s234 = sadd.s32 1, %s230
                $region53: #{closed_call.8} parent=46 // loop_footer_branch
                  %229 = sbr.rel target = $region49
                $region54: #{closed_call.8} parent=46 // loop_exit
                  _
              $region47: #{closed_call.8} parent=31 // pred_fallthru
                _
              // Predicated region
              $region55: #{closed_call.8} parent=31 // pred_check
                _
              $region56: #{closed_call.8} parent=31 // pred_check_branch
                %242 = sbr.rel target = $region58
              $region57: #{closed_call.8} parent=31 // pred_region
                _
              $region58: #{closed_call.8} parent=31 // pred_fallthru
                _
            $region32: #{closed_call.8} parent=27 // pred_fallthru
              _
            // Predicated region
            $region33: #{closed_call.8} parent=27 // pred_check
              _
            $region34: #{closed_call.8} parent=27 // pred_check_branch
              %212 = sbr.rel target = $region36
            $region35: #{closed_call.8} parent=27 // pred_region
              %s214 = ssub.s32 256, 1
              loop: start=0, step=1, limit=1
              $region37: #{closed_call.8} parent=35 // loop_pre_header
                _
              $region38: #{closed_call.8} parent=35 // loop_header
                %s216 = sphi 0, %s220
                %p217 = scmp.ge.s32.totalorder %s216, 1
                %s221 = sphi %s206, %s206
                %s222 = sphi %s200, %s200
              $region39: #{closed_call.8} parent=35 // loop_header_branch
                %219 = sbr.rel (%p217) target = $region43
              $region40: #{closed_call.8} parent=35 // loop_body
                %v223 = vld [vmem:[%s221] sm:%s214]
                %224 = vst [vmem:[%s222] sm:%s214] %v223
                %v225 = vld [vmem:[%s221 + $0x48] sm:%s214]
                %226 = vst [vmem:[%s222 + $0x8] sm:%s214] %v225
              $region41: #{closed_call.8} parent=35 // loop_footer
                %s220 = sadd.s32 1, %s216
              $region42: #{closed_call.8} parent=35 // loop_footer_branch
                %215 = sbr.rel target = $region38
              $region43: #{closed_call.8} parent=35 // loop_exit
                _
            $region36: #{closed_call.8} parent=27 // pred_fallthru
              _
          $region28: #{closed_call.8} parent=23 // pred_fallthru
            _
          %243 = vnop
        $region24: #{closed_call.8} parent=19 // pred_fallthru
          _
        // Predicated region
        $region59: #{closed_call.8} parent=19 // pred_check
          %p244 = pneg %p79
        $region60: #{closed_call.8} parent=19 // pred_check_branch
          %246 = sbr.rel (%p244) target = $region62
        $region61: #{closed_call.8} parent=19 // pred_region
          %s247 = smul.u32 32, %s19
          %s248 = smul.u32 2, %s18
          %p249 = scmp.lt.s32.totalorder %s247, 287
          %s250 = scalar_select %p249, %s247, 287
          %p251 = scmp.lt.s32.totalorder %s248, 1
          %s252 = scalar_select %p251, %s248, 1
          %s253 = smul.addr %s250, 2
          %s254 = sadd.s32 %s252, %s253
          %s255 = smul.addr %s254, 4
          %s256 = scalar_lea.vmem %s1, %s255
          %s257 = smul.u32 32, %s19
          %s258 = smul.u32 2, %s18
        $region62: #{closed_call.8} parent=19 // pred_fallthru
          _
        // Predicated region
        $region63: #{closed_call.8} parent=19 // pred_check
          %p259 = pneg %p133
        $region64: #{closed_call.8} parent=19 // pred_check_branch
          %261 = sbr.rel (%p259) target = $region66
        $region65: #{closed_call.8} parent=19 // pred_region
          %s262 = smul.u32 2, %s17
          %s263 = smul.u32 2, %s18
          %p264 = scmp.lt.s32.totalorder %s262, 3
          %s265 = scalar_select %p264, %s262, 3
          %p266 = scmp.lt.s32.totalorder %s263, 1
          %s267 = scalar_select %p266, %s263, 1
          %s268 = smul.addr %s265, 2
          %s269 = sadd.s32 %s267, %s268
          %s270 = smul.addr %s269, 8
          %s271 = scalar_lea.vmem %s3, %s270
          %s272 = smul.u32 2, %s17
          %s273 = smul.u32 2, %s18
        $region66: #{closed_call.8} parent=19 // pred_fallthru
          _
      $region20: #{closed_call.8} parent=5 // pred_fallthru
        _
      %p274 = scmp.le.s32.totalorder 1, %s10
      %p275 = scmp.lt.s32.totalorder %s10, 19
      %p276 = pnand %p274, %p275
      %p277 = pneg %p276
      // Predicated region
      $region67: #{closed_call.8} parent=5 // pred_check
        _
      $region68: #{closed_call.8} parent=5 // pred_check_branch
        %279 = sbr.rel (%p276) target = $region70
      $region69: #{closed_call.8} parent=5 // pred_region
        %s280 = ssub.s32 %s10, 1
        %s281 = sand.u32 %s44, 1
        %s282 = sand.u32 %s44, 1
        %s283 = smul.addr %s282, 16
        %s284 = scalar_lea.vmem [#allocation3], %s283
        // Predicated region
        $region71: #{closed_call.8} parent=69 // pred_check
          %p285 = pneg %p57
        $region72: #{closed_call.8} parent=69 // pred_check_branch
          %287 = sbr.rel (%p285) target = $region74
        $region73: #{closed_call.8} parent=69 // pred_region
          _
        $region74: #{closed_call.8} parent=69 // pred_fallthru
          _
        %s288 = sand.u32 %s44, 1
        %s289 = sand.u32 %s44, 1
        %s290 = smul.addr %s289, 16
        %s291 = scalar_lea.vmem [#allocation3], %s290
        %p292 = pneg %p57
        %p293 = pneg %p54
        %s294 = smul.u32 32, %s22
        %s295 = smul.u32 2, %s21
        %p296 = scmp.lt.s32.totalorder %s294, 287
        %s297 = scalar_select %p296, %s294, 287
        %p298 = scmp.lt.s32.totalorder %s295, 1
        %s299 = scalar_select %p298, %s295, 1
        %s300 = smul.addr %s297, 2
        %s301 = sadd.s32 %s299, %s300
        %s302 = smul.addr %s301, 4
        %s303 = scalar_lea.vmem %s1, %s302
        %p304 = pneg %p85
        %p305 = pneg %p82
        %s306 = smul.u32 2, %s21
        %p307 = scmp.lt.s32.totalorder %s306, 1
        %s308 = scalar_select %p307, %s306, 1
        %s309 = scalar_lea.vmem %s2, %s308
        %p310 = pneg %p111
        %p311 = pneg %p108
        %s312 = smul.u32 2, %s20
        %s313 = smul.u32 2, %s21
        %p314 = scmp.lt.s32.totalorder %s312, 3
        %s315 = scalar_select %p314, %s312, 3
        %p316 = scmp.lt.s32.totalorder %s313, 1
        %s317 = scalar_select %p316, %s313, 1
        %s318 = smul.addr %s315, 2
        %s319 = sadd.s32 %s317, %s318
        %s320 = smul.addr %s319, 8
        %s321 = scalar_lea.vmem %s3, %s320
        %p322 = pneg %p139
        %p323 = pneg %p136
        %p324 = pneg %p167
        %p325 = pneg %p164
        %s326 = smul.u32 2, %s20
        %s327 = smul.u32 2, %s21
        %p328 = scmp.lt.s32.totalorder %s326, 3
        %s329 = scalar_select %p328, %s326, 3
        %p330 = scmp.lt.s32.totalorder %s327, 1
        %s331 = scalar_select %p330, %s327, 1
        %s332 = smul.addr %s329, 2
        %s333 = sadd.s32 %s331, %s332
        %s334 = smul.addr %s333, 8
        %s335 = scalar_lea.vmem %s4, %s334
        %s336 = smul.u32 2, %s20
        %s337 = smul.u32 2, %s22
        %s338 = smul.u32 32, %s22
        %s339 = smul.u32 2, %s21
        %p340 = scmp.lt.s32.totalorder %s338, 287
        %s341 = scalar_select %p340, %s338, 287
        %p342 = scmp.lt.s32.totalorder %s339, 1
        %s343 = scalar_select %p342, %s339, 1
        %s344 = smul.addr %s341, 2
        %s345 = sadd.s32 %s343, %s344
        %s346 = smul.addr %s345, 4
        %s347 = scalar_lea.vmem %s1, %s346
        %s348 = smul.u32 32, %s22
        %s349 = smul.u32 2, %s21
        %s350 = smul.u32 2, %s21
        %p351 = scmp.lt.s32.totalorder %s350, 1
        %s352 = scalar_select %p351, %s350, 1
        %s353 = scalar_lea.vmem %s2, %s352
        %s354 = smul.u32 2, %s21
        %s355 = smul.u32 2, %s20
        %s356 = smul.u32 2, %s21
        %p357 = scmp.lt.s32.totalorder %s355, 3
        %s358 = scalar_select %p357, %s355, 3
        %p359 = scmp.lt.s32.totalorder %s356, 1
        %s360 = scalar_select %p359, %s356, 1
        %s361 = smul.addr %s358, 2
        %s362 = sadd.s32 %s360, %s361
        %s363 = smul.addr %s362, 8
        %s364 = scalar_lea.vmem %s3, %s363
        %s365 = smul.u32 2, %s20
        %s366 = smul.u32 2, %s21
        %s367 = smul.u32 2, %s20
        %s368 = smul.u32 2, %s21
        %p369 = scmp.lt.s32.totalorder %s367, 3
        %s370 = scalar_select %p369, %s367, 3
        %p371 = scmp.lt.s32.totalorder %s368, 1
        %s372 = scalar_select %p371, %s368, 1
        %s373 = smul.addr %s370, 2
        %s374 = sadd.s32 %s372, %s373
        %s375 = smul.addr %s374, 8
        %s376 = scalar_lea.vmem %s4, %s375
        %s377 = smul.u32 2, %s20
        %s378 = smul.u32 2, %s21
        %p379 = scmp.eq.s32.totalorder %s22, 0
        // Predicated region
        $region75: #{closed_call.8} parent=69 // pred_check
          %p380 = pneg %p379
        $region76: #{closed_call.8} parent=69 // pred_check_branch
          %382 = sbr.rel (%p380) target = $region78
        $region77: #{closed_call.8} parent=69 // pred_region
          %383 = vst [vmem:[#allocation2] sm:$0xff] 0.0
          %384 = vst [vmem:[#allocation2 + $0x8] sm:$0xff] 0.0
          %385 = vst [vmem:[#allocation2 + $0x10] sm:$0xff] 0.0
          %386 = vst [vmem:[#allocation2 + $0x18] sm:$0xff] 0.0
        $region78: #{closed_call.8} parent=69 // pred_fallthru
          _
        %v387 = vld [vmem:[#allocation2] sm:$0xff]
        %v388 = vld [vmem:[#allocation2 + $0x8] sm:$0xff]
        %v389 = vld [vmem:[#allocation2 + $0x10] sm:$0xff]
        %v390 = vld [vmem:[#allocation2 + $0x18] sm:$0xff]
        %v391 = vld [vmem:[%s284] sm:$0xff]
        %v392 = vld [vmem:[%s284 + $0x8] sm:$0xff]
        %v393 = vld [vmem:[%s347] sm:$0xff]
        %v394 = vld [vmem:[%s347 + $0x8] sm:$0xff]
        %v395 = vld [vmem:[%s347 + $0x10] sm:$0xff]
        %v396 = vld [vmem:[%s347 + $0x18] sm:$0xff]
        %v397 = vld [vmem:[%s347 + $0x20] sm:$0xff]
        %v398 = vld [vmem:[%s347 + $0x28] sm:$0xff]
        %v399 = vld [vmem:[%s347 + $0x30] sm:$0xff]
        %v400 = vld [vmem:[%s347 + $0x38] sm:$0xff]
        %v401 = vld [vmem:[%s347 + $0x40] sm:$0xff]
        %v402 = vld [vmem:[%s347 + $0x48] sm:$0xff]
        %v403 = vld [vmem:[%s347 + $0x50] sm:$0xff]
        %v404 = vld [vmem:[%s347 + $0x58] sm:$0xff]
        %v405 = vld [vmem:[%s347 + $0x60] sm:$0xff]
        %v406 = vld [vmem:[%s347 + $0x68] sm:$0xff]
        %v407 = vld [vmem:[%s347 + $0x70] sm:$0xff]
        %v408 = vld [vmem:[%s347 + $0x78] sm:$0xff]
        %v409 = vld [vmem:[%s347 + $0x80] sm:$0xff]
        %v410 = vld [vmem:[%s347 + $0x88] sm:$0xff]
        %v411 = vld [vmem:[%s347 + $0x90] sm:$0xff]
        %v412 = vld [vmem:[%s347 + $0x98] sm:$0xff]
        %v413 = vld [vmem:[%s347 + $0xa0] sm:$0xff]
        %v414 = vld [vmem:[%s347 + $0xa8] sm:$0xff]
        %v415 = vld [vmem:[%s347 + $0xb0] sm:$0xff]
        %v416 = vld [vmem:[%s347 + $0xb8] sm:$0xff]
        %v417 = vld [vmem:[%s347 + $0xc0] sm:$0xff]
        %v418 = vld [vmem:[%s347 + $0xc8] sm:$0xff]
        %v419 = vld [vmem:[%s347 + $0xd0] sm:$0xff]
        %v420 = vld [vmem:[%s347 + $0xd8] sm:$0xff]
        %v421 = vld [vmem:[%s347 + $0xe0] sm:$0xff]
        %v422 = vld [vmem:[%s347 + $0xe8] sm:$0xff]
        %v423 = vld [vmem:[%s347 + $0xf0] sm:$0xff]
        %v424 = vld [vmem:[%s347 + $0xf8] sm:$0xff]
        %v427 = vunpack.c.l.b16 %v391
        %v428 = vunpack.c.h.b16 %v391
        %v429 = vunpack.c.l.b16 %v392
        %v430 = vunpack.c.h.b16 %v392
        %v431 = vpack.c.b16 %v429, %v427
        %v432 = vpack.c.b16 %v430, %v428
        %v467 = vunpack.c.l.b16 %v393
        %v468 = vunpack.c.h.b16 %v393
        %v469 = vunpack.c.l.b16 %v394
        %v470 = vunpack.c.h.b16 %v394
        %v471 = vunpack.c.l.b16 %v395
        %v472 = vunpack.c.h.b16 %v395
        %v473 = vunpack.c.l.b16 %v396
        %v474 = vunpack.c.h.b16 %v396
        %v475 = vunpack.c.l.b16 %v397
        %v476 = vunpack.c.h.b16 %v397
        %v477 = vunpack.c.l.b16 %v398
        %v478 = vunpack.c.h.b16 %v398
        %v479 = vunpack.c.l.b16 %v399
        %v480 = vunpack.c.h.b16 %v399
        %v481 = vunpack.c.l.b16 %v400
        %v482 = vunpack.c.h.b16 %v400
        %v483 = vunpack.c.l.b16 %v401
        %v484 = vunpack.c.h.b16 %v401
        %v485 = vunpack.c.l.b16 %v402
        %v486 = vunpack.c.h.b16 %v402
        %v487 = vunpack.c.l.b16 %v403
        %v488 = vunpack.c.h.b16 %v403
        %v489 = vunpack.c.l.b16 %v404
        %v490 = vunpack.c.h.b16 %v404
        %v491 = vunpack.c.l.b16 %v405
        %v492 = vunpack.c.h.b16 %v405
        %v493 = vunpack.c.l.b16 %v406
        %v494 = vunpack.c.h.b16 %v406
        %v495 = vunpack.c.l.b16 %v407
        %v496 = vunpack.c.h.b16 %v407
        %v497 = vunpack.c.l.b16 %v408
        %v498 = vunpack.c.h.b16 %v408
        %v499 = vunpack.c.l.b16 %v409
        %v500 = vunpack.c.h.b16 %v409
        %v501 = vunpack.c.l.b16 %v410
        %v502 = vunpack.c.h.b16 %v410
        %v503 = vunpack.c.l.b16 %v411
        %v504 = vunpack.c.h.b16 %v411
        %v505 = vunpack.c.l.b16 %v412
        %v506 = vunpack.c.h.b16 %v412
        %v507 = vunpack.c.l.b16 %v413
        %v508 = vunpack.c.h.b16 %v413
        %v509 = vunpack.c.l.b16 %v414
        %v510 = vunpack.c.h.b16 %v414
        %v511 = vunpack.c.l.b16 %v415
        %v512 = vunpack.c.h.b16 %v415
        %v513 = vunpack.c.l.b16 %v416
        %v514 = vunpack.c.h.b16 %v416
        %v515 = vunpack.c.l.b16 %v417
        %v516 = vunpack.c.h.b16 %v417
        %v517 = vunpack.c.l.b16 %v418
        %v518 = vunpack.c.h.b16 %v418
        %v519 = vunpack.c.l.b16 %v419
        %v520 = vunpack.c.h.b16 %v419
        %v521 = vunpack.c.l.b16 %v420
        %v522 = vunpack.c.h.b16 %v420
        %v523 = vunpack.c.l.b16 %v421
        %v524 = vunpack.c.h.b16 %v421
        %v525 = vunpack.c.l.b16 %v422
        %v526 = vunpack.c.h.b16 %v422
        %v527 = vunpack.c.l.b16 %v423
        %v528 = vunpack.c.h.b16 %v423
        %v529 = vunpack.c.l.b16 %v424
        %v530 = vunpack.c.h.b16 %v424
        %v531 = vpack.c.b16 %v469, %v467
        %v532 = vpack.c.b16 %v470, %v468
        %v533 = vpack.c.b16 %v473, %v471
        %v534 = vpack.c.b16 %v474, %v472
        %v535 = vpack.c.b16 %v477, %v475
        %v536 = vpack.c.b16 %v478, %v476
        %v537 = vpack.c.b16 %v481, %v479
        %v538 = vpack.c.b16 %v482, %v480
        %v539 = vpack.c.b16 %v485, %v483
        %v540 = vpack.c.b16 %v486, %v484
        %v541 = vpack.c.b16 %v489, %v487
        %v542 = vpack.c.b16 %v490, %v488
        %v543 = vpack.c.b16 %v493, %v491
        %v544 = vpack.c.b16 %v494, %v492
        %v545 = vpack.c.b16 %v497, %v495
        %v546 = vpack.c.b16 %v498, %v496
        %v547 = vpack.c.b16 %v501, %v499
        %v548 = vpack.c.b16 %v502, %v500
        %v549 = vpack.c.b16 %v505, %v503
        %v550 = vpack.c.b16 %v506, %v504
        %v551 = vpack.c.b16 %v509, %v507
        %v552 = vpack.c.b16 %v510, %v508
        %v553 = vpack.c.b16 %v513, %v511
        %v554 = vpack.c.b16 %v514, %v512
        %v555 = vpack.c.b16 %v517, %v515
        %v556 = vpack.c.b16 %v518, %v516
        %v557 = vpack.c.b16 %v521, %v519
        %v558 = vpack.c.b16 %v522, %v520
        %v559 = vpack.c.b16 %v525, %v523
        %v560 = vpack.c.b16 %v526, %v524
        %v561 = vpack.c.b16 %v529, %v527
        %v562 = vpack.c.b16 %v530, %v528
        %595 = vmatpush.bf16.msra.mxu0 %v545
        %596 = vmatpush.bf16.msra.mxu0 %v543
        %597 = vmatpush.bf16.msra.mxu0 %v541
        %598 = vmatpush.bf16.msra.mxu0 %v539
        %599 = vmatpush.bf16.msra.mxu0 %v537
        %600 = vmatpush.bf16.msra.mxu0 %v535
        %601 = vmatpush.bf16.msra.mxu0 %v533
        %602 = vmatpush.bf16.msra.mxu0 %v531
        %603 = vmatmul.bf16.gmra.mxu0 %v431
        %v604 = vpop.f32.mrf.mxu0
        %v605 = vadd.f32 0.0, %v604
        %v606 = vpop.f32.mrf.mxu0
        %v607 = vadd.f32 0.0, %v606
        %608 = vdwg.mxu0
        %609 = vmatpush.bf16.msra.mxu0 %v561
        %610 = vmatpush.bf16.msra.mxu0 %v559
        %611 = vmatpush.bf16.msra.mxu0 %v557
        %612 = vmatpush.bf16.msra.mxu0 %v555
        %613 = vmatpush.bf16.msra.mxu0 %v553
        %614 = vmatpush.bf16.msra.mxu0 %v551
        %615 = vmatpush.bf16.msra.mxu0 %v549
        %616 = vmatpush.bf16.msra.mxu0 %v547
        %617 = vmatmul.bf16.gmra.mxu0 %v432
        %v618 = vpop.f32.mrf.mxu0
        %v619 = vadd.f32 %v605, %v618
        %v620 = vpop.f32.mrf.mxu0
        %v621 = vadd.f32 %v607, %v620
        %622 = vdwg.mxu0
        %623 = vmatpush.bf16.msra.mxu0 %v546
        %624 = vmatpush.bf16.msra.mxu0 %v544
        %625 = vmatpush.bf16.msra.mxu0 %v542
        %626 = vmatpush.bf16.msra.mxu0 %v540
        %627 = vmatpush.bf16.msra.mxu0 %v538
        %628 = vmatpush.bf16.msra.mxu0 %v536
        %629 = vmatpush.bf16.msra.mxu0 %v534
        %630 = vmatpush.bf16.msra.mxu0 %v532
        %631 = vmatmul.bf16.gmra.mxu0 %v431
        %v632 = vpop.f32.mrf.mxu0
        %v633 = vadd.f32 0.0, %v632
        %v634 = vpop.f32.mrf.mxu0
        %v635 = vadd.f32 0.0, %v634
        %636 = vdwg.mxu0
        %637 = vmatpush.bf16.msra.mxu0 %v562
        %638 = vmatpush.bf16.msra.mxu0 %v560
        %639 = vmatpush.bf16.msra.mxu0 %v558
        %640 = vmatpush.bf16.msra.mxu0 %v556
        %641 = vmatpush.bf16.msra.mxu0 %v554
        %642 = vmatpush.bf16.msra.mxu0 %v552
        %643 = vmatpush.bf16.msra.mxu0 %v550
        %644 = vmatpush.bf16.msra.mxu0 %v548
        %645 = vmatmul.bf16.gmra.mxu0 %v432
        %v646 = vpop.f32.mrf.mxu0
        %v647 = vadd.f32 %v633, %v646
        %v648 = vpop.f32.mrf.mxu0
        %v649 = vadd.f32 %v635, %v648
        %650 = vdwg.mxu0
        %v651 = vadd.f32 %v387, %v619
        %v652 = vadd.f32 %v388, %v647
        %v653 = vadd.f32 %v389, %v621
        %v654 = vadd.f32 %v390, %v649
        %655 = vst [vmem:[#allocation2] sm:$0xff] %v651
        %656 = vst [vmem:[#allocation2 + $0x8] sm:$0xff] %v652
        %657 = vst [vmem:[#allocation2 + $0x10] sm:$0xff] %v653
        %658 = vst [vmem:[#allocation2 + $0x18] sm:$0xff] %v654
        %p659 = scmp.eq.s32.totalorder %s22, 8
        // Predicated region
        $region79: #{closed_call.8} parent=69 // pred_check
          %p660 = pneg %p659
        $region80: #{closed_call.8} parent=69 // pred_check_branch
          %662 = sbr.rel (%p660) target = $region82
        $region81: #{closed_call.8} parent=69 // pred_region
          %v663 = vld [vmem:[#allocation2] sm:$0xff]
          %v664 = vld [vmem:[#allocation2 + $0x8] sm:$0xff]
          %v665 = vld [vmem:[#allocation2 + $0x10] sm:$0xff]
          %v666 = vld [vmem:[#allocation2 + $0x18] sm:$0xff]
          %v667 = vld [vmem:[%s353] sm:$0x3]
          %v669 = vperm.slane %v667, 0
          %v670 = vperm.slane %v667, 1
          %v673 = vadd.f32 %v663, %v669
          %v674 = vadd.f32 %v664, %v670
          %v675 = vadd.f32 %v665, %v669
          %v676 = vadd.f32 %v666, %v670
          %v677 = vlaneseq
          %v678 = vshrl.u32 %v677, 7
          %v679 = vadd.s32 %v678, 8
          %vm680 = vcmp.lt.s32.totalorder %v678, 16
          %vm681 = vcmp.lt.s32.totalorder %v679, 16
          %v682 = vsel %vm680, %v673, 0.0
          %v683 = vsel %vm680, %v674, 0.0
          %v684 = vsel %vm681, %v675, 0.0
          %v685 = vsel %vm681, %v676, 0.0
          %v686 = vadd.f32 %v682, %v684
          %v687 = vrot.slane %v686, 4
          %v688 = vadd.f32 %v686, %v687
          %v689 = vrot.slane %v688, 2
          %v690 = vadd.f32 %v688, %v689
          %v691 = vrot.slane %v690, 1
          %v692 = vadd.f32 %v690, %v691
          %v693 = vadd.f32 %v683, %v685
          %v694 = vrot.slane %v693, 4
          %v695 = vadd.f32 %v693, %v694
          %v696 = vrot.slane %v695, 2
          %v697 = vadd.f32 %v695, %v696
          %v698 = vrot.slane %v697, 1
          %v699 = vadd.f32 %v697, %v698
          %v700 = vmul.f32 %v692, 0.0625
          %v701 = vmul.f32 %v699, 0.0625
          %v702 = vmul.f32 %v682, %v682
          %v703 = vmul.f32 %v683, %v683
          %v704 = vmul.f32 %v684, %v684
          %v705 = vmul.f32 %v685, %v685
          %v706 = vadd.f32 %v702, %v704
          %v707 = vrot.slane %v706, 4
          %v708 = vadd.f32 %v706, %v707
          %v709 = vrot.slane %v708, 2
          %v710 = vadd.f32 %v708, %v709
          %v711 = vrot.slane %v710, 1
          %v712 = vadd.f32 %v710, %v711
          %v713 = vadd.f32 %v703, %v705
          %v714 = vrot.slane %v713, 4
          %v715 = vadd.f32 %v713, %v714
          %v716 = vrot.slane %v715, 2
          %v717 = vadd.f32 %v715, %v716
          %v718 = vrot.slane %v717, 1
          %v719 = vadd.f32 %v717, %v718
          %v720 = vmul.f32 %v712, 0.0625
          %v721 = vmul.f32 %v719, 0.0625
          %v722 = vmul.f32 %v700, %v700
          %v723 = vmul.f32 %v701, %v701
          %v724 = vsub.f32 %v720, %v722
          %v725 = vsub.f32 %v721, %v723
          %v726 = vadd.f32 %v724, 1e-05
          %v727 = vadd.f32 %v725, 1e-05
          %v728 = vrsqrt.pop %v726
          %v729 = vmul.f32 %v728, %v726
          %v730 = vmul.f32 %v729, %v728
          %v731 = vmul.f32 0.5, %v730
          %v732 = vsub.f32 1.5, %v731
          %v733 = vmul.f32 %v728, %v732
          %vm734 = vweird.f32 %v726
          %vm735 = vweird.f32 %v728
          %vm736 = vmor %vm734, %vm735
          %v737 = vsel %vm736, %v728, %v733
          %v738 = vrsqrt.pop %v727
          %v739 = vmul.f32 %v738, %v727
          %v740 = vmul.f32 %v739, %v738
          %v741 = vmul.f32 0.5, %v740
          %v742 = vsub.f32 1.5, %v741
          %v743 = vmul.f32 %v738, %v742
          %vm744 = vweird.f32 %v727
          %vm745 = vweird.f32 %v738
          %vm746 = vmor %vm744, %vm745
          %v747 = vsel %vm746, %v738, %v743
          %v748 = vld [vmem:[%s364] sm:$0xff]
          %v749 = vld [vmem:[%s364 + $0x8] sm:$0xff]
          %v750 = vld [vmem:[%s364 + $0x10] sm:$0xff]
          %v751 = vld [vmem:[%s364 + $0x18] sm:$0xff]
          %v752 = vsub.f32 %v673, %v700
          %v753 = vsub.f32 %v674, %v701
          %v754 = vsub.f32 %v675, %v700
          %v755 = vsub.f32 %v676, %v701
          %v756 = vmul.f32 %v752, %v737
          %v757 = vmul.f32 %v753, %v747
          %v758 = vmul.f32 %v754, %v737
          %v759 = vmul.f32 %v755, %v747
          %v760 = vadd.f32 %v748, %v756
          %v761 = vadd.f32 %v749, %v757
          %v762 = vadd.f32 %v750, %v758
          %v763 = vadd.f32 %v751, %v759
          %764 = vst [vmem:[%s376] sm:$0xff] %v760
          %765 = vst [vmem:[%s376 + $0x8] sm:$0xff] %v761
          %766 = vst [vmem:[%s376 + $0x10] sm:$0xff] %v762
          %767 = vst [vmem:[%s376 + $0x18] sm:$0xff] %v763
        $region82: #{closed_call.8} parent=69 // pred_fallthru
          _
        %s768 = smul.u32 2, %s20
        %s769 = smul.u32 2, %s21
        %p770 = scmp.lt.s32.totalorder %s768, 3
        %s771 = scalar_select %p770, %s768, 3
        %p772 = scmp.lt.s32.totalorder %s769, 1
        %s773 = scalar_select %p772, %s769, 1
        %s774 = smul.addr %s771, 2
        %s775 = sadd.s32 %s773, %s774
        %s776 = smul.addr %s775, 8
        %s777 = scalar_lea.vmem %s4, %s776
        // Predicated region
        $region83: #{closed_call.8} parent=69 // pred_check
          %p778 = pneg %p164
        $region84: #{closed_call.8} parent=69 // pred_check_branch
          %780 = sbr.rel (%p778) target = $region86
        $region85: #{closed_call.8} parent=69 // pred_region
          %s781 = smul.u32 2, %s20
          %s782 = smul.u32 2, %s21
        $region86: #{closed_call.8} parent=69 // pred_fallthru
          _
      $region70: #{closed_call.8} parent=5 // pred_fallthru
        _
      %p783 = scmp.le.s32.totalorder 2, %s10
      // Predicated region
      $region87: #{closed_call.8} parent=5 // pred_check
        %p784 = pneg %p783
      $region88: #{closed_call.8} parent=5 // pred_check_branch
        %786 = sbr.rel (%p784) target = $region90
      $region89: #{closed_call.8} parent=5 // pred_region
        %s787 = ssub.s32 %s10, 2
        // Predicated region
        $region91: #{closed_call.8} parent=89 // pred_check
          %p788 = pneg %p170
        $region92: #{closed_call.8} parent=89 // pred_check_branch
          %790 = sbr.rel (%p788) target = $region94
        $region93: #{closed_call.8} parent=89 // pred_region
          %s791 = smul.u32 2, %s23
          %s792 = smul.u32 2, %s24
          %p793 = scmp.lt.s32.totalorder %s791, 3
          %s794 = scalar_select %p793, %s791, 3
          %p795 = scmp.lt.s32.totalorder %s792, 1
          %s796 = scalar_select %p795, %s792, 1
          %s797 = smul.addr %s794, 2
          %s798 = sadd.s32 %s796, %s797
          %s799 = smul.addr %s798, 8
          %s800 = scalar_lea.vmem %s4, %s799
        $region94: #{closed_call.8} parent=89 // pred_fallthru
          _
      $region90: #{closed_call.8} parent=5 // pred_fallthru
        _
    $region6: #{closed_call.8} parent=1 // loop_footer
      %s14 = sadd.s32 1, %s10
    $region7: #{closed_call.8} parent=1 // loop_footer_branch
      %9 = sbr.rel target = $region3
    $region8: #{closed_call.8} parent=1 // loop_exit
      _

// kernel: tile.13
$region0: #{tile.13}
  #allocation0 [shape = 's32[1]{0}', space=sflag, size = 0x4, scoped, tag = 'scoped memory for tile.13']
  %s0 = inlined_call_operand.vmem [shape: f32[128], index: 0, kind: input, shape index: {}]
  %s1 = inlined_call_operand.vmem [shape: f32[4,128], index: 1, kind: output, shape index: {}]
  // Predicated region
  $region2: #{tile.13} parent=0 // pred_check
    _
  $region3: #{tile.13} parent=0 // pred_check_branch
    %3 = sbr.rel (0) target = $region5
  $region4: #{tile.13} parent=0 // pred_region
    _
  $region5: #{tile.13} parent=0 // pred_fallthru
    _
  %v4 = vld [vmem:[%s0] ss:$0 sm:$0xff]
  %5 = vst [vmem:[%s1] sm:$0xf] %v4

// kernel: generator_forward.12
$region0: #{generator_forward.12}
  #allocation0 [shape = 'u32[]', space=smem, size = 0x4, offset = 0x4, fixed_abs, tag = 'smem constant byte address 0x4 - core index']
  #allocation1 [shape = 'u32[72,128]{1,0:T(1,128)}', space=vmem, size = 0x9000, scoped, tag = 'internal scratch']
  %s0 = inlined_call_operand.vmem [shape: f32[2,64,128], index: 0, kind: input, shape index: {}]
  %s1 = inlined_call_operand.vmem [shape: f32[2,64,128], index: 1, kind: output, shape index: {}]
  %s2 = sld [smem:[#allocation0]]
  $region37: #{generator_forward.12} parent=0
    _
  %s4 = ssub.s32 1, %s2
  %s5 = scalar_select 0, %s4, %s2
  loop: start=0, step=1, limit=4
  $region2: #{generator_forward.12} parent=0 // loop_pre_header
    _
  $region3: #{generator_forward.12} parent=0 // loop_header
    %s7 = sphi 0, %s11
    %p8 = scmp.ge.s32.totalorder %s7, 4
    %s17 = sphi 0, %s19
    %s20 = sphi 0, %s17
    %s21 = sphi 0, %s20
    %s37 = sphi 0, %s21
    %s43 = sphi 0, %s45
    %s46 = sphi 0, %s43
    %s47 = sphi 0, %s46
    %s63 = sphi 0, %s47
  $region4: #{generator_forward.12} parent=0 // loop_header_branch
    %10 = sbr.rel (%p8) target = $region8
  $region5: #{generator_forward.12} parent=0 // loop_body
    %s12 = ssub.s32 %s7, 1
    %s13 = ssub.s32 %s7, 2
    %s14 = sadd.s32 %s7, 1
    %s15 = ssub.s32 %s7, %s14
    %p16 = scmp.eq.s32.totalorder %s15, 0
    %s18 = sadd.s32 %s17, 1
    %s19 = scalar_select %p16, %s17, %s18
    %p22 = pneg %p16
    %p23 = scmp.eq.s32.totalorder %s7, 1
    %p24 = por %p22, %p23
    %p25 = scmp.ne.s32.totalorder %s17, %s20
    %p26 = scmp.eq.s32.totalorder %s7, 0
    %p27 = por %p25, %p26
    %p28 = scmp.ne.s32.totalorder %s17, %s20
    %p29 = scmp.eq.s32.totalorder %s12, 1
    %p30 = por %p28, %p29
    %p31 = scmp.ne.s32.totalorder %s20, %s21
    %p32 = scmp.eq.s32.totalorder %s12, 0
    %p33 = por %p31, %p32
    %p34 = scmp.ne.s32.totalorder %s20, %s21
    %p35 = scmp.eq.s32.totalorder %s13, 1
    %p36 = por %p34, %p35
    %p38 = scmp.ne.s32.totalorder %s21, %s37
    %p39 = scmp.eq.s32.totalorder %s13, 0
    %p40 = por %p38, %p39
    %s41 = ssub.s32 %s7, %s14
    %p42 = scmp.eq.s32.totalorder %s41, 0
    %s44 = sadd.s32 %s43, 1
    %s45 = scalar_select %p42, %s43, %s44
    %p48 = pneg %p42
    %p49 = scmp.eq.s32.totalorder %s7, 1
    %p50 = por %p48, %p49
    %p51 = scmp.ne.s32.totalorder %s43, %s46
    %p52 = scmp.eq.s32.totalorder %s7, 0
    %p53 = por %p51, %p52
    %p54 = scmp.ne.s32.totalorder %s43, %s46
    %p55 = scmp.eq.s32.totalorder %s12, 1
    %p56 = por %p54, %p55
    %p57 = scmp.ne.s32.totalorder %s46, %s47
    %p58 = scmp.eq.s32.totalorder %s12, 0
    %p59 = por %p57, %p58
    %p60 = scmp.ne.s32.totalorder %s46, %s47
    %p61 = scmp.eq.s32.totalorder %s13, 1
    %p62 = por %p60, %p61
    %p64 = scmp.ne.s32.totalorder %s47, %s63
    %p65 = scmp.eq.s32.totalorder %s13, 0
    %p66 = por %p64, %p65
    %p67 = scmp.le.s32.totalorder 1, %s7
    %p68 = scmp.lt.s32.totalorder %s7, 3
    %p69 = pnand %p67, %p68
    %p70 = pneg %p69
    // Predicated region
    $region9: #{generator_forward.12} parent=5 // pred_check
      _
    $region10: #{generator_forward.12} parent=5 // pred_check_branch
      %72 = sbr.rel (%p69) target = $region12
    $region11: #{generator_forward.12} parent=5 // pred_region
      %s73 = ssub.s32 %s7, 1
    $region12: #{generator_forward.12} parent=5 // pred_fallthru
      _
    %p74 = scmp.lt.s32.totalorder %s7, 2
    // Predicated region
    $region13: #{generator_forward.12} parent=5 // pred_check
      %p75 = pneg %p74
    $region14: #{generator_forward.12} parent=5 // pred_check_branch
      %77 = sbr.rel (%p75) target = $region16
    $region15: #{generator_forward.12} parent=5 // pred_region
      // Predicated region
      $region17: #{generator_forward.12} parent=15 // pred_check
        %p78 = pneg %p27
      $region18: #{generator_forward.12} parent=15 // pred_check_branch
        %80 = sbr.rel (%p78) target = $region20
      $region19: #{generator_forward.12} parent=15 // pred_region
        %p81 = scmp.lt.s32.totalorder %s7, 1
        %s82 = scalar_select %p81, %s7, 1
        %s83 = smul.addr %s82, 8
        %s84 = smul.addr %s83, 8
        %s85 = scalar_lea.vmem %s0, %s84
      $region20: #{generator_forward.12} parent=15 // pred_fallthru
        _
    $region16: #{generator_forward.12} parent=5 // pred_fallthru
      _
    %p86 = scmp.le.s32.totalorder 1, %s7
    %p87 = scmp.lt.s32.totalorder %s7, 3
    %p88 = pnand %p86, %p87
    %p89 = pneg %p88
    // Predicated region
    $region21: #{generator_forward.12} parent=5 // pred_check
      _
    $region22: #{generator_forward.12} parent=5 // pred_check_branch
      %91 = sbr.rel (%p88) target = $region24
    $region23: #{generator_forward.12} parent=5 // pred_region
      %s92 = ssub.s32 %s7, 1
      %p93 = scmp.lt.s32.totalorder %s12, 1
      %s94 = scalar_select %p93, %s12, 1
      %s95 = smul.addr %s94, 8
      %s96 = smul.addr %s95, 8
      %s97 = scalar_lea.vmem %s0, %s96
      %p98 = pneg %p33
      %p99 = pneg %p30
      %p100 = pneg %p59
      %p101 = pneg %p56
      %p102 = scmp.lt.s32.totalorder %s12, 1
      %s103 = scalar_select %p102, %s12, 1
      %s104 = smul.addr %s103, 8
      %s105 = smul.addr %s104, 8
      %s106 = scalar_lea.vmem %s1, %s105
      %p107 = scmp.lt.s32.totalorder %s12, 1
      %s108 = scalar_select %p107, %s12, 1
      %s109 = smul.addr %s108, 8
      %s110 = smul.addr %s109, 8
      %s111 = scalar_lea.vmem %s0, %s110
      %p112 = scmp.lt.s32.totalorder %s12, 1
      %s113 = scalar_select %p112, %s12, 1
      %s114 = smul.addr %s113, 8
      %s115 = smul.addr %s114, 8
      %s116 = scalar_lea.vmem %s1, %s115
      %v117 = vld [vmem:[%s111] sm:$0xff]
      %v118 = vld [vmem:[%s111 + $0x8] sm:$0xff]
      %v119 = vld [vmem:[%s111 + $0x10] sm:$0xff]
      %v120 = vld [vmem:[%s111 + $0x18] sm:$0xff]
      %v121 = vld [vmem:[%s111 + $0x20] sm:$0xff]
      %v122 = vld [vmem:[%s111 + $0x28] sm:$0xff]
      %v123 = vld [vmem:[%s111 + $0x30] sm:$0xff]
      %v124 = vld [vmem:[%s111 + $0x38] sm:$0xff]
      %v125 = vadd.f32 %v117, %v118
      %v126 = vadd.f32 %v125, %v119
      %v127 = vadd.f32 %v126, %v120
      %v128 = vadd.f32 %v127, %v121
      %v129 = vadd.f32 %v128, %v122
      %v130 = vadd.f32 %v129, %v123
      %v131 = vadd.f32 %v130, %v124
      %v132 = vrot.slane %v131, 4
      %v133 = vadd.f32 %v131, %v132
      %v134 = vrot.slane %v133, 2
      %v135 = vadd.f32 %v133, %v134
      %v136 = vrot.slane %v135, 1
      %v137 = vadd.f32 %v135, %v136
      %v138 = vmul.f32 %v137, 0.015625
      %v139 = vmul.f32 %v117, %v117
      %v140 = vmul.f32 %v118, %v118
      %v141 = vmul.f32 %v119, %v119
      %v142 = vmul.f32 %v120, %v120
      %v143 = vmul.f32 %v121, %v121
      %v144 = vmul.f32 %v122, %v122
      %v145 = vmul.f32 %v123, %v123
      %v146 = vmul.f32 %v124, %v124
      %v147 = vadd.f32 %v139, %v140
      %v148 = vadd.f32 %v147, %v141
      %v149 = vadd.f32 %v148, %v142
      %v150 = vadd.f32 %v149, %v143
      %v151 = vadd.f32 %v150, %v144
      %v152 = vadd.f32 %v151, %v145
      %v153 = vadd.f32 %v152, %v146
      %v154 = vrot.slane %v153, 4
      %v155 = vadd.f32 %v153, %v154
      %v156 = vrot.slane %v155, 2
      %v157 = vadd.f32 %v155, %v156
      %v158 = vrot.slane %v157, 1
      %v159 = vadd.f32 %v157, %v158
      %v160 = vmul.f32 %v159, 0.015625
      %v161 = vmul.f32 %v138, %v138
      %v162 = vsub.f32 %v160, %v161
      %v163 = vsub.f32 %v117, %v138
      %v164 = vsub.f32 %v118, %v138
      %v165 = vsub.f32 %v119, %v138
      %v166 = vsub.f32 %v120, %v138
      %v167 = vsub.f32 %v121, %v138
      %v168 = vsub.f32 %v122, %v138
      %v169 = vsub.f32 %v123, %v138
      %v170 = vsub.f32 %v124, %v138
      %v171 = vadd.f32 %v162, 1e-05
      %v172 = vrsqrt.pop %v171
      %v173 = vmul.f32 %v172, %v171
      %v174 = vmul.f32 %v173, %v172
      %v175 = vmul.f32 0.5, %v174
      %v176 = vsub.f32 1.5, %v175
      %v177 = vmul.f32 %v172, %v176
      %vm178 = vweird.f32 %v171
      %vm179 = vweird.f32 %v172
      %vm180 = vmor %vm178, %vm179
      %v181 = vsel %vm180, %v172, %v177
      %v182 = vmul.f32 %v163, %v181
      %v183 = vmul.f32 %v164, %v181
      %v184 = vmul.f32 %v165, %v181
      %v185 = vmul.f32 %v166, %v181
      %v186 = vmul.f32 %v167, %v181
      %v187 = vmul.f32 %v168, %v181
      %v188 = vmul.f32 %v169, %v181
      %v189 = vmul.f32 %v170, %v181
      %v190 = vmax.f32 %v182, 0.0
      %v191 = vmax.f32 %v183, 0.0
      %v192 = vmax.f32 %v184, 0.0
      %v193 = vmax.f32 %v185, 0.0
      %v194 = vmax.f32 %v186, 0.0
      %v195 = vmax.f32 %v187, 0.0
      %v196 = vmax.f32 %v188, 0.0
      %v197 = vmax.f32 %v189, 0.0
      %198 = vst [vmem:[%s116] sm:$0xff] %v190
      %199 = vst [vmem:[%s116 + $0x8] sm:$0xff] %v191
      %200 = vst [vmem:[%s116 + $0x10] sm:$0xff] %v192
      %201 = vst [vmem:[%s116 + $0x18] sm:$0xff] %v193
      %202 = vst [vmem:[%s116 + $0x20] sm:$0xff] %v194
      %203 = vst [vmem:[%s116 + $0x28] sm:$0xff] %v195
      %204 = vst [vmem:[%s116 + $0x30] sm:$0xff] %v196
      %205 = vst [vmem:[%s116 + $0x38] sm:$0xff] %v197
      %p206 = scmp.lt.s32.totalorder %s12, 1
      %s207 = scalar_select %p206, %s12, 1
      %s208 = smul.addr %s207, 8
      %s209 = smul.addr %s208, 8
      %s210 = scalar_lea.vmem %s1, %s209
      // Predicated region
      $region25: #{generator_forward.12} parent=23 // pred_check
        %p211 = pneg %p56
      $region26: #{generator_forward.12} parent=23 // pred_check_branch
        %213 = sbr.rel (%p211) target = $region28
      $region27: #{generator_forward.12} parent=23 // pred_region
        _
      $region28: #{generator_forward.12} parent=23 // pred_fallthru
        _
    $region24: #{generator_forward.12} parent=5 // pred_fallthru
      _
    %p214 = scmp.le.s32.totalorder 2, %s7
    // Predicated region
    $region29: #{generator_forward.12} parent=5 // pred_check
      %p215 = pneg %p214
    $region30: #{generator_forward.12} parent=5 // pred_check_branch
      %217 = sbr.rel (%p215) target = $region32
    $region31: #{generator_forward.12} parent=5 // pred_region
      %s218 = ssub.s32 %s7, 2
      // Predicated region
      $region33: #{generator_forward.12} parent=31 // pred_check
        %p219 = pneg %p62
      $region34: #{generator_forward.12} parent=31 // pred_check_branch
        %221 = sbr.rel (%p219) target = $region36
      $region35: #{generator_forward.12} parent=31 // pred_region
        %p222 = scmp.lt.s32.totalorder %s13, 1
        %s223 = scalar_select %p222, %s13, 1
        %s224 = smul.addr %s223, 8
        %s225 = smul.addr %s224, 8
        %s226 = scalar_lea.vmem %s1, %s225
      $region36: #{generator_forward.12} parent=31 // pred_fallthru
        _
    $region32: #{generator_forward.12} parent=5 // pred_fallthru
      _
  $region6: #{generator_forward.12} parent=0 // loop_footer
    %s11 = sadd.s32 1, %s7
  $region7: #{generator_forward.12} parent=0 // loop_footer_branch
    %6 = sbr.rel target = $region3
  $region8: #{generator_forward.12} parent=0 // loop_exit
    _

// kernel: generator_forward.11
$region0: #{generator_forward.11}
  #allocation0 [shape = 'u32[]', space=smem, size = 0x4, offset = 0x4, fixed_abs, tag = 'smem constant byte address 0x4 - core index']
  #allocation1 [shape = 'u32[72,128]{1,0:T(1,128)}', space=vmem, size = 0x9000, scoped, tag = 'internal scratch']
  #allocation2 [shape = 'f32[32,256]{1,0:T(8,128)}', space=vmem, size = 0x8000, scoped, tag = 'scratch operand']
  %s0 = inlined_call_operand.vmem [shape: bf16[32,1024], index: 0, kind: input, shape index: {}]
  %s1 = inlined_call_operand.vmem [shape: bf16[1024,512], index: 1, kind: input, shape index: {}]
  %s2 = inlined_call_operand.vmem [shape: f32[1,512], index: 2, kind: input, shape index: {}]
  %s3 = inlined_call_operand.vmem [shape: f32[32,512], index: 3, kind: output, shape index: {}]
  %s4 = sld [smem:[#allocation0]]
  $region148: #{generator_forward.11} parent=0
    _
  %s6 = ssub.s32 1, %s4
  %s7 = scalar_select 0, %s6, %s4
  $region1: #{generator_forward.11} parent=0
    #allocation3 [shape = 'u8[32768]{0}', space=vmem, size = 0x8000, scoped, tag = 'input window, operand 0']
    #allocation4 [shape = 'u8[262144]{0}', space=vmem, size = 0x40000, scoped, tag = 'input window, operand 1']
    #allocation5 [shape = 'u8[65536]{0}', space=vmem, size = 0x10000, scoped, tag = 'output window, operand 0']
    loop: start=0, step=1, limit=10
    $region2: #{generator_forward.11} parent=1 // loop_pre_header
      _
    $region3: #{generator_forward.11} parent=1 // loop_header
      %s9 = sphi 0, %s13
      %p10 = scmp.ge.s32.totalorder %s9, 10
      %s16 = sphi 0, %s35
      %s17 = sphi 0, %s31
      %s18 = sphi 0, %s27
      %s19 = sphi 0, %s16
      %s20 = sphi 0, %s17
      %s21 = sphi 0, %s18
      %s22 = sphi 0, %s19
      %s23 = sphi 0, %s20
      %s24 = sphi 0, %s21
      %s40 = sphi 0, %s42
      %s43 = sphi 0, %s40
      %s44 = sphi 0, %s43
      %s60 = sphi 0, %s44
      %s68 = sphi 0, %s70
      %s71 = sphi 0, %s68
      %s72 = sphi 0, %s71
      %s88 = sphi 0, %s72
      %s94 = sphi 0, %s96
      %s97 = sphi 0, %s94
      %s98 = sphi 0, %s97
      %s114 = sphi 0, %s98
      %s122 = sphi 0, %s124
      %s125 = sphi 0, %s122
      %s126 = sphi 0, %s125
      %s142 = sphi 0, %s126
    $region4: #{generator_forward.11} parent=1 // loop_header_branch
      %12 = sbr.rel (%p10) target = $region8
    $region5: #{generator_forward.11} parent=1 // loop_body
      %s14 = ssub.s32 %s9, 1
      %s15 = ssub.s32 %s9, 2
      %s25 = sadd.s32 1, %s18
      %p26 = scmp.ge.s32.totalorder %s25, 4
      %s27 = scalar_select %p26, 0, %s25
      %s28 = sadd.s32 1, %s17
      %s29 = scalar_select %p26, %s28, %s17
      %p30 = scmp.ge.s32.totalorder %s29, 2
      %s31 = scalar_select %p30, 0, %s29
      %s32 = sadd.s32 1, %s16
      %s33 = scalar_select %p30, %s32, %s16
      %p34 = scmp.ge.s32.totalorder %s33, 1
      %s35 = scalar_select %p34, 0, %s33
      %s36 = ssub.s32 %s16, %s35
      %s37 = ssub.s32 %s18, %s27
      %s38 = sor.u32 %s36, %s37
      %p39 = scmp.eq.s32.totalorder %s38, 0
      %s41 = sadd.s32 %s40, 1
      %s42 = scalar_select %p39, %s40, %s41
      %p45 = pneg %p39
      %p46 = scmp.eq.s32.totalorder %s9, 7
      %p47 = por %p45, %p46
      %p48 = scmp.ne.s32.totalorder %s40, %s43
      %p49 = scmp.eq.s32.totalorder %s9, 0
      %p50 = por %p48, %p49
      %p51 = scmp.ne.s32.totalorder %s40, %s43
      %p52 = scmp.eq.s32.totalorder %s14, 7
      %p53 = por %p51, %p52
      %p54 = scmp.ne.s32.totalorder %s43, %s44
      %p55 = scmp.eq.s32.totalorder %s14, 0
      %p56 = por %p54, %p55
      %p57 = scmp.ne.s32.totalorder %s43, %s44
      %p58 = scmp.eq.s32.totalorder %s15, 7
      %p59 = por %p57, %p58
      %p61 = scmp.ne.s32.totalorder %s44, %s60
      %p62 = scmp.eq.s32.totalorder %s15, 0
      %p63 = por %p61, %p62
      %s64 = ssub.s32 %s18, %s27
      %s65 = ssub.s32 %s17, %s31
      %s66 = sor.u32 %s64, %s65
      %p67 = scmp.eq.s32.totalorder %s66, 0
      %s69 = sadd.s32 %s68, 1
      %s70 = scalar_select %p67, %s68, %s69
      %p73 = pneg %p67
      %p74 = scmp.eq.s32.totalorder %s9, 7
      %p75 = por %p73, %p74
      %p76 = scmp.ne.s32.totalorder %s68, %s71
      %p77 = scmp.eq.s32.totalorder %s9, 0
      %p78 = por %p76, %p77
      %p79 = scmp.ne.s32.totalorder %s68, %s71
      %p80 = scmp.eq.s32.totalorder %s14, 7
      %p81 = por %p79, %p80
      %p82 = scmp.ne.s32.totalorder %s71, %s72
      %p83 = scmp.eq.s32.totalorder %s14, 0
      %p84 = por %p82, %p83
      %p85 = scmp.ne.s32.totalorder %s71, %s72
      %p86 = scmp.eq.s32.totalorder %s15, 7
      %p87 = por %p85, %p86
      %p89 = scmp.ne.s32.totalorder %s72, %s88
      %p90 = scmp.eq.s32.totalorder %s15, 0
      %p91 = por %p89, %p90
      %s92 = ssub.s32 %s17, %s31
      %p93 = scmp.eq.s32.totalorder %s92, 0
      %s95 = sadd.s32 %s94, 1
      %s96 = scalar_select %p93, %s94, %s95
      %p99 = pneg %p93
      %p100 = scmp.eq.s32.totalorder %s9, 7
      %p101 = por %p99, %p100
      %p102 = scmp.ne.s32.totalorder %s94, %s97
      %p103 = scmp.eq.s32.totalorder %s9, 0
      %p104 = por %p102, %p103
      %p105 = scmp.ne.s32.totalorder %s94, %s97
      %p106 = scmp.eq.s32.totalorder %s14, 7
      %p107 = por %p105, %p106
      %p108 = scmp.ne.s32.totalorder %s97, %s98
      %p109 = scmp.eq.s32.totalorder %s14, 0
      %p110 = por %p108, %p109
      %p111 = scmp.ne.s32.totalorder %s97, %s98
      %p112 = scmp.eq.s32.totalorder %s15, 7
      %p113 = por %p111, %p112
      %p115 = scmp.ne.s32.totalorder %s98, %s114
      %p116 = scmp.eq.s32.totalorder %s15, 0
      %p117 = por %p115, %p116
      %s118 = ssub.s32 %s16, %s35
      %s119 = ssub.s32 %s17, %s31
      %s120 = sor.u32 %s118, %s119
      %p121 = scmp.eq.s32.totalorder %s120, 0
      %s123 = sadd.s32 %s122, 1
      %s124 = scalar_select %p121, %s122, %s123
      %p127 = pneg %p121
      %p128 = scmp.eq.s32.totalorder %s9, 7
      %p129 = por %p127, %p128
      %p130 = scmp.ne.s32.totalorder %s122, %s125
      %p131 = scmp.eq.s32.totalorder %s9, 0
      %p132 = por %p130, %p131
      %p133 = scmp.ne.s32.totalorder %s122, %s125
      %p134 = scmp.eq.s32.totalorder %s14, 7
      %p135 = por %p133, %p134
      %p136 = scmp.ne.s32.totalorder %s125, %s126
      %p137 = scmp.eq.s32.totalorder %s14, 0
      %p138 = por %p136, %p137
      %p139 = scmp.ne.s32.totalorder %s125, %s126
      %p140 = scmp.eq.s32.totalorder %s15, 7
      %p141 = por %p139, %p140
      %p143 = scmp.ne.s32.totalorder %s126, %s142
      %p144 = scmp.eq.s32.totalorder %s15, 0
      %p145 = por %p143, %p144
      %p146 = scmp.le.s32.totalorder 1, %s9
      %p147 = scmp.lt.s32.totalorder %s9, 9
      %p148 = pnand %p146, %p147
      %p149 = pneg %p148
      // Predicated region
      $region9: #{generator_forward.11} parent=5 // pred_check
        _
      $region10: #{generator_forward.11} parent=5 // pred_check_branch
        %151 = sbr.rel (%p148) target = $region12
      $region11: #{generator_forward.11} parent=5 // pred_region
        %s152 = ssub.s32 %s9, 1
      $region12: #{generator_forward.11} parent=5 // pred_fallthru
        _
      %p153 = scmp.lt.s32.totalorder %s9, 8
      // Predicated region
      $region13: #{generator_forward.11} parent=5 // pred_check
        %p154 = pneg %p153
      $region14: #{generator_forward.11} parent=5 // pred_check_branch
        %156 = sbr.rel (%p154) target = $region16
      $region15: #{generator_forward.11} parent=5 // pred_region
        // Predicated region
        $region17: #{generator_forward.11} parent=15 // pred_check
          %p157 = pneg %p50
        $region18: #{generator_forward.11} parent=15 // pred_check_branch
          %159 = sbr.rel (%p157) target = $region20
        $region19: #{generator_forward.11} parent=15 // pred_region
          %s160 = sand.u32 %s40, 1
          %s161 = sand.u32 %s40, 1
          %s162 = smul.addr %s161, 32
          %s163 = scalar_lea.vmem [#allocation3], %s162
          %s164 = smul.u32 4, %s16
          %s165 = smul.u32 2, %s18
          %s166 = smul.addr %s164, 8
          %s167 = sadd.s32 %s165, %s166
          %s168 = smul.addr %s167, 4
          %s169 = scalar_lea.vmem %s0, %s168
          // Predicated region
          $region21: #{generator_forward.11} parent=19 // pred_check
            _
          $region22: #{generator_forward.11} parent=19 // pred_check_branch
            %171 = sbr.rel (0) target = $region24
          $region23: #{generator_forward.11} parent=19 // pred_region
            // Predicated region
            $region25: #{generator_forward.11} parent=23 // pred_check
              _
            $region26: #{generator_forward.11} parent=23 // pred_check_branch
              %173 = sbr.rel (0) target = $region28
            $region27: #{generator_forward.11} parent=23 // pred_region
              // Predicated region
              $region40: #{generator_forward.11} parent=27 // pred_check
                _
              $region41: #{generator_forward.11} parent=27 // pred_check_branch
                %195 = sbr.rel (0) target = $region43
              $region42: #{generator_forward.11} parent=27 // pred_region
                loop: start=0, step=1, limit=1
                $region44: #{generator_forward.11} parent=42 // loop_pre_header
                  _
                $region45: #{generator_forward.11} parent=42 // loop_header
                  %s197 = sphi 0, %s201
                  %p198 = scmp.ge.s32.totalorder %s197, 1
                  %s202 = sphi %s169, %s169
                  %s203 = sphi %s163, %s163
                $region46: #{generator_forward.11} parent=42 // loop_header_branch
                  %200 = sbr.rel (%p198) target = $region50
                $region47: #{generator_forward.11} parent=42 // loop_body
                  %v204 = vld [vmem:[%s202] sm:$0xff]
                  %205 = vst [vmem:[%s203] sm:$0xff] %v204
                  %v206 = vld [vmem:[%s202 + $0x20] sm:$0xff]
                  %207 = vst [vmem:[%s203 + $0x8] sm:$0xff] %v206
                  %v208 = vld [vmem:[%s202 + $0x40] sm:$0xff]
                  %209 = vst [vmem:[%s203 + $0x10] sm:$0xff] %v208
                  %v210 = vld [vmem:[%s202 + $0x60] sm:$0xff]
                  %211 = vst [vmem:[%s203 + $0x18] sm:$0xff] %v210
                $region48: #{generator_forward.11} parent=42 // loop_footer
                  %s201 = sadd.s32 1, %s197
                $region49: #{generator_forward.11} parent=42 // loop_footer_branch
                  %196 = sbr.rel target = $region45
                $region50: #{generator_forward.11} parent=42 // loop_exit
                  _
              $region43: #{generator_forward.11} parent=27 // pred_fallthru
                _
              // Predicated region
              $region51: #{generator_forward.11} parent=27 // pred_check
                _
              $region52: #{generator_forward.11} parent=27 // pred_check_branch
                %213 = sbr.rel target = $region54
              $region53: #{generator_forward.11} parent=27 // pred_region
                _
              $region54: #{generator_forward.11} parent=27 // pred_fallthru
                _
            $region28: #{generator_forward.11} parent=23 // pred_fallthru
              _
            // Predicated region
            $region29: #{generator_forward.11} parent=23 // pred_check
              _
            $region30: #{generator_forward.11} parent=23 // pred_check_branch
              %175 = sbr.rel target = $region32
            $region31: #{generator_forward.11} parent=23 // pred_region
              %s177 = ssub.s32 256, 1
              loop: start=0, step=1, limit=1
              $region33: #{generator_forward.11} parent=31 // loop_pre_header
                _
              $region34: #{generator_forward.11} parent=31 // loop_header
                %s179 = sphi 0, %s183
                %p180 = scmp.ge.s32.totalorder %s179, 1
                %s184 = sphi %s169, %s169
                %s185 = sphi %s163, %s163
              $region35: #{generator_forward.11} parent=31 // loop_header_branch
                %182 = sbr.rel (%p180) target = $region39
              $region36: #{generator_forward.11} parent=31 // loop_body
                %v186 = vld [vmem:[%s184] sm:%s177]
                %187 = vst [vmem:[%s185] sm:%s177] %v186
                %v188 = vld [vmem:[%s184 + $0x20] sm:%s177]
                %189 = vst [vmem:[%s185 + $0x8] sm:%s177] %v188
                %v190 = vld [vmem:[%s184 + $0x40] sm:%s177]
                %191 = vst [vmem:[%s185 + $0x10] sm:%s177] %v190
                %v192 = vld [vmem:[%s184 + $0x60] sm:%s177]
                %193 = vst [vmem:[%s185 + $0x18] sm:%s177] %v192
              $region37: #{generator_forward.11} parent=31 // loop_footer
                %s183 = sadd.s32 1, %s179
              $region38: #{generator_forward.11} parent=31 // loop_footer_branch
                %178 = sbr.rel target = $region34
              $region39: #{generator_forward.11} parent=31 // loop_exit
                _
            $region32: #{generator_forward.11} parent=23 // pred_fallthru
              _
          $region24: #{generator_forward.11} parent=19 // pred_fallthru
            _
          %214 = vnop
        $region20: #{generator_forward.11} parent=15 // pred_fallthru
          _
        // Predicated region
        $region55: #{generator_forward.11} parent=15 // pred_check
          %p215 = pneg %p78
        $region56: #{generator_forward.11} parent=15 // pred_check_branch
          %217 = sbr.rel (%p215) target = $region58
        $region57: #{generator_forward.11} parent=15 // pred_region
          %s218 = sand.u32 %s68, 1
          %s219 = sand.u32 %s68, 1
          %s220 = smul.addr %s219, 256
          %s221 = scalar_lea.vmem [#allocation4], %s220
          %s222 = smul.u32 32, %s18
          %s223 = smul.u32 2, %s17
          %s224 = smul.addr %s222, 4
          %s225 = sadd.s32 %s223, %s224
          %s226 = smul.addr %s225, 4
          %s227 = scalar_lea.vmem %s1, %s226
          // Predicated region
          $region59: #{generator_forward.11} parent=57 // pred_check
            _
          $region60: #{generator_forward.11} parent=57 // pred_check_branch
            %229 = sbr.rel (0) target = $region62
          $region61: #{generator_forward.11} parent=57 // pred_region
            // Predicated region
            $region63: #{generator_forward.11} parent=61 // pred_check
              _
            $region64: #{generator_forward.11} parent=61 // pred_check_branch
              %231 = sbr.rel (0) target = $region66
            $region65: #{generator_forward.11} parent=61 // pred_region
              // Predicated region
              $region78: #{generator_forward.11} parent=65 // pred_check
                _
              $region79: #{generator_forward.11} parent=65 // pred_check_branch
                %309 = sbr.rel (0) target = $region81
              $region80: #{generator_forward.11} parent=65 // pred_region
                loop: start=0, step=1, limit=1
                $region82: #{generator_forward.11} parent=80 // loop_pre_header
                  _
                $region83: #{generator_forward.11} parent=80 // loop_header
                  %s311 = sphi 0, %s315
                  %p312 = scmp.ge.s32.totalorder %s311, 1
                  %s316 = sphi %s227, %s227
                  %s317 = sphi %s221, %s221
                $region84: #{generator_forward.11} parent=80 // loop_header_branch
                  %314 = sbr.rel (%p312) target = $region88
                $region85: #{generator_forward.11} parent=80 // loop_body
                  %v318 = vld [vmem:[%s316] sm:$0xff]
                  %319 = vst [vmem:[%s317] sm:$0xff] %v318
                  %v320 = vld [vmem:[%s316 + $0x10] sm:$0xff]
                  %321 = vst [vmem:[%s317 + $0x8] sm:$0xff] %v320
                  %v322 = vld [vmem:[%s316 + $0x20] sm:$0xff]
                  %323 = vst [vmem:[%s317 + $0x10] sm:$0xff] %v322
                  %v324 = vld [vmem:[%s316 + $0x30] sm:$0xff]
                  %325 = vst [vmem:[%s317 + $0x18] sm:$0xff] %v324
                  %v326 = vld [vmem:[%s316 + $0x40] sm:$0xff]
                  %327 = vst [vmem:[%s317 + $0x20] sm:$0xff] %v326
                  %v328 = vld [vmem:[%s316 + $0x50] sm:$0xff]
                  %329 = vst [vmem:[%s317 + $0x28] sm:$0xff] %v328
                  %v330 = vld [vmem:[%s316 + $0x60] sm:$0xff]
                  %331 = vst [vmem:[%s317 + $0x30] sm:$0xff] %v330
                  %v332 = vld [vmem:[%s316 + $0x70] sm:$0xff]
                  %333 = vst [vmem:[%s317 + $0x38] sm:$0xff] %v332
                  %v334 = vld [vmem:[%s316 + $0x80] sm:$0xff]
                  %335 = vst [vmem:[%s317 + $0x40] sm:$0xff] %v334
                  %v336 = vld [vmem:[%s316 + $0x90] sm:$0xff]
                  %337 = vst [vmem:[%s317 + $0x48] sm:$0xff] %v336
                  %v338 = vld [vmem:[%s316 + $0xa0] sm:$0xff]
                  %339 = vst [vmem:[%s317 + $0x50] sm:$0xff] %v338
                  %v340 = vld [vmem:[%s316 + $0xb0] sm:$0xff]
                  %341 = vst [vmem:[%s317 + $0x58] sm:$0xff] %v340
                  %v342 = vld [vmem:[%s316 + $0xc0] sm:$0xff]
                  %343 = vst [vmem:[%s317 + $0x60] sm:$0xff] %v342
                  %v344 = vld [vmem:[%s316 + $0xd0] sm:$0xff]
                  %345 = vst [vmem:[%s317 + $0x68] sm:$0xff] %v344
                  %v346 = vld [vmem:[%s316 + $0xe0] sm:$0xff]
                  %347 = vst [vmem:[%s317 + $0x70] sm:$0xff] %v346
                  %v348 = vld [vmem:[%s316 + $0xf0] sm:$0xff]
                  %349 = vst [vmem:[%s317 + $0x78] sm:$0xff] %v348
                  %v350 = vld [vmem:[%s316 + $0x100] sm:$0xff]
                  %351 = vst [vmem:[%s317 + $0x80] sm:$0xff] %v350
                  %v352 = vld [vmem:[%s316 + $0x110] sm:$0xff]
                  %353 = vst [vmem:[%s317 + $0x88] sm:$0xff] %v352
                  %v354 = vld [vmem:[%s316 + $0x120] sm:$0xff]
                  %355 = vst [vmem:[%s317 + $0x90] sm:$0xff] %v354
                  %v356 = vld [vmem:[%s316 + $0x130] sm:$0xff]
                  %357 = vst [vmem:[%s317 + $0x98] sm:$0xff] %v356
                  %v358 = vld [vmem:[%s316 + $0x140] sm:$0xff]
                  %359 = vst [vmem:[%s317 + $0xa0] sm:$0xff] %v358
                  %v360 = vld [vmem:[%s316 + $0x150] sm:$0xff]
                  %361 = vst [vmem:[%s317 + $0xa8] sm:$0xff] %v360
                  %v362 = vld [vmem:[%s316 + $0x160] sm:$0xff]
                  %363 = vst [vmem:[%s317 + $0xb0] sm:$0xff] %v362
                  %v364 = vld [vmem:[%s316 + $0x170] sm:$0xff]
                  %365 = vst [vmem:[%s317 + $0xb8] sm:$0xff] %v364
                  %v366 = vld [vmem:[%s316 + $0x180] sm:$0xff]
                  %367 = vst [vmem:[%s317 + $0xc0] sm:$0xff] %v366
                  %v368 = vld [vmem:[%s316 + $0x190] sm:$0xff]
                  %369 = vst [vmem:[%s317 + $0xc8] sm:$0xff] %v368
                  %v370 = vld [vmem:[%s316 + $0x1a0] sm:$0xff]
                  %371 = vst [vmem:[%s317 + $0xd0] sm:$0xff] %v370
                  %v372 = vld [vmem:[%s316 + $0x1b0] sm:$0xff]
                  %373 = vst [vmem:[%s317 + $0xd8] sm:$0xff] %v372
                  %v374 = vld [vmem:[%s316 + $0x1c0] sm:$0xff]
                  %375 = vst [vmem:[%s317 + $0xe0] sm:$0xff] %v374
                  %v376 = vld [vmem:[%s316 + $0x1d0] sm:$0xff]
                  %377 = vst [vmem:[%s317 + $0xe8] sm:$0xff] %v376
                  %v378 = vld [vmem:[%s316 + $0x1e0] sm:$0xff]
                  %379 = vst [vmem:[%s317 + $0xf0] sm:$0xff] %v378
                  %v380 = vld [vmem:[%s316 + $0x1f0] sm:$0xff]
                  %381 = vst [vmem:[%s317 + $0xf8] sm:$0xff] %v380
                $region86: #{generator_forward.11} parent=80 // loop_footer
                  %s315 = sadd.s32 1, %s311
                $region87: #{generator_forward.11} parent=80 // loop_footer_branch
                  %310 = sbr.rel target = $region83
                $region88: #{generator_forward.11} parent=80 // loop_exit
                  _
              $region81: #{generator_forward.11} parent=65 // pred_fallthru
                _
              // Predicated region
              $region89: #{generator_forward.11} parent=65 // pred_check
                _
              $region90: #{generator_forward.11} parent=65 // pred_check_branch
                %383 = sbr.rel target = $region92
              $region91: #{generator_forward.11} parent=65 // pred_region
                _
              $region92: #{generator_forward.11} parent=65 // pred_fallthru
                _
            $region66: #{generator_forward.11} parent=61 // pred_fallthru
              _
            // Predicated region
            $region67: #{generator_forward.11} parent=61 // pred_check
              _
            $region68: #{generator_forward.11} parent=61 // pred_check_branch
              %233 = sbr.rel target = $region70
            $region69: #{generator_forward.11} parent=61 // pred_region
              %s235 = ssub.s32 256, 1
              loop: start=0, step=1, limit=1
              $region71: #{generator_forward.11} parent=69 // loop_pre_header
                _
              $region72: #{generator_forward.11} parent=69 // loop_header
                %s237 = sphi 0, %s241
                %p238 = scmp.ge.s32.totalorder %s237, 1
                %s242 = sphi %s227, %s227
                %s243 = sphi %s221, %s221
              $region73: #{generator_forward.11} parent=69 // loop_header_branch
                %240 = sbr.rel (%p238) target = $region77
              $region74: #{generator_forward.11} parent=69 // loop_body
                %v244 = vld [vmem:[%s242] sm:%s235]
                %245 = vst [vmem:[%s243] sm:%s235] %v244
                %v246 = vld [vmem:[%s242 + $0x10] sm:%s235]
                %247 = vst [vmem:[%s243 + $0x8] sm:%s235] %v246
                %v248 = vld [vmem:[%s242 + $0x20] sm:%s235]
                %249 = vst [vmem:[%s243 + $0x10] sm:%s235] %v248
                %v250 = vld [vmem:[%s242 + $0x30] sm:%s235]
                %251 = vst [vmem:[%s243 + $0x18] sm:%s235] %v250
                %v252 = vld [vmem:[%s242 + $0x40] sm:%s235]
                %253 = vst [vmem:[%s243 + $0x20] sm:%s235] %v252
                %v254 = vld [vmem:[%s242 + $0x50] sm:%s235]
                %255 = vst [vmem:[%s243 + $0x28] sm:%s235] %v254
                %v256 = vld [vmem:[%s242 + $0x60] sm:%s235]
                %257 = vst [vmem:[%s243 + $0x30] sm:%s235] %v256
                %v258 = vld [vmem:[%s242 + $0x70] sm:%s235]
                %259 = vst [vmem:[%s243 + $0x38] sm:%s235] %v258
                %v260 = vld [vmem:[%s242 + $0x80] sm:%s235]
                %261 = vst [vmem:[%s243 + $0x40] sm:%s235] %v260
                %v262 = vld [vmem:[%s242 + $0x90] sm:%s235]
                %263 = vst [vmem:[%s243 + $0x48] sm:%s235] %v262
                %v264 = vld [vmem:[%s242 + $0xa0] sm:%s235]
                %265 = vst [vmem:[%s243 + $0x50] sm:%s235] %v264
                %v266 = vld [vmem:[%s242 + $0xb0] sm:%s235]
                %267 = vst [vmem:[%s243 + $0x58] sm:%s235] %v266
                %v268 = vld [vmem:[%s242 + $0xc0] sm:%s235]
                %269 = vst [vmem:[%s243 + $0x60] sm:%s235] %v268
                %v270 = vld [vmem:[%s242 + $0xd0] sm:%s235]
                %271 = vst [vmem:[%s243 + $0x68] sm:%s235] %v270
                %v272 = vld [vmem:[%s242 + $0xe0] sm:%s235]
                %273 = vst [vmem:[%s243 + $0x70] sm:%s235] %v272
                %v274 = vld [vmem:[%s242 + $0xf0] sm:%s235]
                %275 = vst [vmem:[%s243 + $0x78] sm:%s235] %v274
                %v276 = vld [vmem:[%s242 + $0x100] sm:%s235]
                %277 = vst [vmem:[%s243 + $0x80] sm:%s235] %v276
                %v278 = vld [vmem:[%s242 + $0x110] sm:%s235]
                %279 = vst [vmem:[%s243 + $0x88] sm:%s235] %v278
                %v280 = vld [vmem:[%s242 + $0x120] sm:%s235]
                %281 = vst [vmem:[%s243 + $0x90] sm:%s235] %v280
                %v282 = vld [vmem:[%s242 + $0x130] sm:%s235]
                %283 = vst [vmem:[%s243 + $0x98] sm:%s235] %v282
                %v284 = vld [vmem:[%s242 + $0x140] sm:%s235]
                %285 = vst [vmem:[%s243 + $0xa0] sm:%s235] %v284
                %v286 = vld [vmem:[%s242 + $0x150] sm:%s235]
                %287 = vst [vmem:[%s243 + $0xa8] sm:%s235] %v286
                %v288 = vld [vmem:[%s242 + $0x160] sm:%s235]
                %289 = vst [vmem:[%s243 + $0xb0] sm:%s235] %v288
                %v290 = vld [vmem:[%s242 + $0x170] sm:%s235]
                %291 = vst [vmem:[%s243 + $0xb8] sm:%s235] %v290
                %v292 = vld [vmem:[%s242 + $0x180] sm:%s235]
                %293 = vst [vmem:[%s243 + $0xc0] sm:%s235] %v292
                %v294 = vld [vmem:[%s242 + $0x190] sm:%s235]
                %295 = vst [vmem:[%s243 + $0xc8] sm:%s235] %v294
                %v296 = vld [vmem:[%s242 + $0x1a0] sm:%s235]
                %297 = vst [vmem:[%s243 + $0xd0] sm:%s235] %v296
                %v298 = vld [vmem:[%s242 + $0x1b0] sm:%s235]
                %299 = vst [vmem:[%s243 + $0xd8] sm:%s235] %v298
                %v300 = vld [vmem:[%s242 + $0x1c0] sm:%s235]
                %301 = vst [vmem:[%s243 + $0xe0] sm:%s235] %v300
                %v302 = vld [vmem:[%s242 + $0x1d0] sm:%s235]
                %303 = vst [vmem:[%s243 + $0xe8] sm:%s235] %v302
                %v304 = vld [vmem:[%s242 + $0x1e0] sm:%s235]
                %305 = vst [vmem:[%s243 + $0xf0] sm:%s235] %v304
                %v306 = vld [vmem:[%s242 + $0x1f0] sm:%s235]
                %307 = vst [vmem:[%s243 + $0xf8] sm:%s235] %v306
              $region75: #{generator_forward.11} parent=69 // loop_footer
                %s241 = sadd.s32 1, %s237
              $region76: #{generator_forward.11} parent=69 // loop_footer_branch
                %236 = sbr.rel target = $region72
              $region77: #{generator_forward.11} parent=69 // loop_exit
                _
            $region70: #{generator_forward.11} parent=61 // pred_fallthru
              _
          $region62: #{generator_forward.11} parent=57 // pred_fallthru
            _
          %384 = vnop
        $region58: #{generator_forward.11} parent=15 // pred_fallthru
          _
        // Predicated region
        $region93: #{generator_forward.11} parent=15 // pred_check
          %p385 = pneg %p104
        $region94: #{generator_forward.11} parent=15 // pred_check_branch
          %387 = sbr.rel (%p385) target = $region96
        $region95: #{generator_forward.11} parent=15 // pred_region
          %s388 = smul.u32 2, %s17
          %p389 = scmp.lt.s32.totalorder %s388, 3
          %s390 = scalar_select %p389, %s388, 3
          %s391 = scalar_lea.vmem %s2, %s390
          %s392 = smul.u32 2, %s17
        $region96: #{generator_forward.11} parent=15 // pred_fallthru
          _
      $region16: #{generator_forward.11} parent=5 // pred_fallthru
        _
      %p393 = scmp.le.s32.totalorder 1, %s9
      %p394 = scmp.lt.s32.totalorder %s9, 9
      %p395 = pnand %p393, %p394
      %p396 = pneg %p395
      // Predicated region
      $region97: #{generator_forward.11} parent=5 // pred_check
        _
      $region98: #{generator_forward.11} parent=5 // pred_check_branch
        %398 = sbr.rel (%p395) target = $region100
      $region99: #{generator_forward.11} parent=5 // pred_region
        %s399 = ssub.s32 %s9, 1
        %s400 = sand.u32 %s43, 1
        %s401 = sand.u32 %s43, 1
        %s402 = smul.addr %s401, 32
        %s403 = scalar_lea.vmem [#allocation3], %s402
        // Predicated region
        $region101: #{generator_forward.11} parent=99 // pred_check
          %p404 = pneg %p56
        $region102: #{generator_forward.11} parent=99 // pred_check_branch
          %406 = sbr.rel (%p404) target = $region104
        $region103: #{generator_forward.11} parent=99 // pred_region
          _
        $region104: #{generator_forward.11} parent=99 // pred_fallthru
          _
        %s407 = sand.u32 %s71, 1
        %s408 = sand.u32 %s71, 1
        %s409 = smul.addr %s408, 256
        %s410 = scalar_lea.vmem [#allocation4], %s409
        // Predicated region
        $region105: #{generator_forward.11} parent=99 // pred_check
          %p411 = pneg %p84
        $region106: #{generator_forward.11} parent=99 // pred_check_branch
          %413 = sbr.rel (%p411) target = $region108
        $region107: #{generator_forward.11} parent=99 // pred_region
          _
        $region108: #{generator_forward.11} parent=99 // pred_fallthru
          _
        %s414 = sand.u32 %s43, 1
        %s415 = sand.u32 %s43, 1
        %s416 = smul.addr %s415, 32
        %s417 = scalar_lea.vmem [#allocation3], %s416
        %p418 = pneg %p56
        %p419 = pneg %p53
        %s420 = sand.u32 %s71, 1
        %s421 = sand.u32 %s71, 1
        %s422 = smul.addr %s421, 256
        %s423 = scalar_lea.vmem [#allocation4], %s422
        %p424 = pneg %p84
        %p425 = pneg %p81
        %s426 = smul.u32 2, %s20
        %p427 = scmp.lt.s32.totalorder %s426, 3
        %s428 = scalar_select %p427, %s426, 3
        %s429 = scalar_lea.vmem %s2, %s428
        %p430 = pneg %p110
        %p431 = pneg %p107
        %p432 = pneg %p138
        %p433 = pneg %p135
        %s434 = sand.u32 %s125, 1
        %s435 = sand.u32 %s125, 1
        %s436 = smul.addr %s435, 64
        %s437 = scalar_lea.vmem [#allocation5], %s436
        %s438 = smul.u32 4, %s19
        %s439 = smul.u32 2, %s21
        %s440 = smul.u32 32, %s21
        %s441 = smul.u32 2, %s20
        %s442 = smul.u32 2, %s20
        %p443 = scmp.lt.s32.totalorder %s442, 3
        %s444 = scalar_select %p443, %s442, 3
        %s445 = scalar_lea.vmem %s2, %s444
        %s446 = smul.u32 2, %s20
        %s447 = smul.u32 4, %s19
        %s448 = smul.u32 2, %s20
        %p449 = scmp.eq.s32.totalorder %s21, 0
        // Predicated region
        $region109: #{generator_forward.11} parent=99 // pred_check
          %p450 = pneg %p449
        $region110: #{generator_forward.11} parent=99 // pred_check_branch
          %452 = sbr.rel (%p450) target = $region112
        $region111: #{generator_forward.11} parent=99 // pred_region
          %453 = vst [vmem:[#allocation2] sm:$0xff] 0.0
          %454 = vst [vmem:[#allocation2 + $0x8] sm:$0xff] 0.0
          %455 = vst [vmem:[#allocation2 + $0x10] sm:$0xff] 0.0
          %456 = vst [vmem:[#allocation2 + $0x18] sm:$0xff] 0.0
          %457 = vst [vmem:[#allocation2 + $0x20] sm:$0xff] 0.0
          %458 = vst [vmem:[#allocation2 + $0x28] sm:$0xff] 0.0
          %459 = vst [vmem:[#allocation2 + $0x30] sm:$0xff] 0.0
          %460 = vst [vmem:[#allocation2 + $0x38] sm:$0xff] 0.0
        $region112: #{generator_forward.11} parent=99 // pred_fallthru
          _
        %v461 = vld [vmem:[#allocation2] sm:$0xff]
        %v462 = vld [vmem:[#allocation2 + $0x8] sm:$0xff]
        %v463 = vld [vmem:[#allocation2 + $0x10] sm:$0xff]
        %v464 = vld [vmem:[#allocation2 + $0x18] sm:$0xff]
        %v465 = vld [vmem:[#allocation2 + $0x20] sm:$0xff]
        %v466 = vld [vmem:[#allocation2 + $0x28] sm:$0xff]
        %v467 = vld [vmem:[#allocation2 + $0x30] sm:$0xff]
        %v468 = vld [vmem:[#allocation2 + $0x38] sm:$0xff]
        %v469 = vld [vmem:[%s403] sm:$0xff]
        %v470 = vld [vmem:[%s403 + $0x8] sm:$0xff]
        %v471 = vld [vmem:[%s403 + $0x10] sm:$0xff]
        %v472 = vld [vmem:[%s403 + $0x18] sm:$0xff]
        %v473 = vld [vmem:[%s410] sm:$0xff]
        %v474 = vld [vmem:[%s410 + $0x8] sm:$0xff]
        %v475 = vld [vmem:[%s410 + $0x10] sm:$0xff]
        %v476 = vld [vmem:[%s410 + $0x18] sm:$0xff]
        %v477 = vld [vmem:[%s410 + $0x20] sm:$0xff]
        %v478 = vld [vmem:[%s410 + $0x28] sm:$0xff]
        %v479 = vld [vmem:[%s410 + $0x30] sm:$0xff]
        %v480 = vld [vmem:[%s410 + $0x38] sm:$0xff]
        %v481 = vld [vmem:[%s410 + $0x40] sm:$0xff]
        %v482 = vld [vmem:[%s410 + $0x48] sm:$0xff]
        %v483 = vld [vmem:[%s410 + $0x50] sm:$0xff]
        %v484 = vld [vmem:[%s410 + $0x58] sm:$0xff]
        %v485 = vld [vmem:[%s410 + $0x60] sm:$0xff]
        %v486 = vld [vmem:[%s410 + $0x68] sm:$0xff]
        %v487 = vld [vmem:[%s410 + $0x70] sm:$0xff]
        %v488 = vld [vmem:[%s410 + $0x78] sm:$0xff]
        %v489 = vld [vmem:[%s410 + $0x80] sm:$0xff]
        %v490 = vld [vmem:[%s410 + $0x88] sm:$0xff]
        %v491 = vld [vmem:[%s410 + $0x90] sm:$0xff]
        %v492 = vld [vmem:[%s410 + $0x98] sm:$0xff]
        %v493 = vld [vmem:[%s410 + $0xa0] sm:$0xff]
        %v494 = vld [vmem:[%s410 + $0xa8] sm:$0xff]
        %v495 = vld [vmem:[%s410 + $0xb0] sm:$0xff]
        %v496 = vld [vmem:[%s410 + $0xb8] sm:$0xff]
        %v497 = vld [vmem:[%s410 + $0xc0] sm:$0xff]
        %v498 = vld [vmem:[%s410 + $0xc8] sm:$0xff]
        %v499 = vld [vmem:[%s410 + $0xd0] sm:$0xff]
        %v500 = vld [vmem:[%s410 + $0xd8] sm:$0xff]
        %v501 = vld [vmem:[%s410 + $0xe0] sm:$0xff]
        %v502 = vld [vmem:[%s410 + $0xe8] sm:$0xff]
        %v503 = vld [vmem:[%s410 + $0xf0] sm:$0xff]
        %v504 = vld [vmem:[%s410 + $0xf8] sm:$0xff]
        %v509 = vunpack.c.l.b16 %v469
        %v510 = vunpack.c.h.b16 %v469
        %v511 = vunpack.c.l.b16 %v470
        %v512 = vunpack.c.h.b16 %v470
        %v513 = vunpack.c.l.b16 %v471
        %v514 = vunpack.c.h.b16 %v471
        %v515 = vunpack.c.l.b16 %v472
        %v516 = vunpack.c.h.b16 %v472
        %v517 = vpack.c.b16 %v511, %v509
        %v518 = vpack.c.b16 %v512, %v510
        %v519 = vpack.c.b16 %v515, %v513
        %v520 = vpack.c.b16 %v516, %v514
        %v557 = vunpack.c.l.b16 %v473
        %v558 = vunpack.c.h.b16 %v473
        %v559 = vunpack.c.l.b16 %v474
        %v560 = vunpack.c.h.b16 %v474
        %v561 = vunpack.c.l.b16 %v475
        %v562 = vunpack.c.h.b16 %v475
        %v563 = vunpack.c.l.b16 %v476
        %v564 = vunpack.c.h.b16 %v476
        %v565 = vunpack.c.l.b16 %v477
        %v566 = vunpack.c.h.b16 %v477
        %v567 = vunpack.c.l.b16 %v478
        %v568 = vunpack.c.h.b16 %v478
        %v569 = vunpack.c.l.b16 %v479
        %v570 = vunpack.c.h.b16 %v479
        %v571 = vunpack.c.l.b16 %v480
        %v572 = vunpack.c.h.b16 %v480
        %v573 = vunpack.c.l.b16 %v481
        %v574 = vunpack.c.h.b16 %v481
        %v575 = vunpack.c.l.b16 %v482
        %v576 = vunpack.c.h.b16 %v482
        %v577 = vunpack.c.l.b16 %v483
        %v578 = vunpack.c.h.b16 %v483
        %v579 = vunpack.c.l.b16 %v484
        %v580 = vunpack.c.h.b16 %v484
        %v581 = vunpack.c.l.b16 %v485
        %v582 = vunpack.c.h.b16 %v485
        %v583 = vunpack.c.l.b16 %v486
        %v584 = vunpack.c.h.b16 %v486
        %v585 = vunpack.c.l.b16 %v487
        %v586 = vunpack.c.h.b16 %v487
        %v587 = vunpack.c.l.b16 %v488
        %v588 = vunpack.c.h.b16 %v488
        %v589 = vunpack.c.l.b16 %v489
        %v590 = vunpack.c.h.b16 %v489
        %v591 = vunpack.c.l.b16 %v490
        %v592 = vunpack.c.h.b16 %v490
        %v593 = vunpack.c.l.b16 %v491
        %v594 = vunpack.c.h.b16 %v491
        %v595 = vunpack.c.l.b16 %v492
        %v596 = vunpack.c.h.b16 %v492
        %v597 = vunpack.c.l.b16 %v493
        %v598 = vunpack.c.h.b16 %v493
        %v599 = vunpack.c.l.b16 %v494
        %v600 = vunpack.c.h.b16 %v494
        %v601 = vunpack.c.l.b16 %v495
        %v602 = vunpack.c.h.b16 %v495
        %v603 = vunpack.c.l.b16 %v496
        %v604 = vunpack.c.h.b16 %v496
        %v605 = vunpack.c.l.b16 %v497
        %v606 = vunpack.c.h.b16 %v497
        %v607 = vunpack.c.l.b16 %v498
        %v608 = vunpack.c.h.b16 %v498
        %v609 = vunpack.c.l.b16 %v499
        %v610 = vunpack.c.h.b16 %v499
        %v611 = vunpack.c.l.b16 %v500
        %v612 = vunpack.c.h.b16 %v500
        %v613 = vunpack.c.l.b16 %v501
        %v614 = vunpack.c.h.b16 %v501
        %v615 = vunpack.c.l.b16 %v502
        %v616 = vunpack.c.h.b16 %v502
        %v617 = vunpack.c.l.b16 %v503
        %v618 = vunpack.c.h.b16 %v503
        %v619 = vunpack.c.l.b16 %v504
        %v620 = vunpack.c.h.b16 %v504
        %v621 = vpack.c.b16 %v559, %v557
        %v622 = vpack.c.b16 %v560, %v558
        %v623 = vpack.c.b16 %v563, %v561
        %v624 = vpack.c.b16 %v564, %v562
        %v625 = vpack.c.b16 %v567, %v565
        %v626 = vpack.c.b16 %v568, %v566
        %v627 = vpack.c.b16 %v571, %v569
        %v628 = vpack.c.b16 %v572, %v570
        %v629 = vpack.c.b16 %v575, %v573
        %v630 = vpack.c.b16 %v576, %v574
        %v631 = vpack.c.b16 %v579, %v577
        %v632 = vpack.c.b16 %v580, %v578
        %v633 = vpack.c.b16 %v583, %v581
        %v634 = vpack.c.b16 %v584, %v582
        %v635 = vpack.c.b16 %v587, %v585
        %v636 = vpack.c.b16 %v588, %v586
        %v637 = vpack.c.b16 %v591, %v589
        %v638 = vpack.c.b16 %v592, %v590
        %v639 = vpack.c.b16 %v595, %v593
        %v640 = vpack.c.b16 %v596, %v594
        %v641 = vpack.c.b16 %v599, %v597
        %v642 = vpack.c.b16 %v600, %v598
        %v643 = vpack.c.b16 %v603, %v601
        %v644 = vpack.c.b16 %v604, %v602
        %v645 = vpack.c.b16 %v607, %v605
        %v646 = vpack.c.b16 %v608, %v606
        %v647 = vpack.c.b16 %v611, %v609
        %v648 = vpack.c.b16 %v612, %v610
        %v649 = vpack.c.b16 %v615, %v613
        %v650 = vpack.c.b16 %v616, %v614
        %v651 = vpack.c.b16 %v619, %v617
        %v652 = vpack.c.b16 %v620, %v618
        %685 = vmatpush.bf16.msra.mxu0 %v635
        %686 = vmatpush.bf16.msra.mxu0 %v633
        %687 = vmatpush.bf16.msra.mxu0 %v631
        %688 = vmatpush.bf16.msra.mxu0 %v629
        %689 = vmatpush.bf16.msra.mxu0 %v627
        %690 = vmatpush.bf16.msra.mxu0 %v625
        %691 = vmatpush.bf16.msra.mxu0 %v623
        %692 = vmatpush.bf16.msra.mxu0 %v621
        %693 = vmatmul.bf16.gmra.mxu0 %v517
        %v694 = vpop.f32.mrf.mxu0
        %v695 = vadd.f32 0.0, %v694
        %v696 = vpop.f32.mrf.mxu0
        %v697 = vadd.f32 0.0, %v696
        %698 = vmatmul.bf16.gmra.mxu0 %v519
        %v699 = vpop.f32.mrf.mxu0
        %v700 = vadd.f32 0.0, %v699
        %v701 = vpop.f32.mrf.mxu0
        %v702 = vadd.f32 0.0, %v701
        %703 = vdwg.mxu0
        %704 = vmatpush.bf16.msra.mxu0 %v651
        %705 = vmatpush.bf16.msra.mxu0 %v649
        %706 = vmatpush.bf16.msra.mxu0 %v647
        %707 = vmatpush.bf16.msra.mxu0 %v645
        %708 = vmatpush.bf16.msra.mxu0 %v643
        %709 = vmatpush.bf16.msra.mxu0 %v641
        %710 = vmatpush.bf16.msra.mxu0 %v639
        %711 = vmatpush.bf16.msra.mxu0 %v637
        %712 = vmatmul.bf16.gmra.mxu0 %v518
        %v713 = vpop.f32.mrf.mxu0
        %v714 = vadd.f32 %v695, %v713
        %v715 = vpop.f32.mrf.mxu0
        %v716 = vadd.f32 %v697, %v715
        %717 = vmatmul.bf16.gmra.mxu0 %v520
        %v718 = vpop.f32.mrf.mxu0
        %v719 = vadd.f32 %v700, %v718
        %v720 = vpop.f32.mrf.mxu0
        %v721 = vadd.f32 %v702, %v720
        %722 = vdwg.mxu0
        %723 = vmatpush.bf16.msra.mxu0 %v636
        %724 = vmatpush.bf16.msra.mxu0 %v634
        %725 = vmatpush.bf16.msra.mxu0 %v632
        %726 = vmatpush.bf16.msra.mxu0 %v630
        %727 = vmatpush.bf16.msra.mxu0 %v628
        %728 = vmatpush.bf16.msra.mxu0 %v626
        %729 = vmatpush.bf16.msra.mxu0 %v624
        %730 = vmatpush.bf16.msra.mxu0 %v622
        %731 = vmatmul.bf16.gmra.mxu0 %v517
        %v732 = vpop.f32.mrf.mxu0
        %v733 = vadd.f32 0.0, %v732
        %v734 = vpop.f32.mrf.mxu0
        %v735 = vadd.f32 0.0, %v734
        %736 = vmatmul.bf16.gmra.mxu0 %v519
        %v737 = vpop.f32.mrf.mxu0
        %v738 = vadd.f32 0.0, %v737
        %v739 = vpop.f32.mrf.mxu0
        %v740 = vadd.f32 0.0, %v739
        %741 = vdwg.mxu0
        %742 = vmatpush.bf16.msra.mxu0 %v652
        %743 = vmatpush.bf16.msra.mxu0 %v650
        %744 = vmatpush.bf16.msra.mxu0 %v648
        %745 = vmatpush.bf16.msra.mxu0 %v646
        %746 = vmatpush.bf16.msra.mxu0 %v644
        %747 = vmatpush.bf16.msra.mxu0 %v642
        %748 = vmatpush.bf16.msra.mxu0 %v640
        %749 = vmatpush.bf16.msra.mxu0 %v638
        %750 = vmatmul.bf16.gmra.mxu0 %v518
        %v751 = vpop.f32.mrf.mxu0
        %v752 = vadd.f32 %v733, %v751
        %v753 = vpop.f32.mrf.mxu0
        %v754 = vadd.f32 %v735, %v753
        %755 = vmatmul.bf16.gmra.mxu0 %v520
        %v756 = vpop.f32.mrf.mxu0
        %v757 = vadd.f32 %v738, %v756
        %v758 = vpop.f32.mrf.mxu0
        %v759 = vadd.f32 %v740, %v758
        %760 = vdwg.mxu0
        %v761 = vadd.f32 %v461, %v714
        %v762 = vadd.f32 %v462, %v752
        %v763 = vadd.f32 %v463, %v716
        %v764 = vadd.f32 %v464, %v754
        %v765 = vadd.f32 %v465, %v719
        %v766 = vadd.f32 %v466, %v757
        %v767 = vadd.f32 %v467, %v721
        %v768 = vadd.f32 %v468, %v759
        %769 = vst [vmem:[#allocation2] sm:$0xff] %v761
        %770 = vst [vmem:[#allocation2 + $0x8] sm:$0xff] %v762
        %771 = vst [vmem:[#allocation2 + $0x10] sm:$0xff] %v763
        %772 = vst [vmem:[#allocation2 + $0x18] sm:$0xff] %v764
        %773 = vst [vmem:[#allocation2 + $0x20] sm:$0xff] %v765
        %774 = vst [vmem:[#allocation2 + $0x28] sm:$0xff] %v766
        %775 = vst [vmem:[#allocation2 + $0x30] sm:$0xff] %v767
        %776 = vst [vmem:[#allocation2 + $0x38] sm:$0xff] %v768
        %p777 = scmp.eq.s32.totalorder %s21, 3
        // Predicated region
        $region113: #{generator_forward.11} parent=99 // pred_check
          %p778 = pneg %p777
        $region114: #{generator_forward.11} parent=99 // pred_check_branch
          %780 = sbr.rel (%p778) target = $region116
        $region115: #{generator_forward.11} parent=99 // pred_region
          %v781 = vld [vmem:[#allocation2] sm:$0xff]
          %v782 = vld [vmem:[#allocation2 + $0x8] sm:$0xff]
          %v783 = vld [vmem:[#allocation2 + $0x10] sm:$0xff]
          %v784 = vld [vmem:[#allocation2 + $0x18] sm:$0xff]
          %v785 = vld [vmem:[#allocation2 + $0x20] sm:$0xff]
          %v786 = vld [vmem:[#allocation2 + $0x28] sm:$0xff]
          %v787 = vld [vmem:[#allocation2 + $0x30] sm:$0xff]
          %v788 = vld [vmem:[#allocation2 + $0x38] sm:$0xff]
          %v789 = vld [vmem:[%s445] sm:$0x3]
          %v791 = vperm.slane %v789, 0
          %v792 = vperm.slane %v789, 1
          %v795 = vadd.f32 %v781, %v791
          %v796 = vadd.f32 %v782, %v792
          %v797 = vadd.f32 %v783, %v791
          %v798 = vadd.f32 %v784, %v792
          %v799 = vadd.f32 %v785, %v791
          %v800 = vadd.f32 %v786, %v792
          %v801 = vadd.f32 %v787, %v791
          %v802 = vadd.f32 %v788, %v792
          %803 = vst [vmem:[%s437] sm:$0xff] %v795
          %804 = vst [vmem:[%s437 + $0x8] sm:$0xff] %v796
          %805 = vst [vmem:[%s437 + $0x10] sm:$0xff] %v797
          %806 = vst [vmem:[%s437 + $0x18] sm:$0xff] %v798
          %807 = vst [vmem:[%s437 + $0x20] sm:$0xff] %v799
          %808 = vst [vmem:[%s437 + $0x28] sm:$0xff] %v800
          %809 = vst [vmem:[%s437 + $0x30] sm:$0xff] %v801
          %810 = vst [vmem:[%s437 + $0x38] sm:$0xff] %v802
        $region116: #{generator_forward.11} parent=99 // pred_fallthru
          _
        %s811 = sand.u32 %s125, 1
        %s812 = sand.u32 %s125, 1
        %s813 = smul.addr %s812, 64
        %s814 = scalar_lea.vmem [#allocation5], %s813
        // Predicated region
        $region117: #{generator_forward.11} parent=99 // pred_check
          %p815 = pneg %p135
        $region118: #{generator_forward.11} parent=99 // pred_check_branch
          %817 = sbr.rel (%p815) target = $region120
        $region119: #{generator_forward.11} parent=99 // pred_region
          %s818 = smul.u32 4, %s19
          %s819 = smul.u32 2, %s20
          %s820 = smul.addr %s818, 4
          %s821 = sadd.s32 %s819, %s820
          %s822 = smul.addr %s821, 8
          %s823 = scalar_lea.vmem %s3, %s822
          // Predicated region
          $region121: #{generator_forward.11} parent=119 // pred_check
            _
          $region122: #{generator_forward.11} parent=119 // pred_check_branch
            %825 = sbr.rel (0) target = $region124
          $region123: #{generator_forward.11} parent=119 // pred_region
            // Predicated region
            $region125: #{generator_forward.11} parent=123 // pred_check
              _
            $region126: #{generator_forward.11} parent=123 // pred_check_branch
              %827 = sbr.rel (0) target = $region128
            $region127: #{generator_forward.11} parent=123 // pred_region
              loop: start=0, step=1, limit=1
              $region129: #{generator_forward.11} parent=127 // loop_pre_header
                _
              $region130: #{generator_forward.11} parent=127 // loop_header
                %s829 = sphi 0, %s833
                %p830 = scmp.ge.s32.totalorder %s829, 1
                %s834 = sphi %s814, %s814
                %s835 = sphi %s823, %s823
              $region131: #{generator_forward.11} parent=127 // loop_header_branch
                %832 = sbr.rel (%p830) target = $region135
              $region132: #{generator_forward.11} parent=127 // loop_body
                %v836 = vld [vmem:[%s834] sm:$0xff]
                %837 = vst [vmem:[%s835] sm:$0xff] %v836
                %v838 = vld [vmem:[%s834 + $0x8] sm:$0xff]
                %839 = vst [vmem:[%s835 + $0x8] sm:$0xff] %v838
                %v840 = vld [vmem:[%s834 + $0x10] sm:$0xff]
                %841 = vst [vmem:[%s835 + $0x20] sm:$0xff] %v840
                %v842 = vld [vmem:[%s834 + $0x18] sm:$0xff]
                %843 = vst [vmem:[%s835 + $0x28] sm:$0xff] %v842
                %v844 = vld [vmem:[%s834 + $0x20] sm:$0xff]
                %845 = vst [vmem:[%s835 + $0x40] sm:$0xff] %v844
                %v846 = vld [vmem:[%s834 + $0x28] sm:$0xff]
                %847 = vst [vmem:[%s835 + $0x48] sm:$0xff] %v846
                %v848 = vld [vmem:[%s834 + $0x30] sm:$0xff]
                %849 = vst [vmem:[%s835 + $0x60] sm:$0xff] %v848
                %v850 = vld [vmem:[%s834 + $0x38] sm:$0xff]
                %851 = vst [vmem:[%s835 + $0x68] sm:$0xff] %v850
              $region133: #{generator_forward.11} parent=127 // loop_footer
                %s833 = sadd.s32 1, %s829
              $region134: #{generator_forward.11} parent=127 // loop_footer_branch
                %828 = sbr.rel target = $region130
              $region135: #{generator_forward.11} parent=127 // loop_exit
                _
            $region128: #{generator_forward.11} parent=123 // pred_fallthru
              _
            // Predicated region
            $region136: #{generator_forward.11} parent=123 // pred_check
              _
            $region137: #{generator_forward.11} parent=123 // pred_check_branch
              %853 = sbr.rel target = $region139
            $region138: #{generator_forward.11} parent=123 // pred_region
              _
            $region139: #{generator_forward.11} parent=123 // pred_fallthru
              _
          $region124: #{generator_forward.11} parent=119 // pred_fallthru
            _
          %854 = vnop
        $region120: #{generator_forward.11} parent=99 // pred_fallthru
          _
      $region100: #{generator_forward.11} parent=5 // pred_fallthru
        _
      %p855 = scmp.le.s32.totalorder 2, %s9
      // Predicated region
      $region140: #{generator_forward.11} parent=5 // pred_check
        %p856 = pneg %p855
      $region141: #{generator_forward.11} parent=5 // pred_check_branch
        %858 = sbr.rel (%p856) target = $region143
      $region142: #{generator_forward.11} parent=5 // pred_region
        %s859 = ssub.s32 %s9, 2
        // Predicated region
        $region144: #{generator_forward.11} parent=142 // pred_check
          %p860 = pneg %p141
        $region145: #{generator_forward.11} parent=142 // pred_check_branch
          %862 = sbr.rel (%p860) target = $region147
        $region146: #{generator_forward.11} parent=142 // pred_region
          %s863 = sand.u32 %s126, 1
          %s864 = sand.u32 %s126, 1
          %s865 = smul.addr %s864, 64
          %s866 = scalar_lea.vmem [#allocation5], %s865
        $region147: #{generator_forward.11} parent=142 // pred_fallthru
          _
      $region143: #{generator_forward.11} parent=5 // pred_fallthru
        _
    $region6: #{generator_forward.11} parent=1 // loop_footer
      %s13 = sadd.s32 1, %s9
    $region7: #{generator_forward.11} parent=1 // loop_footer_branch
      %8 = sbr.rel target = $region3
    $region8: #{generator_forward.11} parent=1 // loop_exit
      _

// kernel: tile.18
$region0: #{tile.18}
  #allocation0 [shape = 's32[1]{0}', space=sflag, size = 0x4, scoped, tag = 'scoped memory for tile.18']
  %s0 = inlined_call_operand.vmem [shape: f32[64], index: 0, kind: input, shape index: {}]
  %s1 = inlined_call_operand.vmem [shape: f32[4,64], index: 1, kind: output, shape index: {}]
  // Predicated region
  $region2: #{tile.18} parent=0 // pred_check
    _
  $region3: #{tile.18} parent=0 // pred_check_branch
    %3 = sbr.rel (0) target = $region5
  $region4: #{tile.18} parent=0 // pred_region
    _
  $region5: #{tile.18} parent=0 // pred_fallthru
    _
  %v4 = vld [vmem:[%s0] ss:$0 sm:$0xff]
  %5 = vst [vmem:[%s1] sm:$0xf] %v4

// kernel: generator_forward.13
$region0: #{generator_forward.13}
  #allocation0 [shape = 'u32[]', space=smem, size = 0x4, offset = 0x4, fixed_abs, tag = 'smem constant byte address 0x4 - core index']
  #allocation1 [shape = 'u32[72,128]{1,0:T(1,128)}', space=vmem, size = 0x9000, scoped, tag = 'internal scratch']
  #allocation2 [shape = 'f32[128,256]{1,0:T(8,128)}', space=vmem, size = 0x20000, scoped, tag = 'scratch operand']
  %s0 = inlined_call_operand.vmem [shape: bf16[128,512], index: 0, kind: input, shape index: {}]
  %s1 = inlined_call_operand.vmem [shape: bf16[512,256], index: 1, kind: input, shape index: {}]
  %s2 = inlined_call_operand.vmem [shape: f32[1,256], index: 2, kind: input, shape index: {}]
  %s3 = inlined_call_operand.vmem [shape: f32[128,256], index: 3, kind: output, shape index: {}]
  %s4 = sld [smem:[#allocation0]]
  $region91: #{generator_forward.13} parent=0
    _
  %s6 = ssub.s32 1, %s4
  %s7 = scalar_select 0, %s6, %s4
  $region1: #{generator_forward.13} parent=0
    #allocation3 [shape = 'u8[131072]{0}', space=vmem, size = 0x20000, scoped, tag = 'input window, operand 0']
    loop: start=0, step=1, limit=4
    $region2: #{generator_forward.13} parent=1 // loop_pre_header
      _
    $region3: #{generator_forward.13} parent=1 // loop_header
      %s9 = sphi 0, %s13
      %p10 = scmp.ge.s32.totalorder %s9, 4
      %s16 = sphi 0, %s35
      %s17 = sphi 0, %s31
      %s18 = sphi 0, %s27
      %s19 = sphi 0, %s16
      %s20 = sphi 0, %s17
      %s21 = sphi 0, %s18
      %s22 = sphi 0, %s19
      %s23 = sphi 0, %s20
      %s24 = sphi 0, %s21
      %s40 = sphi 0, %s42
      %s43 = sphi 0, %s40
      %s44 = sphi 0, %s43
      %s60 = sphi 0, %s44
      %s68 = sphi 0, %s70
      %s71 = sphi 0, %s68
      %s72 = sphi 0, %s71
      %s88 = sphi 0, %s72
      %s94 = sphi 0, %s96
      %s97 = sphi 0, %s94
      %s98 = sphi 0, %s97
      %s114 = sphi 0, %s98
      %s122 = sphi 0, %s124
      %s125 = sphi 0, %s122
      %s126 = sphi 0, %s125
      %s142 = sphi 0, %s126
    $region4: #{generator_forward.13} parent=1 // loop_header_branch
      %12 = sbr.rel (%p10) target = $region8
    $region5: #{generator_forward.13} parent=1 // loop_body
      %s14 = ssub.s32 %s9, 1
      %s15 = ssub.s32 %s9, 2
      %s25 = sadd.s32 1, %s18
      %p26 = scmp.ge.s32.totalorder %s25, 2
      %s27 = scalar_select %p26, 0, %s25
      %s28 = sadd.s32 1, %s17
      %s29 = scalar_select %p26, %s28, %s17
      %p30 = scmp.ge.s32.totalorder %s29, 1
      %s31 = scalar_select %p30, 0, %s29
      %s32 = sadd.s32 1, %s16
      %s33 = scalar_select %p30, %s32, %s16
      %p34 = scmp.ge.s32.totalorder %s33, 1
      %s35 = scalar_select %p34, 0, %s33
      %s36 = ssub.s32 %s16, %s35
      %s37 = ssub.s32 %s18, %s27
      %s38 = sor.u32 %s36, %s37
      %p39 = scmp.eq.s32.totalorder %s38, 0
      %s41 = sadd.s32 %s40, 1
      %s42 = scalar_select %p39, %s40, %s41
      %p45 = pneg %p39
      %p46 = scmp.eq.s32.totalorder %s9, 1
      %p47 = por %p45, %p46
      %p48 = scmp.ne.s32.totalorder %s40, %s43
      %p49 = scmp.eq.s32.totalorder %s9, 0
      %p50 = por %p48, %p49
      %p51 = scmp.ne.s32.totalorder %s40, %s43
      %p52 = scmp.eq.s32.totalorder %s14, 1
      %p53 = por %p51, %p52
      %p54 = scmp.ne.s32.totalorder %s43, %s44
      %p55 = scmp.eq.s32.totalorder %s14, 0
      %p56 = por %p54, %p55
      %p57 = scmp.ne.s32.totalorder %s43, %s44
      %p58 = scmp.eq.s32.totalorder %s15, 1
      %p59 = por %p57, %p58
      %p61 = scmp.ne.s32.totalorder %s44, %s60
      %p62 = scmp.eq.s32.totalorder %s15, 0
      %p63 = por %p61, %p62
      %s64 = ssub.s32 %s18, %s27
      %s65 = ssub.s32 %s17, %s31
      %s66 = sor.u32 %s64, %s65
      %p67 = scmp.eq.s32.totalorder %s66, 0
      %s69 = sadd.s32 %s68, 1
      %s70 = scalar_select %p67, %s68, %s69
      %p73 = pneg %p67
      %p74 = scmp.eq.s32.totalorder %s9, 1
      %p75 = por %p73, %p74
      %p76 = scmp.ne.s32.totalorder %s68, %s71
      %p77 = scmp.eq.s32.totalorder %s9, 0
      %p78 = por %p76, %p77
      %p79 = scmp.ne.s32.totalorder %s68, %s71
      %p80 = scmp.eq.s32.totalorder %s14, 1
      %p81 = por %p79, %p80
      %p82 = scmp.ne.s32.totalorder %s71, %s72
      %p83 = scmp.eq.s32.totalorder %s14, 0
      %p84 = por %p82, %p83
      %p85 = scmp.ne.s32.totalorder %s71, %s72
      %p86 = scmp.eq.s32.totalorder %s15, 1
      %p87 = por %p85, %p86
      %p89 = scmp.ne.s32.totalorder %s72, %s88
      %p90 = scmp.eq.s32.totalorder %s15, 0
      %p91 = por %p89, %p90
      %s92 = ssub.s32 %s17, %s31
      %p93 = scmp.eq.s32.totalorder %s92, 0
      %s95 = sadd.s32 %s94, 1
      %s96 = scalar_select %p93, %s94, %s95
      %p99 = pneg %p93
      %p100 = scmp.eq.s32.totalorder %s9, 1
      %p101 = por %p99, %p100
      %p102 = scmp.ne.s32.totalorder %s94, %s97
      %p103 = scmp.eq.s32.totalorder %s9, 0
      %p104 = por %p102, %p103
      %p105 = scmp.ne.s32.totalorder %s94, %s97
      %p106 = scmp.eq.s32.totalorder %s14, 1
      %p107 = por %p105, %p106
      %p108 = scmp.ne.s32.totalorder %s97, %s98
      %p109 = scmp.eq.s32.totalorder %s14, 0
      %p110 = por %p108, %p109
      %p111 = scmp.ne.s32.totalorder %s97, %s98
      %p112 = scmp.eq.s32.totalorder %s15, 1
      %p113 = por %p111, %p112
      %p115 = scmp.ne.s32.totalorder %s98, %s114
      %p116 = scmp.eq.s32.totalorder %s15, 0
      %p117 = por %p115, %p116
      %s118 = ssub.s32 %s16, %s35
      %s119 = ssub.s32 %s17, %s31
      %s120 = sor.u32 %s118, %s119
      %p121 = scmp.eq.s32.totalorder %s120, 0
      %s123 = sadd.s32 %s122, 1
      %s124 = scalar_select %p121, %s122, %s123
      %p127 = pneg %p121
      %p128 = scmp.eq.s32.totalorder %s9, 1
      %p129 = por %p127, %p128
      %p130 = scmp.ne.s32.totalorder %s122, %s125
      %p131 = scmp.eq.s32.totalorder %s9, 0
      %p132 = por %p130, %p131
      %p133 = scmp.ne.s32.totalorder %s122, %s125
      %p134 = scmp.eq.s32.totalorder %s14, 1
      %p135 = por %p133, %p134
      %p136 = scmp.ne.s32.totalorder %s125, %s126
      %p137 = scmp.eq.s32.totalorder %s14, 0
      %p138 = por %p136, %p137
      %p139 = scmp.ne.s32.totalorder %s125, %s126
      %p140 = scmp.eq.s32.totalorder %s15, 1
      %p141 = por %p139, %p140
      %p143 = scmp.ne.s32.totalorder %s126, %s142
      %p144 = scmp.eq.s32.totalorder %s15, 0
      %p145 = por %p143, %p144
      %p146 = scmp.le.s32.totalorder 1, %s9
      %p147 = scmp.lt.s32.totalorder %s9, 3
      %p148 = pnand %p146, %p147
      %p149 = pneg %p148
      // Predicated region
      $region9: #{generator_forward.13} parent=5 // pred_check
        _
      $region10: #{generator_forward.13} parent=5 // pred_check_branch
        %151 = sbr.rel (%p148) target = $region12
      $region11: #{generator_forward.13} parent=5 // pred_region
        %s152 = ssub.s32 %s9, 1
        // Predicated region
        $region13: #{generator_forward.13} parent=11 // pred_check
          %p153 = pneg %p110
        $region14: #{generator_forward.13} parent=11 // pred_check_branch
          %155 = sbr.rel (%p153) target = $region16
        $region15: #{generator_forward.13} parent=11 // pred_region
          %s156 = smul.u32 2, %s20
          %p157 = scmp.lt.s32.totalorder %s156, 1
          %s158 = scalar_select %p157, %s156, 1
          %s159 = scalar_lea.vmem %s2, %s158
          %s160 = smul.u32 2, %s20
        $region16: #{generator_forward.13} parent=11 // pred_fallthru
          _
      $region12: #{generator_forward.13} parent=5 // pred_fallthru
        _
      %p161 = scmp.lt.s32.totalorder %s9, 2
      // Predicated region
      $region17: #{generator_forward.13} parent=5 // pred_check
        %p162 = pneg %p161
      $region18: #{generator_forward.13} parent=5 // pred_check_branch
        %164 = sbr.rel (%p162) target = $region20
      $region19: #{generator_forward.13} parent=5 // pred_region
        // Predicated region
        $region21: #{generator_forward.13} parent=19 // pred_check
          %p165 = pneg %p50
        $region22: #{generator_forward.13} parent=19 // pred_check_branch
          %167 = sbr.rel (%p165) target = $region24
        $region23: #{generator_forward.13} parent=19 // pred_region
          %s168 = sand.u32 %s40, 1
          %s169 = sand.u32 %s40, 1
          %s170 = smul.addr %s169, 128
          %s171 = scalar_lea.vmem [#allocation3], %s170
          %s172 = smul.u32 16, %s16
          %s173 = smul.u32 2, %s18
          %s174 = smul.addr %s172, 4
          %s175 = sadd.s32 %s173, %s174
          %s176 = smul.addr %s175, 4
          %s177 = scalar_lea.vmem %s0, %s176
          // Predicated region
          $region25: #{generator_forward.13} parent=23 // pred_check
            _
          $region26: #{generator_forward.13} parent=23 // pred_check_branch
            %179 = sbr.rel (0) target = $region28
          $region27: #{generator_forward.13} parent=23 // pred_region
            // Predicated region
            $region29: #{generator_forward.13} parent=27 // pred_check
              _
            $region30: #{generator_forward.13} parent=27 // pred_check_branch
              %181 = sbr.rel (0) target = $region32
            $region31: #{generator_forward.13} parent=27 // pred_region
              // Predicated region
              $region44: #{generator_forward.13} parent=31 // pred_check
                _
              $region45: #{generator_forward.13} parent=31 // pred_check_branch
                %227 = sbr.rel (0) target = $region47
              $region46: #{generator_forward.13} parent=31 // pred_region
                loop: start=0, step=1, limit=1
                $region48: #{generator_forward.13} parent=46 // loop_pre_header
                  _
                $region49: #{generator_forward.13} parent=46 // loop_header
                  %s229 = sphi 0, %s233
                  %p230 = scmp.ge.s32.totalorder %s229, 1
                  %s234 = sphi %s177, %s177
                  %s235 = sphi %s171, %s171
                $region50: #{generator_forward.13} parent=46 // loop_header_branch
                  %232 = sbr.rel (%p230) target = $region54
                $region51: #{generator_forward.13} parent=46 // loop_body
                  %v236 = vld [vmem:[%s234] sm:$0xff]
                  %237 = vst [vmem:[%s235] sm:$0xff] %v236
                  %v238 = vld [vmem:[%s234 + $0x10] sm:$0xff]
                  %239 = vst [vmem:[%s235 + $0x8] sm:$0xff] %v238
                  %v240 = vld [vmem:[%s234 + $0x20] sm:$0xff]
                  %241 = vst [vmem:[%s235 + $0x10] sm:$0xff] %v240
                  %v242 = vld [vmem:[%s234 + $0x30] sm:$0xff]
                  %243 = vst [vmem:[%s235 + $0x18] sm:$0xff] %v242
                  %v244 = vld [vmem:[%s234 + $0x40] sm:$0xff]
                  %245 = vst [vmem:[%s235 + $0x20] sm:$0xff] %v244
                  %v246 = vld [vmem:[%s234 + $0x50] sm:$0xff]
                  %247 = vst [vmem:[%s235 + $0x28] sm:$0xff] %v246
                  %v248 = vld [vmem:[%s234 + $0x60] sm:$0xff]
                  %249 = vst [vmem:[%s235 + $0x30] sm:$0xff] %v248
                  %v250 = vld [vmem:[%s234 + $0x70] sm:$0xff]
                  %251 = vst [vmem:[%s235 + $0x38] sm:$0xff] %v250
                  %v252 = vld [vmem:[%s234 + $0x80] sm:$0xff]
                  %253 = vst [vmem:[%s235 + $0x40] sm:$0xff] %v252
                  %v254 = vld [vmem:[%s234 + $0x90] sm:$0xff]
                  %255 = vst [vmem:[%s235 + $0x48] sm:$0xff] %v254
                  %v256 = vld [vmem:[%s234 + $0xa0] sm:$0xff]
                  %257 = vst [vmem:[%s235 + $0x50] sm:$0xff] %v256
                  %v258 = vld [vmem:[%s234 + $0xb0] sm:$0xff]
                  %259 = vst [vmem:[%s235 + $0x58] sm:$0xff] %v258
                  %v260 = vld [vmem:[%s234 + $0xc0] sm:$0xff]
                  %261 = vst [vmem:[%s235 + $0x60] sm:$0xff] %v260
                  %v262 = vld [vmem:[%s234 + $0xd0] sm:$0xff]
                  %263 = vst [vmem:[%s235 + $0x68] sm:$0xff] %v262
                  %v264 = vld [vmem:[%s234 + $0xe0] sm:$0xff]
                  %265 = vst [vmem:[%s235 + $0x70] sm:$0xff] %v264
                  %v266 = vld [vmem:[%s234 + $0xf0] sm:$0xff]
                  %267 = vst [vmem:[%s235 + $0x78] sm:$0xff] %v266
                $region52: #{generator_forward.13} parent=46 // loop_footer
                  %s233 = sadd.s32 1, %s229
                $region53: #{generator_forward.13} parent=46 // loop_footer_branch
                  %228 = sbr.rel target = $region49
                $region54: #{generator_forward.13} parent=46 // loop_exit
                  _
              $region47: #{generator_forward.13} parent=31 // pred_fallthru
                _
              // Predicated region
              $region55: #{generator_forward.13} parent=31 // pred_check
                _
              $region56: #{generator_forward.13} parent=31 // pred_check_branch
                %269 = sbr.rel target = $region58
              $region57: #{generator_forward.13} parent=31 // pred_region
                _
              $region58: #{generator_forward.13} parent=31 // pred_fallthru
                _
            $region32: #{generator_forward.13} parent=27 // pred_fallthru
              _
            // Predicated region
            $region33: #{generator_forward.13} parent=27 // pred_check
              _
            $region34: #{generator_forward.13} parent=27 // pred_check_branch
              %183 = sbr.rel target = $region36
            $region35: #{generator_forward.13} parent=27 // pred_region
              %s185 = ssub.s32 256, 1
              loop: start=0, step=1, limit=1
              $region37: #{generator_forward.13} parent=35 // loop_pre_header
                _
              $region38: #{generator_forward.13} parent=35 // loop_header
                %s187 = sphi 0, %s191
                %p188 = scmp.ge.s32.totalorder %s187, 1
                %s192 = sphi %s177, %s177
                %s193 = sphi %s171, %s171
              $region39: #{generator_forward.13} parent=35 // loop_header_branch
                %190 = sbr.rel (%p188) target = $region43
              $region40: #{generator_forward.13} parent=35 // loop_body
                %v194 = vld [vmem:[%s192] sm:%s185]
                %195 = vst [vmem:[%s193] sm:%s185] %v194
                %v196 = vld [vmem:[%s192 + $0x10] sm:%s185]
                %197 = vst [vmem:[%s193 + $0x8] sm:%s185] %v196
                %v198 = vld [vmem:[%s192 + $0x20] sm:%s185]
                %199 = vst [vmem:[%s193 + $0x10] sm:%s185] %v198
                %v200 = vld [vmem:[%s192 + $0x30] sm:%s185]
                %201 = vst [vmem:[%s193 + $0x18] sm:%s185] %v200
                %v202 = vld [vmem:[%s192 + $0x40] sm:%s185]
                %203 = vst [vmem:[%s193 + $0x20] sm:%s185] %v202
                %v204 = vld [vmem:[%s192 + $0x50] sm:%s185]
                %205 = vst [vmem:[%s193 + $0x28] sm:%s185] %v204
                %v206 = vld [vmem:[%s192 + $0x60] sm:%s185]
                %207 = vst [vmem:[%s193 + $0x30] sm:%s185] %v206
                %v208 = vld [vmem:[%s192 + $0x70] sm:%s185]
                %209 = vst [vmem:[%s193 + $0x38] sm:%s185] %v208
                %v210 = vld [vmem:[%s192 + $0x80] sm:%s185]
                %211 = vst [vmem:[%s193 + $0x40] sm:%s185] %v210
                %v212 = vld [vmem:[%s192 + $0x90] sm:%s185]
                %213 = vst [vmem:[%s193 + $0x48] sm:%s185] %v212
                %v214 = vld [vmem:[%s192 + $0xa0] sm:%s185]
                %215 = vst [vmem:[%s193 + $0x50] sm:%s185] %v214
                %v216 = vld [vmem:[%s192 + $0xb0] sm:%s185]
                %217 = vst [vmem:[%s193 + $0x58] sm:%s185] %v216
                %v218 = vld [vmem:[%s192 + $0xc0] sm:%s185]
                %219 = vst [vmem:[%s193 + $0x60] sm:%s185] %v218
                %v220 = vld [vmem:[%s192 + $0xd0] sm:%s185]
                %221 = vst [vmem:[%s193 + $0x68] sm:%s185] %v220
                %v222 = vld [vmem:[%s192 + $0xe0] sm:%s185]
                %223 = vst [vmem:[%s193 + $0x70] sm:%s185] %v222
                %v224 = vld [vmem:[%s192 + $0xf0] sm:%s185]
                %225 = vst [vmem:[%s193 + $0x78] sm:%s185] %v224
              $region41: #{generator_forward.13} parent=35 // loop_footer
                %s191 = sadd.s32 1, %s187
              $region42: #{generator_forward.13} parent=35 // loop_footer_branch
                %186 = sbr.rel target = $region38
              $region43: #{generator_forward.13} parent=35 // loop_exit
                _
            $region36: #{generator_forward.13} parent=27 // pred_fallthru
              _
          $region28: #{generator_forward.13} parent=23 // pred_fallthru
            _
          %270 = vnop
        $region24: #{generator_forward.13} parent=19 // pred_fallthru
          _
        // Predicated region
        $region59: #{generator_forward.13} parent=19 // pred_check
          %p271 = pneg %p78
        $region60: #{generator_forward.13} parent=19 // pred_check_branch
          %273 = sbr.rel (%p271) target = $region62
        $region61: #{generator_forward.13} parent=19 // pred_region
          %s274 = smul.u32 32, %s18
          %s275 = smul.u32 2, %s17
          %p276 = scmp.lt.s32.totalorder %s274, 63
          %s277 = scalar_select %p276, %s274, 63
          %p278 = scmp.lt.s32.totalorder %s275, 1
          %s279 = scalar_select %p278, %s275, 1
          %s280 = smul.addr %s277, 2
          %s281 = sadd.s32 %s279, %s280
          %s282 = smul.addr %s281, 4
          %s283 = scalar_lea.vmem %s1, %s282
          %s284 = smul.u32 32, %s18
          %s285 = smul.u32 2, %s17
        $region62: #{generator_forward.13} parent=19 // pred_fallthru
          _
      $region20: #{generator_forward.13} parent=5 // pred_fallthru
        _
      %p286 = scmp.le.s32.totalorder 1, %s9
      %p287 = scmp.lt.s32.totalorder %s9, 3
      %p288 = pnand %p286, %p287
      %p289 = pneg %p288
      // Predicated region
      $region63: #{generator_forward.13} parent=5 // pred_check
        _
      $region64: #{generator_forward.13} parent=5 // pred_check_branch
        %291 = sbr.rel (%p288) target = $region66
      $region65: #{generator_forward.13} parent=5 // pred_region
        %s292 = ssub.s32 %s9, 1
        %s293 = sand.u32 %s43, 1
        %s294 = sand.u32 %s43, 1
        %s295 = smul.addr %s294, 128
        %s296 = scalar_lea.vmem [#allocation3], %s295
        // Predicated region
        $region67: #{generator_forward.13} parent=65 // pred_check
          %p297 = pneg %p56
        $region68: #{generator_forward.13} parent=65 // pred_check_branch
          %299 = sbr.rel (%p297) target = $region70
        $region69: #{generator_forward.13} parent=65 // pred_region
          _
        $region70: #{generator_forward.13} parent=65 // pred_fallthru
          _
        %s300 = sand.u32 %s43, 1
        %s301 = sand.u32 %s43, 1
        %s302 = smul.addr %s301, 128
        %s303 = scalar_lea.vmem [#allocation3], %s302
        %p304 = pneg %p56
        %p305 = pneg %p53
        %s306 = smul.u32 32, %s21
        %s307 = smul.u32 2, %s20
        %p308 = scmp.lt.s32.totalorder %s306, 63
        %s309 = scalar_select %p308, %s306, 63
        %p310 = scmp.lt.s32.totalorder %s307, 1
        %s311 = scalar_select %p310, %s307, 1
        %s312 = smul.addr %s309, 2
        %s313 = sadd.s32 %s311, %s312
        %s314 = smul.addr %s313, 4
        %s315 = scalar_lea.vmem %s1, %s314
        %p316 = pneg %p84
        %p317 = pneg %p81
        %s318 = smul.u32 2, %s20
        %p319 = scmp.lt.s32.totalorder %s318, 1
        %s320 = scalar_select %p319, %s318, 1
        %s321 = scalar_lea.vmem %s2, %s320
        %p322 = pneg %p110
        %p323 = pneg %p107
        %p324 = pneg %p138
        %p325 = pneg %p135
        %s326 = smul.u32 16, %s19
        %s327 = smul.u32 2, %s20
        %p328 = scmp.lt.s32.totalorder %s326, 15
        %s329 = scalar_select %p328, %s326, 15
        %p330 = scmp.lt.s32.totalorder %s327, 1
        %s331 = scalar_select %p330, %s327, 1
        %s332 = smul.addr %s329, 2
        %s333 = sadd.s32 %s331, %s332
        %s334 = smul.addr %s333, 8
        %s335 = scalar_lea.vmem %s3, %s334
        %s336 = smul.u32 16, %s19
        %s337 = smul.u32 2, %s21
        %s338 = smul.u32 32, %s21
        %s339 = smul.u32 2, %s20
        %p340 = scmp.lt.s32.totalorder %s338, 63
        %s341 = scalar_select %p340, %s338, 63
        %p342 = scmp.lt.s32.totalorder %s339, 1
        %s343 = scalar_select %p342, %s339, 1
        %s344 = smul.addr %s341, 2
        %s345 = sadd.s32 %s343, %s344
        %s346 = smul.addr %s345, 4
        %s347 = scalar_lea.vmem %s1, %s346
        %s348 = smul.u32 32, %s21
        %s349 = smul.u32 2, %s20
        %s350 = smul.u32 2, %s20
        %p351 = scmp.lt.s32.totalorder %s350, 1
        %s352 = scalar_select %p351, %s350, 1
        %s353 = scalar_lea.vmem %s2, %s352
        %s354 = smul.u32 2, %s20
        %s355 = smul.u32 16, %s19
        %s356 = smul.u32 2, %s20
        %p357 = scmp.lt.s32.totalorder %s355, 15
        %s358 = scalar_select %p357, %s355, 15
        %p359 = scmp.lt.s32.totalorder %s356, 1
        %s360 = scalar_select %p359, %s356, 1
        %s361 = smul.addr %s358, 2
        %s362 = sadd.s32 %s360, %s361
        %s363 = smul.addr %s362, 8
        %s364 = scalar_lea.vmem %s3, %s363
        %s365 = smul.u32 16, %s19
        %s366 = smul.u32 2, %s20
        %p367 = scmp.eq.s32.totalorder %s21, 0
        // Predicated region
        $region71: #{generator_forward.13} parent=65 // pred_check
          %p368 = pneg %p367
        $region72: #{generator_forward.13} parent=65 // pred_check_branch
          %370 = sbr.rel (%p368) target = $region74
        $region73: #{generator_forward.13} parent=65 // pred_region
          %371 = vst [vmem:[#allocation2] sm:$0xff] 0.0
          %372 = vst [vmem:[#allocation2 + $0x8] sm:$0xff] 0.0
          %373 = vst [vmem:[#allocation2 + $0x10] sm:$0xff] 0.0
          %374 = vst [vmem:[#allocation2 + $0x18] sm:$0xff] 0.0
          %375 = vst [vmem:[#allocation2 + $0x20] sm:$0xff] 0.0
          %376 = vst [vmem:[#allocation2 + $0x28] sm:$0xff] 0.0
          %377 = vst [vmem:[#allocation2 + $0x30] sm:$0xff] 0.0
          %378 = vst [vmem:[#allocation2 + $0x38] sm:$0xff] 0.0
          %379 = vst [vmem:[#allocation2 + $0x40] sm:$0xff] 0.0
          %380 = vst [vmem:[#allocation2 + $0x48] sm:$0xff] 0.0
          %381 = vst [vmem:[#allocation2 + $0x50] sm:$0xff] 0.0
          %382 = vst [vmem:[#allocation2 + $0x58] sm:$0xff] 0.0
          %383 = vst [vmem:[#allocation2 + $0x60] sm:$0xff] 0.0
          %384 = vst [vmem:[#allocation2 + $0x68] sm:$0xff] 0.0
          %385 = vst [vmem:[#allocation2 + $0x70] sm:$0xff] 0.0
          %386 = vst [vmem:[#allocation2 + $0x78] sm:$0xff] 0.0
          %387 = vst [vmem:[#allocation2 + $0x80] sm:$0xff] 0.0
          %388 = vst [vmem:[#allocation2 + $0x88] sm:$0xff] 0.0
          %389 = vst [vmem:[#allocation2 + $0x90] sm:$0xff] 0.0
          %390 = vst [vmem:[#allocation2 + $0x98] sm:$0xff] 0.0
          %391 = vst [vmem:[#allocation2 + $0xa0] sm:$0xff] 0.0
          %392 = vst [vmem:[#allocation2 + $0xa8] sm:$0xff] 0.0
          %393 = vst [vmem:[#allocation2 + $0xb0] sm:$0xff] 0.0
          %394 = vst [vmem:[#allocation2 + $0xb8] sm:$0xff] 0.0
          %395 = vst [vmem:[#allocation2 + $0xc0] sm:$0xff] 0.0
          %396 = vst [vmem:[#allocation2 + $0xc8] sm:$0xff] 0.0
          %397 = vst [vmem:[#allocation2 + $0xd0] sm:$0xff] 0.0
          %398 = vst [vmem:[#allocation2 + $0xd8] sm:$0xff] 0.0
          %399 = vst [vmem:[#allocation2 + $0xe0] sm:$0xff] 0.0
          %400 = vst [vmem:[#allocation2 + $0xe8] sm:$0xff] 0.0
          %401 = vst [vmem:[#allocation2 + $0xf0] sm:$0xff] 0.0
          %402 = vst [vmem:[#allocation2 + $0xf8] sm:$0xff] 0.0
        $region74: #{generator_forward.13} parent=65 // pred_fallthru
          _
        %v403 = vld [vmem:[#allocation2] sm:$0xff]
        %v404 = vld [vmem:[#allocation2 + $0x8] sm:$0xff]
        %v405 = vld [vmem:[#allocation2 + $0x10] sm:$0xff]
        %v406 = vld [vmem:[#allocation2 + $0x18] sm:$0xff]
        %v407 = vld [vmem:[#allocation2 + $0x20] sm:$0xff]
        %v408 = vld [vmem:[#allocation2 + $0x28] sm:$0xff]
        %v409 = vld [vmem:[#allocation2 + $0x30] sm:$0xff]
        %v410 = vld [vmem:[#allocation2 + $0x38] sm:$0xff]
        %v411 = vld [vmem:[#allocation2 + $0x40] sm:$0xff]
        %v412 = vld [vmem:[#allocation2 + $0x48] sm:$0xff]
        %v413 = vld [vmem:[#allocation2 + $0x50] sm:$0xff]
        %v414 = vld [vmem:[#allocation2 + $0x58] sm:$0xff]
        %v415 = vld [vmem:[#allocation2 + $0x60] sm:$0xff]
        %v416 = vld [vmem:[#allocation2 + $0x68] sm:$0xff]
        %v417 = vld [vmem:[#allocation2 + $0x70] sm:$0xff]
        %v418 = vld [vmem:[#allocation2 + $0x78] sm:$0xff]
        %v419 = vld [vmem:[#allocation2 + $0x80] sm:$0xff]
        %v420 = vld [vmem:[#allocation2 + $0x88] sm:$0xff]
        %v421 = vld [vmem:[#allocation2 + $0x90] sm:$0xff]
        %v422 = vld [vmem:[#allocation2 + $0x98] sm:$0xff]
        %v423 = vld [vmem:[#allocation2 + $0xa0] sm:$0xff]
        %v424 = vld [vmem:[#allocation2 + $0xa8] sm:$0xff]
        %v425 = vld [vmem:[#allocation2 + $0xb0] sm:$0xff]
        %v426 = vld [vmem:[#allocation2 + $0xb8] sm:$0xff]
        %v427 = vld [vmem:[#allocation2 + $0xc0] sm:$0xff]
        %v428 = vld [vmem:[#allocation2 + $0xc8] sm:$0xff]
        %v429 = vld [vmem:[#allocation2 + $0xd0] sm:$0xff]
        %v430 = vld [vmem:[#allocation2 + $0xd8] sm:$0xff]
        %v431 = vld [vmem:[#allocation2 + $0xe0] sm:$0xff]
        %v432 = vld [vmem:[#allocation2 + $0xe8] sm:$0xff]
        %v433 = vld [vmem:[#allocation2 + $0xf0] sm:$0xff]
        %v434 = vld [vmem:[#allocation2 + $0xf8] sm:$0xff]
        %v435 = vld [vmem:[%s296] sm:$0xff]
        %v436 = vld [vmem:[%s296 + $0x8] sm:$0xff]
        %v437 = vld [vmem:[%s296 + $0x10] sm:$0xff]
        %v438 = vld [vmem:[%s296 + $0x18] sm:$0xff]
        %v439 = vld [vmem:[%s296 + $0x20] sm:$0xff]
        %v440 = vld [vmem:[%s296 + $0x28] sm:$0xff]
        %v441 = vld [vmem:[%s296 + $0x30] sm:$0xff]
        %v442 = vld [vmem:[%s296 + $0x38] sm:$0xff]
        %v443 = vld [vmem:[%s296 + $0x40] sm:$0xff]
        %v444 = vld [vmem:[%s296 + $0x48] sm:$0xff]
        %v445 = vld [vmem:[%s296 + $0x50] sm:$0xff]
        %v446 = vld [vmem:[%s296 + $0x58] sm:$0xff]
        %v447 = vld [vmem:[%s296 + $0x60] sm:$0xff]
        %v448 = vld [vmem:[%s296 + $0x68] sm:$0xff]
        %v449 = vld [vmem:[%s296 + $0x70] sm:$0xff]
        %v450 = vld [vmem:[%s296 + $0x78] sm:$0xff]
        %v451 = vld [vmem:[%s347] sm:$0xff]
        %v452 = vld [vmem:[%s347 + $0x8] sm:$0xff]
        %v453 = vld [vmem:[%s347 + $0x10] sm:$0xff]
        %v454 = vld [vmem:[%s347 + $0x18] sm:$0xff]
        %v455 = vld [vmem:[%s347 + $0x20] sm:$0xff]
        %v456 = vld [vmem:[%s347 + $0x28] sm:$0xff]
        %v457 = vld [vmem:[%s347 + $0x30] sm:$0xff]
        %v458 = vld [vmem:[%s347 + $0x38] sm:$0xff]
        %v459 = vld [vmem:[%s347 + $0x40] sm:$0xff]
        %v460 = vld [vmem:[%s347 + $0x48] sm:$0xff]
        %v461 = vld [vmem:[%s347 + $0x50] sm:$0xff]
        %v462 = vld [vmem:[%s347 + $0x58] sm:$0xff]
        %v463 = vld [vmem:[%s347 + $0x60] sm:$0xff]
        %v464 = vld [vmem:[%s347 + $0x68] sm:$0xff]
        %v465 = vld [vmem:[%s347 + $0x70] sm:$0xff]
        %v466 = vld [vmem:[%s347 + $0x78] sm:$0xff]
        %v467 = vld [vmem:[%s347 + $0x80] sm:$0xff]
        %v468 = vld [vmem:[%s347 + $0x88] sm:$0xff]
        %v469 = vld [vmem:[%s347 + $0x90] sm:$0xff]
        %v470 = vld [vmem:[%s347 + $0x98] sm:$0xff]
        %v471 = vld [vmem:[%s347 + $0xa0] sm:$0xff]
        %v472 = vld [vmem:[%s347 + $0xa8] sm:$0xff]
        %v473 = vld [vmem:[%s347 + $0xb0] sm:$0xff]
        %v474 = vld [vmem:[%s347 + $0xb8] sm:$0xff]
        %v475 = vld [vmem:[%s347 + $0xc0] sm:$0xff]
        %v476 = vld [vmem:[%s347 + $0xc8] sm:$0xff]
        %v477 = vld [vmem:[%s347 + $0xd0] sm:$0xff]
        %v478 = vld [vmem:[%s347 + $0xd8] sm:$0xff]
        %v479 = vld [vmem:[%s347 + $0xe0] sm:$0xff]
        %v480 = vld [vmem:[%s347 + $0xe8] sm:$0xff]
        %v481 = vld [vmem:[%s347 + $0xf0] sm:$0xff]
        %v482 = vld [vmem:[%s347 + $0xf8] sm:$0xff]
        %v499 = vunpack.c.l.b16 %v435
        %v500 = vunpack.c.h.b16 %v435
        %v501 = vunpack.c.l.b16 %v436
        %v502 = vunpack.c.h.b16 %v436
        %v503 = vunpack.c.l.b16 %v437
        %v504 = vunpack.c.h.b16 %v437
        %v505 = vunpack.c.l.b16 %v438
        %v506 = vunpack.c.h.b16 %v438
        %v507 = vunpack.c.l.b16 %v439
        %v508 = vunpack.c.h.b16 %v439
        %v509 = vunpack.c.l.b16 %v440
        %v510 = vunpack.c.h.b16 %v440
        %v511 = vunpack.c.l.b16 %v441
        %v512 = vunpack.c.h.b16 %v441
        %v513 = vunpack.c.l.b16 %v442
        %v514 = vunpack.c.h.b16 %v442
        %v515 = vunpack.c.l.b16 %v443
        %v516 = vunpack.c.h.b16 %v443
        %v517 = vunpack.c.l.b16 %v444
        %v518 = vunpack.c.h.b16 %v444
        %v519 = vunpack.c.l.b16 %v445
        %v520 = vunpack.c.h.b16 %v445
        %v521 = vunpack.c.l.b16 %v446
        %v522 = vunpack.c.h.b16 %v446
        %v523 = vunpack.c.l.b16 %v447
        %v524 = vunpack.c.h.b16 %v447
        %v525 = vunpack.c.l.b16 %v448
        %v526 = vunpack.c.h.b16 %v448
        %v527 = vunpack.c.l.b16 %v449
        %v528 = vunpack.c.h.b16 %v449
        %v529 = vunpack.c.l.b16 %v450
        %v530 = vunpack.c.h.b16 %v450
        %v531 = vpack.c.b16 %v501, %v499
        %v532 = vpack.c.b16 %v502, %v500
        %v533 = vpack.c.b16 %v505, %v503
        %v534 = vpack.c.b16 %v506, %v504
        %v535 = vpack.c.b16 %v509, %v507
        %v536 = vpack.c.b16 %v510, %v508
        %v537 = vpack.c.b16 %v513, %v511
        %v538 = vpack.c.b16 %v514, %v512
        %v539 = vpack.c.b16 %v517, %v515
        %v540 = vpack.c.b16 %v518, %v516
        %v541 = vpack.c.b16 %v521, %v519
        %v542 = vpack.c.b16 %v522, %v520
        %v543 = vpack.c.b16 %v525, %v523
        %v544 = vpack.c.b16 %v526, %v524
        %v545 = vpack.c.b16 %v529, %v527
        %v546 = vpack.c.b16 %v530, %v528
        %v595 = vunpack.c.l.b16 %v451
        %v596 = vunpack.c.h.b16 %v451
        %v597 = vunpack.c.l.b16 %v452
        %v598 = vunpack.c.h.b16 %v452
        %v599 = vunpack.c.l.b16 %v453
        %v600 = vunpack.c.h.b16 %v453
        %v601 = vunpack.c.l.b16 %v454
        %v602 = vunpack.c.h.b16 %v454
        %v603 = vunpack.c.l.b16 %v455
        %v604 = vunpack.c.h.b16 %v455
        %v605 = vunpack.c.l.b16 %v456
        %v606 = vunpack.c.h.b16 %v456
        %v607 = vunpack.c.l.b16 %v457
        %v608 = vunpack.c.h.b16 %v457
        %v609 = vunpack.c.l.b16 %v458
        %v610 = vunpack.c.h.b16 %v458
        %v611 = vunpack.c.l.b16 %v459
        %v612 = vunpack.c.h.b16 %v459
        %v613 = vunpack.c.l.b16 %v460
        %v614 = vunpack.c.h.b16 %v460
        %v615 = vunpack.c.l.b16 %v461
        %v616 = vunpack.c.h.b16 %v461
        %v617 = vunpack.c.l.b16 %v462
        %v618 = vunpack.c.h.b16 %v462
        %v619 = vunpack.c.l.b16 %v463
        %v620 = vunpack.c.h.b16 %v463
        %v621 = vunpack.c.l.b16 %v464
        %v622 = vunpack.c.h.b16 %v464
        %v623 = vunpack.c.l.b16 %v465
        %v624 = vunpack.c.h.b16 %v465
        %v625 = vunpack.c.l.b16 %v466
        %v626 = vunpack.c.h.b16 %v466
        %v627 = vunpack.c.l.b16 %v467
        %v628 = vunpack.c.h.b16 %v467
        %v629 = vunpack.c.l.b16 %v468
        %v630 = vunpack.c.h.b16 %v468
        %v631 = vunpack.c.l.b16 %v469
        %v632 = vunpack.c.h.b16 %v469
        %v633 = vunpack.c.l.b16 %v470
        %v634 = vunpack.c.h.b16 %v470
        %v635 = vunpack.c.l.b16 %v471
        %v636 = vunpack.c.h.b16 %v471
        %v637 = vunpack.c.l.b16 %v472
        %v638 = vunpack.c.h.b16 %v472
        %v639 = vunpack.c.l.b16 %v473
        %v640 = vunpack.c.h.b16 %v473
        %v641 = vunpack.c.l.b16 %v474
        %v642 = vunpack.c.h.b16 %v474
        %v643 = vunpack.c.l.b16 %v475
        %v644 = vunpack.c.h.b16 %v475
        %v645 = vunpack.c.l.b16 %v476
        %v646 = vunpack.c.h.b16 %v476
        %v647 = vunpack.c.l.b16 %v477
        %v648 = vunpack.c.h.b16 %v477
        %v649 = vunpack.c.l.b16 %v478
        %v650 = vunpack.c.h.b16 %v478
        %v651 = vunpack.c.l.b16 %v479
        %v652 = vunpack.c.h.b16 %v479
        %v653 = vunpack.c.l.b16 %v480
        %v654 = vunpack.c.h.b16 %v480
        %v655 = vunpack.c.l.b16 %v481
        %v656 = vunpack.c.h.b16 %v481
        %v657 = vunpack.c.l.b16 %v482
        %v658 = vunpack.c.h.b16 %v482
        %v659 = vpack.c.b16 %v597, %v595
        %v660 = vpack.c.b16 %v598, %v596
        %v661 = vpack.c.b16 %v601, %v599
        %v662 = vpack.c.b16 %v602, %v600
        %v663 = vpack.c.b16 %v605, %v603
        %v664 = vpack.c.b16 %v606, %v604
        %v665 = vpack.c.b16 %v609, %v607
        %v666 = vpack.c.b16 %v610, %v608
        %v667 = vpack.c.b16 %v613, %v611
        %v668 = vpack.c.b16 %v614, %v612
        %v669 = vpack.c.b16 %v617, %v615
        %v670 = vpack.c.b16 %v618, %v616
        %v671 = vpack.c.b16 %v621, %v619
        %v672 = vpack.c.b16 %v622, %v620
        %v673 = vpack.c.b16 %v625, %v623
        %v674 = vpack.c.b16 %v626, %v624
        %v675 = vpack.c.b16 %v629, %v627
        %v676 = vpack.c.b16 %v630, %v628
        %v677 = vpack.c.b16 %v633, %v631
        %v678 = vpack.c.b16 %v634, %v632
        %v679 = vpack.c.b16 %v637, %v635
        %v680 = vpack.c.b16 %v638, %v636
        %v681 = vpack.c.b16 %v641, %v639
        %v682 = vpack.c.b16 %v642, %v640
        %v683 = vpack.c.b16 %v645, %v643
        %v684 = vpack.c.b16 %v646, %v644
        %v685 = vpack.c.b16 %v649, %v647
        %v686 = vpack.c.b16 %v650, %v648
        %v687 = vpack.c.b16 %v653, %v651
        %v688 = vpack.c.b16 %v654, %v652
        %v689 = vpack.c.b16 %v657, %v655
        %v690 = vpack.c.b16 %v658, %v656
        %723 = vmatpush.bf16.msra.mxu0 %v673
        %724 = vmatpush.bf16.msra.mxu0 %v671
        %725 = vmatpush.bf16.msra.mxu0 %v669
        %726 = vmatpush.bf16.msra.mxu0 %v667
        %727 = vmatpush.bf16.msra.mxu0 %v665
        %728 = vmatpush.bf16.msra.mxu0 %v663
        %729 = vmatpush.bf16.msra.mxu0 %v661
        %730 = vmatpush.bf16.msra.mxu0 %v659
        %731 = vmatmul.bf16.gmra.mxu0 %v531
        %v732 = vpop.f32.mrf.mxu0
        %v733 = vadd.f32 0.0, %v732
        %v734 = vpop.f32.mrf.mxu0
        %v735 = vadd.f32 0.0, %v734
        %736 = vmatmul.bf16.gmra.mxu0 %v533
        %v737 = vpop.f32.mrf.mxu0
        %v738 = vadd.f32 0.0, %v737
        %v739 = vpop.f32.mrf.mxu0
        %v740 = vadd.f32 0.0, %v739
        %741 = vmatmul.bf16.gmra.mxu0 %v535
        %v742 = vpop.f32.mrf.mxu0
        %v743 = vadd.f32 0.0, %v742
        %v744 = vpop.f32.mrf.mxu0
        %v745 = vadd.f32 0.0, %v744
        %746 = vmatmul.bf16.gmra.mxu0 %v537
        %v747 = vpop.f32.mrf.mxu0
        %v748 = vadd.f32 0.0, %v747
        %v749 = vpop.f32.mrf.mxu0
        %v750 = vadd.f32 0.0, %v749
        %751 = vmatmul.bf16.gmra.mxu0 %v539
        %v752 = vpop.f32.mrf.mxu0
        %v753 = vadd.f32 0.0, %v752
        %v754 = vpop.f32.mrf.mxu0
        %v755 = vadd.f32 0.0, %v754
        %756 = vmatmul.bf16.gmra.mxu0 %v541
        %v757 = vpop.f32.mrf.mxu0
        %v758 = vadd.f32 0.0, %v757
        %v759 = vpop.f32.mrf.mxu0
        %v760 = vadd.f32 0.0, %v759
        %761 = vmatmul.bf16.gmra.mxu0 %v543
        %v762 = vpop.f32.mrf.mxu0
        %v763 = vadd.f32 0.0, %v762
        %v764 = vpop.f32.mrf.mxu0
        %v765 = vadd.f32 0.0, %v764
        %766 = vmatmul.bf16.gmra.mxu0 %v545
        %v767 = vpop.f32.mrf.mxu0
        %v768 = vadd.f32 0.0, %v767
        %v769 = vpop.f32.mrf.mxu0
        %v770 = vadd.f32 0.0, %v769
        %771 = vdwg.mxu0
        %772 = vmatpush.bf16.msra.mxu0 %v689
        %773 = vmatpush.bf16.msra.mxu0 %v687
        %774 = vmatpush.bf16.msra.mxu0 %v685
        %775 = vmatpush.bf16.msra.mxu0 %v683
        %776 = vmatpush.bf16.msra.mxu0 %v681
        %777 = vmatpush.bf16.msra.mxu0 %v679
        %778 = vmatpush.bf16.msra.mxu0 %v677
        %779 = vmatpush.bf16.msra.mxu0 %v675
        %780 = vmatmul.bf16.gmra.mxu0 %v532
        %v781 = vpop.f32.mrf.mxu0
        %v782 = vadd.f32 %v733, %v781
        %v783 = vpop.f32.mrf.mxu0
        %v784 = vadd.f32 %v735, %v783
        %785 = vmatmul.bf16.gmra.mxu0 %v534
        %v786 = vpop.f32.mrf.mxu0
        %v787 = vadd.f32 %v738, %v786
        %v788 = vpop.f32.mrf.mxu0
        %v789 = vadd.f32 %v740, %v788
        %790 = vmatmul.bf16.gmra.mxu0 %v536
        %v791 = vpop.f32.mrf.mxu0
        %v792 = vadd.f32 %v743, %v791
        %v793 = vpop.f32.mrf.mxu0
        %v794 = vadd.f32 %v745, %v793
        %795 = vmatmul.bf16.gmra.mxu0 %v538
        %v796 = vpop.f32.mrf.mxu0
        %v797 = vadd.f32 %v748, %v796
        %v798 = vpop.f32.mrf.mxu0
        %v799 = vadd.f32 %v750, %v798
        %800 = vmatmul.bf16.gmra.mxu0 %v540
        %v801 = vpop.f32.mrf.mxu0
        %v802 = vadd.f32 %v753, %v801
        %v803 = vpop.f32.mrf.mxu0
        %v804 = vadd.f32 %v755, %v803
        %805 = vmatmul.bf16.gmra.mxu0 %v542
        %v806 = vpop.f32.mrf.mxu0
        %v807 = vadd.f32 %v758, %v806
        %v808 = vpop.f32.mrf.mxu0
        %v809 = vadd.f32 %v760, %v808
        %810 = vmatmul.bf16.gmra.mxu0 %v544
        %v811 = vpop.f32.mrf.mxu0
        %v812 = vadd.f32 %v763, %v811
        %v813 = vpop.f32.mrf.mxu0
        %v814 = vadd.f32 %v765, %v813
        %815 = vmatmul.bf16.gmra.mxu0 %v546
        %v816 = vpop.f32.mrf.mxu0
        %v817 = vadd.f32 %v768, %v816
        %v818 = vpop.f32.mrf.mxu0
        %v819 = vadd.f32 %v770, %v818
        %820 = vdwg.mxu0
        %821 = vmatpush.bf16.msra.mxu0 %v674
        %822 = vmatpush.bf16.msra.mxu0 %v672
        %823 = vmatpush.bf16.msra.mxu0 %v670
        %824 = vmatpush.bf16.msra.mxu0 %v668
        %825 = vmatpush.bf16.msra.mxu0 %v666
        %826 = vmatpush.bf16.msra.mxu0 %v664
        %827 = vmatpush.bf16.msra.mxu0 %v662
        %828 = vmatpush.bf16.msra.mxu0 %v660
        %829 = vmatmul.bf16.gmra.mxu0 %v531
        %v830 = vpop.f32.mrf.mxu0
        %v831 = vadd.f32 0.0, %v830
        %v832 = vpop.f32.mrf.mxu0
        %v833 = vadd.f32 0.0, %v832
        %834 = vmatmul.bf16.gmra.mxu0 %v533
        %v835 = vpop.f32.mrf.mxu0
        %v836 = vadd.f32 0.0, %v835
        %v837 = vpop.f32.mrf.mxu0
        %v838 = vadd.f32 0.0, %v837
        %839 = vmatmul.bf16.gmra.mxu0 %v535
        %v840 = vpop.f32.mrf.mxu0
        %v841 = vadd.f32 0.0, %v840
        %v842 = vpop.f32.mrf.mxu0
        %v843 = vadd.f32 0.0, %v842
        %844 = vmatmul.bf16.gmra.mxu0 %v537
        %v845 = vpop.f32.mrf.mxu0
        %v846 = vadd.f32 0.0, %v845
        %v847 = vpop.f32.mrf.mxu0
        %v848 = vadd.f32 0.0, %v847
        %849 = vmatmul.bf16.gmra.mxu0 %v539
        %v850 = vpop.f32.mrf.mxu0
        %v851 = vadd.f32 0.0, %v850
        %v852 = vpop.f32.mrf.mxu0
        %v853 = vadd.f32 0.0, %v852
        %854 = vmatmul.bf16.gmra.mxu0 %v541
        %v855 = vpop.f32.mrf.mxu0
        %v856 = vadd.f32 0.0, %v855
        %v857 = vpop.f32.mrf.mxu0
        %v858 = vadd.f32 0.0, %v857
        %859 = vmatmul.bf16.gmra.mxu0 %v543
        %v860 = vpop.f32.mrf.mxu0
        %v861 = vadd.f32 0.0, %v860
        %v862 = vpop.f32.mrf.mxu0
        %v863 = vadd.f32 0.0, %v862
        %864 = vmatmul.bf16.gmra.mxu0 %v545
        %v865 = vpop.f32.mrf.mxu0
        %v866 = vadd.f32 0.0, %v865
        %v867 = vpop.f32.mrf.mxu0
        %v868 = vadd.f32 0.0, %v867
        %869 = vdwg.mxu0
        %870 = vmatpush.bf16.msra.mxu0 %v690
        %871 = vmatpush.bf16.msra.mxu0 %v688
        %872 = vmatpush.bf16.msra.mxu0 %v686
        %873 = vmatpush.bf16.msra.mxu0 %v684
        %874 = vmatpush.bf16.msra.mxu0 %v682
        %875 = vmatpush.bf16.msra.mxu0 %v680
        %876 = vmatpush.bf16.msra.mxu0 %v678
        %877 = vmatpush.bf16.msra.mxu0 %v676
        %878 = vmatmul.bf16.gmra.mxu0 %v532
        %v879 = vpop.f32.mrf.mxu0
        %v880 = vadd.f32 %v831, %v879
        %v881 = vpop.f32.mrf.mxu0
        %v882 = vadd.f32 %v833, %v881
        %883 = vmatmul.bf16.gmra.mxu0 %v534
        %v884 = vpop.f32.mrf.mxu0
        %v885 = vadd.f32 %v836, %v884
        %v886 = vpop.f32.mrf.mxu0
        %v887 = vadd.f32 %v838, %v886
        %888 = vmatmul.bf16.gmra.mxu0 %v536
        %v889 = vpop.f32.mrf.mxu0
        %v890 = vadd.f32 %v841, %v889
        %v891 = vpop.f32.mrf.mxu0
        %v892 = vadd.f32 %v843, %v891
        %893 = vmatmul.bf16.gmra.mxu0 %v538
        %v894 = vpop.f32.mrf.mxu0
        %v895 = vadd.f32 %v846, %v894
        %v896 = vpop.f32.mrf.mxu0
        %v897 = vadd.f32 %v848, %v896
        %898 = vmatmul.bf16.gmra.mxu0 %v540
        %v899 = vpop.f32.mrf.mxu0
        %v900 = vadd.f32 %v851, %v899
        %v901 = vpop.f32.mrf.mxu0
        %v902 = vadd.f32 %v853, %v901
        %903 = vmatmul.bf16.gmra.mxu0 %v542
        %v904 = vpop.f32.mrf.mxu0
        %v905 = vadd.f32 %v856, %v904
        %v906 = vpop.f32.mrf.mxu0
        %v907 = vadd.f32 %v858, %v906
        %908 = vmatmul.bf16.gmra.mxu0 %v544
        %v909 = vpop.f32.mrf.mxu0
        %v910 = vadd.f32 %v861, %v909
        %v911 = vpop.f32.mrf.mxu0
        %v912 = vadd.f32 %v863, %v911
        %913 = vmatmul.bf16.gmra.mxu0 %v546
        %v914 = vpop.f32.mrf.mxu0
        %v915 = vadd.f32 %v866, %v914
        %v916 = vpop.f32.mrf.mxu0
        %v917 = vadd.f32 %v868, %v916
        %918 = vdwg.mxu0
        %v919 = vadd.f32 %v403, %v782
        %v920 = vadd.f32 %v404, %v880
        %v921 = vadd.f32 %v405, %v784
        %v922 = vadd.f32 %v406, %v882
        %v923 = vadd.f32 %v407, %v787
        %v924 = vadd.f32 %v408, %v885
        %v925 = vadd.f32 %v409, %v789
        %v926 = vadd.f32 %v410, %v887
        %v927 = vadd.f32 %v411, %v792
        %v928 = vadd.f32 %v412, %v890
        %v929 = vadd.f32 %v413, %v794
        %v930 = vadd.f32 %v414, %v892
        %v931 = vadd.f32 %v415, %v797
        %v932 = vadd.f32 %v416, %v895
        %v933 = vadd.f32 %v417, %v799
        %v934 = vadd.f32 %v418, %v897
        %v935 = vadd.f32 %v419, %v802
        %v936 = vadd.f32 %v420, %v900
        %v937 = vadd.f32 %v421, %v804
        %v938 = vadd.f32 %v422, %v902
        %v939 = vadd.f32 %v423, %v807
        %v940 = vadd.f32 %v424, %v905
        %v941 = vadd.f32 %v425, %v809
        %v942 = vadd.f32 %v426, %v907
        %v943 = vadd.f32 %v427, %v812
        %v944 = vadd.f32 %v428, %v910
        %v945 = vadd.f32 %v429, %v814
        %v946 = vadd.f32 %v430, %v912
        %v947 = vadd.f32 %v431, %v817
        %v948 = vadd.f32 %v432, %v915
        %v949 = vadd.f32 %v433, %v819
        %v950 = vadd.f32 %v434, %v917
        %951 = vst [vmem:[#allocation2] sm:$0xff] %v919
        %952 = vst [vmem:[#allocation2 + $0x8] sm:$0xff] %v920
        %953 = vst [vmem:[#allocation2 + $0x10] sm:$0xff] %v921
        %954 = vst [vmem:[#allocation2 + $0x18] sm:$0xff] %v922
        %955 = vst [vmem:[#allocation2 + $0x20] sm:$0xff] %v923
        %956 = vst [vmem:[#allocation2 + $0x28] sm:$0xff] %v924
        %957 = vst [vmem:[#allocation2 + $0x30] sm:$0xff] %v925
        %958 = vst [vmem:[#allocation2 + $0x38] sm:$0xff] %v926
        %959 = vst [vmem:[#allocation2 + $0x40] sm:$0xff] %v927
        %960 = vst [vmem:[#allocation2 + $0x48] sm:$0xff] %v928
        %961 = vst [vmem:[#allocation2 + $0x50] sm:$0xff] %v929
        %962 = vst [vmem:[#allocation2 + $0x58] sm:$0xff] %v930
        %963 = vst [vmem:[#allocation2 + $0x60] sm:$0xff] %v931
        %964 = vst [vmem:[#allocation2 + $0x68] sm:$0xff] %v932
        %965 = vst [vmem:[#allocation2 + $0x70] sm:$0xff] %v933
        %966 = vst [vmem:[#allocation2 + $0x78] sm:$0xff] %v934
        %967 = vst [vmem:[#allocation2 + $0x80] sm:$0xff] %v935
        %968 = vst [vmem:[#allocation2 + $0x88] sm:$0xff] %v936
        %969 = vst [vmem:[#allocation2 + $0x90] sm:$0xff] %v937
        %970 = vst [vmem:[#allocation2 + $0x98] sm:$0xff] %v938
        %971 = vst [vmem:[#allocation2 + $0xa0] sm:$0xff] %v939
        %972 = vst [vmem:[#allocation2 + $0xa8] sm:$0xff] %v940
        %973 = vst [vmem:[#allocation2 + $0xb0] sm:$0xff] %v941
        %974 = vst [vmem:[#allocation2 + $0xb8] sm:$0xff] %v942
        %975 = vst [vmem:[#allocation2 + $0xc0] sm:$0xff] %v943
        %976 = vst [vmem:[#allocation2 + $0xc8] sm:$0xff] %v944
        %977 = vst [vmem:[#allocation2 + $0xd0] sm:$0xff] %v945
        %978 = vst [vmem:[#allocation2 + $0xd8] sm:$0xff] %v946
        %979 = vst [vmem:[#allocation2 + $0xe0] sm:$0xff] %v947
        %980 = vst [vmem:[#allocation2 + $0xe8] sm:$0xff] %v948
        %981 = vst [vmem:[#allocation2 + $0xf0] sm:$0xff] %v949
        %982 = vst [vmem:[#allocation2 + $0xf8] sm:$0xff] %v950
        %p983 = scmp.eq.s32.totalorder %s21, 1
        // Predicated region
        $region75: #{generator_forward.13} parent=65 // pred_check
          %p984 = pneg %p983
        $region76: #{generator_forward.13} parent=65 // pred_check_branch
          %986 = sbr.rel (%p984) target = $region78
        $region77: #{generator_forward.13} parent=65 // pred_region
          %v987 = vld [vmem:[#allocation2] sm:$0xff]
          %v988 = vld [vmem:[#allocation2 + $0x8] sm:$0xff]
          %v989 = vld [vmem:[#allocation2 + $0x10] sm:$0xff]
          %v990 = vld [vmem:[#allocation2 + $0x18] sm:$0xff]
          %v991 = vld [vmem:[#allocation2 + $0x20] sm:$0xff]
          %v992 = vld [vmem:[#allocation2 + $0x28] sm:$0xff]
          %v993 = vld [vmem:[#allocation2 + $0x30] sm:$0xff]
          %v994 = vld [vmem:[#allocation2 + $0x38] sm:$0xff]
          %v995 = vld [vmem:[#allocation2 + $0x40] sm:$0xff]
          %v996 = vld [vmem:[#allocation2 + $0x48] sm:$0xff]
          %v997 = vld [vmem:[#allocation2 + $0x50] sm:$0xff]
          %v998 = vld [vmem:[#allocation2 + $0x58] sm:$0xff]
          %v999 = vld [vmem:[#allocation2 + $0x60] sm:$0xff]
          %v1000 = vld [vmem:[#allocation2 + $0x68] sm:$0xff]
          %v1001 = vld [vmem:[#allocation2 + $0x70] sm:$0xff]
          %v1002 = vld [vmem:[#allocation2 + $0x78] sm:$0xff]
          %v1003 = vld [vmem:[#allocation2 + $0x80] sm:$0xff]
          %v1004 = vld [vmem:[#allocation2 + $0x88] sm:$0xff]
          %v1005 = vld [vmem:[#allocation2 + $0x90] sm:$0xff]
          %v1006 = vld [vmem:[#allocation2 + $0x98] sm:$0xff]
          %v1007 = vld [vmem:[#allocation2 + $0xa0] sm:$0xff]
          %v1008 = vld [vmem:[#allocation2 + $0xa8] sm:$0xff]
          %v1009 = vld [vmem:[#allocation2 + $0xb0] sm:$0xff]
          %v1010 = vld [vmem:[#allocation2 + $0xb8] sm:$0xff]
          %v1011 = vld [vmem:[#allocation2 + $0xc0] sm:$0xff]
          %v1012 = vld [vmem:[#allocation2 + $0xc8] sm:$0xff]
          %v1013 = vld [vmem:[#allocation2 + $0xd0] sm:$0xff]
          %v1014 = vld [vmem:[#allocation2 + $0xd8] sm:$0xff]
          %v1015 = vld [vmem:[#allocation2 + $0xe0] sm:$0xff]
          %v1016 = vld [vmem:[#allocation2 + $0xe8] sm:$0xff]
          %v1017 = vld [vmem:[#allocation2 + $0xf0] sm:$0xff]
          %v1018 = vld [vmem:[#allocation2 + $0xf8] sm:$0xff]
          %v1019 = vld [vmem:[%s353] sm:$0x3]
          %v1021 = vperm.slane %v1019, 0
          %v1022 = vperm.slane %v1019, 1
          %v1025 = vadd.f32 %v987, %v1021
          %v1026 = vadd.f32 %v988, %v1022
          %v1027 = vadd.f32 %v989, %v1021
          %v1028 = vadd.f32 %v990, %v1022
          %v1029 = vadd.f32 %v991, %v1021
          %v1030 = vadd.f32 %v992, %v1022
          %v1031 = vadd.f32 %v993, %v1021
          %v1032 = vadd.f32 %v994, %v1022
          %v1033 = vadd.f32 %v995, %v1021
          %v1034 = vadd.f32 %v996, %v1022
          %v1035 = vadd.f32 %v997, %v1021
          %v1036 = vadd.f32 %v998, %v1022
          %v1037 = vadd.f32 %v999, %v1021
          %v1038 = vadd.f32 %v1000, %v1022
          %v1039 = vadd.f32 %v1001, %v1021
          %v1040 = vadd.f32 %v1002, %v1022
          %v1041 = vadd.f32 %v1003, %v1021
          %v1042 = vadd.f32 %v1004, %v1022
          %v1043 = vadd.f32 %v1005, %v1021
          %v1044 = vadd.f32 %v1006, %v1022
          %v1045 = vadd.f32 %v1007, %v1021
          %v1046 = vadd.f32 %v1008, %v1022
          %v1047 = vadd.f32 %v1009, %v1021
          %v1048 = vadd.f32 %v1010, %v1022
          %v1049 = vadd.f32 %v1011, %v1021
          %v1050 = vadd.f32 %v1012, %v1022
          %v1051 = vadd.f32 %v1013, %v1021
          %v1052 = vadd.f32 %v1014, %v1022
          %v1053 = vadd.f32 %v1015, %v1021
          %v1054 = vadd.f32 %v1016, %v1022
          %v1055 = vadd.f32 %v1017, %v1021
          %v1056 = vadd.f32 %v1018, %v1022
          %1057 = vst [vmem:[%s364] sm:$0xff] %v1025
          %1058 = vst [vmem:[%s364 + $0x8] sm:$0xff] %v1026
          %1059 = vst [vmem:[%s364 + $0x10] sm:$0xff] %v1027
          %1060 = vst [vmem:[%s364 + $0x18] sm:$0xff] %v1028
          %1061 = vst [vmem:[%s364 + $0x20] sm:$0xff] %v1029
          %1062 = vst [vmem:[%s364 + $0x28] sm:$0xff] %v1030
          %1063 = vst [vmem:[%s364 + $0x30] sm:$0xff] %v1031
          %1064 = vst [vmem:[%s364 + $0x38] sm:$0xff] %v1032
          %1065 = vst [vmem:[%s364 + $0x40] sm:$0xff] %v1033
          %1066 = vst [vmem:[%s364 + $0x48] sm:$0xff] %v1034
          %1067 = vst [vmem:[%s364 + $0x50] sm:$0xff] %v1035
          %1068 = vst [vmem:[%s364 + $0x58] sm:$0xff] %v1036
          %1069 = vst [vmem:[%s364 + $0x60] sm:$0xff] %v1037
          %1070 = vst [vmem:[%s364 + $0x68] sm:$0xff] %v1038
          %1071 = vst [vmem:[%s364 + $0x70] sm:$0xff] %v1039
          %1072 = vst [vmem:[%s364 + $0x78] sm:$0xff] %v1040
          %1073 = vst [vmem:[%s364 + $0x80] sm:$0xff] %v1041
          %1074 = vst [vmem:[%s364 + $0x88] sm:$0xff] %v1042
          %1075 = vst [vmem:[%s364 + $0x90] sm:$0xff] %v1043
          %1076 = vst [vmem:[%s364 + $0x98] sm:$0xff] %v1044
          %1077 = vst [vmem:[%s364 + $0xa0] sm:$0xff] %v1045
          %1078 = vst [vmem:[%s364 + $0xa8] sm:$0xff] %v1046
          %1079 = vst [vmem:[%s364 + $0xb0] sm:$0xff] %v1047
          %1080 = vst [vmem:[%s364 + $0xb8] sm:$0xff] %v1048
          %1081 = vst [vmem:[%s364 + $0xc0] sm:$0xff] %v1049
          %1082 = vst [vmem:[%s364 + $0xc8] sm:$0xff] %v1050
          %1083 = vst [vmem:[%s364 + $0xd0] sm:$0xff] %v1051
          %1084 = vst [vmem:[%s364 + $0xd8] sm:$0xff] %v1052
          %1085 = vst [vmem:[%s364 + $0xe0] sm:$0xff] %v1053
          %1086 = vst [vmem:[%s364 + $0xe8] sm:$0xff] %v1054
          %1087 = vst [vmem:[%s364 + $0xf0] sm:$0xff] %v1055
          %1088 = vst [vmem:[%s364 + $0xf8] sm:$0xff] %v1056
        $region78: #{generator_forward.13} parent=65 // pred_fallthru
          _
        %s1089 = smul.u32 16, %s19
        %s1090 = smul.u32 2, %s20
        %p1091 = scmp.lt.s32.totalorder %s1089, 15
        %s1092 = scalar_select %p1091, %s1089, 15
        %p1093 = scmp.lt.s32.totalorder %s1090, 1
        %s1094 = scalar_select %p1093, %s1090, 1
        %s1095 = smul.addr %s1092, 2
        %s1096 = sadd.s32 %s1094, %s1095
        %s1097 = smul.addr %s1096, 8
        %s1098 = scalar_lea.vmem %s3, %s1097
        // Predicated region
        $region79: #{generator_forward.13} parent=65 // pred_check
          %p1099 = pneg %p135
        $region80: #{generator_forward.13} parent=65 // pred_check_branch
          %1101 = sbr.rel (%p1099) target = $region82
        $region81: #{generator_forward.13} parent=65 // pred_region
          %s1102 = smul.u32 16, %s19
          %s1103 = smul.u32 2, %s20
        $region82: #{generator_forward.13} parent=65 // pred_fallthru
          _
        // Predicated region
        $region83: #{generator_forward.13} parent=65 // pred_check
          %p1104 = pneg %p135
        $region84: #{generator_forward.13} parent=65 // pred_check_branch
          %1106 = sbr.rel (%p1104) target = $region86
        $region85: #{generator_forward.13} parent=65 // pred_region
          %s1107 = smul.u32 16, %s19
          %s1108 = smul.u32 2, %s20
          %p1109 = scmp.lt.s32.totalorder %s1107, 15
          %s1110 = scalar_select %p1109, %s1107, 15
          %p1111 = scmp.lt.s32.totalorder %s1108, 1
          %s1112 = scalar_select %p1111, %s1108, 1
          %s1113 = smul.addr %s1110, 2
          %s1114 = sadd.s32 %s1112, %s1113
          %s1115 = smul.addr %s1114, 8
          %s1116 = scalar_lea.vmem %s3, %s1115
        $region86: #{generator_forward.13} parent=65 // pred_fallthru
          _
      $region66: #{generator_forward.13} parent=5 // pred_fallthru
        _
      %p1117 = scmp.le.s32.totalorder 2, %s9
      // Predicated region
      $region87: #{generator_forward.13} parent=5 // pred_check
        %p1118 = pneg %p1117
      $region88: #{generator_forward.13} parent=5 // pred_check_branch
        %1120 = sbr.rel (%p1118) target = $region90
      $region89: #{generator_forward.13} parent=5 // pred_region
        %s1121 = ssub.s32 %s9, 2
      $region90: #{generator_forward.13} parent=5 // pred_fallthru
        _
    $region6: #{generator_forward.13} parent=1 // loop_footer
      %s13 = sadd.s32 1, %s9
    $region7: #{generator_forward.13} parent=1 // loop_footer_branch
      %8 = sbr.rel target = $region3
    $region8: #{generator_forward.13} parent=1 // loop_exit
      _

// kernel: generator_forward.14
$region0: #{generator_forward.14}
  #allocation0 [shape = 'u32[]', space=smem, size = 0x4, offset = 0x4, fixed_abs, tag = 'smem constant byte address 0x4 - core index']
  #allocation1 [shape = 'u32[72,128]{1,0:T(1,128)}', space=vmem, size = 0x9000, scoped, tag = 'internal scratch']
  %s0 = inlined_call_operand.vmem [shape: f32[2,256,64], index: 0, kind: input, shape index: {}]
  %s1 = inlined_call_operand.vmem [shape: f32[2,256,64], index: 1, kind: output, shape index: {}]
  %s2 = sld [smem:[#allocation0]]
  $region37: #{generator_forward.14} parent=0
    _
  %s4 = ssub.s32 1, %s2
  %s5 = scalar_select 0, %s4, %s2
  loop: start=0, step=1, limit=4
  $region2: #{generator_forward.14} parent=0 // loop_pre_header
    _
  $region3: #{generator_forward.14} parent=0 // loop_header
    %s7 = sphi 0, %s11
    %p8 = scmp.ge.s32.totalorder %s7, 4
    %s17 = sphi 0, %s19
    %s20 = sphi 0, %s17
    %s21 = sphi 0, %s20
    %s37 = sphi 0, %s21
    %s43 = sphi 0, %s45
    %s46 = sphi 0, %s43
    %s47 = sphi 0, %s46
    %s63 = sphi 0, %s47
  $region4: #{generator_forward.14} parent=0 // loop_header_branch
    %10 = sbr.rel (%p8) target = $region8
  $region5: #{generator_forward.14} parent=0 // loop_body
    %s12 = ssub.s32 %s7, 1
    %s13 = ssub.s32 %s7, 2
    %s14 = sadd.s32 %s7, 1
    %s15 = ssub.s32 %s7, %s14
    %p16 = scmp.eq.s32.totalorder %s15, 0
    %s18 = sadd.s32 %s17, 1
    %s19 = scalar_select %p16, %s17, %s18
    %p22 = pneg %p16
    %p23 = scmp.eq.s32.totalorder %s7, 1
    %p24 = por %p22, %p23
    %p25 = scmp.ne.s32.totalorder %s17, %s20
    %p26 = scmp.eq.s32.totalorder %s7, 0
    %p27 = por %p25, %p26
    %p28 = scmp.ne.s32.totalorder %s17, %s20
    %p29 = scmp.eq.s32.totalorder %s12, 1
    %p30 = por %p28, %p29
    %p31 = scmp.ne.s32.totalorder %s20, %s21
    %p32 = scmp.eq.s32.totalorder %s12, 0
    %p33 = por %p31, %p32
    %p34 = scmp.ne.s32.totalorder %s20, %s21
    %p35 = scmp.eq.s32.totalorder %s13, 1
    %p36 = por %p34, %p35
    %p38 = scmp.ne.s32.totalorder %s21, %s37
    %p39 = scmp.eq.s32.totalorder %s13, 0
    %p40 = por %p38, %p39
    %s41 = ssub.s32 %s7, %s14
    %p42 = scmp.eq.s32.totalorder %s41, 0
    %s44 = sadd.s32 %s43, 1
    %s45 = scalar_select %p42, %s43, %s44
    %p48 = pneg %p42
    %p49 = scmp.eq.s32.totalorder %s7, 1
    %p50 = por %p48, %p49
    %p51 = scmp.ne.s32.totalorder %s43, %s46
    %p52 = scmp.eq.s32.totalorder %s7, 0
    %p53 = por %p51, %p52
    %p54 = scmp.ne.s32.totalorder %s43, %s46
    %p55 = scmp.eq.s32.totalorder %s12, 1
    %p56 = por %p54, %p55
    %p57 = scmp.ne.s32.totalorder %s46, %s47
    %p58 = scmp.eq.s32.totalorder %s12, 0
    %p59 = por %p57, %p58
    %p60 = scmp.ne.s32.totalorder %s46, %s47
    %p61 = scmp.eq.s32.totalorder %s13, 1
    %p62 = por %p60, %p61
    %p64 = scmp.ne.s32.totalorder %s47, %s63
    %p65 = scmp.eq.s32.totalorder %s13, 0
    %p66 = por %p64, %p65
    %p67 = scmp.le.s32.totalorder 1, %s7
    %p68 = scmp.lt.s32.totalorder %s7, 3
    %p69 = pnand %p67, %p68
    %p70 = pneg %p69
    // Predicated region
    $region9: #{generator_forward.14} parent=5 // pred_check
      _
    $region10: #{generator_forward.14} parent=5 // pred_check_branch
      %72 = sbr.rel (%p69) target = $region12
    $region11: #{generator_forward.14} parent=5 // pred_region
      %s73 = ssub.s32 %s7, 1
    $region12: #{generator_forward.14} parent=5 // pred_fallthru
      _
    %p74 = scmp.lt.s32.totalorder %s7, 2
    // Predicated region
    $region13: #{generator_forward.14} parent=5 // pred_check
      %p75 = pneg %p74
    $region14: #{generator_forward.14} parent=5 // pred_check_branch
      %77 = sbr.rel (%p75) target = $region16
    $region15: #{generator_forward.14} parent=5 // pred_region
      // Predicated region
      $region17: #{generator_forward.14} parent=15 // pred_check
        %p78 = pneg %p27
      $region18: #{generator_forward.14} parent=15 // pred_check_branch
        %80 = sbr.rel (%p78) target = $region20
      $region19: #{generator_forward.14} parent=15 // pred_region
        %p81 = scmp.lt.s32.totalorder %s7, 1
        %s82 = scalar_select %p81, %s7, 1
        %s83 = smul.addr %s82, 32
        %s84 = smul.addr %s83, 8
        %s85 = scalar_lea.vmem %s0, %s84
      $region20: #{generator_forward.14} parent=15 // pred_fallthru
        _
    $region16: #{generator_forward.14} parent=5 // pred_fallthru
      _
    %p86 = scmp.le.s32.totalorder 1, %s7
    %p87 = scmp.lt.s32.totalorder %s7, 3
    %p88 = pnand %p86, %p87
    %p89 = pneg %p88
    // Predicated region
    $region21: #{generator_forward.14} parent=5 // pred_check
      _
    $region22: #{generator_forward.14} parent=5 // pred_check_branch
      %91 = sbr.rel (%p88) target = $region24
    $region23: #{generator_forward.14} parent=5 // pred_region
      %s92 = ssub.s32 %s7, 1
      %p93 = scmp.lt.s32.totalorder %s12, 1
      %s94 = scalar_select %p93, %s12, 1
      %s95 = smul.addr %s94, 32
      %s96 = smul.addr %s95, 8
      %s97 = scalar_lea.vmem %s0, %s96
      %p98 = pneg %p33
      %p99 = pneg %p30
      %p100 = pneg %p59
      %p101 = pneg %p56
      %p102 = scmp.lt.s32.totalorder %s12, 1
      %s103 = scalar_select %p102, %s12, 1
      %s104 = smul.addr %s103, 32
      %s105 = smul.addr %s104, 8
      %s106 = scalar_lea.vmem %s1, %s105
      %p107 = scmp.lt.s32.totalorder %s12, 1
      %s108 = scalar_select %p107, %s12, 1
      %s109 = smul.addr %s108, 32
      %s110 = smul.addr %s109, 8
      %s111 = scalar_lea.vmem %s0, %s110
      %p112 = scmp.lt.s32.totalorder %s12, 1
      %s113 = scalar_select %p112, %s12, 1
      %s114 = smul.addr %s113, 32
      %s115 = smul.addr %s114, 8
      %s116 = scalar_lea.vmem %s1, %s115
      %v117 = vld [vmem:[%s111] sm:$0xff]
      %v118 = vld [vmem:[%s111 + $0x8] sm:$0xff]
      %v119 = vld [vmem:[%s111 + $0x10] sm:$0xff]
      %v120 = vld [vmem:[%s111 + $0x18] sm:$0xff]
      %v121 = vld [vmem:[%s111 + $0x20] sm:$0xff]
      %v122 = vld [vmem:[%s111 + $0x28] sm:$0xff]
      %v123 = vld [vmem:[%s111 + $0x30] sm:$0xff]
      %v124 = vld [vmem:[%s111 + $0x38] sm:$0xff]
      %v125 = vld [vmem:[%s111 + $0x40] sm:$0xff]
      %v126 = vld [vmem:[%s111 + $0x48] sm:$0xff]
      %v127 = vld [vmem:[%s111 + $0x50] sm:$0xff]
      %v128 = vld [vmem:[%s111 + $0x58] sm:$0xff]
      %v129 = vld [vmem:[%s111 + $0x60] sm:$0xff]
      %v130 = vld [vmem:[%s111 + $0x68] sm:$0xff]
      %v131 = vld [vmem:[%s111 + $0x70] sm:$0xff]
      %v132 = vld [vmem:[%s111 + $0x78] sm:$0xff]
      %v133 = vld [vmem:[%s111 + $0x80] sm:$0xff]
      %v134 = vld [vmem:[%s111 + $0x88] sm:$0xff]
      %v135 = vld [vmem:[%s111 + $0x90] sm:$0xff]
      %v136 = vld [vmem:[%s111 + $0x98] sm:$0xff]
      %v137 = vld [vmem:[%s111 + $0xa0] sm:$0xff]
      %v138 = vld [vmem:[%s111 + $0xa8] sm:$0xff]
      %v139 = vld [vmem:[%s111 + $0xb0] sm:$0xff]
      %v140 = vld [vmem:[%s111 + $0xb8] sm:$0xff]
      %v141 = vld [vmem:[%s111 + $0xc0] sm:$0xff]
      %v142 = vld [vmem:[%s111 + $0xc8] sm:$0xff]
      %v143 = vld [vmem:[%s111 + $0xd0] sm:$0xff]
      %v144 = vld [vmem:[%s111 + $0xd8] sm:$0xff]
      %v145 = vld [vmem:[%s111 + $0xe0] sm:$0xff]
      %v146 = vld [vmem:[%s111 + $0xe8] sm:$0xff]
      %v147 = vld [vmem:[%s111 + $0xf0] sm:$0xff]
      %v148 = vld [vmem:[%s111 + $0xf8] sm:$0xff]
      %vm149 = vcmask 523264
      %v150 = vsel %vm149, %v117, 0.0
      %v151 = vsel %vm149, %v118, 0.0
      %v152 = vadd.f32 %v150, %v151
      %v153 = vsel %vm149, %v119, 0.0
      %v154 = vadd.f32 %v152, %v153
      %v155 = vsel %vm149, %v120, 0.0
      %v156 = vadd.f32 %v154, %v155
      %v157 = vsel %vm149, %v121, 0.0
      %v158 = vadd.f32 %v156, %v157
      %v159 = vsel %vm149, %v122, 0.0
      %v160 = vadd.f32 %v158, %v159
      %v161 = vsel %vm149, %v123, 0.0
      %v162 = vadd.f32 %v160, %v161
      %v163 = vsel %vm149, %v124, 0.0
      %v164 = vadd.f32 %v162, %v163
      %v165 = vsel %vm149, %v125, 0.0
      %v166 = vadd.f32 %v164, %v165
      %v167 = vsel %vm149, %v126, 0.0
      %v168 = vadd.f32 %v166, %v167
      %v169 = vsel %vm149, %v127, 0.0
      %v170 = vadd.f32 %v168, %v169
      %v171 = vsel %vm149, %v128, 0.0
      %v172 = vadd.f32 %v170, %v171
      %v173 = vsel %vm149, %v129, 0.0
      %v174 = vadd.f32 %v172, %v173
      %v175 = vsel %vm149, %v130, 0.0
      %v176 = vadd.f32 %v174, %v175
      %v177 = vsel %vm149, %v131, 0.0
      %v178 = vadd.f32 %v176, %v177
      %v179 = vsel %vm149, %v132, 0.0
      %v180 = vadd.f32 %v178, %v179
      %v181 = vsel %vm149, %v133, 0.0
      %v182 = vadd.f32 %v180, %v181
      %v183 = vsel %vm149, %v134, 0.0
      %v184 = vadd.f32 %v182, %v183
      %v185 = vsel %vm149, %v135, 0.0
      %v186 = vadd.f32 %v184, %v185
      %v187 = vsel %vm149, %v136, 0.0
      %v188 = vadd.f32 %v186, %v187
      %v189 = vsel %vm149, %v137, 0.0
      %v190 = vadd.f32 %v188, %v189
      %v191 = vsel %vm149, %v138, 0.0
      %v192 = vadd.f32 %v190, %v191
      %v193 = vsel %vm149, %v139, 0.0
      %v194 = vadd.f32 %v192, %v193
      %v195 = vsel %vm149, %v140, 0.0
      %v196 = vadd.f32 %v194, %v195
      %v197 = vsel %vm149, %v141, 0.0
      %v198 = vadd.f32 %v196, %v197
      %v199 = vsel %vm149, %v142, 0.0
      %v200 = vadd.f32 %v198, %v199
      %v201 = vsel %vm149, %v143, 0.0
      %v202 = vadd.f32 %v200, %v201
      %v203 = vsel %vm149, %v144, 0.0
      %v204 = vadd.f32 %v202, %v203
      %v205 = vsel %vm149, %v145, 0.0
      %v206 = vadd.f32 %v204, %v205
      %v207 = vsel %vm149, %v146, 0.0
      %v208 = vadd.f32 %v206, %v207
      %v209 = vsel %vm149, %v147, 0.0
      %v210 = vadd.f32 %v208, %v209
      %v211 = vsel %vm149, %v148, 0.0
      %v212 = vadd.f32 %v210, %v211
      %v213 = vrot.slane %v212, 4
      %v214 = vadd.f32 %v212, %v213
      %v215 = vrot.slane %v214, 2
      %v216 = vadd.f32 %v214, %v215
      %v217 = vrot.slane %v216, 1
      %v218 = vadd.f32 %v216, %v217
      %v219 = vmul.f32 %v218, 0.00390625
      %v220 = vmul.f32 %v117, %v117
      %v221 = vmul.f32 %v118, %v118
      %v222 = vmul.f32 %v119, %v119
      %v223 = vmul.f32 %v120, %v120
      %v224 = vmul.f32 %v121, %v121
      %v225 = vmul.f32 %v122, %v122
      %v226 = vmul.f32 %v123, %v123
      %v227 = vmul.f32 %v124, %v124
      %v228 = vmul.f32 %v125, %v125
      %v229 = vmul.f32 %v126, %v126
      %v230 = vmul.f32 %v127, %v127
      %v231 = vmul.f32 %v128, %v128
      %v232 = vmul.f32 %v129, %v129
      %v233 = vmul.f32 %v130, %v130
      %v234 = vmul.f32 %v131, %v131
      %v235 = vmul.f32 %v132, %v132
      %v236 = vmul.f32 %v133, %v133
      %v237 = vmul.f32 %v134, %v134
      %v238 = vmul.f32 %v135, %v135
      %v239 = vmul.f32 %v136, %v136
      %v240 = vmul.f32 %v137, %v137
      %v241 = vmul.f32 %v138, %v138
      %v242 = vmul.f32 %v139, %v139
      %v243 = vmul.f32 %v140, %v140
      %v244 = vmul.f32 %v141, %v141
      %v245 = vmul.f32 %v142, %v142
      %v246 = vmul.f32 %v143, %v143
      %v247 = vmul.f32 %v144, %v144
      %v248 = vmul.f32 %v145, %v145
      %v249 = vmul.f32 %v146, %v146
      %v250 = vmul.f32 %v147, %v147
      %v251 = vmul.f32 %v148, %v148
      %v252 = vsel %vm149, %v220, 0.0
      %v253 = vsel %vm149, %v221, 0.0
      %v254 = vadd.f32 %v252, %v253
      %v255 = vsel %vm149, %v222, 0.0
      %v256 = vadd.f32 %v254, %v255
      %v257 = vsel %vm149, %v223, 0.0
      %v258 = vadd.f32 %v256, %v257
      %v259 = vsel %vm149, %v224, 0.0
      %v260 = vadd.f32 %v258, %v259
      %v261 = vsel %vm149, %v225, 0.0
      %v262 = vadd.f32 %v260, %v261
      %v263 = vsel %vm149, %v226, 0.0
      %v264 = vadd.f32 %v262, %v263
      %v265 = vsel %vm149, %v227, 0.0
      %v266 = vadd.f32 %v264, %v265
      %v267 = vsel %vm149, %v228, 0.0
      %v268 = vadd.f32 %v266, %v267
      %v269 = vsel %vm149, %v229, 0.0
      %v270 = vadd.f32 %v268, %v269
      %v271 = vsel %vm149, %v230, 0.0
      %v272 = vadd.f32 %v270, %v271
      %v273 = vsel %vm149, %v231, 0.0
      %v274 = vadd.f32 %v272, %v273
      %v275 = vsel %vm149, %v232, 0.0
      %v276 = vadd.f32 %v274, %v275
      %v277 = vsel %vm149, %v233, 0.0
      %v278 = vadd.f32 %v276, %v277
      %v279 = vsel %vm149, %v234, 0.0
      %v280 = vadd.f32 %v278, %v279
      %v281 = vsel %vm149, %v235, 0.0
      %v282 = vadd.f32 %v280, %v281
      %v283 = vsel %vm149, %v236, 0.0
      %v284 = vadd.f32 %v282, %v283
      %v285 = vsel %vm149, %v237, 0.0
      %v286 = vadd.f32 %v284, %v285
      %v287 = vsel %vm149, %v238, 0.0
      %v288 = vadd.f32 %v286, %v287
      %v289 = vsel %vm149, %v239, 0.0
      %v290 = vadd.f32 %v288, %v289
      %v291 = vsel %vm149, %v240, 0.0
      %v292 = vadd.f32 %v290, %v291
      %v293 = vsel %vm149, %v241, 0.0
      %v294 = vadd.f32 %v292, %v293
      %v295 = vsel %vm149, %v242, 0.0
      %v296 = vadd.f32 %v294, %v295
      %v297 = vsel %vm149, %v243, 0.0
      %v298 = vadd.f32 %v296, %v297
      %v299 = vsel %vm149, %v244, 0.0
      %v300 = vadd.f32 %v298, %v299
      %v301 = vsel %vm149, %v245, 0.0
      %v302 = vadd.f32 %v300, %v301
      %v303 = vsel %vm149, %v246, 0.0
      %v304 = vadd.f32 %v302, %v303
      %v305 = vsel %vm149, %v247, 0.0
      %v306 = vadd.f32 %v304, %v305
      %v307 = vsel %vm149, %v248, 0.0
      %v308 = vadd.f32 %v306, %v307
      %v309 = vsel %vm149, %v249, 0.0
      %v310 = vadd.f32 %v308, %v309
      %v311 = vsel %vm149, %v250, 0.0
      %v312 = vadd.f32 %v310, %v311
      %v313 = vsel %vm149, %v251, 0.0
      %v314 = vadd.f32 %v312, %v313
      %v315 = vrot.slane %v314, 4
      %v316 = vadd.f32 %v314, %v315
      %v317 = vrot.slane %v316, 2
      %v318 = vadd.f32 %v316, %v317
      %v319 = vrot.slane %v318, 1
      %v320 = vadd.f32 %v318, %v319
      %v321 = vmul.f32 %v320, 0.00390625
      %v322 = vmul.f32 %v219, %v219
      %v323 = vsub.f32 %v321, %v322
      %v324 = vsub.f32 %v117, %v219
      %v325 = vsub.f32 %v118, %v219
      %v326 = vsub.f32 %v119, %v219
      %v327 = vsub.f32 %v120, %v219
      %v328 = vsub.f32 %v121, %v219
      %v329 = vsub.f32 %v122, %v219
      %v330 = vsub.f32 %v123, %v219
      %v331 = vsub.f32 %v124, %v219
      %v332 = vsub.f32 %v125, %v219
      %v333 = vsub.f32 %v126, %v219
      %v334 = vsub.f32 %v127, %v219
      %v335 = vsub.f32 %v128, %v219
      %v336 = vsub.f32 %v129, %v219
      %v337 = vsub.f32 %v130, %v219
      %v338 = vsub.f32 %v131, %v219
      %v339 = vsub.f32 %v132, %v219
      %v340 = vsub.f32 %v133, %v219
      %v341 = vsub.f32 %v134, %v219
      %v342 = vsub.f32 %v135, %v219
      %v343 = vsub.f32 %v136, %v219
      %v344 = vsub.f32 %v137, %v219
      %v345 = vsub.f32 %v138, %v219
      %v346 = vsub.f32 %v139, %v219
      %v347 = vsub.f32 %v140, %v219
      %v348 = vsub.f32 %v141, %v219
      %v349 = vsub.f32 %v142, %v219
      %v350 = vsub.f32 %v143, %v219
      %v351 = vsub.f32 %v144, %v219
      %v352 = vsub.f32 %v145, %v219
      %v353 = vsub.f32 %v146, %v219
      %v354 = vsub.f32 %v147, %v219
      %v355 = vsub.f32 %v148, %v219
      %v356 = vadd.f32 %v323, 1e-05
      %v357 = vrsqrt.pop %v356
      %v358 = vmul.f32 %v357, %v356
      %v359 = vmul.f32 %v358, %v357
      %v360 = vmul.f32 0.5, %v359
      %v361 = vsub.f32 1.5, %v360
      %v362 = vmul.f32 %v357, %v361
      %vm363 = vweird.f32 %v356
      %vm364 = vweird.f32 %v357
      %vm365 = vmor %vm363, %vm364
      %v366 = vsel %vm365, %v357, %v362
      %v367 = vmul.f32 %v324, %v366
      %v368 = vmul.f32 %v325, %v366
      %v369 = vmul.f32 %v326, %v366
      %v370 = vmul.f32 %v327, %v366
      %v371 = vmul.f32 %v328, %v366
      %v372 = vmul.f32 %v329, %v366
      %v373 = vmul.f32 %v330, %v366
      %v374 = vmul.f32 %v331, %v366
      %v375 = vmul.f32 %v332, %v366
      %v376 = vmul.f32 %v333, %v366
      %v377 = vmul.f32 %v334, %v366
      %v378 = vmul.f32 %v335, %v366
      %v379 = vmul.f32 %v336, %v366
      %v380 = vmul.f32 %v337, %v366
      %v381 = vmul.f32 %v338, %v366
      %v382 = vmul.f32 %v339, %v366
      %v383 = vmul.f32 %v340, %v366
      %v384 = vmul.f32 %v341, %v366
      %v385 = vmul.f32 %v342, %v366
      %v386 = vmul.f32 %v343, %v366
      %v387 = vmul.f32 %v344, %v366
      %v388 = vmul.f32 %v345, %v366
      %v389 = vmul.f32 %v346, %v366
      %v390 = vmul.f32 %v347, %v366
      %v391 = vmul.f32 %v348, %v366
      %v392 = vmul.f32 %v349, %v366
      %v393 = vmul.f32 %v350, %v366
      %v394 = vmul.f32 %v351, %v366
      %v395 = vmul.f32 %v352, %v366
      %v396 = vmul.f32 %v353, %v366
      %v397 = vmul.f32 %v354, %v366
      %v398 = vmul.f32 %v355, %v366
      %v399 = vmax.f32 %v367, 0.0
      %v400 = vmax.f32 %v368, 0.0
      %v401 = vmax.f32 %v369, 0.0
      %v402 = vmax.f32 %v370, 0.0
      %v403 = vmax.f32 %v371, 0.0
      %v404 = vmax.f32 %v372, 0.0
      %v405 = vmax.f32 %v373, 0.0
      %v406 = vmax.f32 %v374, 0.0
      %v407 = vmax.f32 %v375, 0.0
      %v408 = vmax.f32 %v376, 0.0
      %v409 = vmax.f32 %v377, 0.0
      %v410 = vmax.f32 %v378, 0.0
      %v411 = vmax.f32 %v379, 0.0
      %v412 = vmax.f32 %v380, 0.0
      %v413 = vmax.f32 %v381, 0.0
      %v414 = vmax.f32 %v382, 0.0
      %v415 = vmax.f32 %v383, 0.0
      %v416 = vmax.f32 %v384, 0.0
      %v417 = vmax.f32 %v385, 0.0
      %v418 = vmax.f32 %v386, 0.0
      %v419 = vmax.f32 %v387, 0.0
      %v420 = vmax.f32 %v388, 0.0
      %v421 = vmax.f32 %v389, 0.0
      %v422 = vmax.f32 %v390, 0.0
      %v423 = vmax.f32 %v391, 0.0
      %v424 = vmax.f32 %v392, 0.0
      %v425 = vmax.f32 %v393, 0.0
      %v426 = vmax.f32 %v394, 0.0
      %v427 = vmax.f32 %v395, 0.0
      %v428 = vmax.f32 %v396, 0.0
      %v429 = vmax.f32 %v397, 0.0
      %v430 = vmax.f32 %v398, 0.0
      %431 = vst.msk [vmem:[%s116] sm:$0xff] %vm149, %v399
      %432 = vst.msk [vmem:[%s116 + $0x8] sm:$0xff] %vm149, %v400
      %433 = vst.msk [vmem:[%s116 + $0x10] sm:$0xff] %vm149, %v401
      %434 = vst.msk [vmem:[%s116 + $0x18] sm:$0xff] %vm149, %v402
      %435 = vst.msk [vmem:[%s116 + $0x20] sm:$0xff] %vm149, %v403
      %436 = vst.msk [vmem:[%s116 + $0x28] sm:$0xff] %vm149, %v404
      %437 = vst.msk [vmem:[%s116 + $0x30] sm:$0xff] %vm149, %v405
      %438 = vst.msk [vmem:[%s116 + $0x38] sm:$0xff] %vm149, %v406
      %439 = vst.msk [vmem:[%s116 + $0x40] sm:$0xff] %vm149, %v407
      %440 = vst.msk [vmem:[%s116 + $0x48] sm:$0xff] %vm149, %v408
      %441 = vst.msk [vmem:[%s116 + $0x50] sm:$0xff] %vm149, %v409
      %442 = vst.msk [vmem:[%s116 + $0x58] sm:$0xff] %vm149, %v410
      %443 = vst.msk [vmem:[%s116 + $0x60] sm:$0xff] %vm149, %v411
      %444 = vst.msk [vmem:[%s116 + $0x68] sm:$0xff] %vm149, %v412
      %445 = vst.msk [vmem:[%s116 + $0x70] sm:$0xff] %vm149, %v413
      %446 = vst.msk [vmem:[%s116 + $0x78] sm:$0xff] %vm149, %v414
      %447 = vst.msk [vmem:[%s116 + $0x80] sm:$0xff] %vm149, %v415
      %448 = vst.msk [vmem:[%s116 + $0x88] sm:$0xff] %vm149, %v416
      %449 = vst.msk [vmem:[%s116 + $0x90] sm:$0xff] %vm149, %v417
      %450 = vst.msk [vmem:[%s116 + $0x98] sm:$0xff] %vm149, %v418
      %451 = vst.msk [vmem:[%s116 + $0xa0] sm:$0xff] %vm149, %v419
      %452 = vst.msk [vmem:[%s116 + $0xa8] sm:$0xff] %vm149, %v420
      %453 = vst.msk [vmem:[%s116 + $0xb0] sm:$0xff] %vm149, %v421
      %454 = vst.msk [vmem:[%s116 + $0xb8] sm:$0xff] %vm149, %v422
      %455 = vst.msk [vmem:[%s116 + $0xc0] sm:$0xff] %vm149, %v423
      %456 = vst.msk [vmem:[%s116 + $0xc8] sm:$0xff] %vm149, %v424
      %457 = vst.msk [vmem:[%s116 + $0xd0] sm:$0xff] %vm149, %v425
      %458 = vst.msk [vmem:[%s116 + $0xd8] sm:$0xff] %vm149, %v426
      %459 = vst.msk [vmem:[%s116 + $0xe0] sm:$0xff] %vm149, %v427
      %460 = vst.msk [vmem:[%s116 + $0xe8] sm:$0xff] %vm149, %v428
      %461 = vst.msk [vmem:[%s116 + $0xf0] sm:$0xff] %vm149, %v429
      %462 = vst.msk [vmem:[%s116 + $0xf8] sm:$0xff] %vm149, %v430
      %p463 = scmp.lt.s32.totalorder %s12, 1
      %s464 = scalar_select %p463, %s12, 1
      %s465 = smul.addr %s464, 32
      %s466 = smul.addr %s465, 8
      %s467 = scalar_lea.vmem %s1, %s466
      // Predicated region
      $region25: #{generator_forward.14} parent=23 // pred_check
        %p468 = pneg %p56
      $region26: #{generator_forward.14} parent=23 // pred_check_branch
        %470 = sbr.rel (%p468) target = $region28
      $region27: #{generator_forward.14} parent=23 // pred_region
        _
      $region28: #{generator_forward.14} parent=23 // pred_fallthru
        _
    $region24: #{generator_forward.14} parent=5 // pred_fallthru
      _
    %p471 = scmp.le.s32.totalorder 2, %s7
    // Predicated region
    $region29: #{generator_forward.14} parent=5 // pred_check
      %p472 = pneg %p471
    $region30: #{generator_forward.14} parent=5 // pred_check_branch
      %474 = sbr.rel (%p472) target = $region32
    $region31: #{generator_forward.14} parent=5 // pred_region
      %s475 = ssub.s32 %s7, 2
      // Predicated region
      $region33: #{generator_forward.14} parent=31 // pred_check
        %p476 = pneg %p62
      $region34: #{generator_forward.14} parent=31 // pred_check_branch
        %478 = sbr.rel (%p476) target = $region36
      $region35: #{generator_forward.14} parent=31 // pred_region
        %p479 = scmp.lt.s32.totalorder %s13, 1
        %s480 = scalar_select %p479, %s13, 1
        %s481 = smul.addr %s480, 32
        %s482 = smul.addr %s481, 8
        %s483 = scalar_lea.vmem %s1, %s482
      $region36: #{generator_forward.14} parent=31 // pred_fallthru
        _
    $region32: #{generator_forward.14} parent=5 // pred_fallthru
      _
  $region6: #{generator_forward.14} parent=0 // loop_footer
    %s11 = sadd.s32 1, %s7
  $region7: #{generator_forward.14} parent=0 // loop_footer_branch
    %6 = sbr.rel target = $region3
  $region8: #{generator_forward.14} parent=0 // loop_exit
    _

// kernel: generator_forward.15
$region0: #{generator_forward.15}
  #allocation0 [shape = 'u32[]', space=smem, size = 0x4, offset = 0x4, fixed_abs, tag = 'smem constant byte address 0x4 - core index']
  #allocation1 [shape = 'u32[72,128]{1,0:T(1,128)}', space=vmem, size = 0x9000, scoped, tag = 'internal scratch']
  #allocation2 [shape = 'f32[512,128]{1,0:T(8,128)}', space=vmem, size = 0x40000, scoped, tag = 'scratch operand']
  %s0 = inlined_call_operand.vmem [shape: bf16[512,3328], index: 0, kind: input, shape index: {}]
  %s1 = inlined_call_operand.vmem [shape: bf16[3328,128], index: 1, kind: input, shape index: {}]
  %s2 = inlined_call_operand.vmem [shape: f32[1,128], index: 2, kind: input, shape index: {}]
  %s3 = inlined_call_operand.vmem [shape: f32[512,128], index: 3, kind: output, shape index: {}]
  %s4 = sld [smem:[#allocation0]]
  $region91: #{generator_forward.15} parent=0
    _
  %s6 = ssub.s32 1, %s4
  %s7 = scalar_select 0, %s6, %s4
  $region1: #{generator_forward.15} parent=0
    #allocation3 [shape = 'u8[524288]{0}', space=vmem, size = 0x80000, scoped, tag = 'input window, operand 0']
    loop: start=0, step=1, limit=15
    $region2: #{generator_forward.15} parent=1 // loop_pre_header
      _
    $region3: #{generator_forward.15} parent=1 // loop_header
      %s9 = sphi 0, %s13
      %p10 = scmp.ge.s32.totalorder %s9, 15
      %s16 = sphi 0, %s35
      %s17 = sphi 0, %s31
      %s18 = sphi 0, %s27
      %s19 = sphi 0, %s16
      %s20 = sphi 0, %s17
      %s21 = sphi 0, %s18
      %s22 = sphi 0, %s19
      %s23 = sphi 0, %s20
      %s24 = sphi 0, %s21
      %s40 = sphi 0, %s42
      %s43 = sphi 0, %s40
      %s44 = sphi 0, %s43
      %s60 = sphi 0, %s44
      %s68 = sphi 0, %s70
      %s71 = sphi 0, %s68
      %s72 = sphi 0, %s71
      %s88 = sphi 0, %s72
      %s94 = sphi 0, %s96
      %s97 = sphi 0, %s94
      %s98 = sphi 0, %s97
      %s114 = sphi 0, %s98
      %s122 = sphi 0, %s124
      %s125 = sphi 0, %s122
      %s126 = sphi 0, %s125
      %s142 = sphi 0, %s126
    $region4: #{generator_forward.15} parent=1 // loop_header_branch
      %12 = sbr.rel (%p10) target = $region8
    $region5: #{generator_forward.15} parent=1 // loop_body
      %s14 = ssub.s32 %s9, 1
      %s15 = ssub.s32 %s9, 2
      %s25 = sadd.s32 1, %s18
      %p26 = scmp.ge.s32.totalorder %s25, 13
      %s27 = scalar_select %p26, 0, %s25
      %s28 = sadd.s32 1, %s17
      %s29 = scalar_select %p26, %s28, %s17
      %p30 = scmp.ge.s32.totalorder %s29, 1
      %s31 = scalar_select %p30, 0, %s29
      %s32 = sadd.s32 1, %s16
      %s33 = scalar_select %p30, %s32, %s16
      %p34 = scmp.ge.s32.totalorder %s33, 1
      %s35 = scalar_select %p34, 0, %s33
      %s36 = ssub.s32 %s16, %s35
      %s37 = ssub.s32 %s18, %s27
      %s38 = sor.u32 %s36, %s37
      %p39 = scmp.eq.s32.totalorder %s38, 0
      %s41 = sadd.s32 %s40, 1
      %s42 = scalar_select %p39, %s40, %s41
      %p45 = pneg %p39
      %p46 = scmp.eq.s32.totalorder %s9, 12
      %p47 = por %p45, %p46
      %p48 = scmp.ne.s32.totalorder %s40, %s43
      %p49 = scmp.eq.s32.totalorder %s9, 0
      %p50 = por %p48, %p49
      %p51 = scmp.ne.s32.totalorder %s40, %s43
      %p52 = scmp.eq.s32.totalorder %s14, 12
      %p53 = por %p51, %p52
      %p54 = scmp.ne.s32.totalorder %s43, %s44
      %p55 = scmp.eq.s32.totalorder %s14, 0
      %p56 = por %p54, %p55
      %p57 = scmp.ne.s32.totalorder %s43, %s44
      %p58 = scmp.eq.s32.totalorder %s15, 12
      %p59 = por %p57, %p58
      %p61 = scmp.ne.s32.totalorder %s44, %s60
      %p62 = scmp.eq.s32.totalorder %s15, 0
      %p63 = por %p61, %p62
      %s64 = ssub.s32 %s18, %s27
      %s65 = ssub.s32 %s17, %s31
      %s66 = sor.u32 %s64, %s65
      %p67 = scmp.eq.s32.totalorder %s66, 0
      %s69 = sadd.s32 %s68, 1
      %s70 = scalar_select %p67, %s68, %s69
      %p73 = pneg %p67
      %p74 = scmp.eq.s32.totalorder %s9, 12
      %p75 = por %p73, %p74
      %p76 = scmp.ne.s32.totalorder %s68, %s71
      %p77 = scmp.eq.s32.totalorder %s9, 0
      %p78 = por %p76, %p77
      %p79 = scmp.ne.s32.totalorder %s68, %s71
      %p80 = scmp.eq.s32.totalorder %s14, 12
      %p81 = por %p79, %p80
      %p82 = scmp.ne.s32.totalorder %s71, %s72
      %p83 = scmp.eq.s32.totalorder %s14, 0
      %p84 = por %p82, %p83
      %p85 = scmp.ne.s32.totalorder %s71, %s72
      %p86 = scmp.eq.s32.totalorder %s15, 12
      %p87 = por %p85, %p86
      %p89 = scmp.ne.s32.totalorder %s72, %s88
      %p90 = scmp.eq.s32.totalorder %s15, 0
      %p91 = por %p89, %p90
      %s92 = ssub.s32 %s17, %s31
      %p93 = scmp.eq.s32.totalorder %s92, 0
      %s95 = sadd.s32 %s94, 1
      %s96 = scalar_select %p93, %s94, %s95
      %p99 = pneg %p93
      %p100 = scmp.eq.s32.totalorder %s9, 12
      %p101 = por %p99, %p100
      %p102 = scmp.ne.s32.totalorder %s94, %s97
      %p103 = scmp.eq.s32.totalorder %s9, 0
      %p104 = por %p102, %p103
      %p105 = scmp.ne.s32.totalorder %s94, %s97
      %p106 = scmp.eq.s32.totalorder %s14, 12
      %p107 = por %p105, %p106
      %p108 = scmp.ne.s32.totalorder %s97, %s98
      %p109 = scmp.eq.s32.totalorder %s14, 0
      %p110 = por %p108, %p109
      %p111 = scmp.ne.s32.totalorder %s97, %s98
      %p112 = scmp.eq.s32.totalorder %s15, 12
      %p113 = por %p111, %p112
      %p115 = scmp.ne.s32.totalorder %s98, %s114
      %p116 = scmp.eq.s32.totalorder %s15, 0
      %p117 = por %p115, %p116
      %s118 = ssub.s32 %s16, %s35
      %s119 = ssub.s32 %s17, %s31
      %s120 = sor.u32 %s118, %s119
      %p121 = scmp.eq.s32.totalorder %s120, 0
      %s123 = sadd.s32 %s122, 1
      %s124 = scalar_select %p121, %s122, %s123
      %p127 = pneg %p121
      %p128 = scmp.eq.s32.totalorder %s9, 12
      %p129 = por %p127, %p128
      %p130 = scmp.ne.s32.totalorder %s122, %s125
      %p131 = scmp.eq.s32.totalorder %s9, 0
      %p132 = por %p130, %p131
      %p133 = scmp.ne.s32.totalorder %s122, %s125
      %p134 = scmp.eq.s32.totalorder %s14, 12
      %p135 = por %p133, %p134
      %p136 = scmp.ne.s32.totalorder %s125, %s126
      %p137 = scmp.eq.s32.totalorder %s14, 0
      %p138 = por %p136, %p137
      %p139 = scmp.ne.s32.totalorder %s125, %s126
      %p140 = scmp.eq.s32.totalorder %s15, 12
      %p141 = por %p139, %p140
      %p143 = scmp.ne.s32.totalorder %s126, %s142
      %p144 = scmp.eq.s32.totalorder %s15, 0
      %p145 = por %p143, %p144
      %p146 = scmp.le.s32.totalorder 1, %s9
      %p147 = scmp.lt.s32.totalorder %s9, 14
      %p148 = pnand %p146, %p147
      %p149 = pneg %p148
      // Predicated region
      $region9: #{generator_forward.15} parent=5 // pred_check
        _
      $region10: #{generator_forward.15} parent=5 // pred_check_branch
        %151 = sbr.rel (%p148) target = $region12
      $region11: #{generator_forward.15} parent=5 // pred_region
        %s152 = ssub.s32 %s9, 1
        // Predicated region
        $region13: #{generator_forward.15} parent=11 // pred_check
          %p153 = pneg %p110
        $region14: #{generator_forward.15} parent=11 // pred_check_branch
          %155 = sbr.rel (%p153) target = $region16
        $region15: #{generator_forward.15} parent=11 // pred_region
          %p156 = scmp.lt.s32.totalorder %s20, 0
          %s157 = scalar_select %p156, %s20, 0
          %s158 = scalar_lea.vmem %s2, %s157
        $region16: #{generator_forward.15} parent=11 // pred_fallthru
          _
      $region12: #{generator_forward.15} parent=5 // pred_fallthru
        _
      %p159 = scmp.lt.s32.totalorder %s9, 13
      // Predicated region
      $region17: #{generator_forward.15} parent=5 // pred_check
        %p160 = pneg %p159
      $region18: #{generator_forward.15} parent=5 // pred_check_branch
        %162 = sbr.rel (%p160) target = $region20
      $region19: #{generator_forward.15} parent=5 // pred_region
        // Predicated region
        $region21: #{generator_forward.15} parent=19 // pred_check
          %p163 = pneg %p50
        $region22: #{generator_forward.15} parent=19 // pred_check_branch
          %165 = sbr.rel (%p163) target = $region24
        $region23: #{generator_forward.15} parent=19 // pred_region
          %s166 = sand.u32 %s40, 1
          %s167 = sand.u32 %s40, 1
          %s168 = smul.addr %s167, 512
          %s169 = scalar_lea.vmem [#allocation3], %s168
          %s170 = smul.u32 64, %s16
          %s171 = smul.u32 2, %s18
          %s172 = smul.addr %s170, 26
          %s173 = sadd.s32 %s171, %s172
          %s174 = smul.addr %s173, 4
          %s175 = scalar_lea.vmem %s0, %s174
          // Predicated region
          $region25: #{generator_forward.15} parent=23 // pred_check
            _
          $region26: #{generator_forward.15} parent=23 // pred_check_branch
            %177 = sbr.rel (0) target = $region28
          $region27: #{generator_forward.15} parent=23 // pred_region
            // Predicated region
            $region29: #{generator_forward.15} parent=27 // pred_check
              _
            $region30: #{generator_forward.15} parent=27 // pred_check_branch
              %179 = sbr.rel (0) target = $region32
            $region31: #{generator_forward.15} parent=27 // pred_region
              // Predicated region
              $region44: #{generator_forward.15} parent=31 // pred_check
                _
              $region45: #{generator_forward.15} parent=31 // pred_check_branch
                %321 = sbr.rel (0) target = $region47
              $region46: #{generator_forward.15} parent=31 // pred_region
                loop: start=0, step=1, limit=1
                $region48: #{generator_forward.15} parent=46 // loop_pre_header
                  _
                $region49: #{generator_forward.15} parent=46 // loop_header
                  %s323 = sphi 0, %s327
                  %p324 = scmp.ge.s32.totalorder %s323, 1
                  %s328 = sphi %s175, %s175
                  %s329 = sphi %s169, %s169
                $region50: #{generator_forward.15} parent=46 // loop_header_branch
                  %326 = sbr.rel (%p324) target = $region54
                $region51: #{generator_forward.15} parent=46 // loop_body
                  %v330 = vld [vmem:[%s328] sm:$0xff]
                  %331 = vst [vmem:[%s329] sm:$0xff] %v330
                  %v332 = vld [vmem:[%s328 + $0x68] sm:$0xff]
                  %333 = vst [vmem:[%s329 + $0x8] sm:$0xff] %v332
                  %v334 = vld [vmem:[%s328 + $0xd0] sm:$0xff]
                  %335 = vst [vmem:[%s329 + $0x10] sm:$0xff] %v334
                  %v336 = vld [vmem:[%s328 + $0x138] sm:$0xff]
                  %337 = vst [vmem:[%s329 + $0x18] sm:$0xff] %v336
                  %v338 = vld [vmem:[%s328 + $0x1a0] sm:$0xff]
                  %339 = vst [vmem:[%s329 + $0x20] sm:$0xff] %v338
                  %v340 = vld [vmem:[%s328 + $0x208] sm:$0xff]
                  %341 = vst [vmem:[%s329 + $0x28] sm:$0xff] %v340
                  %v342 = vld [vmem:[%s328 + $0x270] sm:$0xff]
                  %343 = vst [vmem:[%s329 + $0x30] sm:$0xff] %v342
                  %v344 = vld [vmem:[%s328 + $0x2d8] sm:$0xff]
                  %345 = vst [vmem:[%s329 + $0x38] sm:$0xff] %v344
                  %v346 = vld [vmem:[%s328 + $0x340] sm:$0xff]
                  %347 = vst [vmem:[%s329 + $0x40] sm:$0xff] %v346
                  %v348 = vld [vmem:[%s328 + $0x3a8] sm:$0xff]
                  %349 = vst [vmem:[%s329 + $0x48] sm:$0xff] %v348
                  %v350 = vld [vmem:[%s328 + $0x410] sm:$0xff]
                  %351 = vst [vmem:[%s329 + $0x50] sm:$0xff] %v350
                  %v352 = vld [vmem:[%s328 + $0x478] sm:$0xff]
                  %353 = vst [vmem:[%s329 + $0x58] sm:$0xff] %v352
                  %v354 = vld [vmem:[%s328 + $0x4e0] sm:$0xff]
                  %355 = vst [vmem:[%s329 + $0x60] sm:$0xff] %v354
                  %v356 = vld [vmem:[%s328 + $0x548] sm:$0xff]
                  %357 = vst [vmem:[%s329 + $0x68] sm:$0xff] %v356
                  %v358 = vld [vmem:[%s328 + $0x5b0] sm:$0xff]
                  %359 = vst [vmem:[%s329 + $0x70] sm:$0xff] %v358
                  %v360 = vld [vmem:[%s328 + $0x618] sm:$0xff]
                  %361 = vst [vmem:[%s329 + $0x78] sm:$0xff] %v360
                  %v362 = vld [vmem:[%s328 + $0x680] sm:$0xff]
                  %363 = vst [vmem:[%s329 + $0x80] sm:$0xff] %v362
                  %v364 = vld [vmem:[%s328 + $0x6e8] sm:$0xff]
                  %365 = vst [vmem:[%s329 + $0x88] sm:$0xff] %v364
                  %v366 = vld [vmem:[%s328 + $0x750] sm:$0xff]
                  %367 = vst [vmem:[%s329 + $0x90] sm:$0xff] %v366
                  %v368 = vld [vmem:[%s328 + $0x7b8] sm:$0xff]
                  %369 = vst [vmem:[%s329 + $0x98] sm:$0xff] %v368
                  %v370 = vld [vmem:[%s328 + $0x820] sm:$0xff]
                  %371 = vst [vmem:[%s329 + $0xa0] sm:$0xff] %v370
                  %v372 = vld [vmem:[%s328 + $0x888] sm:$0xff]
                  %373 = vst [vmem:[%s329 + $0xa8] sm:$0xff] %v372
                  %v374 = vld [vmem:[%s328 + $0x8f0] sm:$0xff]
                  %375 = vst [vmem:[%s329 + $0xb0] sm:$0xff] %v374
                  %v376 = vld [vmem:[%s328 + $0x958] sm:$0xff]
                  %377 = vst [vmem:[%s329 + $0xb8] sm:$0xff] %v376
                  %v378 = vld [vmem:[%s328 + $0x9c0] sm:$0xff]
                  %379 = vst [vmem:[%s329 + $0xc0] sm:$0xff] %v378
                  %v380 = vld [vmem:[%s328 + $0xa28] sm:$0xff]
                  %381 = vst [vmem:[%s329 + $0xc8] sm:$0xff] %v380
                  %v382 = vld [vmem:[%s328 + $0xa90] sm:$0xff]
                  %383 = vst [vmem:[%s329 + $0xd0] sm:$0xff] %v382
                  %v384 = vld [vmem:[%s328 + $0xaf8] sm:$0xff]
                  %385 = vst [vmem:[%s329 + $0xd8] sm:$0xff] %v384
                  %v386 = vld [vmem:[%s328 + $0xb60] sm:$0xff]
                  %387 = vst [vmem:[%s329 + $0xe0] sm:$0xff] %v386
                  %v388 = vld [vmem:[%s328 + $0xbc8] sm:$0xff]
                  %389 = vst [vmem:[%s329 + $0xe8] sm:$0xff] %v388
                  %v390 = vld [vmem:[%s328 + $0xc30] sm:$0xff]
                  %391 = vst [vmem:[%s329 + $0xf0] sm:$0xff] %v390
                  %v392 = vld [vmem:[%s328 + $0xc98] sm:$0xff]
                  %393 = vst [vmem:[%s329 + $0xf8] sm:$0xff] %v392
                  %v394 = vld [vmem:[%s328 + $0xd00] sm:$0xff]
                  %395 = vst [vmem:[%s329 + $0x100] sm:$0xff] %v394
                  %v396 = vld [vmem:[%s328 + $0xd68] sm:$0xff]
                  %397 = vst [vmem:[%s329 + $0x108] sm:$0xff] %v396
                  %v398 = vld [vmem:[%s328 + $0xdd0] sm:$0xff]
                  %399 = vst [vmem:[%s329 + $0x110] sm:$0xff] %v398
                  %v400 = vld [vmem:[%s328 + $0xe38] sm:$0xff]
                  %401 = vst [vmem:[%s329 + $0x118] sm:$0xff] %v400
                  %v402 = vld [vmem:[%s328 + $0xea0] sm:$0xff]
                  %403 = vst [vmem:[%s329 + $0x120] sm:$0xff] %v402
                  %v404 = vld [vmem:[%s328 + $0xf08] sm:$0xff]
                  %405 = vst [vmem:[%s329 + $0x128] sm:$0xff] %v404
                  %v406 = vld [vmem:[%s328 + $0xf70] sm:$0xff]
                  %407 = vst [vmem:[%s329 + $0x130] sm:$0xff] %v406
                  %v408 = vld [vmem:[%s328 + $0xfd8] sm:$0xff]
                  %409 = vst [vmem:[%s329 + $0x138] sm:$0xff] %v408
                  %v410 = vld [vmem:[%s328 + $0x1040] sm:$0xff]
                  %411 = vst [vmem:[%s329 + $0x140] sm:$0xff] %v410
                  %v412 = vld [vmem:[%s328 + $0x10a8] sm:$0xff]
                  %413 = vst [vmem:[%s329 + $0x148] sm:$0xff] %v412
                  %v414 = vld [vmem:[%s328 + $0x1110] sm:$0xff]
                  %415 = vst [vmem:[%s329 + $0x150] sm:$0xff] %v414
                  %v416 = vld [vmem:[%s328 + $0x1178] sm:$0xff]
                  %417 = vst [vmem:[%s329 + $0x158] sm:$0xff] %v416
                  %v418 = vld [vmem:[%s328 + $0x11e0] sm:$0xff]
                  %419 = vst [vmem:[%s329 + $0x160] sm:$0xff] %v418
                  %v420 = vld [vmem:[%s328 + $0x1248] sm:$0xff]
                  %421 = vst [vmem:[%s329 + $0x168] sm:$0xff] %v420
                  %v422 = vld [vmem:[%s328 + $0x12b0] sm:$0xff]
                  %423 = vst [vmem:[%s329 + $0x170] sm:$0xff] %v422
                  %v424 = vld [vmem:[%s328 + $0x1318] sm:$0xff]
                  %425 = vst [vmem:[%s329 + $0x178] sm:$0xff] %v424
                  %v426 = vld [vmem:[%s328 + $0x1380] sm:$0xff]
                  %427 = vst [vmem:[%s329 + $0x180] sm:$0xff] %v426
                  %v428 = vld [vmem:[%s328 + $0x13e8] sm:$0xff]
                  %429 = vst [vmem:[%s329 + $0x188] sm:$0xff] %v428
                  %v430 = vld [vmem:[%s328 + $0x1450] sm:$0xff]
                  %431 = vst [vmem:[%s329 + $0x190] sm:$0xff] %v430
                  %v432 = vld [vmem:[%s328 + $0x14b8] sm:$0xff]
                  %433 = vst [vmem:[%s329 + $0x198] sm:$0xff] %v432
                  %v434 = vld [vmem:[%s328 + $0x1520] sm:$0xff]
                  %435 = vst [vmem:[%s329 + $0x1a0] sm:$0xff] %v434
                  %v436 = vld [vmem:[%s328 + $0x1588] sm:$0xff]
                  %437 = vst [vmem:[%s329 + $0x1a8] sm:$0xff] %v436
                  %v438 = vld [vmem:[%s328 + $0x15f0] sm:$0xff]
                  %439 = vst [vmem:[%s329 + $0x1b0] sm:$0xff] %v438
                  %v440 = vld [vmem:[%s328 + $0x1658] sm:$0xff]
                  %441 = vst [vmem:[%s329 + $0x1b8] sm:$0xff] %v440
                  %v442 = vld [vmem:[%s328 + $0x16c0] sm:$0xff]
                  %443 = vst [vmem:[%s329 + $0x1c0] sm:$0xff] %v442
                  %v444 = vld [vmem:[%s328 + $0x1728] sm:$0xff]
                  %445 = vst [vmem:[%s329 + $0x1c8] sm:$0xff] %v444
                  %v446 = vld [vmem:[%s328 + $0x1790] sm:$0xff]
                  %447 = vst [vmem:[%s329 + $0x1d0] sm:$0xff] %v446
                  %v448 = vld [vmem:[%s328 + $0x17f8] sm:$0xff]
                  %449 = vst [vmem:[%s329 + $0x1d8] sm:$0xff] %v448
                  %v450 = vld [vmem:[%s328 + $0x1860] sm:$0xff]
                  %451 = vst [vmem:[%s329 + $0x1e0] sm:$0xff] %v450
                  %v452 = vld [vmem:[%s328 + $0x18c8] sm:$0xff]
                  %453 = vst [vmem:[%s329 + $0x1e8] sm:$0xff] %v452
                  %v454 = vld [vmem:[%s328 + $0x1930] sm:$0xff]
                  %455 = vst [vmem:[%s329 + $0x1f0] sm:$0xff] %v454
                  %v456 = vld [vmem:[%s328 + $0x1998] sm:$0xff]
                  %457 = vst [vmem:[%s329 + $0x1f8] sm:$0xff] %v456
                $region52: #{generator_forward.15} parent=46 // loop_footer
                  %s327 = sadd.s32 1, %s323
                $region53: #{generator_forward.15} parent=46 // loop_footer_branch
                  %322 = sbr.rel target = $region49
                $region54: #{generator_forward.15} parent=46 // loop_exit
                  _
              $region47: #{generator_forward.15} parent=31 // pred_fallthru
                _
              // Predicated region
              $region55: #{generator_forward.15} parent=31 // pred_check
                _
              $region56: #{generator_forward.15} parent=31 // pred_check_branch
                %459 = sbr.rel target = $region58
              $region57: #{generator_forward.15} parent=31 // pred_region
                _
              $region58: #{generator_forward.15} parent=31 // pred_fallthru
                _
            $region32: #{generator_forward.15} parent=27 // pred_fallthru
              _
            // Predicated region
            $region33: #{generator_forward.15} parent=27 // pred_check
              _
            $region34: #{generator_forward.15} parent=27 // pred_check_branch
              %181 = sbr.rel target = $region36
            $region35: #{generator_forward.15} parent=27 // pred_region
              %s183 = ssub.s32 256, 1
              loop: start=0, step=1, limit=1
              $region37: #{generator_forward.15} parent=35 // loop_pre_header
                _
              $region38: #{generator_forward.15} parent=35 // loop_header
                %s185 = sphi 0, %s189
                %p186 = scmp.ge.s32.totalorder %s185, 1
                %s190 = sphi %s175, %s175
                %s191 = sphi %s169, %s169
              $region39: #{generator_forward.15} parent=35 // loop_header_branch
                %188 = sbr.rel (%p186) target = $region43
              $region40: #{generator_forward.15} parent=35 // loop_body
                %v192 = vld [vmem:[%s190] sm:%s183]
                %193 = vst [vmem:[%s191] sm:%s183] %v192
                %v194 = vld [vmem:[%s190 + $0x68] sm:%s183]
                %195 = vst [vmem:[%s191 + $0x8] sm:%s183] %v194
                %v196 = vld [vmem:[%s190 + $0xd0] sm:%s183]
                %197 = vst [vmem:[%s191 + $0x10] sm:%s183] %v196
                %v198 = vld [vmem:[%s190 + $0x138] sm:%s183]
                %199 = vst [vmem:[%s191 + $0x18] sm:%s183] %v198
                %v200 = vld [vmem:[%s190 + $0x1a0] sm:%s183]
                %201 = vst [vmem:[%s191 + $0x20] sm:%s183] %v200
                %v202 = vld [vmem:[%s190 + $0x208] sm:%s183]
                %203 = vst [vmem:[%s191 + $0x28] sm:%s183] %v202
                %v204 = vld [vmem:[%s190 + $0x270] sm:%s183]
                %205 = vst [vmem:[%s191 + $0x30] sm:%s183] %v204
                %v206 = vld [vmem:[%s190 + $0x2d8] sm:%s183]
                %207 = vst [vmem:[%s191 + $0x38] sm:%s183] %v206
                %v208 = vld [vmem:[%s190 + $0x340] sm:%s183]
                %209 = vst [vmem:[%s191 + $0x40] sm:%s183] %v208
                %v210 = vld [vmem:[%s190 + $0x3a8] sm:%s183]
                %211 = vst [vmem:[%s191 + $0x48] sm:%s183] %v210
                %v212 = vld [vmem:[%s190 + $0x410] sm:%s183]
                %213 = vst [vmem:[%s191 + $0x50] sm:%s183] %v212
                %v214 = vld [vmem:[%s190 + $0x478] sm:%s183]
                %215 = vst [vmem:[%s191 + $0x58] sm:%s183] %v214
                %v216 = vld [vmem:[%s190 + $0x4e0] sm:%s183]
                %217 = vst [vmem:[%s191 + $0x60] sm:%s183] %v216
                %v218 = vld [vmem:[%s190 + $0x548] sm:%s183]
                %219 = vst [vmem:[%s191 + $0x68] sm:%s183] %v218
                %v220 = vld [vmem:[%s190 + $0x5b0] sm:%s183]
                %221 = vst [vmem:[%s191 + $0x70] sm:%s183] %v220
                %v222 = vld [vmem:[%s190 + $0x618] sm:%s183]
                %223 = vst [vmem:[%s191 + $0x78] sm:%s183] %v222
                %v224 = vld [vmem:[%s190 + $0x680] sm:%s183]
                %225 = vst [vmem:[%s191 + $0x80] sm:%s183] %v224
                %v226 = vld [vmem:[%s190 + $0x6e8] sm:%s183]
                %227 = vst [vmem:[%s191 + $0x88] sm:%s183] %v226
                %v228 = vld [vmem:[%s190 + $0x750] sm:%s183]
                %229 = vst [vmem:[%s191 + $0x90] sm:%s183] %v228
                %v230 = vld [vmem:[%s190 + $0x7b8] sm:%s183]
                %231 = vst [vmem:[%s191 + $0x98] sm:%s183] %v230
                %v232 = vld [vmem:[%s190 + $0x820] sm:%s183]
                %233 = vst [vmem:[%s191 + $0xa0] sm:%s183] %v232
                %v234 = vld [vmem:[%s190 + $0x888] sm:%s183]
                %235 = vst [vmem:[%s191 + $0xa8] sm:%s183] %v234
                %v236 = vld [vmem:[%s190 + $0x8f0] sm:%s183]
                %237 = vst [vmem:[%s191 + $0xb0] sm:%s183] %v236
                %v238 = vld [vmem:[%s190 + $0x958] sm:%s183]
                %239 = vst [vmem:[%s191 + $0xb8] sm:%s183] %v238
                %v240 = vld [vmem:[%s190 + $0x9c0] sm:%s183]
                %241 = vst [vmem:[%s191 + $0xc0] sm:%s183] %v240
                %v242 = vld [vmem:[%s190 + $0xa28] sm:%s183]
                %243 = vst [vmem:[%s191 + $0xc8] sm:%s183] %v242
                %v244 = vld [vmem:[%s190 + $0xa90] sm:%s183]
                %245 = vst [vmem:[%s191 + $0xd0] sm:%s183] %v244
                %v246 = vld [vmem:[%s190 + $0xaf8] sm:%s183]
                %247 = vst [vmem:[%s191 + $0xd8] sm:%s183] %v246
                %v248 = vld [vmem:[%s190 + $0xb60] sm:%s183]
                %249 = vst [vmem:[%s191 + $0xe0] sm:%s183] %v248
                %v250 = vld [vmem:[%s190 + $0xbc8] sm:%s183]
                %251 = vst [vmem:[%s191 + $0xe8] sm:%s183] %v250
                %v252 = vld [vmem:[%s190 + $0xc30] sm:%s183]
                %253 = vst [vmem:[%s191 + $0xf0] sm:%s183] %v252
                %v254 = vld [vmem:[%s190 + $0xc98] sm:%s183]
                %255 = vst [vmem:[%s191 + $0xf8] sm:%s183] %v254
                %v256 = vld [vmem:[%s190 + $0xd00] sm:%s183]
                %257 = vst [vmem:[%s191 + $0x100] sm:%s183] %v256
                %v258 = vld [vmem:[%s190 + $0xd68] sm:%s183]
                %259 = vst [vmem:[%s191 + $0x108] sm:%s183] %v258
                %v260 = vld [vmem:[%s190 + $0xdd0] sm:%s183]
                %261 = vst [vmem:[%s191 + $0x110] sm:%s183] %v260
                %v262 = vld [vmem:[%s190 + $0xe38] sm:%s183]
                %263 = vst [vmem:[%s191 + $0x118] sm:%s183] %v262
                %v264 = vld [vmem:[%s190 + $0xea0] sm:%s183]
                %265 = vst [vmem:[%s191 + $0x120] sm:%s183] %v264
                %v266 = vld [vmem:[%s190 + $0xf08] sm:%s183]
                %267 = vst [vmem:[%s191 + $0x128] sm:%s183] %v266
                %v268 = vld [vmem:[%s190 + $0xf70] sm:%s183]
                %269 = vst [vmem:[%s191 + $0x130] sm:%s183] %v268
                %v270 = vld [vmem:[%s190 + $0xfd8] sm:%s183]
                %271 = vst [vmem:[%s191 + $0x138] sm:%s183] %v270
                %v272 = vld [vmem:[%s190 + $0x1040] sm:%s183]
                %273 = vst [vmem:[%s191 + $0x140] sm:%s183] %v272
                %v274 = vld [vmem:[%s190 + $0x10a8] sm:%s183]
                %275 = vst [vmem:[%s191 + $0x148] sm:%s183] %v274
                %v276 = vld [vmem:[%s190 + $0x1110] sm:%s183]
                %277 = vst [vmem:[%s191 + $0x150] sm:%s183] %v276
                %v278 = vld [vmem:[%s190 + $0x1178] sm:%s183]
                %279 = vst [vmem:[%s191 + $0x158] sm:%s183] %v278
                %v280 = vld [vmem:[%s190 + $0x11e0] sm:%s183]
                %281 = vst [vmem:[%s191 + $0x160] sm:%s183] %v280
                %v282 = vld [vmem:[%s190 + $0x1248] sm:%s183]
                %283 = vst [vmem:[%s191 + $0x168] sm:%s183] %v282
                %v284 = vld [vmem:[%s190 + $0x12b0] sm:%s183]
                %285 = vst [vmem:[%s191 + $0x170] sm:%s183] %v284
                %v286 = vld [vmem:[%s190 + $0x1318] sm:%s183]
                %287 = vst [vmem:[%s191 + $0x178] sm:%s183] %v286
                %v288 = vld [vmem:[%s190 + $0x1380] sm:%s183]
                %289 = vst [vmem:[%s191 + $0x180] sm:%s183] %v288
                %v290 = vld [vmem:[%s190 + $0x13e8] sm:%s183]
                %291 = vst [vmem:[%s191 + $0x188] sm:%s183] %v290
                %v292 = vld [vmem:[%s190 + $0x1450] sm:%s183]
                %293 = vst [vmem:[%s191 + $0x190] sm:%s183] %v292
                %v294 = vld [vmem:[%s190 + $0x14b8] sm:%s183]
                %295 = vst [vmem:[%s191 + $0x198] sm:%s183] %v294
                %v296 = vld [vmem:[%s190 + $0x1520] sm:%s183]
                %297 = vst [vmem:[%s191 + $0x1a0] sm:%s183] %v296
                %v298 = vld [vmem:[%s190 + $0x1588] sm:%s183]
                %299 = vst [vmem:[%s191 + $0x1a8] sm:%s183] %v298
                %v300 = vld [vmem:[%s190 + $0x15f0] sm:%s183]
                %301 = vst [vmem:[%s191 + $0x1b0] sm:%s183] %v300
                %v302 = vld [vmem:[%s190 + $0x1658] sm:%s183]
                %303 = vst [vmem:[%s191 + $0x1b8] sm:%s183] %v302
                %v304 = vld [vmem:[%s190 + $0x16c0] sm:%s183]
                %305 = vst [vmem:[%s191 + $0x1c0] sm:%s183] %v304
                %v306 = vld [vmem:[%s190 + $0x1728] sm:%s183]
                %307 = vst [vmem:[%s191 + $0x1c8] sm:%s183] %v306
                %v308 = vld [vmem:[%s190 + $0x1790] sm:%s183]
                %309 = vst [vmem:[%s191 + $0x1d0] sm:%s183] %v308
                %v310 = vld [vmem:[%s190 + $0x17f8] sm:%s183]
                %311 = vst [vmem:[%s191 + $0x1d8] sm:%s183] %v310
                %v312 = vld [vmem:[%s190 + $0x1860] sm:%s183]
                %313 = vst [vmem:[%s191 + $0x1e0] sm:%s183] %v312
                %v314 = vld [vmem:[%s190 + $0x18c8] sm:%s183]
                %315 = vst [vmem:[%s191 + $0x1e8] sm:%s183] %v314
                %v316 = vld [vmem:[%s190 + $0x1930] sm:%s183]
                %317 = vst [vmem:[%s191 + $0x1f0] sm:%s183] %v316
                %v318 = vld [vmem:[%s190 + $0x1998] sm:%s183]
                %319 = vst [vmem:[%s191 + $0x1f8] sm:%s183] %v318
              $region41: #{generator_forward.15} parent=35 // loop_footer
                %s189 = sadd.s32 1, %s185
              $region42: #{generator_forward.15} parent=35 // loop_footer_branch
                %184 = sbr.rel target = $region38
              $region43: #{generator_forward.15} parent=35 // loop_exit
                _
            $region36: #{generator_forward.15} parent=27 // pred_fallthru
              _
          $region28: #{generator_forward.15} parent=23 // pred_fallthru
            _
          %460 = vnop
        $region24: #{generator_forward.15} parent=19 // pred_fallthru
          _
        // Predicated region
        $region59: #{generator_forward.15} parent=19 // pred_check
          %p461 = pneg %p78
        $region60: #{generator_forward.15} parent=19 // pred_check_branch
          %463 = sbr.rel (%p461) target = $region62
        $region61: #{generator_forward.15} parent=19 // pred_region
          %s464 = smul.u32 32, %s18
          %p465 = scmp.lt.s32.totalorder %s464, 415
          %s466 = scalar_select %p465, %s464, 415
          %p467 = scmp.lt.s32.totalorder %s17, 0
          %s468 = scalar_select %p467, %s17, 0
          %s469 = sadd.s32 %s468, %s466
          %s470 = smul.addr %s469, 4
          %s471 = scalar_lea.vmem %s1, %s470
          %s472 = smul.u32 32, %s18
        $region62: #{generator_forward.15} parent=19 // pred_fallthru
          _
      $region20: #{generator_forward.15} parent=5 // pred_fallthru
        _
      %p473 = scmp.le.s32.totalorder 1, %s9
      %p474 = scmp.lt.s32.totalorder %s9, 14
      %p475 = pnand %p473, %p474
      %p476 = pneg %p475
      // Predicated region
      $region63: #{generator_forward.15} parent=5 // pred_check
        _
      $region64: #{generator_forward.15} parent=5 // pred_check_branch
        %478 = sbr.rel (%p475) target = $region66
      $region65: #{generator_forward.15} parent=5 // pred_region
        %s479 = ssub.s32 %s9, 1
        %s480 = sand.u32 %s43, 1
        %s481 = sand.u32 %s43, 1
        %s482 = smul.addr %s481, 512
        %s483 = scalar_lea.vmem [#allocation3], %s482
        // Predicated region
        $region67: #{generator_forward.15} parent=65 // pred_check
          %p484 = pneg %p56
        $region68: #{generator_forward.15} parent=65 // pred_check_branch
          %486 = sbr.rel (%p484) target = $region70
        $region69: #{generator_forward.15} parent=65 // pred_region
          _
        $region70: #{generator_forward.15} parent=65 // pred_fallthru
          _
        %s487 = sand.u32 %s43, 1
        %s488 = sand.u32 %s43, 1
        %s489 = smul.addr %s488, 512
        %s490 = scalar_lea.vmem [#allocation3], %s489
        %p491 = pneg %p56
        %p492 = pneg %p53
        %s493 = smul.u32 32, %s21
        %p494 = scmp.lt.s32.totalorder %s493, 415
        %s495 = scalar_select %p494, %s493, 415
        %p496 = scmp.lt.s32.totalorder %s20, 0
        %s497 = scalar_select %p496, %s20, 0
        %s498 = sadd.s32 %s497, %s495
        %s499 = smul.addr %s498, 4
        %s500 = scalar_lea.vmem %s1, %s499
        %p501 = pneg %p84
        %p502 = pneg %p81
        %p503 = scmp.lt.s32.totalorder %s20, 0
        %s504 = scalar_select %p503, %s20, 0
        %s505 = scalar_lea.vmem %s2, %s504
        %p506 = pneg %p110
        %p507 = pneg %p107
        %p508 = pneg %p138
        %p509 = pneg %p135
        %s510 = smul.u32 64, %s19
        %p511 = scmp.lt.s32.totalorder %s510, 63
        %s512 = scalar_select %p511, %s510, 63
        %p513 = scmp.lt.s32.totalorder %s20, 0
        %s514 = scalar_select %p513, %s20, 0
        %s515 = sadd.s32 %s514, %s512
        %s516 = smul.addr %s515, 8
        %s517 = scalar_lea.vmem %s3, %s516
        %s518 = smul.u32 64, %s19
        %s519 = smul.u32 2, %s21
        %s520 = smul.u32 32, %s21
        %p521 = scmp.lt.s32.totalorder %s520, 415
        %s522 = scalar_select %p521, %s520, 415
        %p523 = scmp.lt.s32.totalorder %s20, 0
        %s524 = scalar_select %p523, %s20, 0
        %s525 = sadd.s32 %s524, %s522
        %s526 = smul.addr %s525, 4
        %s527 = scalar_lea.vmem %s1, %s526
        %s528 = smul.u32 32, %s21
        %p529 = scmp.lt.s32.totalorder %s20, 0
        %s530 = scalar_select %p529, %s20, 0
        %s531 = scalar_lea.vmem %s2, %s530
        %s532 = smul.u32 64, %s19
        %p533 = scmp.lt.s32.totalorder %s532, 63
        %s534 = scalar_select %p533, %s532, 63
        %p535 = scmp.lt.s32.totalorder %s20, 0
        %s536 = scalar_select %p535, %s20, 0
        %s537 = sadd.s32 %s536, %s534
        %s538 = smul.addr %s537, 8
        %s539 = scalar_lea.vmem %s3, %s538
        %s540 = smul.u32 64, %s19
        %p541 = scmp.eq.s32.totalorder %s21, 0
        // Predicated region
        $region71: #{generator_forward.15} parent=65 // pred_check
          %p542 = pneg %p541
        $region72: #{generator_forward.15} parent=65 // pred_check_branch
          %544 = sbr.rel (%p542) target = $region74
        $region73: #{generator_forward.15} parent=65 // pred_region
          %545 = vst [vmem:[#allocation2] sm:$0xff] 0.0
          %546 = vst [vmem:[#allocation2 + $0x8] sm:$0xff] 0.0
          %547 = vst [vmem:[#allocation2 + $0x10] sm:$0xff] 0.0
          %548 = vst [vmem:[#allocation2 + $0x18] sm:$0xff] 0.0
          %549 = vst [vmem:[#allocation2 + $0x20] sm:$0xff] 0.0
          %550 = vst [vmem:[#allocation2 + $0x28] sm:$0xff] 0.0
          %551 = vst [vmem:[#allocation2 + $0x30] sm:$0xff] 0.0
          %552 = vst [vmem:[#allocation2 + $0x38] sm:$0xff] 0.0
          %553 = vst [vmem:[#allocation2 + $0x40] sm:$0xff] 0.0
          %554 = vst [vmem:[#allocation2 + $0x48] sm:$0xff] 0.0
          %555 = vst [vmem:[#allocation2 + $0x50] sm:$0xff] 0.0
          %556 = vst [vmem:[#allocation2 + $0x58] sm:$0xff] 0.0
          %557 = vst [vmem:[#allocation2 + $0x60] sm:$0xff] 0.0
          %558 = vst [vmem:[#allocation2 + $0x68] sm:$0xff] 0.0
          %559 = vst [vmem:[#allocation2 + $0x70] sm:$0xff] 0.0
          %560 = vst [vmem:[#allocation2 + $0x78] sm:$0xff] 0.0
          %561 = vst [vmem:[#allocation2 + $0x80] sm:$0xff] 0.0
          %562 = vst [vmem:[#allocation2 + $0x88] sm:$0xff] 0.0
          %563 = vst [vmem:[#allocation2 + $0x90] sm:$0xff] 0.0
          %564 = vst [vmem:[#allocation2 + $0x98] sm:$0xff] 0.0
          %565 = vst [vmem:[#allocation2 + $0xa0] sm:$0xff] 0.0
          %566 = vst [vmem:[#allocation2 + $0xa8] sm:$0xff] 0.0
          %567 = vst [vmem:[#allocation2 + $0xb0] sm:$0xff] 0.0
          %568 = vst [vmem:[#allocation2 + $0xb8] sm:$0xff] 0.0
          %569 = vst [vmem:[#allocation2 + $0xc0] sm:$0xff] 0.0
          %570 = vst [vmem:[#allocation2 + $0xc8] sm:$0xff] 0.0
          %571 = vst [vmem:[#allocation2 + $0xd0] sm:$0xff] 0.0
          %572 = vst [vmem:[#allocation2 + $0xd8] sm:$0xff] 0.0
          %573 = vst [vmem:[#allocation2 + $0xe0] sm:$0xff] 0.0
          %574 = vst [vmem:[#allocation2 + $0xe8] sm:$0xff] 0.0
          %575 = vst [vmem:[#allocation2 + $0xf0] sm:$0xff] 0.0
          %576 = vst [vmem:[#allocation2 + $0xf8] sm:$0xff] 0.0
          %577 = vst [vmem:[#allocation2 + $0x100] sm:$0xff] 0.0
          %578 = vst [vmem:[#allocation2 + $0x108] sm:$0xff] 0.0
          %579 = vst [vmem:[#allocation2 + $0x110] sm:$0xff] 0.0
          %580 = vst [vmem:[#allocation2 + $0x118] sm:$0xff] 0.0
          %581 = vst [vmem:[#allocation2 + $0x120] sm:$0xff] 0.0
          %582 = vst [vmem:[#allocation2 + $0x128] sm:$0xff] 0.0
          %583 = vst [vmem:[#allocation2 + $0x130] sm:$0xff] 0.0
          %584 = vst [vmem:[#allocation2 + $0x138] sm:$0xff] 0.0
          %585 = vst [vmem:[#allocation2 + $0x140] sm:$0xff] 0.0
          %586 = vst [vmem:[#allocation2 + $0x148] sm:$0xff] 0.0
          %587 = vst [vmem:[#allocation2 + $0x150] sm:$0xff] 0.0
          %588 = vst [vmem:[#allocation2 + $0x158] sm:$0xff] 0.0
          %589 = vst [vmem:[#allocation2 + $0x160] sm:$0xff] 0.0
          %590 = vst [vmem:[#allocation2 + $0x168] sm:$0xff] 0.0
          %591 = vst [vmem:[#allocation2 + $0x170] sm:$0xff] 0.0
          %592 = vst [vmem:[#allocation2 + $0x178] sm:$0xff] 0.0
          %593 = vst [vmem:[#allocation2 + $0x180] sm:$0xff] 0.0
          %594 = vst [vmem:[#allocation2 + $0x188] sm:$0xff] 0.0
          %595 = vst [vmem:[#allocation2 + $0x190] sm:$0xff] 0.0
          %596 = vst [vmem:[#allocation2 + $0x198] sm:$0xff] 0.0
          %597 = vst [vmem:[#allocation2 + $0x1a0] sm:$0xff] 0.0
          %598 = vst [vmem:[#allocation2 + $0x1a8] sm:$0xff] 0.0
          %599 = vst [vmem:[#allocation2 + $0x1b0] sm:$0xff] 0.0
          %600 = vst [vmem:[#allocation2 + $0x1b8] sm:$0xff] 0.0
          %601 = vst [vmem:[#allocation2 + $0x1c0] sm:$0xff] 0.0
          %602 = vst [vmem:[#allocation2 + $0x1c8] sm:$0xff] 0.0
          %603 = vst [vmem:[#allocation2 + $0x1d0] sm:$0xff] 0.0
          %604 = vst [vmem:[#allocation2 + $0x1d8] sm:$0xff] 0.0
          %605 = vst [vmem:[#allocation2 + $0x1e0] sm:$0xff] 0.0
          %606 = vst [vmem:[#allocation2 + $0x1e8] sm:$0xff] 0.0
          %607 = vst [vmem:[#allocation2 + $0x1f0] sm:$0xff] 0.0
          %608 = vst [vmem:[#allocation2 + $0x1f8] sm:$0xff] 0.0
        $region74: #{generator_forward.15} parent=65 // pred_fallthru
          _
        %v609 = vld [vmem:[#allocation2] sm:$0xff]
        %v610 = vld [vmem:[#allocation2 + $0x8] sm:$0xff]
        %v611 = vld [vmem:[#allocation2 + $0x10] sm:$0xff]
        %v612 = vld [vmem:[#allocation2 + $0x18] sm:$0xff]
        %v613 = vld [vmem:[#allocation2 + $0x20] sm:$0xff]
        %v614 = vld [vmem:[#allocation2 + $0x28] sm:$0xff]
        %v615 = vld [vmem:[#allocation2 + $0x30] sm:$0xff]
        %v616 = vld [vmem:[#allocation2 + $0x38] sm:$0xff]
        %v617 = vld [vmem:[#allocation2 + $0x40] sm:$0xff]
        %v618 = vld [vmem:[#allocation2 + $0x48] sm:$0xff]
        %v619 = vld [vmem:[#allocation2 + $0x50] sm:$0xff]
        %v620 = vld [vmem:[#allocation2 + $0x58] sm:$0xff]
        %v621 = vld [vmem:[#allocation2 + $0x60] sm:$0xff]
        %v622 = vld [vmem:[#allocation2 + $0x68] sm:$0xff]
        %v623 = vld [vmem:[#allocation2 + $0x70] sm:$0xff]
        %v624 = vld [vmem:[#allocation2 + $0x78] sm:$0xff]
        %v625 = vld [vmem:[#allocation2 + $0x80] sm:$0xff]
        %v626 = vld [vmem:[#allocation2 + $0x88] sm:$0xff]
        %v627 = vld [vmem:[#allocation2 + $0x90] sm:$0xff]
        %v628 = vld [vmem:[#allocation2 + $0x98] sm:$0xff]
        %v629 = vld [vmem:[#allocation2 + $0xa0] sm:$0xff]
        %v630 = vld [vmem:[#allocation2 + $0xa8] sm:$0xff]
        %v631 = vld [vmem:[#allocation2 + $0xb0] sm:$0xff]
        %v632 = vld [vmem:[#allocation2 + $0xb8] sm:$0xff]
        %v633 = vld [vmem:[#allocation2 + $0xc0] sm:$0xff]
        %v634 = vld [vmem:[#allocation2 + $0xc8] sm:$0xff]
        %v635 = vld [vmem:[#allocation2 + $0xd0] sm:$0xff]
        %v636 = vld [vmem:[#allocation2 + $0xd8] sm:$0xff]
        %v637 = vld [vmem:[#allocation2 + $0xe0] sm:$0xff]
        %v638 = vld [vmem:[#allocation2 + $0xe8] sm:$0xff]
        %v639 = vld [vmem:[#allocation2 + $0xf0] sm:$0xff]
        %v640 = vld [vmem:[#allocation2 + $0xf8] sm:$0xff]
        %v641 = vld [vmem:[#allocation2 + $0x100] sm:$0xff]
        %v642 = vld [vmem:[#allocation2 + $0x108] sm:$0xff]
        %v643 = vld [vmem:[#allocation2 + $0x110] sm:$0xff]
        %v644 = vld [vmem:[#allocation2 + $0x118] sm:$0xff]
        %v645 = vld [vmem:[#allocation2 + $0x120] sm:$0xff]
        %v646 = vld [vmem:[#allocation2 + $0x128] sm:$0xff]
        %v647 = vld [vmem:[#allocation2 + $0x130] sm:$0xff]
        %v648 = vld [vmem:[#allocation2 + $0x138] sm:$0xff]
        %v649 = vld [vmem:[#allocation2 + $0x140] sm:$0xff]
        %v650 = vld [vmem:[#allocation2 + $0x148] sm:$0xff]
        %v651 = vld [vmem:[#allocation2 + $0x150] sm:$0xff]
        %v652 = vld [vmem:[#allocation2 + $0x158] sm:$0xff]
        %v653 = vld [vmem:[#allocation2 + $0x160] sm:$0xff]
        %v654 = vld [vmem:[#allocation2 + $0x168] sm:$0xff]
        %v655 = vld [vmem:[#allocation2 + $0x170] sm:$0xff]
        %v656 = vld [vmem:[#allocation2 + $0x178] sm:$0xff]
        %v657 = vld [vmem:[#allocation2 + $0x180] sm:$0xff]
        %v658 = vld [vmem:[#allocation2 + $0x188] sm:$0xff]
        %v659 = vld [vmem:[#allocation2 + $0x190] sm:$0xff]
        %v660 = vld [vmem:[#allocation2 + $0x198] sm:$0xff]
        %v661 = vld [vmem:[#allocation2 + $0x1a0] sm:$0xff]
        %v662 = vld [vmem:[#allocation2 + $0x1a8] sm:$0xff]
        %v663 = vld [vmem:[#allocation2 + $0x1b0] sm:$0xff]
        %v664 = vld [vmem:[#allocation2 + $0x1b8] sm:$0xff]
        %v665 = vld [vmem:[#allocation2 + $0x1c0] sm:$0xff]
        %v666 = vld [vmem:[#allocation2 + $0x1c8] sm:$0xff]
        %v667 = vld [vmem:[#allocation2 + $0x1d0] sm:$0xff]
        %v668 = vld [vmem:[#allocation2 + $0x1d8] sm:$0xff]
        %v669 = vld [vmem:[#allocation2 + $0x1e0] sm:$0xff]
        %v670 = vld [vmem:[#allocation2 + $0x1e8] sm:$0xff]
        %v671 = vld [vmem:[#allocation2 + $0x1f0] sm:$0xff]
        %v672 = vld [vmem:[#allocation2 + $0x1f8] sm:$0xff]
        %v673 = vld [vmem:[%s483] sm:$0xff]
        %v674 = vld [vmem:[%s483 + $0x8] sm:$0xff]
        %v675 = vld [vmem:[%s483 + $0x10] sm:$0xff]
        %v676 = vld [vmem:[%s483 + $0x18] sm:$0xff]
        %v677 = vld [vmem:[%s483 + $0x20] sm:$0xff]
        %v678 = vld [vmem:[%s483 + $0x28] sm:$0xff]
        %v679 = vld [vmem:[%s483 + $0x30] sm:$0xff]
        %v680 = vld [vmem:[%s483 + $0x38] sm:$0xff]
        %v681 = vld [vmem:[%s483 + $0x40] sm:$0xff]
        %v682 = vld [vmem:[%s483 + $0x48] sm:$0xff]
        %v683 = vld [vmem:[%s483 + $0x50] sm:$0xff]
        %v684 = vld [vmem:[%s483 + $0x58] sm:$0xff]
        %v685 = vld [vmem:[%s483 + $0x60] sm:$0xff]
        %v686 = vld [vmem:[%s483 + $0x68] sm:$0xff]
        %v687 = vld [vmem:[%s483 + $0x70] sm:$0xff]
        %v688 = vld [vmem:[%s483 + $0x78] sm:$0xff]
        %v689 = vld [vmem:[%s483 + $0x80] sm:$0xff]
        %v690 = vld [vmem:[%s483 + $0x88] sm:$0xff]
        %v691 = vld [vmem:[%s483 + $0x90] sm:$0xff]
        %v692 = vld [vmem:[%s483 + $0x98] sm:$0xff]
        %v693 = vld [vmem:[%s483 + $0xa0] sm:$0xff]
        %v694 = vld [vmem:[%s483 + $0xa8] sm:$0xff]
        %v695 = vld [vmem:[%s483 + $0xb0] sm:$0xff]
        %v696 = vld [vmem:[%s483 + $0xb8] sm:$0xff]
        %v697 = vld [vmem:[%s483 + $0xc0] sm:$0xff]
        %v698 = vld [vmem:[%s483 + $0xc8] sm:$0xff]
        %v699 = vld [vmem:[%s483 + $0xd0] sm:$0xff]
        %v700 = vld [vmem:[%s483 + $0xd8] sm:$0xff]
        %v701 = vld [vmem:[%s483 + $0xe0] sm:$0xff]
        %v702 = vld [vmem:[%s483 + $0xe8] sm:$0xff]
        %v703 = vld [vmem:[%s483 + $0xf0] sm:$0xff]
        %v704 = vld [vmem:[%s483 + $0xf8] sm:$0xff]
        %v705 = vld [vmem:[%s483 + $0x100] sm:$0xff]
        %v706 = vld [vmem:[%s483 + $0x108] sm:$0xff]
        %v707 = vld [vmem:[%s483 + $0x110] sm:$0xff]
        %v708 = vld [vmem:[%s483 + $0x118] sm:$0xff]
        %v709 = vld [vmem:[%s483 + $0x120] sm:$0xff]
        %v710 = vld [vmem:[%s483 + $0x128] sm:$0xff]
        %v711 = vld [vmem:[%s483 + $0x130] sm:$0xff]
        %v712 = vld [vmem:[%s483 + $0x138] sm:$0xff]
        %v713 = vld [vmem:[%s483 + $0x140] sm:$0xff]
        %v714 = vld [vmem:[%s483 + $0x148] sm:$0xff]
        %v715 = vld [vmem:[%s483 + $0x150] sm:$0xff]
        %v716 = vld [vmem:[%s483 + $0x158] sm:$0xff]
        %v717 = vld [vmem:[%s483 + $0x160] sm:$0xff]
        %v718 = vld [vmem:[%s483 + $0x168] sm:$0xff]
        %v719 = vld [vmem:[%s483 + $0x170] sm:$0xff]
        %v720 = vld [vmem:[%s483 + $0x178] sm:$0xff]
        %v721 = vld [vmem:[%s483 + $0x180] sm:$0xff]
        %v722 = vld [vmem:[%s483 + $0x188] sm:$0xff]
        %v723 = vld [vmem:[%s483 + $0x190] sm:$0xff]
        %v724 = vld [vmem:[%s483 + $0x198] sm:$0xff]
        %v725 = vld [vmem:[%s483 + $0x1a0] sm:$0xff]
        %v726 = vld [vmem:[%s483 + $0x1a8] sm:$0xff]
        %v727 = vld [vmem:[%s483 + $0x1b0] sm:$0xff]
        %v728 = vld [vmem:[%s483 + $0x1b8] sm:$0xff]
        %v729 = vld [vmem:[%s483 + $0x1c0] sm:$0xff]
        %v730 = vld [vmem:[%s483 + $0x1c8] sm:$0xff]
        %v731 = vld [vmem:[%s483 + $0x1d0] sm:$0xff]
        %v732 = vld [vmem:[%s483 + $0x1d8] sm:$0xff]
        %v733 = vld [vmem:[%s483 + $0x1e0] sm:$0xff]
        %v734 = vld [vmem:[%s483 + $0x1e8] sm:$0xff]
        %v735 = vld [vmem:[%s483 + $0x1f0] sm:$0xff]
        %v736 = vld [vmem:[%s483 + $0x1f8] sm:$0xff]
        %v737 = vld [vmem:[%s527] sm:$0xf]
        %v738 = vld [vmem:[%s527 + $0x4] sm:$0xf]
        %v739 = vld [vmem:[%s527 + $0x8] sm:$0xf]
        %v740 = vld [vmem:[%s527 + $0xc] sm:$0xf]
        %v741 = vld [vmem:[%s527 + $0x10] sm:$0xf]
        %v742 = vld [vmem:[%s527 + $0x14] sm:$0xf]
        %v743 = vld [vmem:[%s527 + $0x18] sm:$0xf]
        %v744 = vld [vmem:[%s527 + $0x1c] sm:$0xf]
        %v745 = vld [vmem:[%s527 + $0x20] sm:$0xf]
        %v746 = vld [vmem:[%s527 + $0x24] sm:$0xf]
        %v747 = vld [vmem:[%s527 + $0x28] sm:$0xf]
        %v748 = vld [vmem:[%s527 + $0x2c] sm:$0xf]
        %v749 = vld [vmem:[%s527 + $0x30] sm:$0xf]
        %v750 = vld [vmem:[%s527 + $0x34] sm:$0xf]
        %v751 = vld [vmem:[%s527 + $0x38] sm:$0xf]
        %v752 = vld [vmem:[%s527 + $0x3c] sm:$0xf]
        %v753 = vld [vmem:[%s527 + $0x40] sm:$0xf]
        %v754 = vld [vmem:[%s527 + $0x44] sm:$0xf]
        %v755 = vld [vmem:[%s527 + $0x48] sm:$0xf]
        %v756 = vld [vmem:[%s527 + $0x4c] sm:$0xf]
        %v757 = vld [vmem:[%s527 + $0x50] sm:$0xf]
        %v758 = vld [vmem:[%s527 + $0x54] sm:$0xf]
        %v759 = vld [vmem:[%s527 + $0x58] sm:$0xf]
        %v760 = vld [vmem:[%s527 + $0x5c] sm:$0xf]
        %v761 = vld [vmem:[%s527 + $0x60] sm:$0xf]
        %v762 = vld [vmem:[%s527 + $0x64] sm:$0xf]
        %v763 = vld [vmem:[%s527 + $0x68] sm:$0xf]
        %v764 = vld [vmem:[%s527 + $0x6c] sm:$0xf]
        %v765 = vld [vmem:[%s527 + $0x70] sm:$0xf]
        %v766 = vld [vmem:[%s527 + $0x74] sm:$0xf]
        %v767 = vld [vmem:[%s527 + $0x78] sm:$0xf]
        %v768 = vld [vmem:[%s527 + $0x7c] sm:$0xf]
        %v833 = vunpack.c.l.b16 %v673
        %v834 = vunpack.c.h.b16 %v673
        %v835 = vunpack.c.l.b16 %v674
        %v836 = vunpack.c.h.b16 %v674
        %v837 = vunpack.c.l.b16 %v675
        %v838 = vunpack.c.h.b16 %v675
        %v839 = vunpack.c.l.b16 %v676
        %v840 = vunpack.c.h.b16 %v676
        %v841 = vunpack.c.l.b16 %v677
        %v842 = vunpack.c.h.b16 %v677
        %v843 = vunpack.c.l.b16 %v678
        %v844 = vunpack.c.h.b16 %v678
        %v845 = vunpack.c.l.b16 %v679
        %v846 = vunpack.c.h.b16 %v679
        %v847 = vunpack.c.l.b16 %v680
        %v848 = vunpack.c.h.b16 %v680
        %v849 = vunpack.c.l.b16 %v681
        %v850 = vunpack.c.h.b16 %v681
        %v851 = vunpack.c.l.b16 %v682
        %v852 = vunpack.c.h.b16 %v682
        %v853 = vunpack.c.l.b16 %v683
        %v854 = vunpack.c.h.b16 %v683
        %v855 = vunpack.c.l.b16 %v684
        %v856 = vunpack.c.h.b16 %v684
        %v857 = vunpack.c.l.b16 %v685
        %v858 = vunpack.c.h.b16 %v685
        %v859 = vunpack.c.l.b16 %v686
        %v860 = vunpack.c.h.b16 %v686
        %v861 = vunpack.c.l.b16 %v687
        %v862 = vunpack.c.h.b16 %v687
        %v863 = vunpack.c.l.b16 %v688
        %v864 = vunpack.c.h.b16 %v688
        %v865 = vunpack.c.l.b16 %v689
        %v866 = vunpack.c.h.b16 %v689
        %v867 = vunpack.c.l.b16 %v690
        %v868 = vunpack.c.h.b16 %v690
        %v869 = vunpack.c.l.b16 %v691
        %v870 = vunpack.c.h.b16 %v691
        %v871 = vunpack.c.l.b16 %v692
        %v872 = vunpack.c.h.b16 %v692
        %v873 = vunpack.c.l.b16 %v693
        %v874 = vunpack.c.h.b16 %v693
        %v875 = vunpack.c.l.b16 %v694
        %v876 = vunpack.c.h.b16 %v694
        %v877 = vunpack.c.l.b16 %v695
        %v878 = vunpack.c.h.b16 %v695
        %v879 = vunpack.c.l.b16 %v696
        %v880 = vunpack.c.h.b16 %v696
        %v881 = vunpack.c.l.b16 %v697
        %v882 = vunpack.c.h.b16 %v697
        %v883 = vunpack.c.l.b16 %v698
        %v884 = vunpack.c.h.b16 %v698
        %v885 = vunpack.c.l.b16 %v699
        %v886 = vunpack.c.h.b16 %v699
        %v887 = vunpack.c.l.b16 %v700
        %v888 = vunpack.c.h.b16 %v700
        %v889 = vunpack.c.l.b16 %v701
        %v890 = vunpack.c.h.b16 %v701
        %v891 = vunpack.c.l.b16 %v702
        %v892 = vunpack.c.h.b16 %v702
        %v893 = vunpack.c.l.b16 %v703
        %v894 = vunpack.c.h.b16 %v703
        %v895 = vunpack.c.l.b16 %v704
        %v896 = vunpack.c.h.b16 %v704
        %v897 = vunpack.c.l.b16 %v705
        %v898 = vunpack.c.h.b16 %v705
        %v899 = vunpack.c.l.b16 %v706
        %v900 = vunpack.c.h.b16 %v706
        %v901 = vunpack.c.l.b16 %v707
        %v902 = vunpack.c.h.b16 %v707
        %v903 = vunpack.c.l.b16 %v708
        %v904 = vunpack.c.h.b16 %v708
        %v905 = vunpack.c.l.b16 %v709
        %v906 = vunpack.c.h.b16 %v709
        %v907 = vunpack.c.l.b16 %v710
        %v908 = vunpack.c.h.b16 %v710
        %v909 = vunpack.c.l.b16 %v711
        %v910 = vunpack.c.h.b16 %v711
        %v911 = vunpack.c.l.b16 %v712
        %v912 = vunpack.c.h.b16 %v712
        %v913 = vunpack.c.l.b16 %v713
        %v914 = vunpack.c.h.b16 %v713
        %v915 = vunpack.c.l.b16 %v714
        %v916 = vunpack.c.h.b16 %v714
        %v917 = vunpack.c.l.b16 %v715
        %v918 = vunpack.c.h.b16 %v715
        %v919 = vunpack.c.l.b16 %v716
        %v920 = vunpack.c.h.b16 %v716
        %v921 = vunpack.c.l.b16 %v717
        %v922 = vunpack.c.h.b16 %v717
        %v923 = vunpack.c.l.b16 %v718
        %v924 = vunpack.c.h.b16 %v718
        %v925 = vunpack.c.l.b16 %v719
        %v926 = vunpack.c.h.b16 %v719
        %v927 = vunpack.c.l.b16 %v720
        %v928 = vunpack.c.h.b16 %v720
        %v929 = vunpack.c.l.b16 %v721
        %v930 = vunpack.c.h.b16 %v721
        %v931 = vunpack.c.l.b16 %v722
        %v932 = vunpack.c.h.b16 %v722
        %v933 = vunpack.c.l.b16 %v723
        %v934 = vunpack.c.h.b16 %v723
        %v935 = vunpack.c.l.b16 %v724
        %v936 = vunpack.c.h.b16 %v724
        %v937 = vunpack.c.l.b16 %v725
        %v938 = vunpack.c.h.b16 %v725
        %v939 = vunpack.c.l.b16 %v726
        %v940 = vunpack.c.h.b16 %v726
        %v941 = vunpack.c.l.b16 %v727
        %v942 = vunpack.c.h.b16 %v727
        %v943 = vunpack.c.l.b16 %v728
        %v944 = vunpack.c.h.b16 %v728
        %v945 = vunpack.c.l.b16 %v729
        %v946 = vunpack.c.h.b16 %v729
        %v947 = vunpack.c.l.b16 %v730
        %v948 = vunpack.c.h.b16 %v730
        %v949 = vunpack.c.l.b16 %v731
        %v950 = vunpack.c.h.b16 %v731
        %v951 = vunpack.c.l.b16 %v732
        %v952 = vunpack.c.h.b16 %v732
        %v953 = vunpack.c.l.b16 %v733
        %v954 = vunpack.c.h.b16 %v733
        %v955 = vunpack.c.l.b16 %v734
        %v956 = vunpack.c.h.b16 %v734
        %v957 = vunpack.c.l.b16 %v735
        %v958 = vunpack.c.h.b16 %v735
        %v959 = vunpack.c.l.b16 %v736
        %v960 = vunpack.c.h.b16 %v736
        %v961 = vpack.c.b16 %v835, %v833
        %v962 = vpack.c.b16 %v836, %v834
        %v963 = vpack.c.b16 %v839, %v837
        %v964 = vpack.c.b16 %v840, %v838
        %v965 = vpack.c.b16 %v843, %v841
        %v966 = vpack.c.b16 %v844, %v842
        %v967 = vpack.c.b16 %v847, %v845
        %v968 = vpack.c.b16 %v848, %v846
        %v969 = vpack.c.b16 %v851, %v849
        %v970 = vpack.c.b16 %v852, %v850
        %v971 = vpack.c.b16 %v855, %v853
        %v972 = vpack.c.b16 %v856, %v854
        %v973 = vpack.c.b16 %v859, %v857
        %v974 = vpack.c.b16 %v860, %v858
        %v975 = vpack.c.b16 %v863, %v861
        %v976 = vpack.c.b16 %v864, %v862
        %v977 = vpack.c.b16 %v867, %v865
        %v978 = vpack.c.b16 %v868, %v866
        %v979 = vpack.c.b16 %v871, %v869
        %v980 = vpack.c.b16 %v872, %v870
        %v981 = vpack.c.b16 %v875, %v873
        %v982 = vpack.c.b16 %v876, %v874
        %v983 = vpack.c.b16 %v879, %v877
        %v984 = vpack.c.b16 %v880, %v878
        %v985 = vpack.c.b16 %v883, %v881
        %v986 = vpack.c.b16 %v884, %v882
        %v987 = vpack.c.b16 %v887, %v885
        %v988 = vpack.c.b16 %v888, %v886
        %v989 = vpack.c.b16 %v891, %v889
        %v990 = vpack.c.b16 %v892, %v890
        %v991 = vpack.c.b16 %v895, %v893
        %v992 = vpack.c.b16 %v896, %v894
        %v993 = vpack.c.b16 %v899, %v897
        %v994 = vpack.c.b16 %v900, %v898
        %v995 = vpack.c.b16 %v903, %v901
        %v996 = vpack.c.b16 %v904, %v902
        %v997 = vpack.c.b16 %v907, %v905
        %v998 = vpack.c.b16 %v908, %v906
        %v999 = vpack.c.b16 %v911, %v909
        %v1000 = vpack.c.b16 %v912, %v910
        %v1001 = vpack.c.b16 %v915, %v913
        %v1002 = vpack.c.b16 %v916, %v914
        %v1003 = vpack.c.b16 %v919, %v917
        %v1004 = vpack.c.b16 %v920, %v918
        %v1005 = vpack.c.b16 %v923, %v921
        %v1006 = vpack.c.b16 %v924, %v922
        %v1007 = vpack.c.b16 %v927, %v925
        %v1008 = vpack.c.b16 %v928, %v926
        %v1009 = vpack.c.b16 %v931, %v929
        %v1010 = vpack.c.b16 %v932, %v930
        %v1011 = vpack.c.b16 %v935, %v933
        %v1012 = vpack.c.b16 %v936, %v934
        %v1013 = vpack.c.b16 %v939, %v937
        %v1014 = vpack.c.b16 %v940, %v938
        %v1015 = vpack.c.b16 %v943, %v941
        %v1016 = vpack.c.b16 %v944, %v942
        %v1017 = vpack.c.b16 %v947, %v945
        %v1018 = vpack.c.b16 %v948, %v946
        %v1019 = vpack.c.b16 %v951, %v949
        %v1020 = vpack.c.b16 %v952, %v950
        %v1021 = vpack.c.b16 %v955, %v953
        %v1022 = vpack.c.b16 %v956, %v954
        %v1023 = vpack.c.b16 %v959, %v957
        %v1024 = vpack.c.b16 %v960, %v958
        %v1121 = vunpack.c.l.b16 %v737
        %v1122 = vunpack.c.l.b16 %v738
        %v1123 = vunpack.c.l.b16 %v739
        %v1124 = vunpack.c.l.b16 %v740
        %v1125 = vunpack.c.l.b16 %v741
        %v1126 = vunpack.c.l.b16 %v742
        %v1127 = vunpack.c.l.b16 %v743
        %v1128 = vunpack.c.l.b16 %v744
        %v1129 = vunpack.c.l.b16 %v745
        %v1130 = vunpack.c.l.b16 %v746
        %v1131 = vunpack.c.l.b16 %v747
        %v1132 = vunpack.c.l.b16 %v748
        %v1133 = vunpack.c.l.b16 %v749
        %v1134 = vunpack.c.l.b16 %v750
        %v1135 = vunpack.c.l.b16 %v751
        %v1136 = vunpack.c.l.b16 %v752
        %v1137 = vunpack.c.l.b16 %v753
        %v1138 = vunpack.c.l.b16 %v754
        %v1139 = vunpack.c.l.b16 %v755
        %v1140 = vunpack.c.l.b16 %v756
        %v1141 = vunpack.c.l.b16 %v757
        %v1142 = vunpack.c.l.b16 %v758
        %v1143 = vunpack.c.l.b16 %v759
        %v1144 = vunpack.c.l.b16 %v760
        %v1145 = vunpack.c.l.b16 %v761
        %v1146 = vunpack.c.l.b16 %v762
        %v1147 = vunpack.c.l.b16 %v763
        %v1148 = vunpack.c.l.b16 %v764
        %v1149 = vunpack.c.l.b16 %v765
        %v1150 = vunpack.c.l.b16 %v766
        %v1151 = vunpack.c.l.b16 %v767
        %v1152 = vunpack.c.l.b16 %v768
        %v1153 = vpack.c.b16 %v1122, %v1121
        %v1154 = vpack.c.b16 %v1124, %v1123
        %v1155 = vpack.c.b16 %v1126, %v1125
        %v1156 = vpack.c.b16 %v1128, %v1127
        %v1157 = vpack.c.b16 %v1130, %v1129
        %v1158 = vpack.c.b16 %v1132, %v1131
        %v1159 = vpack.c.b16 %v1134, %v1133
        %v1160 = vpack.c.b16 %v1136, %v1135
        %v1161 = vpack.c.b16 %v1138, %v1137
        %v1162 = vpack.c.b16 %v1140, %v1139
        %v1163 = vpack.c.b16 %v1142, %v1141
        %v1164 = vpack.c.b16 %v1144, %v1143
        %v1165 = vpack.c.b16 %v1146, %v1145
        %v1166 = vpack.c.b16 %v1148, %v1147
        %v1167 = vpack.c.b16 %v1150, %v1149
        %v1168 = vpack.c.b16 %v1152, %v1151
        %1185 = vmatpush.bf16.msra.mxu0 %v1160
        %1186 = vmatpush.bf16.msra.mxu0 %v1159
        %1187 = vmatpush.bf16.msra.mxu0 %v1158
        %1188 = vmatpush.bf16.msra.mxu0 %v1157
        %1189 = vmatpush.bf16.msra.mxu0 %v1156
        %1190 = vmatpush.bf16.msra.mxu0 %v1155
        %1191 = vmatpush.bf16.msra.mxu0 %v1154
        %1192 = vmatpush.bf16.msra.mxu0 %v1153
        %1193 = vmatmul.bf16.gmra.mxu0 %v961
        %v1194 = vpop.f32.mrf.mxu0
        %v1195 = vadd.f32 0.0, %v1194
        %v1196 = vpop.f32.mrf.mxu0
        %v1197 = vadd.f32 0.0, %v1196
        %1198 = vmatmul.bf16.gmra.mxu0 %v963
        %v1199 = vpop.f32.mrf.mxu0
        %v1200 = vadd.f32 0.0, %v1199
        %v1201 = vpop.f32.mrf.mxu0
        %v1202 = vadd.f32 0.0, %v1201
        %1203 = vmatmul.bf16.gmra.mxu0 %v965
        %v1204 = vpop.f32.mrf.mxu0
        %v1205 = vadd.f32 0.0, %v1204
        %v1206 = vpop.f32.mrf.mxu0
        %v1207 = vadd.f32 0.0, %v1206
        %1208 = vmatmul.bf16.gmra.mxu0 %v967
        %v1209 = vpop.f32.mrf.mxu0
        %v1210 = vadd.f32 0.0, %v1209
        %v1211 = vpop.f32.mrf.mxu0
        %v1212 = vadd.f32 0.0, %v1211
        %1213 = vmatmul.bf16.gmra.mxu0 %v969
        %v1214 = vpop.f32.mrf.mxu0
        %v1215 = vadd.f32 0.0, %v1214
        %v1216 = vpop.f32.mrf.mxu0
        %v1217 = vadd.f32 0.0, %v1216
        %1218 = vmatmul.bf16.gmra.mxu0 %v971
        %v1219 = vpop.f32.mrf.mxu0
        %v1220 = vadd.f32 0.0, %v1219
        %v1221 = vpop.f32.mrf.mxu0
        %v1222 = vadd.f32 0.0, %v1221
        %1223 = vmatmul.bf16.gmra.mxu0 %v973
        %v1224 = vpop.f32.mrf.mxu0
        %v1225 = vadd.f32 0.0, %v1224
        %v1226 = vpop.f32.mrf.mxu0
        %v1227 = vadd.f32 0.0, %v1226
        %1228 = vmatmul.bf16.gmra.mxu0 %v975
        %v1229 = vpop.f32.mrf.mxu0
        %v1230 = vadd.f32 0.0, %v1229
        %v1231 = vpop.f32.mrf.mxu0
        %v1232 = vadd.f32 0.0, %v1231
        %1233 = vmatmul.bf16.gmra.mxu0 %v977
        %v1234 = vpop.f32.mrf.mxu0
        %v1235 = vadd.f32 0.0, %v1234
        %v1236 = vpop.f32.mrf.mxu0
        %v1237 = vadd.f32 0.0, %v1236
        %1238 = vmatmul.bf16.gmra.mxu0 %v979
        %v1239 = vpop.f32.mrf.mxu0
        %v1240 = vadd.f32 0.0, %v1239
        %v1241 = vpop.f32.mrf.mxu0
        %v1242 = vadd.f32 0.0, %v1241
        %1243 = vmatmul.bf16.gmra.mxu0 %v981
        %v1244 = vpop.f32.mrf.mxu0
        %v1245 = vadd.f32 0.0, %v1244
        %v1246 = vpop.f32.mrf.mxu0
        %v1247 = vadd.f32 0.0, %v1246
        %1248 = vmatmul.bf16.gmra.mxu0 %v983
        %v1249 = vpop.f32.mrf.mxu0
        %v1250 = vadd.f32 0.0, %v1249
        %v1251 = vpop.f32.mrf.mxu0
        %v1252 = vadd.f32 0.0, %v1251
        %1253 = vmatmul.bf16.gmra.mxu0 %v985
        %v1254 = vpop.f32.mrf.mxu0
        %v1255 = vadd.f32 0.0, %v1254
        %v1256 = vpop.f32.mrf.mxu0
        %v1257 = vadd.f32 0.0, %v1256
        %1258 = vmatmul.bf16.gmra.mxu0 %v987
        %v1259 = vpop.f32.mrf.mxu0
        %v1260 = vadd.f32 0.0, %v1259
        %v1261 = vpop.f32.mrf.mxu0
        %v1262 = vadd.f32 0.0, %v1261
        %1263 = vmatmul.bf16.gmra.mxu0 %v989
        %v1264 = vpop.f32.mrf.mxu0
        %v1265 = vadd.f32 0.0, %v1264
        %v1266 = vpop.f32.mrf.mxu0
        %v1267 = vadd.f32 0.0, %v1266
        %1268 = vmatmul.bf16.gmra.mxu0 %v991
        %v1269 = vpop.f32.mrf.mxu0
        %v1270 = vadd.f32 0.0, %v1269
        %v1271 = vpop.f32.mrf.mxu0
        %v1272 = vadd.f32 0.0, %v1271
        %1273 = vmatmul.bf16.gmra.mxu0 %v993
        %v1274 = vpop.f32.mrf.mxu0
        %v1275 = vadd.f32 0.0, %v1274
        %v1276 = vpop.f32.mrf.mxu0
        %v1277 = vadd.f32 0.0, %v1276
        %1278 = vmatmul.bf16.gmra.mxu0 %v995
        %v1279 = vpop.f32.mrf.mxu0
        %v1280 = vadd.f32 0.0, %v1279
        %v1281 = vpop.f32.mrf.mxu0
        %v1282 = vadd.f32 0.0, %v1281
        %1283 = vmatmul.bf16.gmra.mxu0 %v997
        %v1284 = vpop.f32.mrf.mxu0
        %v1285 = vadd.f32 0.0, %v1284
        %v1286 = vpop.f32.mrf.mxu0
        %v1287 = vadd.f32 0.0, %v1286
        %1288 = vmatmul.bf16.gmra.mxu0 %v999
        %v1289 = vpop.f32.mrf.mxu0
        %v1290 = vadd.f32 0.0, %v1289
        %v1291 = vpop.f32.mrf.mxu0
        %v1292 = vadd.f32 0.0, %v1291
        %1293 = vmatmul.bf16.gmra.mxu0 %v1001
        %v1294 = vpop.f32.mrf.mxu0
        %v1295 = vadd.f32 0.0, %v1294
        %v1296 = vpop.f32.mrf.mxu0
        %v1297 = vadd.f32 0.0, %v1296
        %1298 = vmatmul.bf16.gmra.mxu0 %v1003
        %v1299 = vpop.f32.mrf.mxu0
        %v1300 = vadd.f32 0.0, %v1299
        %v1301 = vpop.f32.mrf.mxu0
        %v1302 = vadd.f32 0.0, %v1301
        %1303 = vmatmul.bf16.gmra.mxu0 %v1005
        %v1304 = vpop.f32.mrf.mxu0
        %v1305 = vadd.f32 0.0, %v1304
        %v1306 = vpop.f32.mrf.mxu0
        %v1307 = vadd.f32 0.0, %v1306
        %1308 = vmatmul.bf16.gmra.mxu0 %v1007
        %v1309 = vpop.f32.mrf.mxu0
        %v1310 = vadd.f32 0.0, %v1309
        %v1311 = vpop.f32.mrf.mxu0
        %v1312 = vadd.f32 0.0, %v1311
        %1313 = vmatmul.bf16.gmra.mxu0 %v1009
        %v1314 = vpop.f32.mrf.mxu0
        %v1315 = vadd.f32 0.0, %v1314
        %v1316 = vpop.f32.mrf.mxu0
        %v1317 = vadd.f32 0.0, %v1316
        %1318 = vmatmul.bf16.gmra.mxu0 %v1011
        %v1319 = vpop.f32.mrf.mxu0
        %v1320 = vadd.f32 0.0, %v1319
        %v1321 = vpop.f32.mrf.mxu0
        %v1322 = vadd.f32 0.0, %v1321
        %1323 = vmatmul.bf16.gmra.mxu0 %v1013
        %v1324 = vpop.f32.mrf.mxu0
        %v1325 = vadd.f32 0.0, %v1324
        %v1326 = vpop.f32.mrf.mxu0
        %v1327 = vadd.f32 0.0, %v1326
        %1328 = vmatmul.bf16.gmra.mxu0 %v1015
        %v1329 = vpop.f32.mrf.mxu0
        %v1330 = vadd.f32 0.0, %v1329
        %v1331 = vpop.f32.mrf.mxu0
        %v1332 = vadd.f32 0.0, %v1331
        %1333 = vmatmul.bf16.gmra.mxu0 %v1017
        %v1334 = vpop.f32.mrf.mxu0
        %v1335 = vadd.f32 0.0, %v1334
        %v1336 = vpop.f32.mrf.mxu0
        %v1337 = vadd.f32 0.0, %v1336
        %1338 = vmatmul.bf16.gmra.mxu0 %v1019
        %v1339 = vpop.f32.mrf.mxu0
        %v1340 = vadd.f32 0.0, %v1339
        %v1341 = vpop.f32.mrf.mxu0
        %v1342 = vadd.f32 0.0, %v1341
        %1343 = vmatmul.bf16.gmra.mxu0 %v1021
        %v1344 = vpop.f32.mrf.mxu0
        %v1345 = vadd.f32 0.0, %v1344
        %v1346 = vpop.f32.mrf.mxu0
        %v1347 = vadd.f32 0.0, %v1346
        %1348 = vmatmul.bf16.gmra.mxu0 %v1023
        %v1349 = vpop.f32.mrf.mxu0
        %v1350 = vadd.f32 0.0, %v1349
        %v1351 = vpop.f32.mrf.mxu0
        %v1352 = vadd.f32 0.0, %v1351
        %1353 = vdwg.mxu0
        %1354 = vmatpush.bf16.msra.mxu0 %v1168
        %1355 = vmatpush.bf16.msra.mxu0 %v1167
        %1356 = vmatpush.bf16.msra.mxu0 %v1166
        %1357 = vmatpush.bf16.msra.mxu0 %v1165
        %1358 = vmatpush.bf16.msra.mxu0 %v1164
        %1359 = vmatpush.bf16.msra.mxu0 %v1163
        %1360 = vmatpush.bf16.msra.mxu0 %v1162
        %1361 = vmatpush.bf16.msra.mxu0 %v1161
        %1362 = vmatmul.bf16.gmra.mxu0 %v962
        %v1363 = vpop.f32.mrf.mxu0
        %v1364 = vadd.f32 %v1195, %v1363
        %v1365 = vpop.f32.mrf.mxu0
        %v1366 = vadd.f32 %v1197, %v1365
        %1367 = vmatmul.bf16.gmra.mxu0 %v964
        %v1368 = vpop.f32.mrf.mxu0
        %v1369 = vadd.f32 %v1200, %v1368
        %v1370 = vpop.f32.mrf.mxu0
        %v1371 = vadd.f32 %v1202, %v1370
        %1372 = vmatmul.bf16.gmra.mxu0 %v966
        %v1373 = vpop.f32.mrf.mxu0
        %v1374 = vadd.f32 %v1205, %v1373
        %v1375 = vpop.f32.mrf.mxu0
        %v1376 = vadd.f32 %v1207, %v1375
        %1377 = vmatmul.bf16.gmra.mxu0 %v968
        %v1378 = vpop.f32.mrf.mxu0
        %v1379 = vadd.f32 %v1210, %v1378
        %v1380 = vpop.f32.mrf.mxu0
        %v1381 = vadd.f32 %v1212, %v1380
        %1382 = vmatmul.bf16.gmra.mxu0 %v970
        %v1383 = vpop.f32.mrf.mxu0
        %v1384 = vadd.f32 %v1215, %v1383
        %v1385 = vpop.f32.mrf.mxu0
        %v1386 = vadd.f32 %v1217, %v1385
        %1387 = vmatmul.bf16.gmra.mxu0 %v972
        %v1388 = vpop.f32.mrf.mxu0
        %v1389 = vadd.f32 %v1220, %v1388
        %v1390 = vpop.f32.mrf.mxu0
        %v1391 = vadd.f32 %v1222, %v1390
        %1392 = vmatmul.bf16.gmra.mxu0 %v974
        %v1393 = vpop.f32.mrf.mxu0
        %v1394 = vadd.f32 %v1225, %v1393
        %v1395 = vpop.f32.mrf.mxu0
        %v1396 = vadd.f32 %v1227, %v1395
        %1397 = vmatmul.bf16.gmra.mxu0 %v976
        %v1398 = vpop.f32.mrf.mxu0
        %v1399 = vadd.f32 %v1230, %v1398
        %v1400 = vpop.f32.mrf.mxu0
        %v1401 = vadd.f32 %v1232, %v1400
        %1402 = vmatmul.bf16.gmra.mxu0 %v978
        %v1403 = vpop.f32.mrf.mxu0
        %v1404 = vadd.f32 %v1235, %v1403
        %v1405 = vpop.f32.mrf.mxu0
        %v1406 = vadd.f32 %v1237, %v1405
        %1407 = vmatmul.bf16.gmra.mxu0 %v980
        %v1408 = vpop.f32.mrf.mxu0
        %v1409 = vadd.f32 %v1240, %v1408
        %v1410 = vpop.f32.mrf.mxu0
        %v1411 = vadd.f32 %v1242, %v1410
        %1412 = vmatmul.bf16.gmra.mxu0 %v982
        %v1413 = vpop.f32.mrf.mxu0
        %v1414 = vadd.f32 %v1245, %v1413
        %v1415 = vpop.f32.mrf.mxu0
        %v1416 = vadd.f32 %v1247, %v1415
        %1417 = vmatmul.bf16.gmra.mxu0 %v984
        %v1418 = vpop.f32.mrf.mxu0
        %v1419 = vadd.f32 %v1250, %v1418
        %v1420 = vpop.f32.mrf.mxu0
        %v1421 = vadd.f32 %v1252, %v1420
        %1422 = vmatmul.bf16.gmra.mxu0 %v986
        %v1423 = vpop.f32.mrf.mxu0
        %v1424 = vadd.f32 %v1255, %v1423
        %v1425 = vpop.f32.mrf.mxu0
        %v1426 = vadd.f32 %v1257, %v1425
        %1427 = vmatmul.bf16.gmra.mxu0 %v988
        %v1428 = vpop.f32.mrf.mxu0
        %v1429 = vadd.f32 %v1260, %v1428
        %v1430 = vpop.f32.mrf.mxu0
        %v1431 = vadd.f32 %v1262, %v1430
        %1432 = vmatmul.bf16.gmra.mxu0 %v990
        %v1433 = vpop.f32.mrf.mxu0
        %v1434 = vadd.f32 %v1265, %v1433
        %v1435 = vpop.f32.mrf.mxu0
        %v1436 = vadd.f32 %v1267, %v1435
        %1437 = vmatmul.bf16.gmra.mxu0 %v992
        %v1438 = vpop.f32.mrf.mxu0
        %v1439 = vadd.f32 %v1270, %v1438
        %v1440 = vpop.f32.mrf.mxu0
        %v1441 = vadd.f32 %v1272, %v1440
        %1442 = vmatmul.bf16.gmra.mxu0 %v994
        %v1443 = vpop.f32.mrf.mxu0
        %v1444 = vadd.f32 %v1275, %v1443
        %v1445 = vpop.f32.mrf.mxu0
        %v1446 = vadd.f32 %v1277, %v1445
        %1447 = vmatmul.bf16.gmra.mxu0 %v996
        %v1448 = vpop.f32.mrf.mxu0
        %v1449 = vadd.f32 %v1280, %v1448
        %v1450 = vpop.f32.mrf.mxu0
        %v1451 = vadd.f32 %v1282, %v1450
        %1452 = vmatmul.bf16.gmra.mxu0 %v998
        %v1453 = vpop.f32.mrf.mxu0
        %v1454 = vadd.f32 %v1285, %v1453
        %v1455 = vpop.f32.mrf.mxu0
        %v1456 = vadd.f32 %v1287, %v1455
        %1457 = vmatmul.bf16.gmra.mxu0 %v1000
        %v1458 = vpop.f32.mrf.mxu0
        %v1459 = vadd.f32 %v1290, %v1458
        %v1460 = vpop.f32.mrf.mxu0
        %v1461 = vadd.f32 %v1292, %v1460
        %1462 = vmatmul.bf16.gmra.mxu0 %v1002
        %v1463 = vpop.f32.mrf.mxu0
        %v1464 = vadd.f32 %v1295, %v1463
        %v1465 = vpop.f32.mrf.mxu0
        %v1466 = vadd.f32 %v1297, %v1465
        %1467 = vmatmul.bf16.gmra.mxu0 %v1004
        %v1468 = vpop.f32.mrf.mxu0
        %v1469 = vadd.f32 %v1300, %v1468
        %v1470 = vpop.f32.mrf.mxu0
        %v1471 = vadd.f32 %v1302, %v1470
        %1472 = vmatmul.bf16.gmra.mxu0 %v1006
        %v1473 = vpop.f32.mrf.mxu0
        %v1474 = vadd.f32 %v1305, %v1473
        %v1475 = vpop.f32.mrf.mxu0
        %v1476 = vadd.f32 %v1307, %v1475
        %1477 = vmatmul.bf16.gmra.mxu0 %v1008
        %v1478 = vpop.f32.mrf.mxu0
        %v1479 = vadd.f32 %v1310, %v1478
        %v1480 = vpop.f32.mrf.mxu0
        %v1481 = vadd.f32 %v1312, %v1480
        %1482 = vmatmul.bf16.gmra.mxu0 %v1010
        %v1483 = vpop.f32.mrf.mxu0
        %v1484 = vadd.f32 %v1315, %v1483
        %v1485 = vpop.f32.mrf.mxu0
        %v1486 = vadd.f32 %v1317, %v1485
        %1487 = vmatmul.bf16.gmra.mxu0 %v1012
        %v1488 = vpop.f32.mrf.mxu0
        %v1489 = vadd.f32 %v1320, %v1488
        %v1490 = vpop.f32.mrf.mxu0
        %v1491 = vadd.f32 %v1322, %v1490
        %1492 = vmatmul.bf16.gmra.mxu0 %v1014
        %v1493 = vpop.f32.mrf.mxu0
        %v1494 = vadd.f32 %v1325, %v1493
        %v1495 = vpop.f32.mrf.mxu0
        %v1496 = vadd.f32 %v1327, %v1495
        %1497 = vmatmul.bf16.gmra.mxu0 %v1016
        %v1498 = vpop.f32.mrf.mxu0
        %v1499 = vadd.f32 %v1330, %v1498
        %v1500 = vpop.f32.mrf.mxu0
        %v1501 = vadd.f32 %v1332, %v1500
        %1502 = vmatmul.bf16.gmra.mxu0 %v1018
        %v1503 = vpop.f32.mrf.mxu0
        %v1504 = vadd.f32 %v1335, %v1503
        %v1505 = vpop.f32.mrf.mxu0
        %v1506 = vadd.f32 %v1337, %v1505
        %1507 = vmatmul.bf16.gmra.mxu0 %v1020
        %v1508 = vpop.f32.mrf.mxu0
        %v1509 = vadd.f32 %v1340, %v1508
        %v1510 = vpop.f32.mrf.mxu0
        %v1511 = vadd.f32 %v1342, %v1510
        %1512 = vmatmul.bf16.gmra.mxu0 %v1022
        %v1513 = vpop.f32.mrf.mxu0
        %v1514 = vadd.f32 %v1345, %v1513
        %v1515 = vpop.f32.mrf.mxu0
        %v1516 = vadd.f32 %v1347, %v1515
        %1517 = vmatmul.bf16.gmra.mxu0 %v1024
        %v1518 = vpop.f32.mrf.mxu0
        %v1519 = vadd.f32 %v1350, %v1518
        %v1520 = vpop.f32.mrf.mxu0
        %v1521 = vadd.f32 %v1352, %v1520
        %1522 = vdwg.mxu0
        %v1523 = vadd.f32 %v609, %v1364
        %v1524 = vadd.f32 %v610, %v1366
        %v1525 = vadd.f32 %v611, %v1369
        %v1526 = vadd.f32 %v612, %v1371
        %v1527 = vadd.f32 %v613, %v1374
        %v1528 = vadd.f32 %v614, %v1376
        %v1529 = vadd.f32 %v615, %v1379
        %v1530 = vadd.f32 %v616, %v1381
        %v1531 = vadd.f32 %v617, %v1384
        %v1532 = vadd.f32 %v618, %v1386
        %v1533 = vadd.f32 %v619, %v1389
        %v1534 = vadd.f32 %v620, %v1391
        %v1535 = vadd.f32 %v621, %v1394
        %v1536 = vadd.f32 %v622, %v1396
        %v1537 = vadd.f32 %v623, %v1399
        %v1538 = vadd.f32 %v624, %v1401
        %v1539 = vadd.f32 %v625, %v1404
        %v1540 = vadd.f32 %v626, %v1406
        %v1541 = vadd.f32 %v627, %v1409
        %v1542 = vadd.f32 %v628, %v1411
        %v1543 = vadd.f32 %v629, %v1414
        %v1544 = vadd.f32 %v630, %v1416
        %v1545 = vadd.f32 %v631, %v1419
        %v1546 = vadd.f32 %v632, %v1421
        %v1547 = vadd.f32 %v633, %v1424
        %v1548 = vadd.f32 %v634, %v1426
        %v1549 = vadd.f32 %v635, %v1429
        %v1550 = vadd.f32 %v636, %v1431
        %v1551 = vadd.f32 %v637, %v1434
        %v1552 = vadd.f32 %v638, %v1436
        %v1553 = vadd.f32 %v639, %v1439
        %v1554 = vadd.f32 %v640, %v1441
        %v1555 = vadd.f32 %v641, %v1444
        %v1556 = vadd.f32 %v642, %v1446
        %v1557 = vadd.f32 %v643, %v1449
        %v1558 = vadd.f32 %v644, %v1451
        %v1559 = vadd.f32 %v645, %v1454
        %v1560 = vadd.f32 %v646, %v1456
        %v1561 = vadd.f32 %v647, %v1459
        %v1562 = vadd.f32 %v648, %v1461
        %v1563 = vadd.f32 %v649, %v1464
        %v1564 = vadd.f32 %v650, %v1466
        %v1565 = vadd.f32 %v651, %v1469
        %v1566 = vadd.f32 %v652, %v1471
        %v1567 = vadd.f32 %v653, %v1474
        %v1568 = vadd.f32 %v654, %v1476
        %v1569 = vadd.f32 %v655, %v1479
        %v1570 = vadd.f32 %v656, %v1481
        %v1571 = vadd.f32 %v657, %v1484
        %v1572 = vadd.f32 %v658, %v1486
        %v1573 = vadd.f32 %v659, %v1489
        %v1574 = vadd.f32 %v660, %v1491
        %v1575 = vadd.f32 %v661, %v1494
        %v1576 = vadd.f32 %v662, %v1496
        %v1577 = vadd.f32 %v663, %v1499
        %v1578 = vadd.f32 %v664, %v1501
        %v1579 = vadd.f32 %v665, %v1504
        %v1580 = vadd.f32 %v666, %v1506
        %v1581 = vadd.f32 %v667, %v1509
        %v1582 = vadd.f32 %v668, %v1511
        %v1583 = vadd.f32 %v669, %v1514
        %v1584 = vadd.f32 %v670, %v1516
        %v1585 = vadd.f32 %v671, %v1519
        %v1586 = vadd.f32 %v672, %v1521
        %1587 = vst [vmem:[#allocation2] sm:$0xff] %v1523
        %1588 = vst [vmem:[#allocation2 + $0x8] sm:$0xff] %v1524
        %1589 = vst [vmem:[#allocation2 + $0x10] sm:$0xff] %v1525
        %1590 = vst [vmem:[#allocation2 + $0x18] sm:$0xff] %v1526
        %1591 = vst [vmem:[#allocation2 + $0x20] sm:$0xff] %v1527
        %1592 = vst [vmem:[#allocation2 + $0x28] sm:$0xff] %v1528
        %1593 = vst [vmem:[#allocation2 + $0x30] sm:$0xff] %v1529
        %1594 = vst [vmem:[#allocation2 + $0x38] sm:$0xff] %v1530
        %1595 = vst [vmem:[#allocation2 + $0x40] sm:$0xff] %v1531
        %1596 = vst [vmem:[#allocation2 + $0x48] sm:$0xff] %v1532
        %1597 = vst [vmem:[#allocation2 + $0x50] sm:$0xff] %v1533
        %1598 = vst [vmem:[#allocation2 + $0x58] sm:$0xff] %v1534
        %1599 = vst [vmem:[#allocation2 + $0x60] sm:$0xff] %v1535
        %1600 = vst [vmem:[#allocation2 + $0x68] sm:$0xff] %v1536
        %1601 = vst [vmem:[#allocation2 + $0x70] sm:$0xff] %v1537
        %1602 = vst [vmem:[#allocation2 + $0x78] sm:$0xff] %v1538
        %1603 = vst [vmem:[#allocation2 + $0x80] sm:$0xff] %v1539
        %1604 = vst [vmem:[#allocation2 + $0x88] sm:$0xff] %v1540
        %1605 = vst [vmem:[#allocation2 + $0x90] sm:$0xff] %v1541
        %1606 = vst [vmem:[#allocation2 + $0x98] sm:$0xff] %v1542
        %1607 = vst [vmem:[#allocation2 + $0xa0] sm:$0xff] %v1543
        %1608 = vst [vmem:[#allocation2 + $0xa8] sm:$0xff] %v1544
        %1609 = vst [vmem:[#allocation2 + $0xb0] sm:$0xff] %v1545
        %1610 = vst [vmem:[#allocation2 + $0xb8] sm:$0xff] %v1546
        %1611 = vst [vmem:[#allocation2 + $0xc0] sm:$0xff] %v1547
        %1612 = vst [vmem:[#allocation2 + $0xc8] sm:$0xff] %v1548
        %1613 = vst [vmem:[#allocation2 + $0xd0] sm:$0xff] %v1549
        %1614 = vst [vmem:[#allocation2 + $0xd8] sm:$0xff] %v1550
        %1615 = vst [vmem:[#allocation2 + $0xe0] sm:$0xff] %v1551
        %1616 = vst [vmem:[#allocation2 + $0xe8] sm:$0xff] %v1552
        %1617 = vst [vmem:[#allocation2 + $0xf0] sm:$0xff] %v1553
        %1618 = vst [vmem:[#allocation2 + $0xf8] sm:$0xff] %v1554
        %1619 = vst [vmem:[#allocation2 + $0x100] sm:$0xff] %v1555
        %1620 = vst [vmem:[#allocation2 + $0x108] sm:$0xff] %v1556
        %1621 = vst [vmem:[#allocation2 + $0x110] sm:$0xff] %v1557
        %1622 = vst [vmem:[#allocation2 + $0x118] sm:$0xff] %v1558
        %1623 = vst [vmem:[#allocation2 + $0x120] sm:$0xff] %v1559
        %1624 = vst [vmem:[#allocation2 + $0x128] sm:$0xff] %v1560
        %1625 = vst [vmem:[#allocation2 + $0x130] sm:$0xff] %v1561
        %1626 = vst [vmem:[#allocation2 + $0x138] sm:$0xff] %v1562
        %1627 = vst [vmem:[#allocation2 + $0x140] sm:$0xff] %v1563
        %1628 = vst [vmem:[#allocation2 + $0x148] sm:$0xff] %v1564
        %1629 = vst [vmem:[#allocation2 + $0x150] sm:$0xff] %v1565
        %1630 = vst [vmem:[#allocation2 + $0x158] sm:$0xff] %v1566
        %1631 = vst [vmem:[#allocation2 + $0x160] sm:$0xff] %v1567
        %1632 = vst [vmem:[#allocation2 + $0x168] sm:$0xff] %v1568
        %1633 = vst [vmem:[#allocation2 + $0x170] sm:$0xff] %v1569
        %1634 = vst [vmem:[#allocation2 + $0x178] sm:$0xff] %v1570
        %1635 = vst [vmem:[#allocation2 + $0x180] sm:$0xff] %v1571
        %1636 = vst [vmem:[#allocation2 + $0x188] sm:$0xff] %v1572
        %1637 = vst [vmem:[#allocation2 + $0x190] sm:$0xff] %v1573
        %1638 = vst [vmem:[#allocation2 + $0x198] sm:$0xff] %v1574
        %1639 = vst [vmem:[#allocation2 + $0x1a0] sm:$0xff] %v1575
        %1640 = vst [vmem:[#allocation2 + $0x1a8] sm:$0xff] %v1576
        %1641 = vst [vmem:[#allocation2 + $0x1b0] sm:$0xff] %v1577
        %1642 = vst [vmem:[#allocation2 + $0x1b8] sm:$0xff] %v1578
        %1643 = vst [vmem:[#allocation2 + $0x1c0] sm:$0xff] %v1579
        %1644 = vst [vmem:[#allocation2 + $0x1c8] sm:$0xff] %v1580
        %1645 = vst [vmem:[#allocation2 + $0x1d0] sm:$0xff] %v1581
        %1646 = vst [vmem:[#allocation2 + $0x1d8] sm:$0xff] %v1582
        %1647 = vst [vmem:[#allocation2 + $0x1e0] sm:$0xff] %v1583
        %1648 = vst [vmem:[#allocation2 + $0x1e8] sm:$0xff] %v1584
        %1649 = vst [vmem:[#allocation2 + $0x1f0] sm:$0xff] %v1585
        %1650 = vst [vmem:[#allocation2 + $0x1f8] sm:$0xff] %v1586
        %p1651 = scmp.eq.s32.totalorder %s21, 12
        // Predicated region
        $region75: #{generator_forward.15} parent=65 // pred_check
          %p1652 = pneg %p1651
        $region76: #{generator_forward.15} parent=65 // pred_check_branch
          %1654 = sbr.rel (%p1652) target = $region78
        $region77: #{generator_forward.15} parent=65 // pred_region
          %v1655 = vld [vmem:[#allocation2] sm:$0xff]
          %v1656 = vld [vmem:[#allocation2 + $0x8] sm:$0xff]
          %v1657 = vld [vmem:[#allocation2 + $0x10] sm:$0xff]
          %v1658 = vld [vmem:[#allocation2 + $0x18] sm:$0xff]
          %v1659 = vld [vmem:[#allocation2 + $0x20] sm:$0xff]
          %v1660 = vld [vmem:[#allocation2 + $0x28] sm:$0xff]
          %v1661 = vld [vmem:[#allocation2 + $0x30] sm:$0xff]
          %v1662 = vld [vmem:[#allocation2 + $0x38] sm:$0xff]
          %v1663 = vld [vmem:[#allocation2 + $0x40] sm:$0xff]
          %v1664 = vld [vmem:[#allocation2 + $0x48] sm:$0xff]
          %v1665 = vld [vmem:[#allocation2 + $0x50] sm:$0xff]
          %v1666 = vld [vmem:[#allocation2 + $0x58] sm:$0xff]
          %v1667 = vld [vmem:[#allocation2 + $0x60] sm:$0xff]
          %v1668 = vld [vmem:[#allocation2 + $0x68] sm:$0xff]
          %v1669 = vld [vmem:[#allocation2 + $0x70] sm:$0xff]
          %v1670 = vld [vmem:[#allocation2 + $0x78] sm:$0xff]
          %v1671 = vld [vmem:[#allocation2 + $0x80] sm:$0xff]
          %v1672 = vld [vmem:[#allocation2 + $0x88] sm:$0xff]
          %v1673 = vld [vmem:[#allocation2 + $0x90] sm:$0xff]
          %v1674 = vld [vmem:[#allocation2 + $0x98] sm:$0xff]
          %v1675 = vld [vmem:[#allocation2 + $0xa0] sm:$0xff]
          %v1676 = vld [vmem:[#allocation2 + $0xa8] sm:$0xff]
          %v1677 = vld [vmem:[#allocation2 + $0xb0] sm:$0xff]
          %v1678 = vld [vmem:[#allocation2 + $0xb8] sm:$0xff]
          %v1679 = vld [vmem:[#allocation2 + $0xc0] sm:$0xff]
          %v1680 = vld [vmem:[#allocation2 + $0xc8] sm:$0xff]
          %v1681 = vld [vmem:[#allocation2 + $0xd0] sm:$0xff]
          %v1682 = vld [vmem:[#allocation2 + $0xd8] sm:$0xff]
          %v1683 = vld [vmem:[#allocation2 + $0xe0] sm:$0xff]
          %v1684 = vld [vmem:[#allocation2 + $0xe8] sm:$0xff]
          %v1685 = vld [vmem:[#allocation2 + $0xf0] sm:$0xff]
          %v1686 = vld [vmem:[#allocation2 + $0xf8] sm:$0xff]
          %v1687 = vld [vmem:[#allocation2 + $0x100] sm:$0xff]
          %v1688 = vld [vmem:[#allocation2 + $0x108] sm:$0xff]
          %v1689 = vld [vmem:[#allocation2 + $0x110] sm:$0xff]
          %v1690 = vld [vmem:[#allocation2 + $0x118] sm:$0xff]
          %v1691 = vld [vmem:[#allocation2 + $0x120] sm:$0xff]
          %v1692 = vld [vmem:[#allocation2 + $0x128] sm:$0xff]
          %v1693 = vld [vmem:[#allocation2 + $0x130] sm:$0xff]
          %v1694 = vld [vmem:[#allocation2 + $0x138] sm:$0xff]
          %v1695 = vld [vmem:[#allocation2 + $0x140] sm:$0xff]
          %v1696 = vld [vmem:[#allocation2 + $0x148] sm:$0xff]
          %v1697 = vld [vmem:[#allocation2 + $0x150] sm:$0xff]
          %v1698 = vld [vmem:[#allocation2 + $0x158] sm:$0xff]
          %v1699 = vld [vmem:[#allocation2 + $0x160] sm:$0xff]
          %v1700 = vld [vmem:[#allocation2 + $0x168] sm:$0xff]
          %v1701 = vld [vmem:[#allocation2 + $0x170] sm:$0xff]
          %v1702 = vld [vmem:[#allocation2 + $0x178] sm:$0xff]
          %v1703 = vld [vmem:[#allocation2 + $0x180] sm:$0xff]
          %v1704 = vld [vmem:[#allocation2 + $0x188] sm:$0xff]
          %v1705 = vld [vmem:[#allocation2 + $0x190] sm:$0xff]
          %v1706 = vld [vmem:[#allocation2 + $0x198] sm:$0xff]
          %v1707 = vld [vmem:[#allocation2 + $0x1a0] sm:$0xff]
          %v1708 = vld [vmem:[#allocation2 + $0x1a8] sm:$0xff]
          %v1709 = vld [vmem:[#allocation2 + $0x1b0] sm:$0xff]
          %v1710 = vld [vmem:[#allocation2 + $0x1b8] sm:$0xff]
          %v1711 = vld [vmem:[#allocation2 + $0x1c0] sm:$0xff]
          %v1712 = vld [vmem:[#allocation2 + $0x1c8] sm:$0xff]
          %v1713 = vld [vmem:[#allocation2 + $0x1d0] sm:$0xff]
          %v1714 = vld [vmem:[#allocation2 + $0x1d8] sm:$0xff]
          %v1715 = vld [vmem:[#allocation2 + $0x1e0] sm:$0xff]
          %v1716 = vld [vmem:[#allocation2 + $0x1e8] sm:$0xff]
          %v1717 = vld [vmem:[#allocation2 + $0x1f0] sm:$0xff]
          %v1718 = vld [vmem:[#allocation2 + $0x1f8] sm:$0xff]
          %v1719 = vld [vmem:[%s531] sm:$0x1]
          %v1721 = vperm.slane %v1719, 0
          %v1723 = vadd.f32 %v1655, %v1721
          %v1724 = vadd.f32 %v1656, %v1721
          %v1725 = vadd.f32 %v1657, %v1721
          %v1726 = vadd.f32 %v1658, %v1721
          %v1727 = vadd.f32 %v1659, %v1721
          %v1728 = vadd.f32 %v1660, %v1721
          %v1729 = vadd.f32 %v1661, %v1721
          %v1730 = vadd.f32 %v1662, %v1721
          %v1731 = vadd.f32 %v1663, %v1721
          %v1732 = vadd.f32 %v1664, %v1721
          %v1733 = vadd.f32 %v1665, %v1721
          %v1734 = vadd.f32 %v1666, %v1721
          %v1735 = vadd.f32 %v1667, %v1721
          %v1736 = vadd.f32 %v1668, %v1721
          %v1737 = vadd.f32 %v1669, %v1721
          %v1738 = vadd.f32 %v1670, %v1721
          %v1739 = vadd.f32 %v1671, %v1721
          %v1740 = vadd.f32 %v1672, %v1721
          %v1741 = vadd.f32 %v1673, %v1721
          %v1742 = vadd.f32 %v1674, %v1721
          %v1743 = vadd.f32 %v1675, %v1721
          %v1744 = vadd.f32 %v1676, %v1721
          %v1745 = vadd.f32 %v1677, %v1721
          %v1746 = vadd.f32 %v1678, %v1721
          %v1747 = vadd.f32 %v1679, %v1721
          %v1748 = vadd.f32 %v1680, %v1721
          %v1749 = vadd.f32 %v1681, %v1721
          %v1750 = vadd.f32 %v1682, %v1721
          %v1751 = vadd.f32 %v1683, %v1721
          %v1752 = vadd.f32 %v1684, %v1721
          %v1753 = vadd.f32 %v1685, %v1721
          %v1754 = vadd.f32 %v1686, %v1721
          %v1755 = vadd.f32 %v1687, %v1721
          %v1756 = vadd.f32 %v1688, %v1721
          %v1757 = vadd.f32 %v1689, %v1721
          %v1758 = vadd.f32 %v1690, %v1721
          %v1759 = vadd.f32 %v1691, %v1721
          %v1760 = vadd.f32 %v1692, %v1721
          %v1761 = vadd.f32 %v1693, %v1721
          %v1762 = vadd.f32 %v1694, %v1721
          %v1763 = vadd.f32 %v1695, %v1721
          %v1764 = vadd.f32 %v1696, %v1721
          %v1765 = vadd.f32 %v1697, %v1721
          %v1766 = vadd.f32 %v1698, %v1721
          %v1767 = vadd.f32 %v1699, %v1721
          %v1768 = vadd.f32 %v1700, %v1721
          %v1769 = vadd.f32 %v1701, %v1721
          %v1770 = vadd.f32 %v1702, %v1721
          %v1771 = vadd.f32 %v1703, %v1721
          %v1772 = vadd.f32 %v1704, %v1721
          %v1773 = vadd.f32 %v1705, %v1721
          %v1774 = vadd.f32 %v1706, %v1721
          %v1775 = vadd.f32 %v1707, %v1721
          %v1776 = vadd.f32 %v1708, %v1721
          %v1777 = vadd.f32 %v1709, %v1721
          %v1778 = vadd.f32 %v1710, %v1721
          %v1779 = vadd.f32 %v1711, %v1721
          %v1780 = vadd.f32 %v1712, %v1721
          %v1781 = vadd.f32 %v1713, %v1721
          %v1782 = vadd.f32 %v1714, %v1721
          %v1783 = vadd.f32 %v1715, %v1721
          %v1784 = vadd.f32 %v1716, %v1721
          %v1785 = vadd.f32 %v1717, %v1721
          %v1786 = vadd.f32 %v1718, %v1721
          %v1787 = vtanh.pop %v1723
          %v1788 = vtanh.pop %v1724
          %v1789 = vtanh.pop %v1725
          %v1790 = vtanh.pop %v1726
          %v1791 = vtanh.pop %v1727
          %v1792 = vtanh.pop %v1728
          %v1793 = vtanh.pop %v1729
          %v1794 = vtanh.pop %v1730
          %v1795 = vtanh.pop %v1731
          %v1796 = vtanh.pop %v1732
          %v1797 = vtanh.pop %v1733
          %v1798 = vtanh.pop %v1734
          %v1799 = vtanh.pop %v1735
          %v1800 = vtanh.pop %v1736
          %v1801 = vtanh.pop %v1737
          %v1802 = vtanh.pop %v1738
          %v1803 = vtanh.pop %v1739
          %v1804 = vtanh.pop %v1740
          %v1805 = vtanh.pop %v1741
          %v1806 = vtanh.pop %v1742
          %v1807 = vtanh.pop %v1743
          %v1808 = vtanh.pop %v1744
          %v1809 = vtanh.pop %v1745
          %v1810 = vtanh.pop %v1746
          %v1811 = vtanh.pop %v1747
          %v1812 = vtanh.pop %v1748
          %v1813 = vtanh.pop %v1749
          %v1814 = vtanh.pop %v1750
          %v1815 = vtanh.pop %v1751
          %v1816 = vtanh.pop %v1752
          %v1817 = vtanh.pop %v1753
          %v1818 = vtanh.pop %v1754
          %v1819 = vtanh.pop %v1755
          %v1820 = vtanh.pop %v1756
          %v1821 = vtanh.pop %v1757
          %v1822 = vtanh.pop %v1758
          %v1823 = vtanh.pop %v1759
          %v1824 = vtanh.pop %v1760
          %v1825 = vtanh.pop %v1761
          %v1826 = vtanh.pop %v1762
          %v1827 = vtanh.pop %v1763
          %v1828 = vtanh.pop %v1764
          %v1829 = vtanh.pop %v1765
          %v1830 = vtanh.pop %v1766
          %v1831 = vtanh.pop %v1767
          %v1832 = vtanh.pop %v1768
          %v1833 = vtanh.pop %v1769
          %v1834 = vtanh.pop %v1770
          %v1835 = vtanh.pop %v1771
          %v1836 = vtanh.pop %v1772
          %v1837 = vtanh.pop %v1773
          %v1838 = vtanh.pop %v1774
          %v1839 = vtanh.pop %v1775
          %v1840 = vtanh.pop %v1776
          %v1841 = vtanh.pop %v1777
          %v1842 = vtanh.pop %v1778
          %v1843 = vtanh.pop %v1779
          %v1844 = vtanh.pop %v1780
          %v1845 = vtanh.pop %v1781
          %v1846 = vtanh.pop %v1782
          %v1847 = vtanh.pop %v1783
          %v1848 = vtanh.pop %v1784
          %v1849 = vtanh.pop %v1785
          %v1850 = vtanh.pop %v1786
          %1851 = vst [vmem:[%s539] sm:$0xff] %v1787
          %1852 = vst [vmem:[%s539 + $0x8] sm:$0xff] %v1788
          %1853 = vst [vmem:[%s539 + $0x10] sm:$0xff] %v1789
          %1854 = vst [vmem:[%s539 + $0x18] sm:$0xff] %v1790
          %1855 = vst [vmem:[%s539 + $0x20] sm:$0xff] %v1791
          %1856 = vst [vmem:[%s539 + $0x28] sm:$0xff] %v1792
          %1857 = vst [vmem:[%s539 + $0x30] sm:$0xff] %v1793
          %1858 = vst [vmem:[%s539 + $0x38] sm:$0xff] %v1794
          %1859 = vst [vmem:[%s539 + $0x40] sm:$0xff] %v1795
          %1860 = vst [vmem:[%s539 + $0x48] sm:$0xff] %v1796
          %1861 = vst [vmem:[%s539 + $0x50] sm:$0xff] %v1797
          %1862 = vst [vmem:[%s539 + $0x58] sm:$0xff] %v1798
          %1863 = vst [vmem:[%s539 + $0x60] sm:$0xff] %v1799
          %1864 = vst [vmem:[%s539 + $0x68] sm:$0xff] %v1800
          %1865 = vst [vmem:[%s539 + $0x70] sm:$0xff] %v1801
          %1866 = vst [vmem:[%s539 + $0x78] sm:$0xff] %v1802
          %1867 = vst [vmem:[%s539 + $0x80] sm:$0xff] %v1803
          %1868 = vst [vmem:[%s539 + $0x88] sm:$0xff] %v1804
          %1869 = vst [vmem:[%s539 + $0x90] sm:$0xff] %v1805
          %1870 = vst [vmem:[%s539 + $0x98] sm:$0xff] %v1806
          %1871 = vst [vmem:[%s539 + $0xa0] sm:$0xff] %v1807
          %1872 = vst [vmem:[%s539 + $0xa8] sm:$0xff] %v1808
          %1873 = vst [vmem:[%s539 + $0xb0] sm:$0xff] %v1809
          %1874 = vst [vmem:[%s539 + $0xb8] sm:$0xff] %v1810
          %1875 = vst [vmem:[%s539 + $0xc0] sm:$0xff] %v1811
          %1876 = vst [vmem:[%s539 + $0xc8] sm:$0xff] %v1812
          %1877 = vst [vmem:[%s539 + $0xd0] sm:$0xff] %v1813
          %1878 = vst [vmem:[%s539 + $0xd8] sm:$0xff] %v1814
          %1879 = vst [vmem:[%s539 + $0xe0] sm:$0xff] %v1815
          %1880 = vst [vmem:[%s539 + $0xe8] sm:$0xff] %v1816
          %1881 = vst [vmem:[%s539 + $0xf0] sm:$0xff] %v1817
          %1882 = vst [vmem:[%s539 + $0xf8] sm:$0xff] %v1818
          %1883 = vst [vmem:[%s539 + $0x100] sm:$0xff] %v1819
          %1884 = vst [vmem:[%s539 + $0x108] sm:$0xff] %v1820
          %1885 = vst [vmem:[%s539 + $0x110] sm:$0xff] %v1821
          %1886 = vst [vmem:[%s539 + $0x118] sm:$0xff] %v1822
          %1887 = vst [vmem:[%s539 + $0x120] sm:$0xff] %v1823
          %1888 = vst [vmem:[%s539 + $0x128] sm:$0xff] %v1824
          %1889 = vst [vmem:[%s539 + $0x130] sm:$0xff] %v1825
          %1890 = vst [vmem:[%s539 + $0x138] sm:$0xff] %v1826
          %1891 = vst [vmem:[%s539 + $0x140] sm:$0xff] %v1827
          %1892 = vst [vmem:[%s539 + $0x148] sm:$0xff] %v1828
          %1893 = vst [vmem:[%s539 + $0x150] sm:$0xff] %v1829
          %1894 = vst [vmem:[%s539 + $0x158] sm:$0xff] %v1830
          %1895 = vst [vmem:[%s539 + $0x160] sm:$0xff] %v1831
          %1896 = vst [vmem:[%s539 + $0x168] sm:$0xff] %v1832
          %1897 = vst [vmem:[%s539 + $0x170] sm:$0xff] %v1833
          %1898 = vst [vmem:[%s539 + $0x178] sm:$0xff] %v1834
          %1899 = vst [vmem:[%s539 + $0x180] sm:$0xff] %v1835
          %1900 = vst [vmem:[%s539 + $0x188] sm:$0xff] %v1836
          %1901 = vst [vmem:[%s539 + $0x190] sm:$0xff] %v1837
          %1902 = vst [vmem:[%s539 + $0x198] sm:$0xff] %v1838
          %1903 = vst [vmem:[%s539 + $0x1a0] sm:$0xff] %v1839
          %1904 = vst [vmem:[%s539 + $0x1a8] sm:$0xff] %v1840
          %1905 = vst [vmem:[%s539 + $0x1b0] sm:$0xff] %v1841
          %1906 = vst [vmem:[%s539 + $0x1b8] sm:$0xff] %v1842
          %1907 = vst [vmem:[%s539 + $0x1c0] sm:$0xff] %v1843
          %1908 = vst [vmem:[%s539 + $0x1c8] sm:$0xff] %v1844
          %1909 = vst [vmem:[%s539 + $0x1d0] sm:$0xff] %v1845
          %1910 = vst [vmem:[%s539 + $0x1d8] sm:$0xff] %v1846
          %1911 = vst [vmem:[%s539 + $0x1e0] sm:$0xff] %v1847
          %1912 = vst [vmem:[%s539 + $0x1e8] sm:$0xff] %v1848
          %1913 = vst [vmem:[%s539 + $0x1f0] sm:$0xff] %v1849
          %1914 = vst [vmem:[%s539 + $0x1f8] sm:$0xff] %v1850
        $region78: #{generator_forward.15} parent=65 // pred_fallthru
          _
        %s1915 = smul.u32 64, %s19
        %p1916 = scmp.lt.s32.totalorder %s1915, 63
        %s1917 = scalar_select %p1916, %s1915, 63
        %p1918 = scmp.lt.s32.totalorder %s20, 0
        %s1919 = scalar_select %p1918, %s20, 0
        %s1920 = sadd.s32 %s1919, %s1917
        %s1921 = smul.addr %s1920, 8
        %s1922 = scalar_lea.vmem %s3, %s1921
        // Predicated region
        $region79: #{generator_forward.15} parent=65 // pred_check
          %p1923 = pneg %p135
        $region80: #{generator_forward.15} parent=65 // pred_check_branch
          %1925 = sbr.rel (%p1923) target = $region82
        $region81: #{generator_forward.15} parent=65 // pred_region
          %s1926 = smul.u32 64, %s19
        $region82: #{generator_forward.15} parent=65 // pred_fallthru
          _
        // Predicated region
        $region83: #{generator_forward.15} parent=65 // pred_check
          %p1927 = pneg %p135
        $region84: #{generator_forward.15} parent=65 // pred_check_branch
          %1929 = sbr.rel (%p1927) target = $region86
        $region85: #{generator_forward.15} parent=65 // pred_region
          %s1930 = smul.u32 64, %s19
          %p1931 = scmp.lt.s32.totalorder %s1930, 63
          %s1932 = scalar_select %p1931, %s1930, 63
          %p1933 = scmp.lt.s32.totalorder %s20, 0
          %s1934 = scalar_select %p1933, %s20, 0
          %s1935 = sadd.s32 %s1934, %s1932
          %s1936 = smul.addr %s1935, 8
          %s1937 = scalar_lea.vmem %s3, %s1936
        $region86: #{generator_forward.15} parent=65 // pred_fallthru
          _
      $region66: #{generator_forward.15} parent=5 // pred_fallthru
        _
      %p1938 = scmp.le.s32.totalorder 2, %s9
      // Predicated region
      $region87: #{generator_forward.15} parent=5 // pred_check
        %p1939 = pneg %p1938
      $region88: #{generator_forward.15} parent=5 // pred_check_branch
        %1941 = sbr.rel (%p1939) target = $region90
      $region89: #{generator_forward.15} parent=5 // pred_region
        %s1942 = ssub.s32 %s9, 2
      $region90: #{generator_forward.15} parent=5 // pred_fallthru
        _
    $region6: #{generator_forward.15} parent=1 // loop_footer
      %s13 = sadd.s32 1, %s9
    $region7: #{generator_forward.15} parent=1 // loop_footer_branch
      %8 = sbr.rel target = $region3
    $region8: #{generator_forward.15} parent=1 // loop_exit
      _

</llo_original>
